<compile_context>
chip_gen: v7x
topology: tpu7x:2x2x1
jax: 0.10.0
libtpu: 0.0.40
codegen_flags: <defaults>
</compile_context>

<pallas_src>
import jax
import jax.numpy as jnp
from jax import lax
from jax.experimental import pallas as pl
from jax.experimental.pallas import tpu as pltpu

EPS = 1e-5      # nn.BatchNorm2d default eps
LANE = 128      # TPU lane width


def _round_up(x, m):
    return (x + m - 1) // m * m


def _sigmoid(t):
    # One EUP push (tanh) instead of exp + reciprocal.
    return 0.5 * (jnp.tanh(0.5 * t) + 1.0)


def _rowsum8(y):
    """(M, C) -> (8, C) per-sublane partial column sums (final collapse in JAX)."""
    m, c = y.shape
    pad = (-m) % 8
    if pad:
        y = jnp.concatenate([y, jnp.zeros((pad, c), y.dtype)], axis=0)
    return jnp.sum(y.reshape(-1, 8, c), axis=0)


def _strided_window(img, r0, c0, oh, ow, stride, c):
    """img[r0 + i*stride, c0 + j*stride, :] for i<oh, j<ow (static offsets/stride)."""
    if stride == 1:
        return img[r0:r0 + oh, c0:c0 + ow, :]
    return lax.slice(img, (r0, c0, 0),
                     (r0 + (oh - 1) * stride + 1, c0 + (ow - 1) * stride + 1, c),
                     (stride, stride, 1))


def _conv_from_image(img, w, kh, kw, oh, ow, stride, cin, cpad):
    """Implicit-im2col conv: accumulate kh*kw K-partial matmuls in f32.

    img: (Hp, Wp, cin) padded bf16 input window.
    w:   (kh*kw*cin, cpad) bf16 im2col weights (tap-major, cin-minor rows).
    Returns (oh*ow, cpad) f32.
    """
    acc = jnp.zeros((oh * ow, cpad), jnp.float32)
    for di in range(kh):
        for dj in range(kw):
            tap = _strided_window(img, di, dj, oh, ow, stride, cin)
            tap = tap.reshape(oh * ow, cin)          # collapse-leading: layout no-op
            r = (di * kw + dj) * cin
            acc = acc + jnp.dot(tap, w[r:r + cin, :],
                                preferred_element_type=jnp.float32)
    return acc


class ConvBlockPallas:
    """Mirror of the PyTorch ConvBlock forward (training-mode BatchNorm)."""

    def __init__(self, in_out_shapes, kernels, strides, paddings, key):
        self.cin, self.cout = in_out_shapes
        self.kernels = tuple(kernels)
        self.strides = tuple(strides)
        self.paddings = tuple(paddings)
        self.cpad = _round_up(self.cout, LANE)
        self.has_identity = (self.strides[0] != 1) or (self.cin != self.cout)

        k1, k2, k3, k4 = jax.random.split(key, 4)

        def pad_cols(w):
            return jnp.pad(w, ((0, 0), (0, self.cpad - self.cout)))

        # Conv weights in im2col row order (tap-major, Cin-minor); Cout columns
        # zero-padded to 128 lanes so the MXU result / stats are lane-dense.
        # conv1/conv2 biases omitted: a per-channel constant before training-mode
        # BatchNorm is cancelled exactly by the batch-mean subtraction.
        self.w1 = pad_cols(0.1 * jax.random.normal(
            k1, (self.kernels[0] ** 2 * self.cin, self.cout),
            jnp.float32)).astype(jnp.bfloat16)
        self.w2 = pad_cols(0.1 * jax.random.normal(
            k2, (self.kernels[1] ** 2 * self.cout, self.cout),
            jnp.float32)).astype(jnp.bfloat16)
        if self.has_identity:
            self.wi = (0.1 * jax.random.normal(
                k3, (self.cin, self.cout), jnp.float32)).astype(jnp.bfloat16)
            self.bi = 0.1 * jax.random.normal(k4, (1, self.cout), jnp.float32)

        # BatchNorm affine params (fresh module: gamma=1, beta=0).
        self.g1 = jnp.ones((self.cout,), jnp.float32)
        self.b1 = jnp.zeros((self.cout,), jnp.float32)
        self.g2 = jnp.ones((self.cout,), jnp.float32)
        self.b2 = jnp.zeros((self.cout,), jnp.float32)

    @staticmethod
    def _bn_scale_shift(s_part, q_part, count, gamma, beta):
        """Fold training-mode BN (biased variance) into y*scale + shift."""
        s = jnp.sum(s_part, axis=(0, 1))      # collapse batch + 8 sublane partials
        q = jnp.sum(q_part, axis=(0, 1))
        cout = gamma.shape[0]
        mean = s[:cout] / count
        # TODO(synk): E[x^2]-mean^2 can cancel badly for far-from-zero-mean
        #             activations; use a shifted two-pass variance if needed.
        var = jnp.maximum(q[:cout] / count - mean * mean, 0.0)
        inv = lax.rsqrt(var + EPS)
        scale = gamma * inv
        shift = beta - mean * scale
        return scale.reshape(1, cout), shift.reshape(1, cout)

    def __call__(self, x_nchw):
        k1, k2 = self.kernels
        s1, s2 = self.strides
        p1, p2 = self.paddings
        cin, cout, cpad = self.cin, self.cout, self.cpad

        n, _, h, w = x_nchw.shape
        ho1 = (h + 2 * p1 - k1) // s1 + 1
        wo1 = (w + 2 * p1 - k1) // s1 + 1
        ho2 = (ho1 + 2 * p2 - k2) // s2 + 1
        wo2 = (wo1 + 2 * p2 - k2) // s2 + 1
        hid = (h - 1) // s1 + 1 if self.has_identity else h
        wid = (w - 1) // s1 + 1 if self.has_identity else w
        assert (hid, wid) == (ho2, wo2), "residual add needs matching spatial dims"
        hp1, wp1 = h + 2 * p1, w + 2 * p1
        hp2, wp2 = ho1 + 2 * p2, wo1 + 2 * p2

        # NCHW -> NHWC, cast to bf16 once, spatial zero-pad for conv1.  The padded
        # copy is also reused by the identity branch (it reads the interior).
        # TODO(synk): keep NHWC end-to-end if the surrounding model allows, and
        #             row-tile the per-image blocks (halo DMA) for large spatial sizes.
        xp = jnp.pad(jnp.transpose(x_nchw, (0, 2, 3, 1)).astype(jnp.bfloat16),
                     ((0, 0), (p1, p1), (p1, p1), (0, 0)))

        params = pltpu.CompilerParams(dimension_semantics=("parallel",))

        # ---------------- kernel A: conv1 + batch-stat partials -----------------
        def conv1_kernel(xp_ref, w_ref, y_ref, s_ref, q_ref):
            y = _conv_from_image(xp_ref[0], w_ref[...], k1, k1, ho1, wo1, s1,
                                 cin, cpad)
            y_ref[0] = y[:, :cout].reshape(ho1, wo1, cout).astype(jnp.bfloat16)
            s_ref[0] = _rowsum8(y)
            q_ref[0] = _rowsum8(y * y)

        y1, s1p, q1p = pl.pallas_call(
            conv1_kernel,
            out_shape=(jax.ShapeDtypeStruct((n, ho1, wo1, cout), jnp.bfloat16),
                       jax.ShapeDtypeStruct((n, 8, cpad), jnp.float32),
                       jax.ShapeDtypeStruct((n, 8, cpad), jnp.float32)),
            grid=(n,),
            in_specs=[pl.BlockSpec((1, hp1, wp1, cin), lambda b: (b, 0, 0, 0)),
                      pl.BlockSpec((k1 * k1 * cin, cpad), lambda b: (0, 0))],
            out_specs=(pl.BlockSpec((1, ho1, wo1, cout), lambda b: (b, 0, 0, 0)),
                       pl.BlockSpec((1, 8, cpad), lambda b: (b, 0, 0)),
                       pl.BlockSpec((1, 8, cpad), lambda b: (b, 0, 0))),
            compiler_params=params,
        )(xp, self.w1)

        sc1, sh1 = self._bn_scale_shift(s1p, q1p, float(n * ho1 * wo1),
                                        self.g1, self.b1)

        # ------- kernel B: BN1 affine + SiLU + conv2 + batch-stat partials -------
        def conv2_kernel(y1_ref, sc_ref, sh_ref, w_ref, y_ref, s_ref, q_ref, hbuf):
            t = y1_ref[0].astype(jnp.float32) * sc_ref[0] + sh_ref[0]
            h1 = (t * _sigmoid(t)).astype(jnp.bfloat16)
            if p2 > 0:
                hbuf[...] = jnp.zeros_like(hbuf)      # conv2's spatial zero padding
            hbuf[p2:p2 + ho1, p2:p2 + wo1, :] = h1
            y = _conv_from_image(hbuf[...], w_ref[...], k2, k2, ho2, wo2, s2,
                                 cout, cpad)
            y_ref[0] = y[:, :cout].reshape(ho2, wo2, cout).astype(jnp.bfloat16)
            s_ref[0] = _rowsum8(y)
            q_ref[0] = _rowsum8(y * y)

        y2, s2p, q2p = pl.pallas_call(
            conv2_kernel,
            out_shape=(jax.ShapeDtypeStruct((n, ho2, wo2, cout), jnp.bfloat16),
                       jax.ShapeDtypeStruct((n, 8, cpad), jnp.float32),
                       jax.ShapeDtypeStruct((n, 8, cpad), jnp.float32)),
            grid=(n,),
            in_specs=[pl.BlockSpec((1, ho1, wo1, cout), lambda b: (b, 0, 0, 0)),
                      pl.BlockSpec((1, cout), lambda b: (0, 0)),
                      pl.BlockSpec((1, cout), lambda b: (0, 0)),
                      pl.BlockSpec((k2 * k2 * cout, cpad), lambda b: (0, 0))],
            out_specs=(pl.BlockSpec((1, ho2, wo2, cout), lambda b: (b, 0, 0, 0)),
                       pl.BlockSpec((1, 8, cpad), lambda b: (b, 0, 0)),
                       pl.BlockSpec((1, 8, cpad), lambda b: (b, 0, 0))),
            scratch_shapes=[pltpu.VMEM((hp2, wp2, cout), jnp.bfloat16)],
            compiler_params=params,
        )(y1, sc1, sh1, self.w2)

        sc2, sh2 = self._bn_scale_shift(s2p, q2p, float(n * ho2 * wo2),
                                        self.g2, self.b2)

        # ---- kernel C: BN2 affine + identity (1x1 conv / passthrough) + SiLU ----
        has_identity = self.has_identity

        def out_kernel(*refs):
            if has_identity:
                y2_ref, xp_ref, sc_ref, sh_ref, wi_ref, bi_ref, o_ref = refs
            else:
                y2_ref, xp_ref, sc_ref, sh_ref, o_ref = refs
            t = y2_ref[0].astype(jnp.float32) * sc_ref[0] + sh_ref[0]
            xs = _strided_window(xp_ref[0], p1, p1, ho2, wo2, s1, cin)
            if has_identity:
                idv = jnp.dot(xs.reshape(ho2 * wo2, cin), wi_ref[...],
                              preferred_element_type=jnp.float32)
                idv = idv.reshape(ho2, wo2, cout) + bi_ref[0]
            else:
                idv = xs.astype(jnp.float32)
            t = t + idv
            o_ref[0] = t * _sigmoid(t)

        in_specs = [pl.BlockSpec((1, ho2, wo2, cout), lambda b: (b, 0, 0, 0)),
                    pl.BlockSpec((1, hp1, wp1, cin), lambda b: (b, 0, 0, 0)),
                    pl.BlockSpec((1, cout), lambda b: (0, 0)),
                    pl.BlockSpec((1, cout), lambda b: (0, 0))]
        args = [y2, xp, sc2, sh2]
        if has_identity:
            in_specs += [pl.BlockSpec((cin, cout), lambda b: (0, 0)),
                         pl.BlockSpec((1, cout), lambda b: (0, 0))]
            args += [self.wi, self.bi]

        out = pl.pallas_call(
            out_kernel,
            out_shape=jax.ShapeDtypeStruct((n, ho2, wo2, cout), jnp.float32),
            grid=(n,),
            in_specs=in_specs,
            out_specs=pl.BlockSpec((1, ho2, wo2, cout), lambda b: (b, 0, 0, 0)),
            compiler_params=params,
        )(*args)

        return jnp.transpose(out, (0, 3, 1, 2))        # NHWC -> NCHW


if __name__ == "__main__":
    key = jax.random.PRNGKey(0)
    k_x, k_p = jax.random.split(key)

    # ConvBlock((4, 8), kernels=(3, 3), strides=(1, 1), paddings=(1, 1))
    block = ConvBlockPallas(in_out_shapes=(4, 8), kernels=(3, 3),
                            strides=(1, 1), paddings=(1, 1), key=k_p)

    x = jax.random.normal(k_x, (2, 4, 16, 16), jnp.float32)   # NCHW, like PyTorch

    fwd = jax.jit(lambda v: block(v))
    out = jax.block_until_ready(fwd(x))

    assert out.shape == (2, 8, 16, 16)
    assert bool(jnp.all(jnp.isfinite(out)))
    print("KERNEL_OK")
</pallas_src>

<mosaic_0001>
module attributes {stable_mosaic.version = 11 : i64} {
  func.func @conv1_kernel(%arg0: i32, %arg1: memref<1x18x18x4xbf16, #tpu.memory_space<vmem>>, %arg2: memref<36x128xbf16, #tpu.memory_space<vmem>>, %arg3: memref<1x16x16x8xbf16, #tpu.memory_space<vmem>>, %arg4: memref<1x8x128xf32, #tpu.memory_space<vmem>>, %arg5: memref<1x8x128xf32, #tpu.memory_space<vmem>>) attributes {dimension_semantics = [#tpu.dimension_semantics<parallel>], iteration_bounds = array<i64: 2>, scalar_prefetch = 0 : i64, scratch_operands = 0 : i64, tpu.core_type = #tpu.core_type<tc>, window_params = [{transform_indices = @transform_0, window_bounds = array<i64: 1, 18, 18, 4>}, {pipeline_mode = #tpu.pipeline_mode<synchronous>, transform_indices = @transform_1, window_bounds = array<i64: 36, 128>}, {transform_indices = @transform_2, window_bounds = array<i64: 1, 16, 16, 8>}, {transform_indices = @transform_3, window_bounds = array<i64: 1, 8, 128>}, {transform_indices = @transform_4, window_bounds = array<i64: 1, 8, 128>}]} {
    %c0 = arith.constant 0 : index
    %c0_0 = arith.constant 0 : index
    %c0_1 = arith.constant 0 : index
    %c0_2 = arith.constant 0 : index
    %0 = vector.load %arg1[%c0, %c0_0, %c0_1, %c0_2] : memref<1x18x18x4xbf16, #tpu.memory_space<vmem>>, vector<1x18x18x4xbf16>
    %1 = vector.shape_cast %0 : vector<1x18x18x4xbf16> to vector<18x18x4xbf16>
    %c0_3 = arith.constant 0 : index
    %c0_4 = arith.constant 0 : index
    %2 = vector.load %arg2[%c0_3, %c0_4] : memref<36x128xbf16, #tpu.memory_space<vmem>>, vector<36x128xbf16>
    %cst = arith.constant 0.000000e+00 : f32
    %3 = vector.broadcast %cst : f32 to vector<256x128xf32>
    %4 = vector.extract_strided_slice %1 {offsets = [0, 0, 0], sizes = [16, 16, 4], strides = [1, 1, 1]} : vector<18x18x4xbf16> to vector<16x16x4xbf16>
    %5 = vector.shape_cast %4 : vector<16x16x4xbf16> to vector<256x4xbf16>
    %6 = vector.extract_strided_slice %2 {offsets = [0, 0], sizes = [4, 128], strides = [1, 1]} : vector<36x128xbf16> to vector<4x128xbf16>
    %cst_5 = arith.constant dense<0.000000e+00> : vector<256x128xf32>
    %7 = tpu.matmul %5, %6, %cst_5 {dimension_numbers = #tpu.dot_dimension_numbers<[1], [0], [0], [1], [0, 0, 1, 1], [], []>} : vector<256x4xbf16>, vector<4x128xbf16>, vector<256x128xf32> -> vector<256x128xf32>
    %8 = arith.addf %3, %7 : vector<256x128xf32>
    %9 = vector.extract_strided_slice %1 {offsets = [0, 1, 0], sizes = [16, 16, 4], strides = [1, 1, 1]} : vector<18x18x4xbf16> to vector<16x16x4xbf16>
    %10 = vector.shape_cast %9 : vector<16x16x4xbf16> to vector<256x4xbf16>
    %11 = vector.extract_strided_slice %2 {offsets = [4, 0], sizes = [4, 128], strides = [1, 1]} : vector<36x128xbf16> to vector<4x128xbf16>
    %cst_6 = arith.constant dense<0.000000e+00> : vector<256x128xf32>
    %12 = tpu.matmul %10, %11, %cst_6 {dimension_numbers = #tpu.dot_dimension_numbers<[1], [0], [0], [1], [0, 0, 1, 1], [], []>} : vector<256x4xbf16>, vector<4x128xbf16>, vector<256x128xf32> -> vector<256x128xf32>
    %13 = arith.addf %8, %12 : vector<256x128xf32>
    %14 = vector.extract_strided_slice %1 {offsets = [0, 2, 0], sizes = [16, 16, 4], strides = [1, 1, 1]} : vector<18x18x4xbf16> to vector<16x16x4xbf16>
    %15 = vector.shape_cast %14 : vector<16x16x4xbf16> to vector<256x4xbf16>
    %16 = vector.extract_strided_slice %2 {offsets = [8, 0], sizes = [4, 128], strides = [1, 1]} : vector<36x128xbf16> to vector<4x128xbf16>
    %cst_7 = arith.constant dense<0.000000e+00> : vector<256x128xf32>
    %17 = tpu.matmul %15, %16, %cst_7 {dimension_numbers = #tpu.dot_dimension_numbers<[1], [0], [0], [1], [0, 0, 1, 1], [], []>} : vector<256x4xbf16>, vector<4x128xbf16>, vector<256x128xf32> -> vector<256x128xf32>
    %18 = arith.addf %13, %17 : vector<256x128xf32>
    %19 = vector.extract_strided_slice %1 {offsets = [1, 0, 0], sizes = [16, 16, 4], strides = [1, 1, 1]} : vector<18x18x4xbf16> to vector<16x16x4xbf16>
    %20 = vector.shape_cast %19 : vector<16x16x4xbf16> to vector<256x4xbf16>
    %21 = vector.extract_strided_slice %2 {offsets = [12, 0], sizes = [4, 128], strides = [1, 1]} : vector<36x128xbf16> to vector<4x128xbf16>
    %cst_8 = arith.constant dense<0.000000e+00> : vector<256x128xf32>
    %22 = tpu.matmul %20, %21, %cst_8 {dimension_numbers = #tpu.dot_dimension_numbers<[1], [0], [0], [1], [0, 0, 1, 1], [], []>} : vector<256x4xbf16>, vector<4x128xbf16>, vector<256x128xf32> -> vector<256x128xf32>
    %23 = arith.addf %18, %22 : vector<256x128xf32>
    %24 = vector.extract_strided_slice %1 {offsets = [1, 1, 0], sizes = [16, 16, 4], strides = [1, 1, 1]} : vector<18x18x4xbf16> to vector<16x16x4xbf16>
    %25 = vector.shape_cast %24 : vector<16x16x4xbf16> to vector<256x4xbf16>
    %26 = vector.extract_strided_slice %2 {offsets = [16, 0], sizes = [4, 128], strides = [1, 1]} : vector<36x128xbf16> to vector<4x128xbf16>
    %cst_9 = arith.constant dense<0.000000e+00> : vector<256x128xf32>
    %27 = tpu.matmul %25, %26, %cst_9 {dimension_numbers = #tpu.dot_dimension_numbers<[1], [0], [0], [1], [0, 0, 1, 1], [], []>} : vector<256x4xbf16>, vector<4x128xbf16>, vector<256x128xf32> -> vector<256x128xf32>
    %28 = arith.addf %23, %27 : vector<256x128xf32>
    %29 = vector.extract_strided_slice %1 {offsets = [1, 2, 0], sizes = [16, 16, 4], strides = [1, 1, 1]} : vector<18x18x4xbf16> to vector<16x16x4xbf16>
    %30 = vector.shape_cast %29 : vector<16x16x4xbf16> to vector<256x4xbf16>
    %31 = vector.extract_strided_slice %2 {offsets = [20, 0], sizes = [4, 128], strides = [1, 1]} : vector<36x128xbf16> to vector<4x128xbf16>
    %cst_10 = arith.constant dense<0.000000e+00> : vector<256x128xf32>
    %32 = tpu.matmul %30, %31, %cst_10 {dimension_numbers = #tpu.dot_dimension_numbers<[1], [0], [0], [1], [0, 0, 1, 1], [], []>} : vector<256x4xbf16>, vector<4x128xbf16>, vector<256x128xf32> -> vector<256x128xf32>
    %33 = arith.addf %28, %32 : vector<256x128xf32>
    %34 = vector.extract_strided_slice %1 {offsets = [2, 0, 0], sizes = [16, 16, 4], strides = [1, 1, 1]} : vector<18x18x4xbf16> to vector<16x16x4xbf16>
    %35 = vector.shape_cast %34 : vector<16x16x4xbf16> to vector<256x4xbf16>
    %36 = vector.extract_strided_slice %2 {offsets = [24, 0], sizes = [4, 128], strides = [1, 1]} : vector<36x128xbf16> to vector<4x128xbf16>
    %cst_11 = arith.constant dense<0.000000e+00> : vector<256x128xf32>
    %37 = tpu.matmul %35, %36, %cst_11 {dimension_numbers = #tpu.dot_dimension_numbers<[1], [0], [0], [1], [0, 0, 1, 1], [], []>} : vector<256x4xbf16>, vector<4x128xbf16>, vector<256x128xf32> -> vector<256x128xf32>
    %38 = arith.addf %33, %37 : vector<256x128xf32>
    %39 = vector.extract_strided_slice %1 {offsets = [2, 1, 0], sizes = [16, 16, 4], strides = [1, 1, 1]} : vector<18x18x4xbf16> to vector<16x16x4xbf16>
    %40 = vector.shape_cast %39 : vector<16x16x4xbf16> to vector<256x4xbf16>
    %41 = vector.extract_strided_slice %2 {offsets = [28, 0], sizes = [4, 128], strides = [1, 1]} : vector<36x128xbf16> to vector<4x128xbf16>
    %cst_12 = arith.constant dense<0.000000e+00> : vector<256x128xf32>
    %42 = tpu.matmul %40, %41, %cst_12 {dimension_numbers = #tpu.dot_dimension_numbers<[1], [0], [0], [1], [0, 0, 1, 1], [], []>} : vector<256x4xbf16>, vector<4x128xbf16>, vector<256x128xf32> -> vector<256x128xf32>
    %43 = arith.addf %38, %42 : vector<256x128xf32>
    %44 = vector.extract_strided_slice %1 {offsets = [2, 2, 0], sizes = [16, 16, 4], strides = [1, 1, 1]} : vector<18x18x4xbf16> to vector<16x16x4xbf16>
    %45 = vector.shape_cast %44 : vector<16x16x4xbf16> to vector<256x4xbf16>
    %46 = vector.extract_strided_slice %2 {offsets = [32, 0], sizes = [4, 128], strides = [1, 1]} : vector<36x128xbf16> to vector<4x128xbf16>
    %cst_13 = arith.constant dense<0.000000e+00> : vector<256x128xf32>
    %47 = tpu.matmul %45, %46, %cst_13 {dimension_numbers = #tpu.dot_dimension_numbers<[1], [0], [0], [1], [0, 0, 1, 1], [], []>} : vector<256x4xbf16>, vector<4x128xbf16>, vector<256x128xf32> -> vector<256x128xf32>
    %48 = arith.addf %43, %47 : vector<256x128xf32>
    %49 = vector.extract_strided_slice %48 {offsets = [0, 0], sizes = [256, 8], strides = [1, 1]} : vector<256x128xf32> to vector<256x8xf32>
    %50 = vector.shape_cast %49 : vector<256x8xf32> to vector<16x16x8xf32>
    %51 = arith.truncf %50 : vector<16x16x8xf32> to vector<16x16x8xbf16>
    %c0_14 = arith.constant 0 : index
    %c0_15 = arith.constant 0 : index
    %c0_16 = arith.constant 0 : index
    %c0_17 = arith.constant 0 : index
    %52 = vector.load %arg3[%c0_14, %c0_15, %c0_16, %c0_17] : memref<1x16x16x8xbf16, #tpu.memory_space<vmem>>, vector<1x16x16x8xbf16>
    %53 = vector.shape_cast %52 : vector<1x16x16x8xbf16> to vector<16x16x8xbf16>
    %54 = vector.shape_cast %51 : vector<16x16x8xbf16> to vector<1x16x16x8xbf16>
    tpu.vector_store %arg3[%c0_14, %c0_15, %c0_16, %c0_17], %54 {strides = array<i32>} : memref<1x16x16x8xbf16, #tpu.memory_space<vmem>>, vector<1x16x16x8xbf16>,
    %55 = vector.shape_cast %48 : vector<256x128xf32> to vector<32x8x128xf32>
    %cst_18 = arith.constant dense<0.000000e+00> : vector<8x128xf32>
    %56 = vector.multi_reduction <add>, %55, %cst_18 [0] : vector<32x8x128xf32> to vector<8x128xf32>
    %c0_19 = arith.constant 0 : index
    %c0_20 = arith.constant 0 : index
    %c0_21 = arith.constant 0 : index
    %57 = vector.load %arg4[%c0_19, %c0_20, %c0_21] : memref<1x8x128xf32, #tpu.memory_space<vmem>>, vector<1x8x128xf32>
    %58 = vector.shape_cast %57 : vector<1x8x128xf32> to vector<8x128xf32>
    %59 = vector.shape_cast %56 : vector<8x128xf32> to vector<1x8x128xf32>
    tpu.vector_store %arg4[%c0_19, %c0_20, %c0_21], %59 {strides = array<i32>} : memref<1x8x128xf32, #tpu.memory_space<vmem>>, vector<1x8x128xf32>,
    %60 = arith.mulf %48, %48 : vector<256x128xf32>
    %61 = vector.shape_cast %60 : vector<256x128xf32> to vector<32x8x128xf32>
    %cst_22 = arith.constant dense<0.000000e+00> : vector<8x128xf32>
    %62 = vector.multi_reduction <add>, %61, %cst_22 [0] : vector<32x8x128xf32> to vector<8x128xf32>
    %c0_23 = arith.constant 0 : index
    %c0_24 = arith.constant 0 : index
    %c0_25 = arith.constant 0 : index
    %63 = vector.load %arg5[%c0_23, %c0_24, %c0_25] : memref<1x8x128xf32, #tpu.memory_space<vmem>>, vector<1x8x128xf32>
    %64 = vector.shape_cast %63 : vector<1x8x128xf32> to vector<8x128xf32>
    %65 = vector.shape_cast %62 : vector<8x128xf32> to vector<1x8x128xf32>
    tpu.vector_store %arg5[%c0_23, %c0_24, %c0_25], %65 {strides = array<i32>} : memref<1x8x128xf32, #tpu.memory_space<vmem>>, vector<1x8x128xf32>,
    return
  }
  func.func @transform_0(%arg0: i32) -> (i32, i32, i32, i32) {
    %c0_i32 = arith.constant 0 : i32
    %c0_i32_0 = arith.constant 0 : i32
    %c0_i32_1 = arith.constant 0 : i32
    %c0_i32_2 = arith.constant 0 : i32
    return %arg0, %c0_i32, %c0_i32_0, %c0_i32_1 : i32, i32, i32, i32
  }
  func.func @transform_1(%arg0: i32) -> (i32, i32) {
    %c0_i32 = arith.constant 0 : i32
    %c0_i32_0 = arith.constant 0 : i32
    %c0_i32_1 = arith.constant 0 : i32
    return %c0_i32, %c0_i32_0 : i32, i32
  }
  func.func @transform_2(%arg0: i32) -> (i32, i32, i32, i32) {
    %c0_i32 = arith.constant 0 : i32
    %c0_i32_0 = arith.constant 0 : i32
    %c0_i32_1 = arith.constant 0 : i32
    %c0_i32_2 = arith.constant 0 : i32
    return %arg0, %c0_i32, %c0_i32_0, %c0_i32_1 : i32, i32, i32, i32
  }
  func.func @transform_3(%arg0: i32) -> (i32, i32, i32) {
    %c0_i32 = arith.constant 0 : i32
    %c0_i32_0 = arith.constant 0 : i32
    %c0_i32_1 = arith.constant 0 : i32
    return %arg0, %c0_i32, %c0_i32_0 : i32, i32, i32
  }
  func.func @transform_4(%arg0: i32) -> (i32, i32, i32) {
    %c0_i32 = arith.constant 0 : i32
    %c0_i32_0 = arith.constant 0 : i32
    %c0_i32_1 = arith.constant 0 : i32
    return %arg0, %c0_i32, %c0_i32_0 : i32, i32, i32
  }
}

module attributes {stable_mosaic.version = 11 : i64} {
  func.func @out_kernel(%arg0: i32, %arg1: memref<1x16x16x8xbf16, #tpu.memory_space<vmem>>, %arg2: memref<1x18x18x4xbf16, #tpu.memory_space<vmem>>, %arg3: memref<1x8xf32, #tpu.memory_space<vmem>>, %arg4: memref<1x8xf32, #tpu.memory_space<vmem>>, %arg5: memref<4x8xbf16, #tpu.memory_space<vmem>>, %arg6: memref<1x8xf32, #tpu.memory_space<vmem>>, %arg7: memref<1x16x16x8xf32, #tpu.memory_space<vmem>>) attributes {dimension_semantics = [#tpu.dimension_semantics<parallel>], iteration_bounds = array<i64: 2>, scalar_prefetch = 0 : i64, scratch_operands = 0 : i64, tpu.core_type = #tpu.core_type<tc>, window_params = [{transform_indices = @transform_0, window_bounds = array<i64: 1, 16, 16, 8>}, {transform_indices = @transform_1, window_bounds = array<i64: 1, 18, 18, 4>}, {pipeline_mode = #tpu.pipeline_mode<synchronous>, transform_indices = @transform_2, window_bounds = array<i64: 1, 8>}, {pipeline_mode = #tpu.pipeline_mode<synchronous>, transform_indices = @transform_3, window_bounds = array<i64: 1, 8>}, {pipeline_mode = #tpu.pipeline_mode<synchronous>, transform_indices = @transform_4, window_bounds = array<i64: 4, 8>}, {pipeline_mode = #tpu.pipeline_mode<synchronous>, transform_indices = @transform_5, window_bounds = array<i64: 1, 8>}, {transform_indices = @transform_6, window_bounds = array<i64: 1, 16, 16, 8>}]} {
    %c0 = arith.constant 0 : index
    %c0_0 = arith.constant 0 : index
    %c0_1 = arith.constant 0 : index
    %c0_2 = arith.constant 0 : index
    %0 = vector.load %arg1[%c0, %c0_0, %c0_1, %c0_2] : memref<1x16x16x8xbf16, #tpu.memory_space<vmem>>, vector<1x16x16x8xbf16>
    %1 = vector.shape_cast %0 : vector<1x16x16x8xbf16> to vector<16x16x8xbf16>
    %2 = arith.extf %1 : vector<16x16x8xbf16> to vector<16x16x8xf32>
    %c0_3 = arith.constant 0 : index
    %c0_4 = arith.constant 0 : index
    %3 = vector.load %arg3[%c0_3, %c0_4] : memref<1x8xf32, #tpu.memory_space<vmem>>, vector<1x8xf32>
    %4 = vector.shape_cast %3 : vector<1x8xf32> to vector<8xf32>
    %5 = vector.shape_cast %4 : vector<8xf32> to vector<1x1x8xf32>
    %6 = vector.broadcast %5 : vector<1x1x8xf32> to vector<16x16x8xf32>
    %7 = arith.mulf %2, %6 : vector<16x16x8xf32>
    %c0_5 = arith.constant 0 : index
    %c0_6 = arith.constant 0 : index
    %8 = vector.load %arg4[%c0_5, %c0_6] : memref<1x8xf32, #tpu.memory_space<vmem>>, vector<1x8xf32>
    %9 = vector.shape_cast %8 : vector<1x8xf32> to vector<8xf32>
    %10 = vector.shape_cast %9 : vector<8xf32> to vector<1x1x8xf32>
    %11 = vector.broadcast %10 : vector<1x1x8xf32> to vector<16x16x8xf32>
    %12 = arith.addf %7, %11 : vector<16x16x8xf32>
    %c0_7 = arith.constant 0 : index
    %c0_8 = arith.constant 0 : index
    %c0_9 = arith.constant 0 : index
    %c0_10 = arith.constant 0 : index
    %13 = vector.load %arg2[%c0_7, %c0_8, %c0_9, %c0_10] : memref<1x18x18x4xbf16, #tpu.memory_space<vmem>>, vector<1x18x18x4xbf16>
    %14 = vector.shape_cast %13 : vector<1x18x18x4xbf16> to vector<18x18x4xbf16>
    %15 = vector.extract_strided_slice %14 {offsets = [1, 1, 0], sizes = [16, 16, 4], strides = [1, 1, 1]} : vector<18x18x4xbf16> to vector<16x16x4xbf16>
    %16 = vector.shape_cast %15 : vector<16x16x4xbf16> to vector<256x4xbf16>
    %c0_11 = arith.constant 0 : index
    %c0_12 = arith.constant 0 : index
    %17 = vector.load %arg5[%c0_11, %c0_12] : memref<4x8xbf16, #tpu.memory_space<vmem>>, vector<4x8xbf16>
    %cst = arith.constant dense<0.000000e+00> : vector<256x8xf32>
    %18 = tpu.matmul %16, %17, %cst {dimension_numbers = #tpu.dot_dimension_numbers<[1], [0], [0], [1], [0, 0, 1, 1], [], []>} : vector<256x4xbf16>, vector<4x8xbf16>, vector<256x8xf32> -> vector<256x8xf32>
    %19 = vector.shape_cast %18 : vector<256x8xf32> to vector<16x16x8xf32>
    %c0_13 = arith.constant 0 : index
    %c0_14 = arith.constant 0 : index
    %20 = vector.load %arg6[%c0_13, %c0_14] : memref<1x8xf32, #tpu.memory_space<vmem>>, vector<1x8xf32>
    %21 = vector.shape_cast %20 : vector<1x8xf32> to vector<8xf32>
    %22 = vector.shape_cast %21 : vector<8xf32> to vector<1x1x8xf32>
    %23 = vector.broadcast %22 : vector<1x1x8xf32> to vector<16x16x8xf32>
    %24 = arith.addf %19, %23 : vector<16x16x8xf32>
    %25 = arith.addf %12, %24 : vector<16x16x8xf32>
    %cst_15 = arith.constant 5.000000e-01 : f32
    %26 = vector.broadcast %cst_15 : f32 to vector<16x16x8xf32>
    %27 = arith.mulf %26, %25 : vector<16x16x8xf32>
    %28 = math.tanh %27 : vector<16x16x8xf32>
    %cst_16 = arith.constant 1.000000e+00 : f32
    %29 = vector.broadcast %cst_16 : f32 to vector<16x16x8xf32>
    %30 = arith.addf %28, %29 : vector<16x16x8xf32>
    %cst_17 = arith.constant 5.000000e-01 : f32
    %31 = vector.broadcast %cst_17 : f32 to vector<16x16x8xf32>
    %32 = arith.mulf %31, %30 : vector<16x16x8xf32>
    %33 = arith.mulf %25, %32 : vector<16x16x8xf32>
    %c0_18 = arith.constant 0 : index
    %c0_19 = arith.constant 0 : index
    %c0_20 = arith.constant 0 : index
    %c0_21 = arith.constant 0 : index
    %34 = vector.load %arg7[%c0_18, %c0_19, %c0_20, %c0_21] : memref<1x16x16x8xf32, #tpu.memory_space<vmem>>, vector<1x16x16x8xf32>
    %35 = vector.shape_cast %34 : vector<1x16x16x8xf32> to vector<16x16x8xf32>
    %36 = vector.shape_cast %33 : vector<16x16x8xf32> to vector<1x16x16x8xf32>
    tpu.vector_store %arg7[%c0_18, %c0_19, %c0_20, %c0_21], %36 {strides = array<i32>} : memref<1x16x16x8xf32, #tpu.memory_space<vmem>>, vector<1x16x16x8xf32>,
    return
  }
  func.func @transform_0(%arg0: i32) -> (i32, i32, i32, i32) {
    %c0_i32 = arith.constant 0 : i32
    %c0_i32_0 = arith.constant 0 : i32
    %c0_i32_1 = arith.constant 0 : i32
    %c0_i32_2 = arith.constant 0 : i32
    return %arg0, %c0_i32, %c0_i32_0, %c0_i32_1 : i32, i32, i32, i32
  }
  func.func @transform_1(%arg0: i32) -> (i32, i32, i32, i32) {
    %c0_i32 = arith.constant 0 : i32
    %c0_i32_0 = arith.constant 0 : i32
    %c0_i32_1 = arith.constant 0 : i32
    %c0_i32_2 = arith.constant 0 : i32
    return %arg0, %c0_i32, %c0_i32_0, %c0_i32_1 : i32, i32, i32, i32
  }
  func.func @transform_2(%arg0: i32) -> (i32, i32) {
    %c0_i32 = arith.constant 0 : i32
    %c0_i32_0 = arith.constant 0 : i32
    %c0_i32_1 = arith.constant 0 : i32
    return %c0_i32, %c0_i32_0 : i32, i32
  }
  func.func @transform_3(%arg0: i32) -> (i32, i32) {
    %c0_i32 = arith.constant 0 : i32
    %c0_i32_0 = arith.constant 0 : i32
    %c0_i32_1 = arith.constant 0 : i32
    return %c0_i32, %c0_i32_0 : i32, i32
  }
  func.func @transform_4(%arg0: i32) -> (i32, i32) {
    %c0_i32 = arith.constant 0 : i32
    %c0_i32_0 = arith.constant 0 : i32
    %c0_i32_1 = arith.constant 0 : i32
    return %c0_i32, %c0_i32_0 : i32, i32
  }
  func.func @transform_5(%arg0: i32) -> (i32, i32) {
    %c0_i32 = arith.constant 0 : i32
    %c0_i32_0 = arith.constant 0 : i32
    %c0_i32_1 = arith.constant 0 : i32
    return %c0_i32, %c0_i32_0 : i32, i32
  }
  func.func @transform_6(%arg0: i32) -> (i32, i32, i32, i32) {
    %c0_i32 = arith.constant 0 : i32
    %c0_i32_0 = arith.constant 0 : i32
    %c0_i32_1 = arith.constant 0 : i32
    %c0_i32_2 = arith.constant 0 : i32
    return %arg0, %c0_i32, %c0_i32_0, %c0_i32_1 : i32, i32, i32, i32
  }
}

module attributes {stable_mosaic.version = 11 : i64} {
  func.func @conv2_kernel(%arg0: i32, %arg1: memref<1x16x16x8xbf16, #tpu.memory_space<vmem>>, %arg2: memref<1x8xf32, #tpu.memory_space<vmem>>, %arg3: memref<1x8xf32, #tpu.memory_space<vmem>>, %arg4: memref<72x128xbf16, #tpu.memory_space<vmem>>, %arg5: memref<1x16x16x8xbf16, #tpu.memory_space<vmem>>, %arg6: memref<1x8x128xf32, #tpu.memory_space<vmem>>, %arg7: memref<1x8x128xf32, #tpu.memory_space<vmem>>, %arg8: memref<18x18x8xbf16, #tpu.memory_space<vmem>>) attributes {dimension_semantics = [#tpu.dimension_semantics<parallel>], iteration_bounds = array<i64: 2>, scalar_prefetch = 0 : i64, scratch_operands = 1 : i64, tpu.core_type = #tpu.core_type<tc>, window_params = [{transform_indices = @transform_0, window_bounds = array<i64: 1, 16, 16, 8>}, {pipeline_mode = #tpu.pipeline_mode<synchronous>, transform_indices = @transform_1, window_bounds = array<i64: 1, 8>}, {pipeline_mode = #tpu.pipeline_mode<synchronous>, transform_indices = @transform_2, window_bounds = array<i64: 1, 8>}, {pipeline_mode = #tpu.pipeline_mode<synchronous>, transform_indices = @transform_3, window_bounds = array<i64: 72, 128>}, {transform_indices = @transform_4, window_bounds = array<i64: 1, 16, 16, 8>}, {transform_indices = @transform_5, window_bounds = array<i64: 1, 8, 128>}, {transform_indices = @transform_6, window_bounds = array<i64: 1, 8, 128>}]} {
    %c0 = arith.constant 0 : index
    %c0_0 = arith.constant 0 : index
    %c0_1 = arith.constant 0 : index
    %c0_2 = arith.constant 0 : index
    %0 = vector.load %arg1[%c0, %c0_0, %c0_1, %c0_2] : memref<1x16x16x8xbf16, #tpu.memory_space<vmem>>, vector<1x16x16x8xbf16>
    %1 = vector.shape_cast %0 : vector<1x16x16x8xbf16> to vector<16x16x8xbf16>
    %2 = arith.extf %1 : vector<16x16x8xbf16> to vector<16x16x8xf32>
    %c0_3 = arith.constant 0 : index
    %c0_4 = arith.constant 0 : index
    %3 = vector.load %arg2[%c0_3, %c0_4] : memref<1x8xf32, #tpu.memory_space<vmem>>, vector<1x8xf32>
    %4 = vector.shape_cast %3 : vector<1x8xf32> to vector<8xf32>
    %5 = vector.shape_cast %4 : vector<8xf32> to vector<1x1x8xf32>
    %6 = vector.broadcast %5 : vector<1x1x8xf32> to vector<16x16x8xf32>
    %7 = arith.mulf %2, %6 : vector<16x16x8xf32>
    %c0_5 = arith.constant 0 : index
    %c0_6 = arith.constant 0 : index
    %8 = vector.load %arg3[%c0_5, %c0_6] : memref<1x8xf32, #tpu.memory_space<vmem>>, vector<1x8xf32>
    %9 = vector.shape_cast %8 : vector<1x8xf32> to vector<8xf32>
    %10 = vector.shape_cast %9 : vector<8xf32> to vector<1x1x8xf32>
    %11 = vector.broadcast %10 : vector<1x1x8xf32> to vector<16x16x8xf32>
    %12 = arith.addf %7, %11 : vector<16x16x8xf32>
    %cst = arith.constant 5.000000e-01 : f32
    %13 = vector.broadcast %cst : f32 to vector<16x16x8xf32>
    %14 = arith.mulf %13, %12 : vector<16x16x8xf32>
    %15 = math.tanh %14 : vector<16x16x8xf32>
    %cst_7 = arith.constant 1.000000e+00 : f32
    %16 = vector.broadcast %cst_7 : f32 to vector<16x16x8xf32>
    %17 = arith.addf %15, %16 : vector<16x16x8xf32>
    %cst_8 = arith.constant 5.000000e-01 : f32
    %18 = vector.broadcast %cst_8 : f32 to vector<16x16x8xf32>
    %19 = arith.mulf %18, %17 : vector<16x16x8xf32>
    %20 = arith.mulf %12, %19 : vector<16x16x8xf32>
    %21 = arith.truncf %20 : vector<16x16x8xf32> to vector<16x16x8xbf16>
    %cst_9 = arith.constant 0.000000e+00 : bf16
    %22 = vector.broadcast %cst_9 : bf16 to vector<18x18x8xbf16>
    %c0_10 = arith.constant 0 : index
    %c0_11 = arith.constant 0 : index
    %c0_12 = arith.constant 0 : index
    %23 = vector.load %arg8[%c0_10, %c0_11, %c0_12] : memref<18x18x8xbf16, #tpu.memory_space<vmem>>, vector<18x18x8xbf16>
    tpu.vector_store %arg8[%c0_10, %c0_11, %c0_12], %22 {strides = array<i32>} : memref<18x18x8xbf16, #tpu.memory_space<vmem>>, vector<18x18x8xbf16>,
    %c1 = arith.constant 1 : index
    %c1_13 = arith.constant 1 : index
    %c0_14 = arith.constant 0 : index
    %24 = vector.load %arg8[%c1, %c1_13, %c0_14] : memref<18x18x8xbf16, #tpu.memory_space<vmem>>, vector<16x16x8xbf16>
    tpu.vector_store %arg8[%c1, %c1_13, %c0_14], %21 {strides = array<i32>} : memref<18x18x8xbf16, #tpu.memory_space<vmem>>, vector<16x16x8xbf16>,
    %c0_15 = arith.constant 0 : index
    %c0_16 = arith.constant 0 : index
    %c0_17 = arith.constant 0 : index
    %25 = vector.load %arg8[%c0_15, %c0_16, %c0_17] : memref<18x18x8xbf16, #tpu.memory_space<vmem>>, vector<18x18x8xbf16>
    %c0_18 = arith.constant 0 : index
    %c0_19 = arith.constant 0 : index
    %26 = vector.load %arg4[%c0_18, %c0_19] : memref<72x128xbf16, #tpu.memory_space<vmem>>, vector<72x128xbf16>
    %cst_20 = arith.constant 0.000000e+00 : f32
    %27 = vector.broadcast %cst_20 : f32 to vector<256x128xf32>
    %28 = vector.extract_strided_slice %25 {offsets = [0, 0, 0], sizes = [16, 16, 8], strides = [1, 1, 1]} : vector<18x18x8xbf16> to vector<16x16x8xbf16>
    %29 = vector.shape_cast %28 : vector<16x16x8xbf16> to vector<256x8xbf16>
    %30 = vector.extract_strided_slice %26 {offsets = [0, 0], sizes = [8, 128], strides = [1, 1]} : vector<72x128xbf16> to vector<8x128xbf16>
    %cst_21 = arith.constant dense<0.000000e+00> : vector<256x128xf32>
    %31 = tpu.matmul %29, %30, %cst_21 {dimension_numbers = #tpu.dot_dimension_numbers<[1], [0], [0], [1], [0, 0, 1, 1], [], []>} : vector<256x8xbf16>, vector<8x128xbf16>, vector<256x128xf32> -> vector<256x128xf32>
    %32 = arith.addf %27, %31 : vector<256x128xf32>
    %33 = vector.extract_strided_slice %25 {offsets = [0, 1, 0], sizes = [16, 16, 8], strides = [1, 1, 1]} : vector<18x18x8xbf16> to vector<16x16x8xbf16>
    %34 = vector.shape_cast %33 : vector<16x16x8xbf16> to vector<256x8xbf16>
    %35 = vector.extract_strided_slice %26 {offsets = [8, 0], sizes = [8, 128], strides = [1, 1]} : vector<72x128xbf16> to vector<8x128xbf16>
    %cst_22 = arith.constant dense<0.000000e+00> : vector<256x128xf32>
    %36 = tpu.matmul %34, %35, %cst_22 {dimension_numbers = #tpu.dot_dimension_numbers<[1], [0], [0], [1], [0, 0, 1, 1], [], []>} : vector<256x8xbf16>, vector<8x128xbf16>, vector<256x128xf32> -> vector<256x128xf32>
    %37 = arith.addf %32, %36 : vector<256x128xf32>
    %38 = vector.extract_strided_slice %25 {offsets = [0, 2, 0], sizes = [16, 16, 8], strides = [1, 1, 1]} : vector<18x18x8xbf16> to vector<16x16x8xbf16>
    %39 = vector.shape_cast %38 : vector<16x16x8xbf16> to vector<256x8xbf16>
    %40 = vector.extract_strided_slice %26 {offsets = [16, 0], sizes = [8, 128], strides = [1, 1]} : vector<72x128xbf16> to vector<8x128xbf16>
    %cst_23 = arith.constant dense<0.000000e+00> : vector<256x128xf32>
    %41 = tpu.matmul %39, %40, %cst_23 {dimension_numbers = #tpu.dot_dimension_numbers<[1], [0], [0], [1], [0, 0, 1, 1], [], []>} : vector<256x8xbf16>, vector<8x128xbf16>, vector<256x128xf32> -> vector<256x128xf32>
    %42 = arith.addf %37, %41 : vector<256x128xf32>
    %43 = vector.extract_strided_slice %25 {offsets = [1, 0, 0], sizes = [16, 16, 8], strides = [1, 1, 1]} : vector<18x18x8xbf16> to vector<16x16x8xbf16>
    %44 = vector.shape_cast %43 : vector<16x16x8xbf16> to vector<256x8xbf16>
    %45 = vector.extract_strided_slice %26 {offsets = [24, 0], sizes = [8, 128], strides = [1, 1]} : vector<72x128xbf16> to vector<8x128xbf16>
    %cst_24 = arith.constant dense<0.000000e+00> : vector<256x128xf32>
    %46 = tpu.matmul %44, %45, %cst_24 {dimension_numbers = #tpu.dot_dimension_numbers<[1], [0], [0], [1], [0, 0, 1, 1], [], []>} : vector<256x8xbf16>, vector<8x128xbf16>, vector<256x128xf32> -> vector<256x128xf32>
    %47 = arith.addf %42, %46 : vector<256x128xf32>
    %48 = vector.extract_strided_slice %25 {offsets = [1, 1, 0], sizes = [16, 16, 8], strides = [1, 1, 1]} : vector<18x18x8xbf16> to vector<16x16x8xbf16>
    %49 = vector.shape_cast %48 : vector<16x16x8xbf16> to vector<256x8xbf16>
    %50 = vector.extract_strided_slice %26 {offsets = [32, 0], sizes = [8, 128], strides = [1, 1]} : vector<72x128xbf16> to vector<8x128xbf16>
    %cst_25 = arith.constant dense<0.000000e+00> : vector<256x128xf32>
    %51 = tpu.matmul %49, %50, %cst_25 {dimension_numbers = #tpu.dot_dimension_numbers<[1], [0], [0], [1], [0, 0, 1, 1], [], []>} : vector<256x8xbf16>, vector<8x128xbf16>, vector<256x128xf32> -> vector<256x128xf32>
    %52 = arith.addf %47, %51 : vector<256x128xf32>
    %53 = vector.extract_strided_slice %25 {offsets = [1, 2, 0], sizes = [16, 16, 8], strides = [1, 1, 1]} : vector<18x18x8xbf16> to vector<16x16x8xbf16>
    %54 = vector.shape_cast %53 : vector<16x16x8xbf16> to vector<256x8xbf16>
    %55 = vector.extract_strided_slice %26 {offsets = [40, 0], sizes = [8, 128], strides = [1, 1]} : vector<72x128xbf16> to vector<8x128xbf16>
    %cst_26 = arith.constant dense<0.000000e+00> : vector<256x128xf32>
    %56 = tpu.matmul %54, %55, %cst_26 {dimension_numbers = #tpu.dot_dimension_numbers<[1], [0], [0], [1], [0, 0, 1, 1], [], []>} : vector<256x8xbf16>, vector<8x128xbf16>, vector<256x128xf32> -> vector<256x128xf32>
    %57 = arith.addf %52, %56 : vector<256x128xf32>
    %58 = vector.extract_strided_slice %25 {offsets = [2, 0, 0], sizes = [16, 16, 8], strides = [1, 1, 1]} : vector<18x18x8xbf16> to vector<16x16x8xbf16>
    %59 = vector.shape_cast %58 : vector<16x16x8xbf16> to vector<256x8xbf16>
    %60 = vector.extract_strided_slice %26 {offsets = [48, 0], sizes = [8, 128], strides = [1, 1]} : vector<72x128xbf16> to vector<8x128xbf16>
    %cst_27 = arith.constant dense<0.000000e+00> : vector<256x128xf32>
    %61 = tpu.matmul %59, %60, %cst_27 {dimension_numbers = #tpu.dot_dimension_numbers<[1], [0], [0], [1], [0, 0, 1, 1], [], []>} : vector<256x8xbf16>, vector<8x128xbf16>, vector<256x128xf32> -> vector<256x128xf32>
    %62 = arith.addf %57, %61 : vector<256x128xf32>
    %63 = vector.extract_strided_slice %25 {offsets = [2, 1, 0], sizes = [16, 16, 8], strides = [1, 1, 1]} : vector<18x18x8xbf16> to vector<16x16x8xbf16>
    %64 = vector.shape_cast %63 : vector<16x16x8xbf16> to vector<256x8xbf16>
    %65 = vector.extract_strided_slice %26 {offsets = [56, 0], sizes = [8, 128], strides = [1, 1]} : vector<72x128xbf16> to vector<8x128xbf16>
    %cst_28 = arith.constant dense<0.000000e+00> : vector<256x128xf32>
    %66 = tpu.matmul %64, %65, %cst_28 {dimension_numbers = #tpu.dot_dimension_numbers<[1], [0], [0], [1], [0, 0, 1, 1], [], []>} : vector<256x8xbf16>, vector<8x128xbf16>, vector<256x128xf32> -> vector<256x128xf32>
    %67 = arith.addf %62, %66 : vector<256x128xf32>
    %68 = vector.extract_strided_slice %25 {offsets = [2, 2, 0], sizes = [16, 16, 8], strides = [1, 1, 1]} : vector<18x18x8xbf16> to vector<16x16x8xbf16>
    %69 = vector.shape_cast %68 : vector<16x16x8xbf16> to vector<256x8xbf16>
    %70 = vector.extract_strided_slice %26 {offsets = [64, 0], sizes = [8, 128], strides = [1, 1]} : vector<72x128xbf16> to vector<8x128xbf16>
    %cst_29 = arith.constant dense<0.000000e+00> : vector<256x128xf32>
    %71 = tpu.matmul %69, %70, %cst_29 {dimension_numbers = #tpu.dot_dimension_numbers<[1], [0], [0], [1], [0, 0, 1, 1], [], []>} : vector<256x8xbf16>, vector<8x128xbf16>, vector<256x128xf32> -> vector<256x128xf32>
    %72 = arith.addf %67, %71 : vector<256x128xf32>
    %73 = vector.extract_strided_slice %72 {offsets = [0, 0], sizes = [256, 8], strides = [1, 1]} : vector<256x128xf32> to vector<256x8xf32>
    %74 = vector.shape_cast %73 : vector<256x8xf32> to vector<16x16x8xf32>
    %75 = arith.truncf %74 : vector<16x16x8xf32> to vector<16x16x8xbf16>
    %c0_30 = arith.constant 0 : index
    %c0_31 = arith.constant 0 : index
    %c0_32 = arith.constant 0 : index
    %c0_33 = arith.constant 0 : index
    %76 = vector.load %arg5[%c0_30, %c0_31, %c0_32, %c0_33] : memref<1x16x16x8xbf16, #tpu.memory_space<vmem>>, vector<1x16x16x8xbf16>
    %77 = vector.shape_cast %76 : vector<1x16x16x8xbf16> to vector<16x16x8xbf16>
    %78 = vector.shape_cast %75 : vector<16x16x8xbf16> to vector<1x16x16x8xbf16>
    tpu.vector_store %arg5[%c0_30, %c0_31, %c0_32, %c0_33], %78 {strides = array<i32>} : memref<1x16x16x8xbf16, #tpu.memory_space<vmem>>, vector<1x16x16x8xbf16>,
    %79 = vector.shape_cast %72 : vector<256x128xf32> to vector<32x8x128xf32>
    %cst_34 = arith.constant dense<0.000000e+00> : vector<8x128xf32>
    %80 = vector.multi_reduction <add>, %79, %cst_34 [0] : vector<32x8x128xf32> to vector<8x128xf32>
    %c0_35 = arith.constant 0 : index
    %c0_36 = arith.constant 0 : index
    %c0_37 = arith.constant 0 : index
    %81 = vector.load %arg6[%c0_35, %c0_36, %c0_37] : memref<1x8x128xf32, #tpu.memory_space<vmem>>, vector<1x8x128xf32>
    %82 = vector.shape_cast %81 : vector<1x8x128xf32> to vector<8x128xf32>
    %83 = vector.shape_cast %80 : vector<8x128xf32> to vector<1x8x128xf32>
    tpu.vector_store %arg6[%c0_35, %c0_36, %c0_37], %83 {strides = array<i32>} : memref<1x8x128xf32, #tpu.memory_space<vmem>>, vector<1x8x128xf32>,
    %84 = arith.mulf %72, %72 : vector<256x128xf32>
    %85 = vector.shape_cast %84 : vector<256x128xf32> to vector<32x8x128xf32>
    %cst_38 = arith.constant dense<0.000000e+00> : vector<8x128xf32>
    %86 = vector.multi_reduction <add>, %85, %cst_38 [0] : vector<32x8x128xf32> to vector<8x128xf32>
    %c0_39 = arith.constant 0 : index
    %c0_40 = arith.constant 0 : index
    %c0_41 = arith.constant 0 : index
    %87 = vector.load %arg7[%c0_39, %c0_40, %c0_41] : memref<1x8x128xf32, #tpu.memory_space<vmem>>, vector<1x8x128xf32>
    %88 = vector.shape_cast %87 : vector<1x8x128xf32> to vector<8x128xf32>
    %89 = vector.shape_cast %86 : vector<8x128xf32> to vector<1x8x128xf32>
    tpu.vector_store %arg7[%c0_39, %c0_40, %c0_41], %89 {strides = array<i32>} : memref<1x8x128xf32, #tpu.memory_space<vmem>>, vector<1x8x128xf32>,
    return
  }
  func.func @transform_0(%arg0: i32) -> (i32, i32, i32, i32) {
    %c0_i32 = arith.constant 0 : i32
    %c0_i32_0 = arith.constant 0 : i32
    %c0_i32_1 = arith.constant 0 : i32
    %c0_i32_2 = arith.constant 0 : i32
    return %arg0, %c0_i32, %c0_i32_0, %c0_i32_1 : i32, i32, i32, i32
  }
  func.func @transform_1(%arg0: i32) -> (i32, i32) {
    %c0_i32 = arith.constant 0 : i32
    %c0_i32_0 = arith.constant 0 : i32
    %c0_i32_1 = arith.constant 0 : i32
    return %c0_i32, %c0_i32_0 : i32, i32
  }
  func.func @transform_2(%arg0: i32) -> (i32, i32) {
    %c0_i32 = arith.constant 0 : i32
    %c0_i32_0 = arith.constant 0 : i32
    %c0_i32_1 = arith.constant 0 : i32
    return %c0_i32, %c0_i32_0 : i32, i32
  }
  func.func @transform_3(%arg0: i32) -> (i32, i32) {
    %c0_i32 = arith.constant 0 : i32
    %c0_i32_0 = arith.constant 0 : i32
    %c0_i32_1 = arith.constant 0 : i32
    return %c0_i32, %c0_i32_0 : i32, i32
  }
  func.func @transform_4(%arg0: i32) -> (i32, i32, i32, i32) {
    %c0_i32 = arith.constant 0 : i32
    %c0_i32_0 = arith.constant 0 : i32
    %c0_i32_1 = arith.constant 0 : i32
    %c0_i32_2 = arith.constant 0 : i32
    return %arg0, %c0_i32, %c0_i32_0, %c0_i32_1 : i32, i32, i32, i32
  }
  func.func @transform_5(%arg0: i32) -> (i32, i32, i32) {
    %c0_i32 = arith.constant 0 : i32
    %c0_i32_0 = arith.constant 0 : i32
    %c0_i32_1 = arith.constant 0 : i32
    return %arg0, %c0_i32, %c0_i32_0 : i32, i32, i32
  }
  func.func @transform_6(%arg0: i32) -> (i32, i32, i32) {
    %c0_i32 = arith.constant 0 : i32
    %c0_i32_0 = arith.constant 0 : i32
    %c0_i32_1 = arith.constant 0 : i32
    return %arg0, %c0_i32, %c0_i32_0 : i32, i32, i32
  }
}

</mosaic_0001>

<llo_original>
// kernel: _lambda_.5
$region0: #{_lambda_.5}
  #allocation0 [shape = 'u32[]', space=smem, size = 0x4, offset = 0x4, fixed_abs, tag = 'smem constant byte address 0x4 - core index']
  #allocation1 [shape = 'u32[144,128]{1,0:T(1,128)}', space=vmem, size = 0x12000, scoped, tag = 'internal scratch']
  %s0 = inlined_call_operand.vmem [shape: bf16[2,16,16,8], index: 0, kind: input, shape index: {}]
  %s1 = inlined_call_operand.vmem [shape: bf16[2,18,18,4], index: 1, kind: input, shape index: {}]
  %s2 = inlined_call_operand.vmem [shape: f32[1,8], index: 2, kind: input, shape index: {}]
  %s3 = inlined_call_operand.vmem [shape: f32[1,8], index: 3, kind: input, shape index: {}]
  %s4 = inlined_call_operand.vmem [shape: bf16[4,8], index: 4, kind: input, shape index: {}]
  %s5 = inlined_call_operand.vmem [shape: f32[1,8], index: 5, kind: input, shape index: {}]
  %s6 = inlined_call_operand.vmem [shape: f32[2,16,16,8], index: 6, kind: output, shape index: {}]
  %s7 = sld [smem:[#allocation0]]
  $region57: #{_lambda_.5} parent=0
    _
  %s9 = ssub.s32 1, %s7
  %s10 = scalar_select 0, %s9, %s7
  loop: start=0, step=1, limit=4
  $region2: #{_lambda_.5} parent=0 // loop_pre_header
    _
  $region3: #{_lambda_.5} parent=0 // loop_header
    %s12 = sphi 0, %s16
    %p13 = scmp.ge.s32.totalorder %s12, 4
    %s22 = sphi 0, %s24
    %s25 = sphi 0, %s22
    %s26 = sphi 0, %s25
    %s42 = sphi 0, %s26
    %s48 = sphi 0, %s50
    %s51 = sphi 0, %s48
    %s52 = sphi 0, %s51
    %s68 = sphi 0, %s52
    %s72 = sphi 0, %s72
    %s74 = sphi 0, %s72
    %s75 = sphi 0, %s74
    %s89 = sphi 0, %s75
    %s93 = sphi 0, %s93
    %s95 = sphi 0, %s93
    %s96 = sphi 0, %s95
    %s110 = sphi 0, %s96
    %s114 = sphi 0, %s114
    %s116 = sphi 0, %s114
    %s117 = sphi 0, %s116
    %s131 = sphi 0, %s117
    %s135 = sphi 0, %s135
    %s137 = sphi 0, %s135
    %s138 = sphi 0, %s137
    %s152 = sphi 0, %s138
    %s158 = sphi 0, %s160
    %s161 = sphi 0, %s158
    %s162 = sphi 0, %s161
    %s178 = sphi 0, %s162
  $region4: #{_lambda_.5} parent=0 // loop_header_branch
    %15 = sbr.rel (%p13) target = $region8
  $region5: #{_lambda_.5} parent=0 // loop_body
    %s17 = ssub.s32 %s12, 1
    %s18 = ssub.s32 %s12, 2
    %s19 = sadd.s32 %s12, 1
    %s20 = ssub.s32 %s12, %s19
    %p21 = scmp.eq.s32.totalorder %s20, 0
    %s23 = sadd.s32 %s22, 1
    %s24 = scalar_select %p21, %s22, %s23
    %p27 = pneg %p21
    %p28 = scmp.eq.s32.totalorder %s12, 1
    %p29 = por %p27, %p28
    %p30 = scmp.ne.s32.totalorder %s22, %s25
    %p31 = scmp.eq.s32.totalorder %s12, 0
    %p32 = por %p30, %p31
    %p33 = scmp.ne.s32.totalorder %s22, %s25
    %p34 = scmp.eq.s32.totalorder %s17, 1
    %p35 = por %p33, %p34
    %p36 = scmp.ne.s32.totalorder %s25, %s26
    %p37 = scmp.eq.s32.totalorder %s17, 0
    %p38 = por %p36, %p37
    %p39 = scmp.ne.s32.totalorder %s25, %s26
    %p40 = scmp.eq.s32.totalorder %s18, 1
    %p41 = por %p39, %p40
    %p43 = scmp.ne.s32.totalorder %s26, %s42
    %p44 = scmp.eq.s32.totalorder %s18, 0
    %p45 = por %p43, %p44
    %s46 = ssub.s32 %s12, %s19
    %p47 = scmp.eq.s32.totalorder %s46, 0
    %s49 = sadd.s32 %s48, 1
    %s50 = scalar_select %p47, %s48, %s49
    %p53 = pneg %p47
    %p54 = scmp.eq.s32.totalorder %s12, 1
    %p55 = por %p53, %p54
    %p56 = scmp.ne.s32.totalorder %s48, %s51
    %p57 = scmp.eq.s32.totalorder %s12, 0
    %p58 = por %p56, %p57
    %p59 = scmp.ne.s32.totalorder %s48, %s51
    %p60 = scmp.eq.s32.totalorder %s17, 1
    %p61 = por %p59, %p60
    %p62 = scmp.ne.s32.totalorder %s51, %s52
    %p63 = scmp.eq.s32.totalorder %s17, 0
    %p64 = por %p62, %p63
    %p65 = scmp.ne.s32.totalorder %s51, %s52
    %p66 = scmp.eq.s32.totalorder %s18, 1
    %p67 = por %p65, %p66
    %p69 = scmp.ne.s32.totalorder %s52, %s68
    %p70 = scmp.eq.s32.totalorder %s18, 0
    %p71 = por %p69, %p70
    %s73 = sadd.s32 %s72, 1
    %p76 = scmp.eq.s32.totalorder %s12, 1
    %p77 = scmp.ne.s32.totalorder %s72, %s74
    %p78 = scmp.eq.s32.totalorder %s12, 0
    %p79 = por %p77, %p78
    %p80 = scmp.ne.s32.totalorder %s72, %s74
    %p81 = scmp.eq.s32.totalorder %s17, 1
    %p82 = por %p80, %p81
    %p83 = scmp.ne.s32.totalorder %s74, %s75
    %p84 = scmp.eq.s32.totalorder %s17, 0
    %p85 = por %p83, %p84
    %p86 = scmp.ne.s32.totalorder %s74, %s75
    %p87 = scmp.eq.s32.totalorder %s18, 1
    %p88 = por %p86, %p87
    %p90 = scmp.ne.s32.totalorder %s75, %s89
    %p91 = scmp.eq.s32.totalorder %s18, 0
    %p92 = por %p90, %p91
    %s94 = sadd.s32 %s93, 1
    %p97 = scmp.eq.s32.totalorder %s12, 1
    %p98 = scmp.ne.s32.totalorder %s93, %s95
    %p99 = scmp.eq.s32.totalorder %s12, 0
    %p100 = por %p98, %p99
    %p101 = scmp.ne.s32.totalorder %s93, %s95
    %p102 = scmp.eq.s32.totalorder %s17, 1
    %p103 = por %p101, %p102
    %p104 = scmp.ne.s32.totalorder %s95, %s96
    %p105 = scmp.eq.s32.totalorder %s17, 0
    %p106 = por %p104, %p105
    %p107 = scmp.ne.s32.totalorder %s95, %s96
    %p108 = scmp.eq.s32.totalorder %s18, 1
    %p109 = por %p107, %p108
    %p111 = scmp.ne.s32.totalorder %s96, %s110
    %p112 = scmp.eq.s32.totalorder %s18, 0
    %p113 = por %p111, %p112
    %s115 = sadd.s32 %s114, 1
    %p118 = scmp.eq.s32.totalorder %s12, 1
    %p119 = scmp.ne.s32.totalorder %s114, %s116
    %p120 = scmp.eq.s32.totalorder %s12, 0
    %p121 = por %p119, %p120
    %p122 = scmp.ne.s32.totalorder %s114, %s116
    %p123 = scmp.eq.s32.totalorder %s17, 1
    %p124 = por %p122, %p123
    %p125 = scmp.ne.s32.totalorder %s116, %s117
    %p126 = scmp.eq.s32.totalorder %s17, 0
    %p127 = por %p125, %p126
    %p128 = scmp.ne.s32.totalorder %s116, %s117
    %p129 = scmp.eq.s32.totalorder %s18, 1
    %p130 = por %p128, %p129
    %p132 = scmp.ne.s32.totalorder %s117, %s131
    %p133 = scmp.eq.s32.totalorder %s18, 0
    %p134 = por %p132, %p133
    %s136 = sadd.s32 %s135, 1
    %p139 = scmp.eq.s32.totalorder %s12, 1
    %p140 = scmp.ne.s32.totalorder %s135, %s137
    %p141 = scmp.eq.s32.totalorder %s12, 0
    %p142 = por %p140, %p141
    %p143 = scmp.ne.s32.totalorder %s135, %s137
    %p144 = scmp.eq.s32.totalorder %s17, 1
    %p145 = por %p143, %p144
    %p146 = scmp.ne.s32.totalorder %s137, %s138
    %p147 = scmp.eq.s32.totalorder %s17, 0
    %p148 = por %p146, %p147
    %p149 = scmp.ne.s32.totalorder %s137, %s138
    %p150 = scmp.eq.s32.totalorder %s18, 1
    %p151 = por %p149, %p150
    %p153 = scmp.ne.s32.totalorder %s138, %s152
    %p154 = scmp.eq.s32.totalorder %s18, 0
    %p155 = por %p153, %p154
    %s156 = ssub.s32 %s12, %s19
    %p157 = scmp.eq.s32.totalorder %s156, 0
    %s159 = sadd.s32 %s158, 1
    %s160 = scalar_select %p157, %s158, %s159
    %p163 = pneg %p157
    %p164 = scmp.eq.s32.totalorder %s12, 1
    %p165 = por %p163, %p164
    %p166 = scmp.ne.s32.totalorder %s158, %s161
    %p167 = scmp.eq.s32.totalorder %s12, 0
    %p168 = por %p166, %p167
    %p169 = scmp.ne.s32.totalorder %s158, %s161
    %p170 = scmp.eq.s32.totalorder %s17, 1
    %p171 = por %p169, %p170
    %p172 = scmp.ne.s32.totalorder %s161, %s162
    %p173 = scmp.eq.s32.totalorder %s17, 0
    %p174 = por %p172, %p173
    %p175 = scmp.ne.s32.totalorder %s161, %s162
    %p176 = scmp.eq.s32.totalorder %s18, 1
    %p177 = por %p175, %p176
    %p179 = scmp.ne.s32.totalorder %s162, %s178
    %p180 = scmp.eq.s32.totalorder %s18, 0
    %p181 = por %p179, %p180
    %p182 = scmp.le.s32.totalorder 1, %s12
    %p183 = scmp.lt.s32.totalorder %s12, 3
    %p184 = pnand %p182, %p183
    %p185 = pneg %p184
    // Predicated region
    $region9: #{_lambda_.5} parent=5 // pred_check
      _
    $region10: #{_lambda_.5} parent=5 // pred_check_branch
      %187 = sbr.rel (%p184) target = $region12
    $region11: #{_lambda_.5} parent=5 // pred_region
      %s188 = ssub.s32 %s12, 1
      // Predicated region
      $region13: #{_lambda_.5} parent=11 // pred_check
        %p189 = pneg %p85
      $region14: #{_lambda_.5} parent=11 // pred_check_branch
        %191 = sbr.rel (%p189) target = $region16
      $region15: #{_lambda_.5} parent=11 // pred_region
        _
      $region16: #{_lambda_.5} parent=11 // pred_fallthru
        _
      // Predicated region
      $region17: #{_lambda_.5} parent=11 // pred_check
        %p192 = pneg %p106
      $region18: #{_lambda_.5} parent=11 // pred_check_branch
        %194 = sbr.rel (%p192) target = $region20
      $region19: #{_lambda_.5} parent=11 // pred_region
        _
      $region20: #{_lambda_.5} parent=11 // pred_fallthru
        _
      // Predicated region
      $region21: #{_lambda_.5} parent=11 // pred_check
        %p195 = pneg %p127
      $region22: #{_lambda_.5} parent=11 // pred_check_branch
        %197 = sbr.rel (%p195) target = $region24
      $region23: #{_lambda_.5} parent=11 // pred_region
        _
      $region24: #{_lambda_.5} parent=11 // pred_fallthru
        _
      // Predicated region
      $region25: #{_lambda_.5} parent=11 // pred_check
        %p198 = pneg %p148
      $region26: #{_lambda_.5} parent=11 // pred_check_branch
        %200 = sbr.rel (%p198) target = $region28
      $region27: #{_lambda_.5} parent=11 // pred_region
        _
      $region28: #{_lambda_.5} parent=11 // pred_fallthru
        _
    $region12: #{_lambda_.5} parent=5 // pred_fallthru
      _
    %p201 = scmp.lt.s32.totalorder %s12, 2
    // Predicated region
    $region29: #{_lambda_.5} parent=5 // pred_check
      %p202 = pneg %p201
    $region30: #{_lambda_.5} parent=5 // pred_check_branch
      %204 = sbr.rel (%p202) target = $region32
    $region31: #{_lambda_.5} parent=5 // pred_region
      // Predicated region
      $region33: #{_lambda_.5} parent=31 // pred_check
        %p205 = pneg %p32
      $region34: #{_lambda_.5} parent=31 // pred_check_branch
        %207 = sbr.rel (%p205) target = $region36
      $region35: #{_lambda_.5} parent=31 // pred_region
        %p208 = scmp.lt.s32.totalorder %s12, 1
        %s209 = scalar_select %p208, %s12, 1
        %s210 = smul.addr %s209, 32
        %s211 = smul.addr %s210, 4
        %s212 = scalar_lea.vmem %s0, %s211
      $region36: #{_lambda_.5} parent=31 // pred_fallthru
        _
      // Predicated region
      $region37: #{_lambda_.5} parent=31 // pred_check
        %p213 = pneg %p58
      $region38: #{_lambda_.5} parent=31 // pred_check_branch
        %215 = sbr.rel (%p213) target = $region40
      $region39: #{_lambda_.5} parent=31 // pred_region
        %p216 = scmp.lt.s32.totalorder %s12, 1
        %s217 = scalar_select %p216, %s12, 1
        %s218 = smul.addr %s217, 54
        %s219 = smul.addr %s218, 4
        %s220 = scalar_lea.vmem %s1, %s219
      $region40: #{_lambda_.5} parent=31 // pred_fallthru
        _
    $region32: #{_lambda_.5} parent=5 // pred_fallthru
      _
    %p221 = scmp.le.s32.totalorder 1, %s12
    %p222 = scmp.lt.s32.totalorder %s12, 3
    %p223 = pnand %p221, %p222
    %p224 = pneg %p223
    // Predicated region
    $region41: #{_lambda_.5} parent=5 // pred_check
      _
    $region42: #{_lambda_.5} parent=5 // pred_check_branch
      %226 = sbr.rel (%p223) target = $region44
    $region43: #{_lambda_.5} parent=5 // pred_region
      %s227 = ssub.s32 %s12, 1
      %p228 = scmp.lt.s32.totalorder %s17, 1
      %s229 = scalar_select %p228, %s17, 1
      %s230 = smul.addr %s229, 32
      %s231 = smul.addr %s230, 4
      %s232 = scalar_lea.vmem %s0, %s231
      %p233 = pneg %p38
      %p234 = pneg %p35
      %p235 = scmp.lt.s32.totalorder %s17, 1
      %s236 = scalar_select %p235, %s17, 1
      %s237 = smul.addr %s236, 54
      %s238 = smul.addr %s237, 4
      %s239 = scalar_lea.vmem %s1, %s238
      %p240 = pneg %p64
      %p241 = pneg %p61
      %p242 = pneg %p85
      %p243 = pneg %p82
      %p244 = pneg %p106
      %p245 = pneg %p103
      %p246 = pneg %p127
      %p247 = pneg %p124
      %p248 = pneg %p148
      %p249 = pneg %p145
      %p250 = pneg %p174
      %p251 = pneg %p171
      %p252 = scmp.lt.s32.totalorder %s17, 1
      %s253 = scalar_select %p252, %s17, 1
      %s254 = smul.addr %s253, 32
      %s255 = smul.addr %s254, 8
      %s256 = scalar_lea.vmem %s6, %s255
      %p257 = scmp.lt.s32.totalorder %s17, 1
      %s258 = scalar_select %p257, %s17, 1
      %s259 = smul.addr %s258, 32
      %s260 = smul.addr %s259, 4
      %s261 = scalar_lea.vmem %s0, %s260
      %p262 = scmp.lt.s32.totalorder %s17, 1
      %s263 = scalar_select %p262, %s17, 1
      %s264 = smul.addr %s263, 54
      %s265 = smul.addr %s264, 4
      %s266 = scalar_lea.vmem %s1, %s265
      %p267 = scmp.lt.s32.totalorder %s17, 1
      %s268 = scalar_select %p267, %s17, 1
      %s269 = smul.addr %s268, 32
      %s270 = smul.addr %s269, 8
      %s271 = scalar_lea.vmem %s6, %s270
      %v273 = vld [vmem:[%s261] sm:$0xf]
      %v274 = vld [vmem:[%s261 + $0x4] sm:$0xf]
      %v275 = vld [vmem:[%s261 + $0x8] sm:$0xf]
      %v276 = vld [vmem:[%s261 + $0xc] sm:$0xf]
      %v277 = vld [vmem:[%s261 + $0x10] sm:$0xf]
      %v278 = vld [vmem:[%s261 + $0x14] sm:$0xf]
      %v279 = vld [vmem:[%s261 + $0x18] sm:$0xf]
      %v280 = vld [vmem:[%s261 + $0x1c] sm:$0xf]
      %v281 = vld [vmem:[%s261 + $0x20] sm:$0xf]
      %v282 = vld [vmem:[%s261 + $0x24] sm:$0xf]
      %v283 = vld [vmem:[%s261 + $0x28] sm:$0xf]
      %v284 = vld [vmem:[%s261 + $0x2c] sm:$0xf]
      %v285 = vld [vmem:[%s261 + $0x30] sm:$0xf]
      %v286 = vld [vmem:[%s261 + $0x34] sm:$0xf]
      %v287 = vld [vmem:[%s261 + $0x38] sm:$0xf]
      %v288 = vld [vmem:[%s261 + $0x3c] sm:$0xf]
      %v289 = vld [vmem:[%s261 + $0x40] sm:$0xf]
      %v290 = vld [vmem:[%s261 + $0x44] sm:$0xf]
      %v291 = vld [vmem:[%s261 + $0x48] sm:$0xf]
      %v292 = vld [vmem:[%s261 + $0x4c] sm:$0xf]
      %v293 = vld [vmem:[%s261 + $0x50] sm:$0xf]
      %v294 = vld [vmem:[%s261 + $0x54] sm:$0xf]
      %v295 = vld [vmem:[%s261 + $0x58] sm:$0xf]
      %v296 = vld [vmem:[%s261 + $0x5c] sm:$0xf]
      %v297 = vld [vmem:[%s261 + $0x60] sm:$0xf]
      %v298 = vld [vmem:[%s261 + $0x64] sm:$0xf]
      %v299 = vld [vmem:[%s261 + $0x68] sm:$0xf]
      %v300 = vld [vmem:[%s261 + $0x6c] sm:$0xf]
      %v301 = vld [vmem:[%s261 + $0x70] sm:$0xf]
      %v302 = vld [vmem:[%s261 + $0x74] sm:$0xf]
      %v303 = vld [vmem:[%s261 + $0x78] sm:$0xf]
      %v304 = vld [vmem:[%s261 + $0x7c] sm:$0xf]
      %v305 = vunpack.c.l.bf16 %v273
      %v306 = vunpack.c.l.bf16 %v274
      %v307 = vunpack.c.l.bf16 %v275
      %v308 = vunpack.c.l.bf16 %v276
      %v309 = vunpack.c.l.bf16 %v277
      %v310 = vunpack.c.l.bf16 %v278
      %v311 = vunpack.c.l.bf16 %v279
      %v312 = vunpack.c.l.bf16 %v280
      %v313 = vunpack.c.l.bf16 %v281
      %v314 = vunpack.c.l.bf16 %v282
      %v315 = vunpack.c.l.bf16 %v283
      %v316 = vunpack.c.l.bf16 %v284
      %v317 = vunpack.c.l.bf16 %v285
      %v318 = vunpack.c.l.bf16 %v286
      %v319 = vunpack.c.l.bf16 %v287
      %v320 = vunpack.c.l.bf16 %v288
      %v321 = vunpack.c.l.bf16 %v289
      %v322 = vunpack.c.l.bf16 %v290
      %v323 = vunpack.c.l.bf16 %v291
      %v324 = vunpack.c.l.bf16 %v292
      %v325 = vunpack.c.l.bf16 %v293
      %v326 = vunpack.c.l.bf16 %v294
      %v327 = vunpack.c.l.bf16 %v295
      %v328 = vunpack.c.l.bf16 %v296
      %v329 = vunpack.c.l.bf16 %v297
      %v330 = vunpack.c.l.bf16 %v298
      %v331 = vunpack.c.l.bf16 %v299
      %v332 = vunpack.c.l.bf16 %v300
      %v333 = vunpack.c.l.bf16 %v301
      %v334 = vunpack.c.l.bf16 %v302
      %v335 = vunpack.c.l.bf16 %v303
      %v336 = vunpack.c.l.bf16 %v304
      %v337 = vld [vmem:[%s2] sm:$0x1]
      %v339 = vlaneseq
      %v340 = vshrl.u32 %v339, 7
      %v341 = vsub.s32 0, %v340
      %v342 = vrot.slane %v337, %v341
      %v344 = vmul.f32 %v305, %v342
      %v345 = vmul.f32 %v306, %v342
      %v346 = vmul.f32 %v307, %v342
      %v347 = vmul.f32 %v308, %v342
      %v348 = vmul.f32 %v309, %v342
      %v349 = vmul.f32 %v310, %v342
      %v350 = vmul.f32 %v311, %v342
      %v351 = vmul.f32 %v312, %v342
      %v352 = vmul.f32 %v313, %v342
      %v353 = vmul.f32 %v314, %v342
      %v354 = vmul.f32 %v315, %v342
      %v355 = vmul.f32 %v316, %v342
      %v356 = vmul.f32 %v317, %v342
      %v357 = vmul.f32 %v318, %v342
      %v358 = vmul.f32 %v319, %v342
      %v359 = vmul.f32 %v320, %v342
      %v360 = vmul.f32 %v321, %v342
      %v361 = vmul.f32 %v322, %v342
      %v362 = vmul.f32 %v323, %v342
      %v363 = vmul.f32 %v324, %v342
      %v364 = vmul.f32 %v325, %v342
      %v365 = vmul.f32 %v326, %v342
      %v366 = vmul.f32 %v327, %v342
      %v367 = vmul.f32 %v328, %v342
      %v368 = vmul.f32 %v329, %v342
      %v369 = vmul.f32 %v330, %v342
      %v370 = vmul.f32 %v331, %v342
      %v371 = vmul.f32 %v332, %v342
      %v372 = vmul.f32 %v333, %v342
      %v373 = vmul.f32 %v334, %v342
      %v374 = vmul.f32 %v335, %v342
      %v375 = vmul.f32 %v336, %v342
      %v376 = vld [vmem:[%s3] sm:$0x1]
      %v378 = vlaneseq
      %v379 = vshrl.u32 %v378, 7
      %v380 = vsub.s32 0, %v379
      %v381 = vrot.slane %v376, %v380
      %v383 = vadd.f32 %v344, %v381
      %v384 = vadd.f32 %v345, %v381
      %v385 = vadd.f32 %v346, %v381
      %v386 = vadd.f32 %v347, %v381
      %v387 = vadd.f32 %v348, %v381
      %v388 = vadd.f32 %v349, %v381
      %v389 = vadd.f32 %v350, %v381
      %v390 = vadd.f32 %v351, %v381
      %v391 = vadd.f32 %v352, %v381
      %v392 = vadd.f32 %v353, %v381
      %v393 = vadd.f32 %v354, %v381
      %v394 = vadd.f32 %v355, %v381
      %v395 = vadd.f32 %v356, %v381
      %v396 = vadd.f32 %v357, %v381
      %v397 = vadd.f32 %v358, %v381
      %v398 = vadd.f32 %v359, %v381
      %v399 = vadd.f32 %v360, %v381
      %v400 = vadd.f32 %v361, %v381
      %v401 = vadd.f32 %v362, %v381
      %v402 = vadd.f32 %v363, %v381
      %v403 = vadd.f32 %v364, %v381
      %v404 = vadd.f32 %v365, %v381
      %v405 = vadd.f32 %v366, %v381
      %v406 = vadd.f32 %v367, %v381
      %v407 = vadd.f32 %v368, %v381
      %v408 = vadd.f32 %v369, %v381
      %v409 = vadd.f32 %v370, %v381
      %v410 = vadd.f32 %v371, %v381
      %v411 = vadd.f32 %v372, %v381
      %v412 = vadd.f32 %v373, %v381
      %v413 = vadd.f32 %v374, %v381
      %v414 = vadd.f32 %v375, %v381
      %v415 = vld [vmem:[%s266 + $0xc] sm:$0xf]
      %v416 = vld [vmem:[%s266 + $0x10] sm:$0xf]
      %v417 = vld [vmem:[%s266 + $0x14] sm:$0x1]
      %v418 = vld [vmem:[%s266 + $0x18] sm:$0xf]
      %v419 = vld [vmem:[%s266 + $0x1c] sm:$0xf]
      %v420 = vld [vmem:[%s266 + $0x20] sm:$0x1]
      %v421 = vld [vmem:[%s266 + $0x24] sm:$0xf]
      %v422 = vld [vmem:[%s266 + $0x28] sm:$0xf]
      %v423 = vld [vmem:[%s266 + $0x2c] sm:$0x1]
      %v424 = vld [vmem:[%s266 + $0x30] sm:$0xf]
      %v425 = vld [vmem:[%s266 + $0x34] sm:$0xf]
      %v426 = vld [vmem:[%s266 + $0x38] sm:$0x1]
      %v427 = vld [vmem:[%s266 + $0x3c] sm:$0xf]
      %v428 = vld [vmem:[%s266 + $0x40] sm:$0xf]
      %v429 = vld [vmem:[%s266 + $0x44] sm:$0x1]
      %v430 = vld [vmem:[%s266 + $0x48] sm:$0xf]
      %v431 = vld [vmem:[%s266 + $0x4c] sm:$0xf]
      %v432 = vld [vmem:[%s266 + $0x50] sm:$0x1]
      %v433 = vld [vmem:[%s266 + $0x54] sm:$0xf]
      %v434 = vld [vmem:[%s266 + $0x58] sm:$0xf]
      %v435 = vld [vmem:[%s266 + $0x5c] sm:$0x1]
      %v436 = vld [vmem:[%s266 + $0x60] sm:$0xf]
      %v437 = vld [vmem:[%s266 + $0x64] sm:$0xf]
      %v438 = vld [vmem:[%s266 + $0x68] sm:$0x1]
      %v439 = vld [vmem:[%s266 + $0x6c] sm:$0xf]
      %v440 = vld [vmem:[%s266 + $0x70] sm:$0xf]
      %v441 = vld [vmem:[%s266 + $0x74] sm:$0x1]
      %v442 = vld [vmem:[%s266 + $0x78] sm:$0xf]
      %v443 = vld [vmem:[%s266 + $0x7c] sm:$0xf]
      %v444 = vld [vmem:[%s266 + $0x80] sm:$0x1]
      %v445 = vld [vmem:[%s266 + $0x84] sm:$0xf]
      %v446 = vld [vmem:[%s266 + $0x88] sm:$0xf]
      %v447 = vld [vmem:[%s266 + $0x8c] sm:$0x1]
      %v448 = vld [vmem:[%s266 + $0x90] sm:$0xf]
      %v449 = vld [vmem:[%s266 + $0x94] sm:$0xf]
      %v450 = vld [vmem:[%s266 + $0x98] sm:$0x1]
      %v451 = vld [vmem:[%s266 + $0x9c] sm:$0xf]
      %v452 = vld [vmem:[%s266 + $0xa0] sm:$0xf]
      %v453 = vld [vmem:[%s266 + $0xa4] sm:$0x1]
      %v454 = vld [vmem:[%s266 + $0xa8] sm:$0xf]
      %v455 = vld [vmem:[%s266 + $0xac] sm:$0xf]
      %v456 = vld [vmem:[%s266 + $0xb0] sm:$0x1]
      %v457 = vld [vmem:[%s266 + $0xb4] sm:$0xf]
      %v458 = vld [vmem:[%s266 + $0xb8] sm:$0xf]
      %v459 = vld [vmem:[%s266 + $0xbc] sm:$0x1]
      %v460 = vld [vmem:[%s266 + $0xc0] sm:$0xf]
      %v461 = vld [vmem:[%s266 + $0xc4] sm:$0xf]
      %v462 = vld [vmem:[%s266 + $0xc8] sm:$0x1]
      %vm463 = vsmask.f32 3328
      %vm464 = vsmask.f32 7440
      %vm465 = vmor %vm463, %vm464
      %v467 = vshrl.u32 %v415, 16
      %v469 = vrot.slane %v467, 4
      %v470 = vshll.u32 %v415, 16
      %v472 = vrot.slane %v470, 5
      %v473 = vor.u32 %v469, %v472
      %v474 = vrot.slane %v473, 4
      %v476 = vshll.u32 %v416, 16
      %v478 = vrot.slane %v476, 5
      %v479 = vsel %vm465, %v474, %v478
      %v480 = vshrl.u32 %v416, 16
      %v482 = vrot.slane %v480, 4
      %v483 = vor.u32 %v482, %v478
      %v484 = vrot.slane %v483, 4
      %v486 = vshll.u32 %v417, 16
      %v488 = vrot.slane %v486, 5
      %v489 = vsel %vm465, %v484, %v488
      %v491 = vshrl.u32 %v418, 16
      %v493 = vrot.slane %v491, 4
      %v494 = vshll.u32 %v418, 16
      %v496 = vrot.slane %v494, 5
      %v497 = vor.u32 %v493, %v496
      %v498 = vrot.slane %v497, 4
      %v500 = vshll.u32 %v419, 16
      %v502 = vrot.slane %v500, 5
      %v503 = vsel %vm465, %v498, %v502
      %v504 = vshrl.u32 %v419, 16
      %v506 = vrot.slane %v504, 4
      %v507 = vor.u32 %v506, %v502
      %v508 = vrot.slane %v507, 4
      %v510 = vshll.u32 %v420, 16
      %v512 = vrot.slane %v510, 5
      %v513 = vsel %vm465, %v508, %v512
      %v515 = vshrl.u32 %v421, 16
      %v517 = vrot.slane %v515, 4
      %v518 = vshll.u32 %v421, 16
      %v520 = vrot.slane %v518, 5
      %v521 = vor.u32 %v517, %v520
      %v522 = vrot.slane %v521, 4
      %v524 = vshll.u32 %v422, 16
      %v526 = vrot.slane %v524, 5
      %v527 = vsel %vm465, %v522, %v526
      %v528 = vshrl.u32 %v422, 16
      %v530 = vrot.slane %v528, 4
      %v531 = vor.u32 %v530, %v526
      %v532 = vrot.slane %v531, 4
      %v534 = vshll.u32 %v423, 16
      %v536 = vrot.slane %v534, 5
      %v537 = vsel %vm465, %v532, %v536
      %v539 = vshrl.u32 %v424, 16
      %v541 = vrot.slane %v539, 4
      %v542 = vshll.u32 %v424, 16
      %v544 = vrot.slane %v542, 5
      %v545 = vor.u32 %v541, %v544
      %v546 = vrot.slane %v545, 4
      %v548 = vshll.u32 %v425, 16
      %v550 = vrot.slane %v548, 5
      %v551 = vsel %vm465, %v546, %v550
      %v552 = vshrl.u32 %v425, 16
      %v554 = vrot.slane %v552, 4
      %v555 = vor.u32 %v554, %v550
      %v556 = vrot.slane %v555, 4
      %v558 = vshll.u32 %v426, 16
      %v560 = vrot.slane %v558, 5
      %v561 = vsel %vm465, %v556, %v560
      %v563 = vshrl.u32 %v427, 16
      %v565 = vrot.slane %v563, 4
      %v566 = vshll.u32 %v427, 16
      %v568 = vrot.slane %v566, 5
      %v569 = vor.u32 %v565, %v568
      %v570 = vrot.slane %v569, 4
      %v572 = vshll.u32 %v428, 16
      %v574 = vrot.slane %v572, 5
      %v575 = vsel %vm465, %v570, %v574
      %v576 = vshrl.u32 %v428, 16
      %v578 = vrot.slane %v576, 4
      %v579 = vor.u32 %v578, %v574
      %v580 = vrot.slane %v579, 4
      %v582 = vshll.u32 %v429, 16
      %v584 = vrot.slane %v582, 5
      %v585 = vsel %vm465, %v580, %v584
      %v587 = vshrl.u32 %v430, 16
      %v589 = vrot.slane %v587, 4
      %v590 = vshll.u32 %v430, 16
      %v592 = vrot.slane %v590, 5
      %v593 = vor.u32 %v589, %v592
      %v594 = vrot.slane %v593, 4
      %v596 = vshll.u32 %v431, 16
      %v598 = vrot.slane %v596, 5
      %v599 = vsel %vm465, %v594, %v598
      %v600 = vshrl.u32 %v431, 16
      %v602 = vrot.slane %v600, 4
      %v603 = vor.u32 %v602, %v598
      %v604 = vrot.slane %v603, 4
      %v606 = vshll.u32 %v432, 16
      %v608 = vrot.slane %v606, 5
      %v609 = vsel %vm465, %v604, %v608
      %v611 = vshrl.u32 %v433, 16
      %v613 = vrot.slane %v611, 4
      %v614 = vshll.u32 %v433, 16
      %v616 = vrot.slane %v614, 5
      %v617 = vor.u32 %v613, %v616
      %v618 = vrot.slane %v617, 4
      %v620 = vshll.u32 %v434, 16
      %v622 = vrot.slane %v620, 5
      %v623 = vsel %vm465, %v618, %v622
      %v624 = vshrl.u32 %v434, 16
      %v626 = vrot.slane %v624, 4
      %v627 = vor.u32 %v626, %v622
      %v628 = vrot.slane %v627, 4
      %v630 = vshll.u32 %v435, 16
      %v632 = vrot.slane %v630, 5
      %v633 = vsel %vm465, %v628, %v632
      %v635 = vshrl.u32 %v436, 16
      %v637 = vrot.slane %v635, 4
      %v638 = vshll.u32 %v436, 16
      %v640 = vrot.slane %v638, 5
      %v641 = vor.u32 %v637, %v640
      %v642 = vrot.slane %v641, 4
      %v644 = vshll.u32 %v437, 16
      %v646 = vrot.slane %v644, 5
      %v647 = vsel %vm465, %v642, %v646
      %v648 = vshrl.u32 %v437, 16
      %v650 = vrot.slane %v648, 4
      %v651 = vor.u32 %v650, %v646
      %v652 = vrot.slane %v651, 4
      %v654 = vshll.u32 %v438, 16
      %v656 = vrot.slane %v654, 5
      %v657 = vsel %vm465, %v652, %v656
      %v659 = vshrl.u32 %v439, 16
      %v661 = vrot.slane %v659, 4
      %v662 = vshll.u32 %v439, 16
      %v664 = vrot.slane %v662, 5
      %v665 = vor.u32 %v661, %v664
      %v666 = vrot.slane %v665, 4
      %v668 = vshll.u32 %v440, 16
      %v670 = vrot.slane %v668, 5
      %v671 = vsel %vm465, %v666, %v670
      %v672 = vshrl.u32 %v440, 16
      %v674 = vrot.slane %v672, 4
      %v675 = vor.u32 %v674, %v670
      %v676 = vrot.slane %v675, 4
      %v678 = vshll.u32 %v441, 16
      %v680 = vrot.slane %v678, 5
      %v681 = vsel %vm465, %v676, %v680
      %v683 = vshrl.u32 %v442, 16
      %v685 = vrot.slane %v683, 4
      %v686 = vshll.u32 %v442, 16
      %v688 = vrot.slane %v686, 5
      %v689 = vor.u32 %v685, %v688
      %v690 = vrot.slane %v689, 4
      %v692 = vshll.u32 %v443, 16
      %v694 = vrot.slane %v692, 5
      %v695 = vsel %vm465, %v690, %v694
      %v696 = vshrl.u32 %v443, 16
      %v698 = vrot.slane %v696, 4
      %v699 = vor.u32 %v698, %v694
      %v700 = vrot.slane %v699, 4
      %v702 = vshll.u32 %v444, 16
      %v704 = vrot.slane %v702, 5
      %v705 = vsel %vm465, %v700, %v704
      %v707 = vshrl.u32 %v445, 16
      %v709 = vrot.slane %v707, 4
      %v710 = vshll.u32 %v445, 16
      %v712 = vrot.slane %v710, 5
      %v713 = vor.u32 %v709, %v712
      %v714 = vrot.slane %v713, 4
      %v716 = vshll.u32 %v446, 16
      %v718 = vrot.slane %v716, 5
      %v719 = vsel %vm465, %v714, %v718
      %v720 = vshrl.u32 %v446, 16
      %v722 = vrot.slane %v720, 4
      %v723 = vor.u32 %v722, %v718
      %v724 = vrot.slane %v723, 4
      %v726 = vshll.u32 %v447, 16
      %v728 = vrot.slane %v726, 5
      %v729 = vsel %vm465, %v724, %v728
      %v731 = vshrl.u32 %v448, 16
      %v733 = vrot.slane %v731, 4
      %v734 = vshll.u32 %v448, 16
      %v736 = vrot.slane %v734, 5
      %v737 = vor.u32 %v733, %v736
      %v738 = vrot.slane %v737, 4
      %v740 = vshll.u32 %v449, 16
      %v742 = vrot.slane %v740, 5
      %v743 = vsel %vm465, %v738, %v742
      %v744 = vshrl.u32 %v449, 16
      %v746 = vrot.slane %v744, 4
      %v747 = vor.u32 %v746, %v742
      %v748 = vrot.slane %v747, 4
      %v750 = vshll.u32 %v450, 16
      %v752 = vrot.slane %v750, 5
      %v753 = vsel %vm465, %v748, %v752
      %v755 = vshrl.u32 %v451, 16
      %v757 = vrot.slane %v755, 4
      %v758 = vshll.u32 %v451, 16
      %v760 = vrot.slane %v758, 5
      %v761 = vor.u32 %v757, %v760
      %v762 = vrot.slane %v761, 4
      %v764 = vshll.u32 %v452, 16
      %v766 = vrot.slane %v764, 5
      %v767 = vsel %vm465, %v762, %v766
      %v768 = vshrl.u32 %v452, 16
      %v770 = vrot.slane %v768, 4
      %v771 = vor.u32 %v770, %v766
      %v772 = vrot.slane %v771, 4
      %v774 = vshll.u32 %v453, 16
      %v776 = vrot.slane %v774, 5
      %v777 = vsel %vm465, %v772, %v776
      %v779 = vshrl.u32 %v454, 16
      %v781 = vrot.slane %v779, 4
      %v782 = vshll.u32 %v454, 16
      %v784 = vrot.slane %v782, 5
      %v785 = vor.u32 %v781, %v784
      %v786 = vrot.slane %v785, 4
      %v788 = vshll.u32 %v455, 16
      %v790 = vrot.slane %v788, 5
      %v791 = vsel %vm465, %v786, %v790
      %v792 = vshrl.u32 %v455, 16
      %v794 = vrot.slane %v792, 4
      %v795 = vor.u32 %v794, %v790
      %v796 = vrot.slane %v795, 4
      %v798 = vshll.u32 %v456, 16
      %v800 = vrot.slane %v798, 5
      %v801 = vsel %vm465, %v796, %v800
      %v803 = vshrl.u32 %v457, 16
      %v805 = vrot.slane %v803, 4
      %v806 = vshll.u32 %v457, 16
      %v808 = vrot.slane %v806, 5
      %v809 = vor.u32 %v805, %v808
      %v810 = vrot.slane %v809, 4
      %v812 = vshll.u32 %v458, 16
      %v814 = vrot.slane %v812, 5
      %v815 = vsel %vm465, %v810, %v814
      %v816 = vshrl.u32 %v458, 16
      %v818 = vrot.slane %v816, 4
      %v819 = vor.u32 %v818, %v814
      %v820 = vrot.slane %v819, 4
      %v822 = vshll.u32 %v459, 16
      %v824 = vrot.slane %v822, 5
      %v825 = vsel %vm465, %v820, %v824
      %v827 = vshrl.u32 %v460, 16
      %v829 = vrot.slane %v827, 4
      %v830 = vshll.u32 %v460, 16
      %v832 = vrot.slane %v830, 5
      %v833 = vor.u32 %v829, %v832
      %v834 = vrot.slane %v833, 4
      %v836 = vshll.u32 %v461, 16
      %v838 = vrot.slane %v836, 5
      %v839 = vsel %vm465, %v834, %v838
      %v840 = vshrl.u32 %v461, 16
      %v842 = vrot.slane %v840, 4
      %v843 = vor.u32 %v842, %v838
      %v844 = vrot.slane %v843, 4
      %v846 = vshll.u32 %v462, 16
      %v848 = vrot.slane %v846, 5
      %v849 = vsel %vm465, %v844, %v848
      %v850 = vld [vmem:[%s4] sm:$0x3]
      %v851 = vunpack.c.l.b16 %v479
      %v852 = vunpack.c.l.b16 %v489
      %v853 = vunpack.c.l.b16 %v503
      %v854 = vunpack.c.l.b16 %v513
      %v855 = vunpack.c.l.b16 %v527
      %v856 = vunpack.c.l.b16 %v537
      %v857 = vunpack.c.l.b16 %v551
      %v858 = vunpack.c.l.b16 %v561
      %v859 = vunpack.c.l.b16 %v575
      %v860 = vunpack.c.l.b16 %v585
      %v861 = vunpack.c.l.b16 %v599
      %v862 = vunpack.c.l.b16 %v609
      %v863 = vunpack.c.l.b16 %v623
      %v864 = vunpack.c.l.b16 %v633
      %v865 = vunpack.c.l.b16 %v647
      %v866 = vunpack.c.l.b16 %v657
      %v867 = vunpack.c.l.b16 %v671
      %v868 = vunpack.c.l.b16 %v681
      %v869 = vunpack.c.l.b16 %v695
      %v870 = vunpack.c.l.b16 %v705
      %v871 = vunpack.c.l.b16 %v719
      %v872 = vunpack.c.l.b16 %v729
      %v873 = vunpack.c.l.b16 %v743
      %v874 = vunpack.c.l.b16 %v753
      %v875 = vunpack.c.l.b16 %v767
      %v876 = vunpack.c.l.b16 %v777
      %v877 = vunpack.c.l.b16 %v791
      %v878 = vunpack.c.l.b16 %v801
      %v879 = vunpack.c.l.b16 %v815
      %v880 = vunpack.c.l.b16 %v825
      %v881 = vunpack.c.l.b16 %v839
      %v882 = vunpack.c.l.b16 %v849
      %v883 = vpack.c.b16 %v852, %v851
      %v884 = vpack.c.b16 %v854, %v853
      %v885 = vpack.c.b16 %v856, %v855
      %v886 = vpack.c.b16 %v858, %v857
      %v887 = vpack.c.b16 %v860, %v859
      %v888 = vpack.c.b16 %v862, %v861
      %v889 = vpack.c.b16 %v864, %v863
      %v890 = vpack.c.b16 %v866, %v865
      %v891 = vpack.c.b16 %v868, %v867
      %v892 = vpack.c.b16 %v870, %v869
      %v893 = vpack.c.b16 %v872, %v871
      %v894 = vpack.c.b16 %v874, %v873
      %v895 = vpack.c.b16 %v876, %v875
      %v896 = vpack.c.b16 %v878, %v877
      %v897 = vpack.c.b16 %v880, %v879
      %v898 = vpack.c.b16 %v882, %v881
      %vm899 = vcmask 31744
      %v901 = vsel %vm899, %v883, 0
      %v904 = vsel %vm899, %v884, 0
      %v907 = vsel %vm899, %v885, 0
      %v910 = vsel %vm899, %v886, 0
      %v913 = vsel %vm899, %v887, 0
      %v916 = vsel %vm899, %v888, 0
      %v919 = vsel %vm899, %v889, 0
      %v922 = vsel %vm899, %v890, 0
      %v925 = vsel %vm899, %v891, 0
      %v928 = vsel %vm899, %v892, 0
      %v931 = vsel %vm899, %v893, 0
      %v934 = vsel %vm899, %v894, 0
      %v937 = vsel %vm899, %v895, 0
      %v940 = vsel %vm899, %v896, 0
      %v943 = vsel %vm899, %v897, 0
      %v946 = vsel %vm899, %v898, 0
      %vm948 = vcmask 1041408
      %v950 = vsel %vm948, %v850, 0
      %952 = vmatprep.subr.bf16.mxu0 0
      %953 = vmatpush1.bf16.msra.mxu0 %v950
      %954 = vmatprep.subr.bf16.mxu0 0
      %955 = vmatpush1.bf16.msra.mxu0 0
      %956 = vmatprep.subr.bf16.mxu0 0
      %957 = vmatpush1.bf16.msra.mxu0 0
      %958 = vmatprep.subr.bf16.mxu0 0
      %959 = vmatpush1.bf16.msra.mxu0 0
      %960 = vmatprep.subr.bf16.mxu0 0
      %961 = vmatpush1.bf16.msra.mxu0 0
      %962 = vmatprep.subr.bf16.mxu0 0
      %963 = vmatpush1.bf16.msra.mxu0 0
      %964 = vmatprep.subr.bf16.mxu0 0
      %965 = vmatpush1.bf16.msra.mxu0 0
      %966 = vmatprep.subr.bf16.mxu0 0
      %967 = vmatpush1.bf16.msra.mxu0 0
      %968 = vmatprep.subr.bf16.mxu0 0
      %969 = vmatpush1.bf16.msra.mxu0 0
      %970 = vmatprep.subr.bf16.mxu0 0
      %971 = vmatpush1.bf16.msra.mxu0 0
      %972 = vmatprep.subr.bf16.mxu0 0
      %973 = vmatpush1.bf16.msra.mxu0 0
      %974 = vmatprep.subr.bf16.mxu0 0
      %975 = vmatpush1.bf16.msra.mxu0 0
      %976 = vmatprep.subr.bf16.mxu0 0
      %977 = vmatpush1.bf16.msra.mxu0 0
      %978 = vmatprep.subr.bf16.mxu0 0
      %979 = vmatpush1.bf16.msra.mxu0 0
      %980 = vmatprep.subr.bf16.mxu0 0
      %981 = vmatpush1.bf16.msra.mxu0 0
      %982 = vmatprep.subr.bf16.mxu0 0
      %983 = vmatpush1.bf16.msra.mxu0 0
      %984 = vmatprep.mubr.bf16.mxu0 0
      %985 = vmatmul.mubr.bf16.gmra.mrb[0].mxu0 %v901
      %v986 = vpop.f32.mrb[0].mxu0
      %v987 = vadd.f32 0.0, %v986
      %v988 = vpop.f32.mrb[0].mxu0
      %v989 = vpop.f32.mrb[0].mxu0
      %v990 = vadd.f32 0.0, %v989
      %v991 = vpop.f32.mrb[0].mxu0
      %992 = vmatprep.mubr.bf16.mxu0 0
      %993 = vmatmul.mubr.bf16.gmra.mrb[0].mxu0 %v904
      %v994 = vpop.f32.mrb[0].mxu0
      %v995 = vadd.f32 0.0, %v994
      %v996 = vpop.f32.mrb[0].mxu0
      %v997 = vpop.f32.mrb[0].mxu0
      %v998 = vadd.f32 0.0, %v997
      %v999 = vpop.f32.mrb[0].mxu0
      %1000 = vmatprep.mubr.bf16.mxu0 0
      %1001 = vmatmul.mubr.bf16.gmra.mrb[0].mxu0 %v907
      %v1002 = vpop.f32.mrb[0].mxu0
      %v1003 = vadd.f32 0.0, %v1002
      %v1004 = vpop.f32.mrb[0].mxu0
      %v1005 = vpop.f32.mrb[0].mxu0
      %v1006 = vadd.f32 0.0, %v1005
      %v1007 = vpop.f32.mrb[0].mxu0
      %1008 = vmatprep.mubr.bf16.mxu0 0
      %1009 = vmatmul.mubr.bf16.gmra.mrb[0].mxu0 %v910
      %v1010 = vpop.f32.mrb[0].mxu0
      %v1011 = vadd.f32 0.0, %v1010
      %v1012 = vpop.f32.mrb[0].mxu0
      %v1013 = vpop.f32.mrb[0].mxu0
      %v1014 = vadd.f32 0.0, %v1013
      %v1015 = vpop.f32.mrb[0].mxu0
      %1016 = vmatprep.mubr.bf16.mxu0 0
      %1017 = vmatmul.mubr.bf16.gmra.mrb[0].mxu0 %v913
      %v1018 = vpop.f32.mrb[0].mxu0
      %v1019 = vadd.f32 0.0, %v1018
      %v1020 = vpop.f32.mrb[0].mxu0
      %v1021 = vpop.f32.mrb[0].mxu0
      %v1022 = vadd.f32 0.0, %v1021
      %v1023 = vpop.f32.mrb[0].mxu0
      %1024 = vmatprep.mubr.bf16.mxu0 0
      %1025 = vmatmul.mubr.bf16.gmra.mrb[0].mxu0 %v916
      %v1026 = vpop.f32.mrb[0].mxu0
      %v1027 = vadd.f32 0.0, %v1026
      %v1028 = vpop.f32.mrb[0].mxu0
      %v1029 = vpop.f32.mrb[0].mxu0
      %v1030 = vadd.f32 0.0, %v1029
      %v1031 = vpop.f32.mrb[0].mxu0
      %1032 = vmatprep.mubr.bf16.mxu0 0
      %1033 = vmatmul.mubr.bf16.gmra.mrb[0].mxu0 %v919
      %v1034 = vpop.f32.mrb[0].mxu0
      %v1035 = vadd.f32 0.0, %v1034
      %v1036 = vpop.f32.mrb[0].mxu0
      %v1037 = vpop.f32.mrb[0].mxu0
      %v1038 = vadd.f32 0.0, %v1037
      %v1039 = vpop.f32.mrb[0].mxu0
      %1040 = vmatprep.mubr.bf16.mxu0 0
      %1041 = vmatmul.mubr.bf16.gmra.mrb[0].mxu0 %v922
      %v1042 = vpop.f32.mrb[0].mxu0
      %v1043 = vadd.f32 0.0, %v1042
      %v1044 = vpop.f32.mrb[0].mxu0
      %v1045 = vpop.f32.mrb[0].mxu0
      %v1046 = vadd.f32 0.0, %v1045
      %v1047 = vpop.f32.mrb[0].mxu0
      %1048 = vmatprep.mubr.bf16.mxu0 0
      %1049 = vmatmul.mubr.bf16.gmra.mrb[0].mxu0 %v925
      %v1050 = vpop.f32.mrb[0].mxu0
      %v1051 = vadd.f32 0.0, %v1050
      %v1052 = vpop.f32.mrb[0].mxu0
      %v1053 = vpop.f32.mrb[0].mxu0
      %v1054 = vadd.f32 0.0, %v1053
      %v1055 = vpop.f32.mrb[0].mxu0
      %1056 = vmatprep.mubr.bf16.mxu0 0
      %1057 = vmatmul.mubr.bf16.gmra.mrb[0].mxu0 %v928
      %v1058 = vpop.f32.mrb[0].mxu0
      %v1059 = vadd.f32 0.0, %v1058
      %v1060 = vpop.f32.mrb[0].mxu0
      %v1061 = vpop.f32.mrb[0].mxu0
      %v1062 = vadd.f32 0.0, %v1061
      %v1063 = vpop.f32.mrb[0].mxu0
      %1064 = vmatprep.mubr.bf16.mxu0 0
      %1065 = vmatmul.mubr.bf16.gmra.mrb[0].mxu0 %v931
      %v1066 = vpop.f32.mrb[0].mxu0
      %v1067 = vadd.f32 0.0, %v1066
      %v1068 = vpop.f32.mrb[0].mxu0
      %v1069 = vpop.f32.mrb[0].mxu0
      %v1070 = vadd.f32 0.0, %v1069
      %v1071 = vpop.f32.mrb[0].mxu0
      %1072 = vmatprep.mubr.bf16.mxu0 0
      %1073 = vmatmul.mubr.bf16.gmra.mrb[0].mxu0 %v934
      %v1074 = vpop.f32.mrb[0].mxu0
      %v1075 = vadd.f32 0.0, %v1074
      %v1076 = vpop.f32.mrb[0].mxu0
      %v1077 = vpop.f32.mrb[0].mxu0
      %v1078 = vadd.f32 0.0, %v1077
      %v1079 = vpop.f32.mrb[0].mxu0
      %1080 = vmatprep.mubr.bf16.mxu0 0
      %1081 = vmatmul.mubr.bf16.gmra.mrb[0].mxu0 %v937
      %v1082 = vpop.f32.mrb[0].mxu0
      %v1083 = vadd.f32 0.0, %v1082
      %v1084 = vpop.f32.mrb[0].mxu0
      %v1085 = vpop.f32.mrb[0].mxu0
      %v1086 = vadd.f32 0.0, %v1085
      %v1087 = vpop.f32.mrb[0].mxu0
      %1088 = vmatprep.mubr.bf16.mxu0 0
      %1089 = vmatmul.mubr.bf16.gmra.mrb[0].mxu0 %v940
      %v1090 = vpop.f32.mrb[0].mxu0
      %v1091 = vadd.f32 0.0, %v1090
      %v1092 = vpop.f32.mrb[0].mxu0
      %v1093 = vpop.f32.mrb[0].mxu0
      %v1094 = vadd.f32 0.0, %v1093
      %v1095 = vpop.f32.mrb[0].mxu0
      %1096 = vmatprep.mubr.bf16.mxu0 0
      %1097 = vmatmul.mubr.bf16.gmra.mrb[0].mxu0 %v943
      %v1098 = vpop.f32.mrb[0].mxu0
      %v1099 = vadd.f32 0.0, %v1098
      %v1100 = vpop.f32.mrb[0].mxu0
      %v1101 = vpop.f32.mrb[0].mxu0
      %v1102 = vadd.f32 0.0, %v1101
      %v1103 = vpop.f32.mrb[0].mxu0
      %1104 = vmatprep.mubr.bf16.mxu0 0
      %1105 = vmatmul.mubr.bf16.gmra.mrb[0].mxu0 %v946
      %v1106 = vpop.f32.mrb[0].mxu0
      %v1107 = vadd.f32 0.0, %v1106
      %v1108 = vpop.f32.mrb[0].mxu0
      %v1109 = vpop.f32.mrb[0].mxu0
      %v1110 = vadd.f32 0.0, %v1109
      %v1111 = vpop.f32.mrb[0].mxu0
      %1112 = vdwg.mxu0
      %v1113 = vld [vmem:[%s5] sm:$0x1]
      %v1115 = vlaneseq
      %v1116 = vshrl.u32 %v1115, 7
      %v1117 = vsub.s32 0, %v1116
      %v1118 = vrot.slane %v1113, %v1117
      %v1120 = vadd.f32 %v987, %v1118
      %v1121 = vadd.f32 %v990, %v1118
      %v1122 = vadd.f32 %v995, %v1118
      %v1123 = vadd.f32 %v998, %v1118
      %v1124 = vadd.f32 %v1003, %v1118
      %v1125 = vadd.f32 %v1006, %v1118
      %v1126 = vadd.f32 %v1011, %v1118
      %v1127 = vadd.f32 %v1014, %v1118
      %v1128 = vadd.f32 %v1019, %v1118
      %v1129 = vadd.f32 %v1022, %v1118
      %v1130 = vadd.f32 %v1027, %v1118
      %v1131 = vadd.f32 %v1030, %v1118
      %v1132 = vadd.f32 %v1035, %v1118
      %v1133 = vadd.f32 %v1038, %v1118
      %v1134 = vadd.f32 %v1043, %v1118
      %v1135 = vadd.f32 %v1046, %v1118
      %v1136 = vadd.f32 %v1051, %v1118
      %v1137 = vadd.f32 %v1054, %v1118
      %v1138 = vadd.f32 %v1059, %v1118
      %v1139 = vadd.f32 %v1062, %v1118
      %v1140 = vadd.f32 %v1067, %v1118
      %v1141 = vadd.f32 %v1070, %v1118
      %v1142 = vadd.f32 %v1075, %v1118
      %v1143 = vadd.f32 %v1078, %v1118
      %v1144 = vadd.f32 %v1083, %v1118
      %v1145 = vadd.f32 %v1086, %v1118
      %v1146 = vadd.f32 %v1091, %v1118
      %v1147 = vadd.f32 %v1094, %v1118
      %v1148 = vadd.f32 %v1099, %v1118
      %v1149 = vadd.f32 %v1102, %v1118
      %v1150 = vadd.f32 %v1107, %v1118
      %v1151 = vadd.f32 %v1110, %v1118
      %v1152 = vadd.f32 %v383, %v1120
      %v1153 = vadd.f32 %v384, %v1121
      %v1154 = vadd.f32 %v385, %v1122
      %v1155 = vadd.f32 %v386, %v1123
      %v1156 = vadd.f32 %v387, %v1124
      %v1157 = vadd.f32 %v388, %v1125
      %v1158 = vadd.f32 %v389, %v1126
      %v1159 = vadd.f32 %v390, %v1127
      %v1160 = vadd.f32 %v391, %v1128
      %v1161 = vadd.f32 %v392, %v1129
      %v1162 = vadd.f32 %v393, %v1130
      %v1163 = vadd.f32 %v394, %v1131
      %v1164 = vadd.f32 %v395, %v1132
      %v1165 = vadd.f32 %v396, %v1133
      %v1166 = vadd.f32 %v397, %v1134
      %v1167 = vadd.f32 %v398, %v1135
      %v1168 = vadd.f32 %v399, %v1136
      %v1169 = vadd.f32 %v400, %v1137
      %v1170 = vadd.f32 %v401, %v1138
      %v1171 = vadd.f32 %v402, %v1139
      %v1172 = vadd.f32 %v403, %v1140
      %v1173 = vadd.f32 %v404, %v1141
      %v1174 = vadd.f32 %v405, %v1142
      %v1175 = vadd.f32 %v406, %v1143
      %v1176 = vadd.f32 %v407, %v1144
      %v1177 = vadd.f32 %v408, %v1145
      %v1178 = vadd.f32 %v409, %v1146
      %v1179 = vadd.f32 %v410, %v1147
      %v1180 = vadd.f32 %v411, %v1148
      %v1181 = vadd.f32 %v412, %v1149
      %v1182 = vadd.f32 %v413, %v1150
      %v1183 = vadd.f32 %v414, %v1151
      %v1184 = vmul.f32 %v1152, 0.5
      %v1185 = vmul.f32 %v1153, 0.5
      %v1186 = vmul.f32 %v1154, 0.5
      %v1187 = vmul.f32 %v1155, 0.5
      %v1188 = vmul.f32 %v1156, 0.5
      %v1189 = vmul.f32 %v1157, 0.5
      %v1190 = vmul.f32 %v1158, 0.5
      %v1191 = vmul.f32 %v1159, 0.5
      %v1192 = vmul.f32 %v1160, 0.5
      %v1193 = vmul.f32 %v1161, 0.5
      %v1194 = vmul.f32 %v1162, 0.5
      %v1195 = vmul.f32 %v1163, 0.5
      %v1196 = vmul.f32 %v1164, 0.5
      %v1197 = vmul.f32 %v1165, 0.5
      %v1198 = vmul.f32 %v1166, 0.5
      %v1199 = vmul.f32 %v1167, 0.5
      %v1200 = vmul.f32 %v1168, 0.5
      %v1201 = vmul.f32 %v1169, 0.5
      %v1202 = vmul.f32 %v1170, 0.5
      %v1203 = vmul.f32 %v1171, 0.5
      %v1204 = vmul.f32 %v1172, 0.5
      %v1205 = vmul.f32 %v1173, 0.5
      %v1206 = vmul.f32 %v1174, 0.5
      %v1207 = vmul.f32 %v1175, 0.5
      %v1208 = vmul.f32 %v1176, 0.5
      %v1209 = vmul.f32 %v1177, 0.5
      %v1210 = vmul.f32 %v1178, 0.5
      %v1211 = vmul.f32 %v1179, 0.5
      %v1212 = vmul.f32 %v1180, 0.5
      %v1213 = vmul.f32 %v1181, 0.5
      %v1214 = vmul.f32 %v1182, 0.5
      %v1215 = vmul.f32 %v1183, 0.5
      %v1216 = vtanh.pop %v1184
      %v1217 = vtanh.pop %v1185
      %v1218 = vtanh.pop %v1186
      %v1219 = vtanh.pop %v1187
      %v1220 = vtanh.pop %v1188
      %v1221 = vtanh.pop %v1189
      %v1222 = vtanh.pop %v1190
      %v1223 = vtanh.pop %v1191
      %v1224 = vtanh.pop %v1192
      %v1225 = vtanh.pop %v1193
      %v1226 = vtanh.pop %v1194
      %v1227 = vtanh.pop %v1195
      %v1228 = vtanh.pop %v1196
      %v1229 = vtanh.pop %v1197
      %v1230 = vtanh.pop %v1198
      %v1231 = vtanh.pop %v1199
      %v1232 = vtanh.pop %v1200
      %v1233 = vtanh.pop %v1201
      %v1234 = vtanh.pop %v1202
      %v1235 = vtanh.pop %v1203
      %v1236 = vtanh.pop %v1204
      %v1237 = vtanh.pop %v1205
      %v1238 = vtanh.pop %v1206
      %v1239 = vtanh.pop %v1207
      %v1240 = vtanh.pop %v1208
      %v1241 = vtanh.pop %v1209
      %v1242 = vtanh.pop %v1210
      %v1243 = vtanh.pop %v1211
      %v1244 = vtanh.pop %v1212
      %v1245 = vtanh.pop %v1213
      %v1246 = vtanh.pop %v1214
      %v1247 = vtanh.pop %v1215
      %v1248 = vadd.f32 %v1216, 1.0
      %v1249 = vadd.f32 %v1217, 1.0
      %v1250 = vadd.f32 %v1218, 1.0
      %v1251 = vadd.f32 %v1219, 1.0
      %v1252 = vadd.f32 %v1220, 1.0
      %v1253 = vadd.f32 %v1221, 1.0
      %v1254 = vadd.f32 %v1222, 1.0
      %v1255 = vadd.f32 %v1223, 1.0
      %v1256 = vadd.f32 %v1224, 1.0
      %v1257 = vadd.f32 %v1225, 1.0
      %v1258 = vadd.f32 %v1226, 1.0
      %v1259 = vadd.f32 %v1227, 1.0
      %v1260 = vadd.f32 %v1228, 1.0
      %v1261 = vadd.f32 %v1229, 1.0
      %v1262 = vadd.f32 %v1230, 1.0
      %v1263 = vadd.f32 %v1231, 1.0
      %v1264 = vadd.f32 %v1232, 1.0
      %v1265 = vadd.f32 %v1233, 1.0
      %v1266 = vadd.f32 %v1234, 1.0
      %v1267 = vadd.f32 %v1235, 1.0
      %v1268 = vadd.f32 %v1236, 1.0
      %v1269 = vadd.f32 %v1237, 1.0
      %v1270 = vadd.f32 %v1238, 1.0
      %v1271 = vadd.f32 %v1239, 1.0
      %v1272 = vadd.f32 %v1240, 1.0
      %v1273 = vadd.f32 %v1241, 1.0
      %v1274 = vadd.f32 %v1242, 1.0
      %v1275 = vadd.f32 %v1243, 1.0
      %v1276 = vadd.f32 %v1244, 1.0
      %v1277 = vadd.f32 %v1245, 1.0
      %v1278 = vadd.f32 %v1246, 1.0
      %v1279 = vadd.f32 %v1247, 1.0
      %v1280 = vmul.f32 %v1248, 0.5
      %v1281 = vmul.f32 %v1249, 0.5
      %v1282 = vmul.f32 %v1250, 0.5
      %v1283 = vmul.f32 %v1251, 0.5
      %v1284 = vmul.f32 %v1252, 0.5
      %v1285 = vmul.f32 %v1253, 0.5
      %v1286 = vmul.f32 %v1254, 0.5
      %v1287 = vmul.f32 %v1255, 0.5
      %v1288 = vmul.f32 %v1256, 0.5
      %v1289 = vmul.f32 %v1257, 0.5
      %v1290 = vmul.f32 %v1258, 0.5
      %v1291 = vmul.f32 %v1259, 0.5
      %v1292 = vmul.f32 %v1260, 0.5
      %v1293 = vmul.f32 %v1261, 0.5
      %v1294 = vmul.f32 %v1262, 0.5
      %v1295 = vmul.f32 %v1263, 0.5
      %v1296 = vmul.f32 %v1264, 0.5
      %v1297 = vmul.f32 %v1265, 0.5
      %v1298 = vmul.f32 %v1266, 0.5
      %v1299 = vmul.f32 %v1267, 0.5
      %v1300 = vmul.f32 %v1268, 0.5
      %v1301 = vmul.f32 %v1269, 0.5
      %v1302 = vmul.f32 %v1270, 0.5
      %v1303 = vmul.f32 %v1271, 0.5
      %v1304 = vmul.f32 %v1272, 0.5
      %v1305 = vmul.f32 %v1273, 0.5
      %v1306 = vmul.f32 %v1274, 0.5
      %v1307 = vmul.f32 %v1275, 0.5
      %v1308 = vmul.f32 %v1276, 0.5
      %v1309 = vmul.f32 %v1277, 0.5
      %v1310 = vmul.f32 %v1278, 0.5
      %v1311 = vmul.f32 %v1279, 0.5
      %v1312 = vmul.f32 %v1152, %v1280
      %v1313 = vmul.f32 %v1153, %v1281
      %v1314 = vmul.f32 %v1154, %v1282
      %v1315 = vmul.f32 %v1155, %v1283
      %v1316 = vmul.f32 %v1156, %v1284
      %v1317 = vmul.f32 %v1157, %v1285
      %v1318 = vmul.f32 %v1158, %v1286
      %v1319 = vmul.f32 %v1159, %v1287
      %v1320 = vmul.f32 %v1160, %v1288
      %v1321 = vmul.f32 %v1161, %v1289
      %v1322 = vmul.f32 %v1162, %v1290
      %v1323 = vmul.f32 %v1163, %v1291
      %v1324 = vmul.f32 %v1164, %v1292
      %v1325 = vmul.f32 %v1165, %v1293
      %v1326 = vmul.f32 %v1166, %v1294
      %v1327 = vmul.f32 %v1167, %v1295
      %v1328 = vmul.f32 %v1168, %v1296
      %v1329 = vmul.f32 %v1169, %v1297
      %v1330 = vmul.f32 %v1170, %v1298
      %v1331 = vmul.f32 %v1171, %v1299
      %v1332 = vmul.f32 %v1172, %v1300
      %v1333 = vmul.f32 %v1173, %v1301
      %v1334 = vmul.f32 %v1174, %v1302
      %v1335 = vmul.f32 %v1175, %v1303
      %v1336 = vmul.f32 %v1176, %v1304
      %v1337 = vmul.f32 %v1177, %v1305
      %v1338 = vmul.f32 %v1178, %v1306
      %v1339 = vmul.f32 %v1179, %v1307
      %v1340 = vmul.f32 %v1180, %v1308
      %v1341 = vmul.f32 %v1181, %v1309
      %v1342 = vmul.f32 %v1182, %v1310
      %v1343 = vmul.f32 %v1183, %v1311
      %vm1344 = vcmask 64512
      %1345 = vst.msk [vmem:[%s271] sm:$0xff] %vm1344, %v1312
      %1346 = vst.msk [vmem:[%s271 + $0x8] sm:$0xff] %vm1344, %v1313
      %1347 = vst.msk [vmem:[%s271 + $0x10] sm:$0xff] %vm1344, %v1314
      %1348 = vst.msk [vmem:[%s271 + $0x18] sm:$0xff] %vm1344, %v1315
      %1349 = vst.msk [vmem:[%s271 + $0x20] sm:$0xff] %vm1344, %v1316
      %1350 = vst.msk [vmem:[%s271 + $0x28] sm:$0xff] %vm1344, %v1317
      %1351 = vst.msk [vmem:[%s271 + $0x30] sm:$0xff] %vm1344, %v1318
      %1352 = vst.msk [vmem:[%s271 + $0x38] sm:$0xff] %vm1344, %v1319
      %1353 = vst.msk [vmem:[%s271 + $0x40] sm:$0xff] %vm1344, %v1320
      %1354 = vst.msk [vmem:[%s271 + $0x48] sm:$0xff] %vm1344, %v1321
      %1355 = vst.msk [vmem:[%s271 + $0x50] sm:$0xff] %vm1344, %v1322
      %1356 = vst.msk [vmem:[%s271 + $0x58] sm:$0xff] %vm1344, %v1323
      %1357 = vst.msk [vmem:[%s271 + $0x60] sm:$0xff] %vm1344, %v1324
      %1358 = vst.msk [vmem:[%s271 + $0x68] sm:$0xff] %vm1344, %v1325
      %1359 = vst.msk [vmem:[%s271 + $0x70] sm:$0xff] %vm1344, %v1326
      %1360 = vst.msk [vmem:[%s271 + $0x78] sm:$0xff] %vm1344, %v1327
      %1361 = vst.msk [vmem:[%s271 + $0x80] sm:$0xff] %vm1344, %v1328
      %1362 = vst.msk [vmem:[%s271 + $0x88] sm:$0xff] %vm1344, %v1329
      %1363 = vst.msk [vmem:[%s271 + $0x90] sm:$0xff] %vm1344, %v1330
      %1364 = vst.msk [vmem:[%s271 + $0x98] sm:$0xff] %vm1344, %v1331
      %1365 = vst.msk [vmem:[%s271 + $0xa0] sm:$0xff] %vm1344, %v1332
      %1366 = vst.msk [vmem:[%s271 + $0xa8] sm:$0xff] %vm1344, %v1333
      %1367 = vst.msk [vmem:[%s271 + $0xb0] sm:$0xff] %vm1344, %v1334
      %1368 = vst.msk [vmem:[%s271 + $0xb8] sm:$0xff] %vm1344, %v1335
      %1369 = vst.msk [vmem:[%s271 + $0xc0] sm:$0xff] %vm1344, %v1336
      %1370 = vst.msk [vmem:[%s271 + $0xc8] sm:$0xff] %vm1344, %v1337
      %1371 = vst.msk [vmem:[%s271 + $0xd0] sm:$0xff] %vm1344, %v1338
      %1372 = vst.msk [vmem:[%s271 + $0xd8] sm:$0xff] %vm1344, %v1339
      %1373 = vst.msk [vmem:[%s271 + $0xe0] sm:$0xff] %vm1344, %v1340
      %1374 = vst.msk [vmem:[%s271 + $0xe8] sm:$0xff] %vm1344, %v1341
      %1375 = vst.msk [vmem:[%s271 + $0xf0] sm:$0xff] %vm1344, %v1342
      %1376 = vst.msk [vmem:[%s271 + $0xf8] sm:$0xff] %vm1344, %v1343
      %p1377 = scmp.lt.s32.totalorder %s17, 1
      %s1378 = scalar_select %p1377, %s17, 1
      %s1379 = smul.addr %s1378, 32
      %s1380 = smul.addr %s1379, 8
      %s1381 = scalar_lea.vmem %s6, %s1380
      // Predicated region
      $region45: #{_lambda_.5} parent=43 // pred_check
        %p1382 = pneg %p171
      $region46: #{_lambda_.5} parent=43 // pred_check_branch
        %1384 = sbr.rel (%p1382) target = $region48
      $region47: #{_lambda_.5} parent=43 // pred_region
        _
      $region48: #{_lambda_.5} parent=43 // pred_fallthru
        _
    $region44: #{_lambda_.5} parent=5 // pred_fallthru
      _
    %p1385 = scmp.le.s32.totalorder 2, %s12
    // Predicated region
    $region49: #{_lambda_.5} parent=5 // pred_check
      %p1386 = pneg %p1385
    $region50: #{_lambda_.5} parent=5 // pred_check_branch
      %1388 = sbr.rel (%p1386) target = $region52
    $region51: #{_lambda_.5} parent=5 // pred_region
      %s1389 = ssub.s32 %s12, 2
      // Predicated region
      $region53: #{_lambda_.5} parent=51 // pred_check
        %p1390 = pneg %p177
      $region54: #{_lambda_.5} parent=51 // pred_check_branch
        %1392 = sbr.rel (%p1390) target = $region56
      $region55: #{_lambda_.5} parent=51 // pred_region
        %p1393 = scmp.lt.s32.totalorder %s18, 1
        %s1394 = scalar_select %p1393, %s18, 1
        %s1395 = smul.addr %s1394, 32
        %s1396 = smul.addr %s1395, 8
        %s1397 = scalar_lea.vmem %s6, %s1396
      $region56: #{_lambda_.5} parent=51 // pred_fallthru
        _
    $region52: #{_lambda_.5} parent=5 // pred_fallthru
      _
  $region6: #{_lambda_.5} parent=0 // loop_footer
    %s16 = sadd.s32 1, %s12
  $region7: #{_lambda_.5} parent=0 // loop_footer_branch
    %11 = sbr.rel target = $region3
  $region8: #{_lambda_.5} parent=0 // loop_exit
    _

// kernel: _lambda_.3
$region0: #{_lambda_.3}
  #allocation0 [shape = 'u32[]', space=smem, size = 0x4, offset = 0x4, fixed_abs, tag = 'smem constant byte address 0x4 - core index']
  #allocation1 [shape = 'u32[144,128]{1,0:T(1,128)}', space=vmem, size = 0x12000, scoped, tag = 'internal scratch']
  %s0 = inlined_call_operand.vmem [shape: bf16[2,18,18,4], index: 0, kind: input, shape index: {}]
  %s1 = inlined_call_operand.vmem [shape: bf16[36,128], index: 1, kind: input, shape index: {}]
  %s2 = inlined_call_operand.vmem [shape: bf16[2,16,16,8], index: 2, kind: output, shape index: {0}]
  %s3 = inlined_call_operand.vmem [shape: f32[2,8,128], index: 3, kind: output, shape index: {1}]
  %s4 = inlined_call_operand.vmem [shape: f32[2,8,128], index: 4, kind: output, shape index: {2}]
  %5 = xla_tuple %s2, %s3, %s4
  %s6 = sld [smem:[#allocation0]]
  $region57: #{_lambda_.3} parent=0
    _
  %s8 = ssub.s32 1, %s6
  %s9 = scalar_select 0, %s8, %s6
  loop: start=0, step=1, limit=4
  $region2: #{_lambda_.3} parent=0 // loop_pre_header
    _
  $region3: #{_lambda_.3} parent=0 // loop_header
    %s11 = sphi 0, %s15
    %p12 = scmp.ge.s32.totalorder %s11, 4
    %s21 = sphi 0, %s23
    %s24 = sphi 0, %s21
    %s25 = sphi 0, %s24
    %s41 = sphi 0, %s25
    %s45 = sphi 0, %s45
    %s47 = sphi 0, %s45
    %s48 = sphi 0, %s47
    %s62 = sphi 0, %s48
    %s68 = sphi 0, %s70
    %s71 = sphi 0, %s68
    %s72 = sphi 0, %s71
    %s88 = sphi 0, %s72
    %s94 = sphi 0, %s96
    %s97 = sphi 0, %s94
    %s98 = sphi 0, %s97
    %s114 = sphi 0, %s98
    %s120 = sphi 0, %s122
    %s123 = sphi 0, %s120
    %s124 = sphi 0, %s123
    %s140 = sphi 0, %s124
  $region4: #{_lambda_.3} parent=0 // loop_header_branch
    %14 = sbr.rel (%p12) target = $region8
  $region5: #{_lambda_.3} parent=0 // loop_body
    %s16 = ssub.s32 %s11, 1
    %s17 = ssub.s32 %s11, 2
    %s18 = sadd.s32 %s11, 1
    %s19 = ssub.s32 %s11, %s18
    %p20 = scmp.eq.s32.totalorder %s19, 0
    %s22 = sadd.s32 %s21, 1
    %s23 = scalar_select %p20, %s21, %s22
    %p26 = pneg %p20
    %p27 = scmp.eq.s32.totalorder %s11, 1
    %p28 = por %p26, %p27
    %p29 = scmp.ne.s32.totalorder %s21, %s24
    %p30 = scmp.eq.s32.totalorder %s11, 0
    %p31 = por %p29, %p30
    %p32 = scmp.ne.s32.totalorder %s21, %s24
    %p33 = scmp.eq.s32.totalorder %s16, 1
    %p34 = por %p32, %p33
    %p35 = scmp.ne.s32.totalorder %s24, %s25
    %p36 = scmp.eq.s32.totalorder %s16, 0
    %p37 = por %p35, %p36
    %p38 = scmp.ne.s32.totalorder %s24, %s25
    %p39 = scmp.eq.s32.totalorder %s17, 1
    %p40 = por %p38, %p39
    %p42 = scmp.ne.s32.totalorder %s25, %s41
    %p43 = scmp.eq.s32.totalorder %s17, 0
    %p44 = por %p42, %p43
    %s46 = sadd.s32 %s45, 1
    %p49 = scmp.eq.s32.totalorder %s11, 1
    %p50 = scmp.ne.s32.totalorder %s45, %s47
    %p51 = scmp.eq.s32.totalorder %s11, 0
    %p52 = por %p50, %p51
    %p53 = scmp.ne.s32.totalorder %s45, %s47
    %p54 = scmp.eq.s32.totalorder %s16, 1
    %p55 = por %p53, %p54
    %p56 = scmp.ne.s32.totalorder %s47, %s48
    %p57 = scmp.eq.s32.totalorder %s16, 0
    %p58 = por %p56, %p57
    %p59 = scmp.ne.s32.totalorder %s47, %s48
    %p60 = scmp.eq.s32.totalorder %s17, 1
    %p61 = por %p59, %p60
    %p63 = scmp.ne.s32.totalorder %s48, %s62
    %p64 = scmp.eq.s32.totalorder %s17, 0
    %p65 = por %p63, %p64
    %s66 = ssub.s32 %s11, %s18
    %p67 = scmp.eq.s32.totalorder %s66, 0
    %s69 = sadd.s32 %s68, 1
    %s70 = scalar_select %p67, %s68, %s69
    %p73 = pneg %p67
    %p74 = scmp.eq.s32.totalorder %s11, 1
    %p75 = por %p73, %p74
    %p76 = scmp.ne.s32.totalorder %s68, %s71
    %p77 = scmp.eq.s32.totalorder %s11, 0
    %p78 = por %p76, %p77
    %p79 = scmp.ne.s32.totalorder %s68, %s71
    %p80 = scmp.eq.s32.totalorder %s16, 1
    %p81 = por %p79, %p80
    %p82 = scmp.ne.s32.totalorder %s71, %s72
    %p83 = scmp.eq.s32.totalorder %s16, 0
    %p84 = por %p82, %p83
    %p85 = scmp.ne.s32.totalorder %s71, %s72
    %p86 = scmp.eq.s32.totalorder %s17, 1
    %p87 = por %p85, %p86
    %p89 = scmp.ne.s32.totalorder %s72, %s88
    %p90 = scmp.eq.s32.totalorder %s17, 0
    %p91 = por %p89, %p90
    %s92 = ssub.s32 %s11, %s18
    %p93 = scmp.eq.s32.totalorder %s92, 0
    %s95 = sadd.s32 %s94, 1
    %s96 = scalar_select %p93, %s94, %s95
    %p99 = pneg %p93
    %p100 = scmp.eq.s32.totalorder %s11, 1
    %p101 = por %p99, %p100
    %p102 = scmp.ne.s32.totalorder %s94, %s97
    %p103 = scmp.eq.s32.totalorder %s11, 0
    %p104 = por %p102, %p103
    %p105 = scmp.ne.s32.totalorder %s94, %s97
    %p106 = scmp.eq.s32.totalorder %s16, 1
    %p107 = por %p105, %p106
    %p108 = scmp.ne.s32.totalorder %s97, %s98
    %p109 = scmp.eq.s32.totalorder %s16, 0
    %p110 = por %p108, %p109
    %p111 = scmp.ne.s32.totalorder %s97, %s98
    %p112 = scmp.eq.s32.totalorder %s17, 1
    %p113 = por %p111, %p112
    %p115 = scmp.ne.s32.totalorder %s98, %s114
    %p116 = scmp.eq.s32.totalorder %s17, 0
    %p117 = por %p115, %p116
    %s118 = ssub.s32 %s11, %s18
    %p119 = scmp.eq.s32.totalorder %s118, 0
    %s121 = sadd.s32 %s120, 1
    %s122 = scalar_select %p119, %s120, %s121
    %p125 = pneg %p119
    %p126 = scmp.eq.s32.totalorder %s11, 1
    %p127 = por %p125, %p126
    %p128 = scmp.ne.s32.totalorder %s120, %s123
    %p129 = scmp.eq.s32.totalorder %s11, 0
    %p130 = por %p128, %p129
    %p131 = scmp.ne.s32.totalorder %s120, %s123
    %p132 = scmp.eq.s32.totalorder %s16, 1
    %p133 = por %p131, %p132
    %p134 = scmp.ne.s32.totalorder %s123, %s124
    %p135 = scmp.eq.s32.totalorder %s16, 0
    %p136 = por %p134, %p135
    %p137 = scmp.ne.s32.totalorder %s123, %s124
    %p138 = scmp.eq.s32.totalorder %s17, 1
    %p139 = por %p137, %p138
    %p141 = scmp.ne.s32.totalorder %s124, %s140
    %p142 = scmp.eq.s32.totalorder %s17, 0
    %p143 = por %p141, %p142
    %p144 = scmp.le.s32.totalorder 1, %s11
    %p145 = scmp.lt.s32.totalorder %s11, 3
    %p146 = pnand %p144, %p145
    %p147 = pneg %p146
    // Predicated region
    $region9: #{_lambda_.3} parent=5 // pred_check
      _
    $region10: #{_lambda_.3} parent=5 // pred_check_branch
      %149 = sbr.rel (%p146) target = $region12
    $region11: #{_lambda_.3} parent=5 // pred_region
      %s150 = ssub.s32 %s11, 1
      // Predicated region
      $region13: #{_lambda_.3} parent=11 // pred_check
        %p151 = pneg %p58
      $region14: #{_lambda_.3} parent=11 // pred_check_branch
        %153 = sbr.rel (%p151) target = $region16
      $region15: #{_lambda_.3} parent=11 // pred_region
        _
      $region16: #{_lambda_.3} parent=11 // pred_fallthru
        _
    $region12: #{_lambda_.3} parent=5 // pred_fallthru
      _
    %p154 = scmp.lt.s32.totalorder %s11, 2
    // Predicated region
    $region17: #{_lambda_.3} parent=5 // pred_check
      %p155 = pneg %p154
    $region18: #{_lambda_.3} parent=5 // pred_check_branch
      %157 = sbr.rel (%p155) target = $region20
    $region19: #{_lambda_.3} parent=5 // pred_region
      // Predicated region
      $region21: #{_lambda_.3} parent=19 // pred_check
        %p158 = pneg %p31
      $region22: #{_lambda_.3} parent=19 // pred_check_branch
        %160 = sbr.rel (%p158) target = $region24
      $region23: #{_lambda_.3} parent=19 // pred_region
        %p161 = scmp.lt.s32.totalorder %s11, 1
        %s162 = scalar_select %p161, %s11, 1
        %s163 = smul.addr %s162, 54
        %s164 = smul.addr %s163, 4
        %s165 = scalar_lea.vmem %s0, %s164
      $region24: #{_lambda_.3} parent=19 // pred_fallthru
        _
    $region20: #{_lambda_.3} parent=5 // pred_fallthru
      _
    %p166 = scmp.le.s32.totalorder 1, %s11
    %p167 = scmp.lt.s32.totalorder %s11, 3
    %p168 = pnand %p166, %p167
    %p169 = pneg %p168
    // Predicated region
    $region25: #{_lambda_.3} parent=5 // pred_check
      _
    $region26: #{_lambda_.3} parent=5 // pred_check_branch
      %171 = sbr.rel (%p168) target = $region28
    $region27: #{_lambda_.3} parent=5 // pred_region
      %s172 = ssub.s32 %s11, 1
      %p173 = scmp.lt.s32.totalorder %s16, 1
      %s174 = scalar_select %p173, %s16, 1
      %s175 = smul.addr %s174, 54
      %s176 = smul.addr %s175, 4
      %s177 = scalar_lea.vmem %s0, %s176
      %p178 = pneg %p37
      %p179 = pneg %p34
      %p180 = pneg %p58
      %p181 = pneg %p55
      %p182 = pneg %p84
      %p183 = pneg %p81
      %p184 = scmp.lt.s32.totalorder %s16, 1
      %s185 = scalar_select %p184, %s16, 1
      %s186 = smul.addr %s185, 32
      %s187 = smul.addr %s186, 4
      %s188 = scalar_lea.vmem %s2, %s187
      %p189 = pneg %p110
      %p190 = pneg %p107
      %p191 = scmp.lt.s32.totalorder %s16, 1
      %s192 = scalar_select %p191, %s16, 1
      %s193 = smul.addr %s192, 8
      %s194 = scalar_lea.vmem %s3, %s193
      %p195 = pneg %p136
      %p196 = pneg %p133
      %p197 = scmp.lt.s32.totalorder %s16, 1
      %s198 = scalar_select %p197, %s16, 1
      %s199 = smul.addr %s198, 8
      %s200 = scalar_lea.vmem %s4, %s199
      %p201 = scmp.lt.s32.totalorder %s16, 1
      %s202 = scalar_select %p201, %s16, 1
      %s203 = smul.addr %s202, 54
      %s204 = smul.addr %s203, 4
      %s205 = scalar_lea.vmem %s0, %s204
      %p206 = scmp.lt.s32.totalorder %s16, 1
      %s207 = scalar_select %p206, %s16, 1
      %s208 = smul.addr %s207, 32
      %s209 = smul.addr %s208, 4
      %s210 = scalar_lea.vmem %s2, %s209
      %p211 = scmp.lt.s32.totalorder %s16, 1
      %s212 = scalar_select %p211, %s16, 1
      %s213 = smul.addr %s212, 8
      %s214 = scalar_lea.vmem %s3, %s213
      %p215 = scmp.lt.s32.totalorder %s16, 1
      %s216 = scalar_select %p215, %s16, 1
      %s217 = smul.addr %s216, 8
      %s218 = scalar_lea.vmem %s4, %s217
      %v220 = vld [vmem:[%s205] sm:$0xf]
      %v221 = vld [vmem:[%s205 + $0x4] sm:$0xf]
      %v222 = vld [vmem:[%s205 + $0x8] sm:$0x1]
      %v223 = vld [vmem:[%s205 + $0xc] sm:$0xf]
      %v224 = vld [vmem:[%s205 + $0x10] sm:$0xf]
      %v225 = vld [vmem:[%s205 + $0x14] sm:$0x1]
      %v226 = vld [vmem:[%s205 + $0x18] sm:$0xf]
      %v227 = vld [vmem:[%s205 + $0x1c] sm:$0xf]
      %v228 = vld [vmem:[%s205 + $0x20] sm:$0x1]
      %v229 = vld [vmem:[%s205 + $0x24] sm:$0xf]
      %v230 = vld [vmem:[%s205 + $0x28] sm:$0xf]
      %v231 = vld [vmem:[%s205 + $0x2c] sm:$0x1]
      %v232 = vld [vmem:[%s205 + $0x30] sm:$0xf]
      %v233 = vld [vmem:[%s205 + $0x34] sm:$0xf]
      %v234 = vld [vmem:[%s205 + $0x38] sm:$0x1]
      %v235 = vld [vmem:[%s205 + $0x3c] sm:$0xf]
      %v236 = vld [vmem:[%s205 + $0x40] sm:$0xf]
      %v237 = vld [vmem:[%s205 + $0x44] sm:$0x1]
      %v238 = vld [vmem:[%s205 + $0x48] sm:$0xf]
      %v239 = vld [vmem:[%s205 + $0x4c] sm:$0xf]
      %v240 = vld [vmem:[%s205 + $0x50] sm:$0x1]
      %v241 = vld [vmem:[%s205 + $0x54] sm:$0xf]
      %v242 = vld [vmem:[%s205 + $0x58] sm:$0xf]
      %v243 = vld [vmem:[%s205 + $0x5c] sm:$0x1]
      %v244 = vld [vmem:[%s205 + $0x60] sm:$0xf]
      %v245 = vld [vmem:[%s205 + $0x64] sm:$0xf]
      %v246 = vld [vmem:[%s205 + $0x68] sm:$0x1]
      %v247 = vld [vmem:[%s205 + $0x6c] sm:$0xf]
      %v248 = vld [vmem:[%s205 + $0x70] sm:$0xf]
      %v249 = vld [vmem:[%s205 + $0x74] sm:$0x1]
      %v250 = vld [vmem:[%s205 + $0x78] sm:$0xf]
      %v251 = vld [vmem:[%s205 + $0x7c] sm:$0xf]
      %v252 = vld [vmem:[%s205 + $0x80] sm:$0x1]
      %v253 = vld [vmem:[%s205 + $0x84] sm:$0xf]
      %v254 = vld [vmem:[%s205 + $0x88] sm:$0xf]
      %v255 = vld [vmem:[%s205 + $0x8c] sm:$0x1]
      %v256 = vld [vmem:[%s205 + $0x90] sm:$0xf]
      %v257 = vld [vmem:[%s205 + $0x94] sm:$0xf]
      %v258 = vld [vmem:[%s205 + $0x98] sm:$0x1]
      %v259 = vld [vmem:[%s205 + $0x9c] sm:$0xf]
      %v260 = vld [vmem:[%s205 + $0xa0] sm:$0xf]
      %v261 = vld [vmem:[%s205 + $0xa4] sm:$0x1]
      %v262 = vld [vmem:[%s205 + $0xa8] sm:$0xf]
      %v263 = vld [vmem:[%s205 + $0xac] sm:$0xf]
      %v264 = vld [vmem:[%s205 + $0xb0] sm:$0x1]
      %v265 = vld [vmem:[%s205 + $0xb4] sm:$0xf]
      %v266 = vld [vmem:[%s205 + $0xb8] sm:$0xf]
      %v267 = vld [vmem:[%s205 + $0xbc] sm:$0x1]
      %v268 = vld [vmem:[%s205 + $0xc0] sm:$0xf]
      %v269 = vld [vmem:[%s205 + $0xc4] sm:$0xf]
      %v270 = vld [vmem:[%s205 + $0xc8] sm:$0x1]
      %v271 = vld [vmem:[%s205 + $0xcc] sm:$0xf]
      %v272 = vld [vmem:[%s205 + $0xd0] sm:$0xf]
      %v273 = vld [vmem:[%s205 + $0xd4] sm:$0x1]
      %v274 = vld [vmem:[%s1] sm:$0xf]
      %v275 = vld [vmem:[%s1 + $0x4] sm:$0xf]
      %v276 = vld [vmem:[%s1 + $0x8] sm:$0xf]
      %v277 = vld [vmem:[%s1 + $0xc] sm:$0xf]
      %v278 = vld [vmem:[%s1 + $0x10] sm:$0x3]
      %vm279 = vsmask.f32 3328
      %vm280 = vsmask.f32 7440
      %vm281 = vmor %vm279, %vm280
      %v283 = vshrl.u32 %v220, 16
      %v285 = vrot.slane %v283, 4
      %v286 = vshll.u32 %v220, 16
      %v288 = vrot.slane %v286, 5
      %v289 = vor.u32 %v285, %v288
      %v290 = vrot.slane %v289, 4
      %v292 = vshll.u32 %v221, 16
      %v294 = vrot.slane %v292, 5
      %v295 = vsel %vm281, %v290, %v294
      %v296 = vshrl.u32 %v221, 16
      %v298 = vrot.slane %v296, 4
      %v299 = vor.u32 %v298, %v294
      %v300 = vrot.slane %v299, 4
      %v302 = vshll.u32 %v222, 16
      %v304 = vrot.slane %v302, 5
      %v305 = vsel %vm281, %v300, %v304
      %v307 = vshrl.u32 %v223, 16
      %v309 = vrot.slane %v307, 4
      %v310 = vshll.u32 %v223, 16
      %v312 = vrot.slane %v310, 5
      %v313 = vor.u32 %v309, %v312
      %v314 = vrot.slane %v313, 4
      %v316 = vshll.u32 %v224, 16
      %v318 = vrot.slane %v316, 5
      %v319 = vsel %vm281, %v314, %v318
      %v320 = vshrl.u32 %v224, 16
      %v322 = vrot.slane %v320, 4
      %v323 = vor.u32 %v322, %v318
      %v324 = vrot.slane %v323, 4
      %v326 = vshll.u32 %v225, 16
      %v328 = vrot.slane %v326, 5
      %v329 = vsel %vm281, %v324, %v328
      %v331 = vshrl.u32 %v226, 16
      %v333 = vrot.slane %v331, 4
      %v334 = vshll.u32 %v226, 16
      %v336 = vrot.slane %v334, 5
      %v337 = vor.u32 %v333, %v336
      %v338 = vrot.slane %v337, 4
      %v340 = vshll.u32 %v227, 16
      %v342 = vrot.slane %v340, 5
      %v343 = vsel %vm281, %v338, %v342
      %v344 = vshrl.u32 %v227, 16
      %v346 = vrot.slane %v344, 4
      %v347 = vor.u32 %v346, %v342
      %v348 = vrot.slane %v347, 4
      %v350 = vshll.u32 %v228, 16
      %v352 = vrot.slane %v350, 5
      %v353 = vsel %vm281, %v348, %v352
      %v355 = vshrl.u32 %v229, 16
      %v357 = vrot.slane %v355, 4
      %v358 = vshll.u32 %v229, 16
      %v360 = vrot.slane %v358, 5
      %v361 = vor.u32 %v357, %v360
      %v362 = vrot.slane %v361, 4
      %v364 = vshll.u32 %v230, 16
      %v366 = vrot.slane %v364, 5
      %v367 = vsel %vm281, %v362, %v366
      %v368 = vshrl.u32 %v230, 16
      %v370 = vrot.slane %v368, 4
      %v371 = vor.u32 %v370, %v366
      %v372 = vrot.slane %v371, 4
      %v374 = vshll.u32 %v231, 16
      %v376 = vrot.slane %v374, 5
      %v377 = vsel %vm281, %v372, %v376
      %v379 = vshrl.u32 %v232, 16
      %v381 = vrot.slane %v379, 4
      %v382 = vshll.u32 %v232, 16
      %v384 = vrot.slane %v382, 5
      %v385 = vor.u32 %v381, %v384
      %v386 = vrot.slane %v385, 4
      %v388 = vshll.u32 %v233, 16
      %v390 = vrot.slane %v388, 5
      %v391 = vsel %vm281, %v386, %v390
      %v392 = vshrl.u32 %v233, 16
      %v394 = vrot.slane %v392, 4
      %v395 = vor.u32 %v394, %v390
      %v396 = vrot.slane %v395, 4
      %v398 = vshll.u32 %v234, 16
      %v400 = vrot.slane %v398, 5
      %v401 = vsel %vm281, %v396, %v400
      %v403 = vshrl.u32 %v235, 16
      %v405 = vrot.slane %v403, 4
      %v406 = vshll.u32 %v235, 16
      %v408 = vrot.slane %v406, 5
      %v409 = vor.u32 %v405, %v408
      %v410 = vrot.slane %v409, 4
      %v412 = vshll.u32 %v236, 16
      %v414 = vrot.slane %v412, 5
      %v415 = vsel %vm281, %v410, %v414
      %v416 = vshrl.u32 %v236, 16
      %v418 = vrot.slane %v416, 4
      %v419 = vor.u32 %v418, %v414
      %v420 = vrot.slane %v419, 4
      %v422 = vshll.u32 %v237, 16
      %v424 = vrot.slane %v422, 5
      %v425 = vsel %vm281, %v420, %v424
      %v427 = vshrl.u32 %v238, 16
      %v429 = vrot.slane %v427, 4
      %v430 = vshll.u32 %v238, 16
      %v432 = vrot.slane %v430, 5
      %v433 = vor.u32 %v429, %v432
      %v434 = vrot.slane %v433, 4
      %v436 = vshll.u32 %v239, 16
      %v438 = vrot.slane %v436, 5
      %v439 = vsel %vm281, %v434, %v438
      %v440 = vshrl.u32 %v239, 16
      %v442 = vrot.slane %v440, 4
      %v443 = vor.u32 %v442, %v438
      %v444 = vrot.slane %v443, 4
      %v446 = vshll.u32 %v240, 16
      %v448 = vrot.slane %v446, 5
      %v449 = vsel %vm281, %v444, %v448
      %v451 = vshrl.u32 %v241, 16
      %v453 = vrot.slane %v451, 4
      %v454 = vshll.u32 %v241, 16
      %v456 = vrot.slane %v454, 5
      %v457 = vor.u32 %v453, %v456
      %v458 = vrot.slane %v457, 4
      %v460 = vshll.u32 %v242, 16
      %v462 = vrot.slane %v460, 5
      %v463 = vsel %vm281, %v458, %v462
      %v464 = vshrl.u32 %v242, 16
      %v466 = vrot.slane %v464, 4
      %v467 = vor.u32 %v466, %v462
      %v468 = vrot.slane %v467, 4
      %v470 = vshll.u32 %v243, 16
      %v472 = vrot.slane %v470, 5
      %v473 = vsel %vm281, %v468, %v472
      %v475 = vshrl.u32 %v244, 16
      %v477 = vrot.slane %v475, 4
      %v478 = vshll.u32 %v244, 16
      %v480 = vrot.slane %v478, 5
      %v481 = vor.u32 %v477, %v480
      %v482 = vrot.slane %v481, 4
      %v484 = vshll.u32 %v245, 16
      %v486 = vrot.slane %v484, 5
      %v487 = vsel %vm281, %v482, %v486
      %v488 = vshrl.u32 %v245, 16
      %v490 = vrot.slane %v488, 4
      %v491 = vor.u32 %v490, %v486
      %v492 = vrot.slane %v491, 4
      %v494 = vshll.u32 %v246, 16
      %v496 = vrot.slane %v494, 5
      %v497 = vsel %vm281, %v492, %v496
      %v499 = vshrl.u32 %v247, 16
      %v501 = vrot.slane %v499, 4
      %v502 = vshll.u32 %v247, 16
      %v504 = vrot.slane %v502, 5
      %v505 = vor.u32 %v501, %v504
      %v506 = vrot.slane %v505, 4
      %v508 = vshll.u32 %v248, 16
      %v510 = vrot.slane %v508, 5
      %v511 = vsel %vm281, %v506, %v510
      %v512 = vshrl.u32 %v248, 16
      %v514 = vrot.slane %v512, 4
      %v515 = vor.u32 %v514, %v510
      %v516 = vrot.slane %v515, 4
      %v518 = vshll.u32 %v249, 16
      %v520 = vrot.slane %v518, 5
      %v521 = vsel %vm281, %v516, %v520
      %v523 = vshrl.u32 %v250, 16
      %v525 = vrot.slane %v523, 4
      %v526 = vshll.u32 %v250, 16
      %v528 = vrot.slane %v526, 5
      %v529 = vor.u32 %v525, %v528
      %v530 = vrot.slane %v529, 4
      %v532 = vshll.u32 %v251, 16
      %v534 = vrot.slane %v532, 5
      %v535 = vsel %vm281, %v530, %v534
      %v536 = vshrl.u32 %v251, 16
      %v538 = vrot.slane %v536, 4
      %v539 = vor.u32 %v538, %v534
      %v540 = vrot.slane %v539, 4
      %v542 = vshll.u32 %v252, 16
      %v544 = vrot.slane %v542, 5
      %v545 = vsel %vm281, %v540, %v544
      %v547 = vshrl.u32 %v253, 16
      %v549 = vrot.slane %v547, 4
      %v550 = vshll.u32 %v253, 16
      %v552 = vrot.slane %v550, 5
      %v553 = vor.u32 %v549, %v552
      %v554 = vrot.slane %v553, 4
      %v556 = vshll.u32 %v254, 16
      %v558 = vrot.slane %v556, 5
      %v559 = vsel %vm281, %v554, %v558
      %v560 = vshrl.u32 %v254, 16
      %v562 = vrot.slane %v560, 4
      %v563 = vor.u32 %v562, %v558
      %v564 = vrot.slane %v563, 4
      %v566 = vshll.u32 %v255, 16
      %v568 = vrot.slane %v566, 5
      %v569 = vsel %vm281, %v564, %v568
      %v571 = vshrl.u32 %v256, 16
      %v573 = vrot.slane %v571, 4
      %v574 = vshll.u32 %v256, 16
      %v576 = vrot.slane %v574, 5
      %v577 = vor.u32 %v573, %v576
      %v578 = vrot.slane %v577, 4
      %v580 = vshll.u32 %v257, 16
      %v582 = vrot.slane %v580, 5
      %v583 = vsel %vm281, %v578, %v582
      %v584 = vshrl.u32 %v257, 16
      %v586 = vrot.slane %v584, 4
      %v587 = vor.u32 %v586, %v582
      %v588 = vrot.slane %v587, 4
      %v590 = vshll.u32 %v258, 16
      %v592 = vrot.slane %v590, 5
      %v593 = vsel %vm281, %v588, %v592
      %v595 = vshrl.u32 %v259, 16
      %v597 = vrot.slane %v595, 4
      %v598 = vshll.u32 %v259, 16
      %v600 = vrot.slane %v598, 5
      %v601 = vor.u32 %v597, %v600
      %v602 = vrot.slane %v601, 4
      %v604 = vshll.u32 %v260, 16
      %v606 = vrot.slane %v604, 5
      %v607 = vsel %vm281, %v602, %v606
      %v608 = vshrl.u32 %v260, 16
      %v610 = vrot.slane %v608, 4
      %v611 = vor.u32 %v610, %v606
      %v612 = vrot.slane %v611, 4
      %v614 = vshll.u32 %v261, 16
      %v616 = vrot.slane %v614, 5
      %v617 = vsel %vm281, %v612, %v616
      %v619 = vshrl.u32 %v262, 16
      %v621 = vrot.slane %v619, 4
      %v622 = vshll.u32 %v262, 16
      %v624 = vrot.slane %v622, 5
      %v625 = vor.u32 %v621, %v624
      %v626 = vrot.slane %v625, 4
      %v628 = vshll.u32 %v263, 16
      %v630 = vrot.slane %v628, 5
      %v631 = vsel %vm281, %v626, %v630
      %v632 = vshrl.u32 %v263, 16
      %v634 = vrot.slane %v632, 4
      %v635 = vor.u32 %v634, %v630
      %v636 = vrot.slane %v635, 4
      %v638 = vshll.u32 %v264, 16
      %v640 = vrot.slane %v638, 5
      %v641 = vsel %vm281, %v636, %v640
      %v643 = vshrl.u32 %v265, 16
      %v645 = vrot.slane %v643, 4
      %v646 = vshll.u32 %v265, 16
      %v648 = vrot.slane %v646, 5
      %v649 = vor.u32 %v645, %v648
      %v650 = vrot.slane %v649, 4
      %v652 = vshll.u32 %v266, 16
      %v654 = vrot.slane %v652, 5
      %v655 = vsel %vm281, %v650, %v654
      %v656 = vshrl.u32 %v266, 16
      %v658 = vrot.slane %v656, 4
      %v659 = vor.u32 %v658, %v654
      %v660 = vrot.slane %v659, 4
      %v662 = vshll.u32 %v267, 16
      %v664 = vrot.slane %v662, 5
      %v665 = vsel %vm281, %v660, %v664
      %v666 = vunpack.c.l.b16 %v295
      %v667 = vunpack.c.l.b16 %v305
      %v668 = vunpack.c.l.b16 %v319
      %v669 = vunpack.c.l.b16 %v329
      %v670 = vunpack.c.l.b16 %v343
      %v671 = vunpack.c.l.b16 %v353
      %v672 = vunpack.c.l.b16 %v367
      %v673 = vunpack.c.l.b16 %v377
      %v674 = vunpack.c.l.b16 %v391
      %v675 = vunpack.c.l.b16 %v401
      %v676 = vunpack.c.l.b16 %v415
      %v677 = vunpack.c.l.b16 %v425
      %v678 = vunpack.c.l.b16 %v439
      %v679 = vunpack.c.l.b16 %v449
      %v680 = vunpack.c.l.b16 %v463
      %v681 = vunpack.c.l.b16 %v473
      %v682 = vunpack.c.l.b16 %v487
      %v683 = vunpack.c.l.b16 %v497
      %v684 = vunpack.c.l.b16 %v511
      %v685 = vunpack.c.l.b16 %v521
      %v686 = vunpack.c.l.b16 %v535
      %v687 = vunpack.c.l.b16 %v545
      %v688 = vunpack.c.l.b16 %v559
      %v689 = vunpack.c.l.b16 %v569
      %v690 = vunpack.c.l.b16 %v583
      %v691 = vunpack.c.l.b16 %v593
      %v692 = vunpack.c.l.b16 %v607
      %v693 = vunpack.c.l.b16 %v617
      %v694 = vunpack.c.l.b16 %v631
      %v695 = vunpack.c.l.b16 %v641
      %v696 = vunpack.c.l.b16 %v655
      %v697 = vunpack.c.l.b16 %v665
      %v698 = vpack.c.b16 %v667, %v666
      %v699 = vpack.c.b16 %v669, %v668
      %v700 = vpack.c.b16 %v671, %v670
      %v701 = vpack.c.b16 %v673, %v672
      %v702 = vpack.c.b16 %v675, %v674
      %v703 = vpack.c.b16 %v677, %v676
      %v704 = vpack.c.b16 %v679, %v678
      %v705 = vpack.c.b16 %v681, %v680
      %v706 = vpack.c.b16 %v683, %v682
      %v707 = vpack.c.b16 %v685, %v684
      %v708 = vpack.c.b16 %v687, %v686
      %v709 = vpack.c.b16 %v689, %v688
      %v710 = vpack.c.b16 %v691, %v690
      %v711 = vpack.c.b16 %v693, %v692
      %v712 = vpack.c.b16 %v695, %v694
      %v713 = vpack.c.b16 %v697, %v696
      %v715 = vunpack.c.l.b16 %v274
      %v716 = vpack.c.b16 %v715, %v715
      %v717 = vrot.slane %v716, 2
      %vm718 = vcmask 31744
      %v720 = vsel %vm718, %v698, 0
      %v723 = vsel %vm718, %v699, 0
      %v726 = vsel %vm718, %v700, 0
      %v729 = vsel %vm718, %v701, 0
      %v732 = vsel %vm718, %v702, 0
      %v735 = vsel %vm718, %v703, 0
      %v738 = vsel %vm718, %v704, 0
      %v741 = vsel %vm718, %v705, 0
      %v744 = vsel %vm718, %v706, 0
      %v747 = vsel %vm718, %v707, 0
      %v750 = vsel %vm718, %v708, 0
      %v753 = vsel %vm718, %v709, 0
      %v756 = vsel %vm718, %v710, 0
      %v759 = vsel %vm718, %v711, 0
      %v762 = vsel %vm718, %v712, 0
      %v765 = vsel %vm718, %v713, 0
      %vm767 = vcmask 1041408
      %v769 = vsel %vm767, %v717, 0
      %771 = vmatprep.subr.bf16.mxu0 0
      %772 = vmatpush1.bf16.msra.mxu0 %v769
      %773 = vmatprep.subr.bf16.mxu0 0
      %774 = vmatpush1.bf16.msra.mxu0 0
      %775 = vmatprep.subr.bf16.mxu0 0
      %776 = vmatpush1.bf16.msra.mxu0 0
      %777 = vmatprep.subr.bf16.mxu0 0
      %778 = vmatpush1.bf16.msra.mxu0 0
      %779 = vmatprep.subr.bf16.mxu0 0
      %780 = vmatpush1.bf16.msra.mxu0 0
      %781 = vmatprep.subr.bf16.mxu0 0
      %782 = vmatpush1.bf16.msra.mxu0 0
      %783 = vmatprep.subr.bf16.mxu0 0
      %784 = vmatpush1.bf16.msra.mxu0 0
      %785 = vmatprep.subr.bf16.mxu0 0
      %786 = vmatpush1.bf16.msra.mxu0 0
      %787 = vmatprep.subr.bf16.mxu0 0
      %788 = vmatpush1.bf16.msra.mxu0 0
      %789 = vmatprep.subr.bf16.mxu0 0
      %790 = vmatpush1.bf16.msra.mxu0 0
      %791 = vmatprep.subr.bf16.mxu0 0
      %792 = vmatpush1.bf16.msra.mxu0 0
      %793 = vmatprep.subr.bf16.mxu0 0
      %794 = vmatpush1.bf16.msra.mxu0 0
      %795 = vmatprep.subr.bf16.mxu0 0
      %796 = vmatpush1.bf16.msra.mxu0 0
      %797 = vmatprep.subr.bf16.mxu0 0
      %798 = vmatpush1.bf16.msra.mxu0 0
      %799 = vmatprep.subr.bf16.mxu0 0
      %800 = vmatpush1.bf16.msra.mxu0 0
      %801 = vmatprep.subr.bf16.mxu0 0
      %802 = vmatpush1.bf16.msra.mxu0 0
      %803 = vmatprep.mubr.bf16.mxu0 0
      %804 = vmatmul.mubr.bf16.gmra.mrb[0].mxu0 %v720
      %v805 = vpop.f32.mrb[0].mxu0
      %v806 = vadd.f32 0.0, %v805
      %v807 = vpop.f32.mrb[0].mxu0
      %v808 = vpop.f32.mrb[0].mxu0
      %v809 = vadd.f32 0.0, %v808
      %v810 = vpop.f32.mrb[0].mxu0
      %811 = vmatprep.mubr.bf16.mxu0 0
      %812 = vmatmul.mubr.bf16.gmra.mrb[0].mxu0 %v723
      %v813 = vpop.f32.mrb[0].mxu0
      %v814 = vadd.f32 0.0, %v813
      %v815 = vpop.f32.mrb[0].mxu0
      %v816 = vpop.f32.mrb[0].mxu0
      %v817 = vadd.f32 0.0, %v816
      %v818 = vpop.f32.mrb[0].mxu0
      %819 = vmatprep.mubr.bf16.mxu0 0
      %820 = vmatmul.mubr.bf16.gmra.mrb[0].mxu0 %v726
      %v821 = vpop.f32.mrb[0].mxu0
      %v822 = vadd.f32 0.0, %v821
      %v823 = vpop.f32.mrb[0].mxu0
      %v824 = vpop.f32.mrb[0].mxu0
      %v825 = vadd.f32 0.0, %v824
      %v826 = vpop.f32.mrb[0].mxu0
      %827 = vmatprep.mubr.bf16.mxu0 0
      %828 = vmatmul.mubr.bf16.gmra.mrb[0].mxu0 %v729
      %v829 = vpop.f32.mrb[0].mxu0
      %v830 = vadd.f32 0.0, %v829
      %v831 = vpop.f32.mrb[0].mxu0
      %v832 = vpop.f32.mrb[0].mxu0
      %v833 = vadd.f32 0.0, %v832
      %v834 = vpop.f32.mrb[0].mxu0
      %835 = vmatprep.mubr.bf16.mxu0 0
      %836 = vmatmul.mubr.bf16.gmra.mrb[0].mxu0 %v732
      %v837 = vpop.f32.mrb[0].mxu0
      %v838 = vadd.f32 0.0, %v837
      %v839 = vpop.f32.mrb[0].mxu0
      %v840 = vpop.f32.mrb[0].mxu0
      %v841 = vadd.f32 0.0, %v840
      %v842 = vpop.f32.mrb[0].mxu0
      %843 = vmatprep.mubr.bf16.mxu0 0
      %844 = vmatmul.mubr.bf16.gmra.mrb[0].mxu0 %v735
      %v845 = vpop.f32.mrb[0].mxu0
      %v846 = vadd.f32 0.0, %v845
      %v847 = vpop.f32.mrb[0].mxu0
      %v848 = vpop.f32.mrb[0].mxu0
      %v849 = vadd.f32 0.0, %v848
      %v850 = vpop.f32.mrb[0].mxu0
      %851 = vmatprep.mubr.bf16.mxu0 0
      %852 = vmatmul.mubr.bf16.gmra.mrb[0].mxu0 %v738
      %v853 = vpop.f32.mrb[0].mxu0
      %v854 = vadd.f32 0.0, %v853
      %v855 = vpop.f32.mrb[0].mxu0
      %v856 = vpop.f32.mrb[0].mxu0
      %v857 = vadd.f32 0.0, %v856
      %v858 = vpop.f32.mrb[0].mxu0
      %859 = vmatprep.mubr.bf16.mxu0 0
      %860 = vmatmul.mubr.bf16.gmra.mrb[0].mxu0 %v741
      %v861 = vpop.f32.mrb[0].mxu0
      %v862 = vadd.f32 0.0, %v861
      %v863 = vpop.f32.mrb[0].mxu0
      %v864 = vpop.f32.mrb[0].mxu0
      %v865 = vadd.f32 0.0, %v864
      %v866 = vpop.f32.mrb[0].mxu0
      %867 = vmatprep.mubr.bf16.mxu0 0
      %868 = vmatmul.mubr.bf16.gmra.mrb[0].mxu0 %v744
      %v869 = vpop.f32.mrb[0].mxu0
      %v870 = vadd.f32 0.0, %v869
      %v871 = vpop.f32.mrb[0].mxu0
      %v872 = vpop.f32.mrb[0].mxu0
      %v873 = vadd.f32 0.0, %v872
      %v874 = vpop.f32.mrb[0].mxu0
      %875 = vmatprep.mubr.bf16.mxu0 0
      %876 = vmatmul.mubr.bf16.gmra.mrb[0].mxu0 %v747
      %v877 = vpop.f32.mrb[0].mxu0
      %v878 = vadd.f32 0.0, %v877
      %v879 = vpop.f32.mrb[0].mxu0
      %v880 = vpop.f32.mrb[0].mxu0
      %v881 = vadd.f32 0.0, %v880
      %v882 = vpop.f32.mrb[0].mxu0
      %883 = vmatprep.mubr.bf16.mxu0 0
      %884 = vmatmul.mubr.bf16.gmra.mrb[0].mxu0 %v750
      %v885 = vpop.f32.mrb[0].mxu0
      %v886 = vadd.f32 0.0, %v885
      %v887 = vpop.f32.mrb[0].mxu0
      %v888 = vpop.f32.mrb[0].mxu0
      %v889 = vadd.f32 0.0, %v888
      %v890 = vpop.f32.mrb[0].mxu0
      %891 = vmatprep.mubr.bf16.mxu0 0
      %892 = vmatmul.mubr.bf16.gmra.mrb[0].mxu0 %v753
      %v893 = vpop.f32.mrb[0].mxu0
      %v894 = vadd.f32 0.0, %v893
      %v895 = vpop.f32.mrb[0].mxu0
      %v896 = vpop.f32.mrb[0].mxu0
      %v897 = vadd.f32 0.0, %v896
      %v898 = vpop.f32.mrb[0].mxu0
      %899 = vmatprep.mubr.bf16.mxu0 0
      %900 = vmatmul.mubr.bf16.gmra.mrb[0].mxu0 %v756
      %v901 = vpop.f32.mrb[0].mxu0
      %v902 = vadd.f32 0.0, %v901
      %v903 = vpop.f32.mrb[0].mxu0
      %v904 = vpop.f32.mrb[0].mxu0
      %v905 = vadd.f32 0.0, %v904
      %v906 = vpop.f32.mrb[0].mxu0
      %907 = vmatprep.mubr.bf16.mxu0 0
      %908 = vmatmul.mubr.bf16.gmra.mrb[0].mxu0 %v759
      %v909 = vpop.f32.mrb[0].mxu0
      %v910 = vadd.f32 0.0, %v909
      %v911 = vpop.f32.mrb[0].mxu0
      %v912 = vpop.f32.mrb[0].mxu0
      %v913 = vadd.f32 0.0, %v912
      %v914 = vpop.f32.mrb[0].mxu0
      %915 = vmatprep.mubr.bf16.mxu0 0
      %916 = vmatmul.mubr.bf16.gmra.mrb[0].mxu0 %v762
      %v917 = vpop.f32.mrb[0].mxu0
      %v918 = vadd.f32 0.0, %v917
      %v919 = vpop.f32.mrb[0].mxu0
      %v920 = vpop.f32.mrb[0].mxu0
      %v921 = vadd.f32 0.0, %v920
      %v922 = vpop.f32.mrb[0].mxu0
      %923 = vmatprep.mubr.bf16.mxu0 0
      %924 = vmatmul.mubr.bf16.gmra.mrb[0].mxu0 %v765
      %v925 = vpop.f32.mrb[0].mxu0
      %v926 = vadd.f32 0.0, %v925
      %v927 = vpop.f32.mrb[0].mxu0
      %v928 = vpop.f32.mrb[0].mxu0
      %v929 = vadd.f32 0.0, %v928
      %v930 = vpop.f32.mrb[0].mxu0
      %931 = vdwg.mxu0
      %v964 = vunpack.c.l.b16 %v220
      %v965 = vunpack.c.l.b16 %v221
      %v966 = vunpack.c.l.b16 %v223
      %v967 = vunpack.c.l.b16 %v224
      %v968 = vunpack.c.l.b16 %v226
      %v969 = vunpack.c.l.b16 %v227
      %v970 = vunpack.c.l.b16 %v229
      %v971 = vunpack.c.l.b16 %v230
      %v972 = vunpack.c.l.b16 %v232
      %v973 = vunpack.c.l.b16 %v233
      %v974 = vunpack.c.l.b16 %v235
      %v975 = vunpack.c.l.b16 %v236
      %v976 = vunpack.c.l.b16 %v238
      %v977 = vunpack.c.l.b16 %v239
      %v978 = vunpack.c.l.b16 %v241
      %v979 = vunpack.c.l.b16 %v242
      %v980 = vunpack.c.l.b16 %v244
      %v981 = vunpack.c.l.b16 %v245
      %v982 = vunpack.c.l.b16 %v247
      %v983 = vunpack.c.l.b16 %v248
      %v984 = vunpack.c.l.b16 %v250
      %v985 = vunpack.c.l.b16 %v251
      %v986 = vunpack.c.l.b16 %v253
      %v987 = vunpack.c.l.b16 %v254
      %v988 = vunpack.c.l.b16 %v256
      %v989 = vunpack.c.l.b16 %v257
      %v990 = vunpack.c.l.b16 %v259
      %v991 = vunpack.c.l.b16 %v260
      %v992 = vunpack.c.l.b16 %v262
      %v993 = vunpack.c.l.b16 %v263
      %v994 = vunpack.c.l.b16 %v265
      %v995 = vunpack.c.l.b16 %v266
      %v996 = vpack.c.b16 %v965, %v964
      %v997 = vpack.c.b16 %v967, %v966
      %v998 = vpack.c.b16 %v969, %v968
      %v999 = vpack.c.b16 %v971, %v970
      %v1000 = vpack.c.b16 %v973, %v972
      %v1001 = vpack.c.b16 %v975, %v974
      %v1002 = vpack.c.b16 %v977, %v976
      %v1003 = vpack.c.b16 %v979, %v978
      %v1004 = vpack.c.b16 %v981, %v980
      %v1005 = vpack.c.b16 %v983, %v982
      %v1006 = vpack.c.b16 %v985, %v984
      %v1007 = vpack.c.b16 %v987, %v986
      %v1008 = vpack.c.b16 %v989, %v988
      %v1009 = vpack.c.b16 %v991, %v990
      %v1010 = vpack.c.b16 %v993, %v992
      %v1011 = vpack.c.b16 %v995, %v994
      %v1013 = vsel %vm718, %v996, 0
      %v1016 = vsel %vm718, %v997, 0
      %v1019 = vsel %vm718, %v998, 0
      %v1022 = vsel %vm718, %v999, 0
      %v1025 = vsel %vm718, %v1000, 0
      %v1028 = vsel %vm718, %v1001, 0
      %v1031 = vsel %vm718, %v1002, 0
      %v1034 = vsel %vm718, %v1003, 0
      %v1037 = vsel %vm718, %v1004, 0
      %v1040 = vsel %vm718, %v1005, 0
      %v1043 = vsel %vm718, %v1006, 0
      %v1046 = vsel %vm718, %v1007, 0
      %v1049 = vsel %vm718, %v1008, 0
      %v1052 = vsel %vm718, %v1009, 0
      %v1055 = vsel %vm718, %v1010, 0
      %v1058 = vsel %vm718, %v1011, 0
      %v1061 = vsel %vm767, %v274, 0
      %1063 = vmatprep.subr.bf16.mxu0 0
      %1064 = vmatpush1.bf16.msra.mxu0 %v1061
      %1065 = vmatprep.subr.bf16.mxu0 0
      %1066 = vmatpush1.bf16.msra.mxu0 0
      %1067 = vmatprep.subr.bf16.mxu0 0
      %1068 = vmatpush1.bf16.msra.mxu0 0
      %1069 = vmatprep.subr.bf16.mxu0 0
      %1070 = vmatpush1.bf16.msra.mxu0 0
      %1071 = vmatprep.subr.bf16.mxu0 0
      %1072 = vmatpush1.bf16.msra.mxu0 0
      %1073 = vmatprep.subr.bf16.mxu0 0
      %1074 = vmatpush1.bf16.msra.mxu0 0
      %1075 = vmatprep.subr.bf16.mxu0 0
      %1076 = vmatpush1.bf16.msra.mxu0 0
      %1077 = vmatprep.subr.bf16.mxu0 0
      %1078 = vmatpush1.bf16.msra.mxu0 0
      %1079 = vmatprep.subr.bf16.mxu0 0
      %1080 = vmatpush1.bf16.msra.mxu0 0
      %1081 = vmatprep.subr.bf16.mxu0 0
      %1082 = vmatpush1.bf16.msra.mxu0 0
      %1083 = vmatprep.subr.bf16.mxu0 0
      %1084 = vmatpush1.bf16.msra.mxu0 0
      %1085 = vmatprep.subr.bf16.mxu0 0
      %1086 = vmatpush1.bf16.msra.mxu0 0
      %1087 = vmatprep.subr.bf16.mxu0 0
      %1088 = vmatpush1.bf16.msra.mxu0 0
      %1089 = vmatprep.subr.bf16.mxu0 0
      %1090 = vmatpush1.bf16.msra.mxu0 0
      %1091 = vmatprep.subr.bf16.mxu0 0
      %1092 = vmatpush1.bf16.msra.mxu0 0
      %1093 = vmatprep.subr.bf16.mxu0 0
      %1094 = vmatpush1.bf16.msra.mxu0 0
      %1095 = vmatprep.mubr.bf16.mxu0 0
      %1096 = vmatmul.mubr.bf16.gmra.mrb[0].mxu0 %v1013
      %v1097 = vpop.f32.mrb[0].mxu0
      %v1098 = vadd.f32 %v806, %v1097
      %v1099 = vpop.f32.mrb[0].mxu0
      %v1100 = vpop.f32.mrb[0].mxu0
      %v1101 = vadd.f32 %v809, %v1100
      %v1102 = vpop.f32.mrb[0].mxu0
      %1103 = vmatprep.mubr.bf16.mxu0 0
      %1104 = vmatmul.mubr.bf16.gmra.mrb[0].mxu0 %v1016
      %v1105 = vpop.f32.mrb[0].mxu0
      %v1106 = vadd.f32 %v814, %v1105
      %v1107 = vpop.f32.mrb[0].mxu0
      %v1108 = vpop.f32.mrb[0].mxu0
      %v1109 = vadd.f32 %v817, %v1108
      %v1110 = vpop.f32.mrb[0].mxu0
      %1111 = vmatprep.mubr.bf16.mxu0 0
      %1112 = vmatmul.mubr.bf16.gmra.mrb[0].mxu0 %v1019
      %v1113 = vpop.f32.mrb[0].mxu0
      %v1114 = vadd.f32 %v822, %v1113
      %v1115 = vpop.f32.mrb[0].mxu0
      %v1116 = vpop.f32.mrb[0].mxu0
      %v1117 = vadd.f32 %v825, %v1116
      %v1118 = vpop.f32.mrb[0].mxu0
      %1119 = vmatprep.mubr.bf16.mxu0 0
      %1120 = vmatmul.mubr.bf16.gmra.mrb[0].mxu0 %v1022
      %v1121 = vpop.f32.mrb[0].mxu0
      %v1122 = vadd.f32 %v830, %v1121
      %v1123 = vpop.f32.mrb[0].mxu0
      %v1124 = vpop.f32.mrb[0].mxu0
      %v1125 = vadd.f32 %v833, %v1124
      %v1126 = vpop.f32.mrb[0].mxu0
      %1127 = vmatprep.mubr.bf16.mxu0 0
      %1128 = vmatmul.mubr.bf16.gmra.mrb[0].mxu0 %v1025
      %v1129 = vpop.f32.mrb[0].mxu0
      %v1130 = vadd.f32 %v838, %v1129
      %v1131 = vpop.f32.mrb[0].mxu0
      %v1132 = vpop.f32.mrb[0].mxu0
      %v1133 = vadd.f32 %v841, %v1132
      %v1134 = vpop.f32.mrb[0].mxu0
      %1135 = vmatprep.mubr.bf16.mxu0 0
      %1136 = vmatmul.mubr.bf16.gmra.mrb[0].mxu0 %v1028
      %v1137 = vpop.f32.mrb[0].mxu0
      %v1138 = vadd.f32 %v846, %v1137
      %v1139 = vpop.f32.mrb[0].mxu0
      %v1140 = vpop.f32.mrb[0].mxu0
      %v1141 = vadd.f32 %v849, %v1140
      %v1142 = vpop.f32.mrb[0].mxu0
      %1143 = vmatprep.mubr.bf16.mxu0 0
      %1144 = vmatmul.mubr.bf16.gmra.mrb[0].mxu0 %v1031
      %v1145 = vpop.f32.mrb[0].mxu0
      %v1146 = vadd.f32 %v854, %v1145
      %v1147 = vpop.f32.mrb[0].mxu0
      %v1148 = vpop.f32.mrb[0].mxu0
      %v1149 = vadd.f32 %v857, %v1148
      %v1150 = vpop.f32.mrb[0].mxu0
      %1151 = vmatprep.mubr.bf16.mxu0 0
      %1152 = vmatmul.mubr.bf16.gmra.mrb[0].mxu0 %v1034
      %v1153 = vpop.f32.mrb[0].mxu0
      %v1154 = vadd.f32 %v862, %v1153
      %v1155 = vpop.f32.mrb[0].mxu0
      %v1156 = vpop.f32.mrb[0].mxu0
      %v1157 = vadd.f32 %v865, %v1156
      %v1158 = vpop.f32.mrb[0].mxu0
      %1159 = vmatprep.mubr.bf16.mxu0 0
      %1160 = vmatmul.mubr.bf16.gmra.mrb[0].mxu0 %v1037
      %v1161 = vpop.f32.mrb[0].mxu0
      %v1162 = vadd.f32 %v870, %v1161
      %v1163 = vpop.f32.mrb[0].mxu0
      %v1164 = vpop.f32.mrb[0].mxu0
      %v1165 = vadd.f32 %v873, %v1164
      %v1166 = vpop.f32.mrb[0].mxu0
      %1167 = vmatprep.mubr.bf16.mxu0 0
      %1168 = vmatmul.mubr.bf16.gmra.mrb[0].mxu0 %v1040
      %v1169 = vpop.f32.mrb[0].mxu0
      %v1170 = vadd.f32 %v878, %v1169
      %v1171 = vpop.f32.mrb[0].mxu0
      %v1172 = vpop.f32.mrb[0].mxu0
      %v1173 = vadd.f32 %v881, %v1172
      %v1174 = vpop.f32.mrb[0].mxu0
      %1175 = vmatprep.mubr.bf16.mxu0 0
      %1176 = vmatmul.mubr.bf16.gmra.mrb[0].mxu0 %v1043
      %v1177 = vpop.f32.mrb[0].mxu0
      %v1178 = vadd.f32 %v886, %v1177
      %v1179 = vpop.f32.mrb[0].mxu0
      %v1180 = vpop.f32.mrb[0].mxu0
      %v1181 = vadd.f32 %v889, %v1180
      %v1182 = vpop.f32.mrb[0].mxu0
      %1183 = vmatprep.mubr.bf16.mxu0 0
      %1184 = vmatmul.mubr.bf16.gmra.mrb[0].mxu0 %v1046
      %v1185 = vpop.f32.mrb[0].mxu0
      %v1186 = vadd.f32 %v894, %v1185
      %v1187 = vpop.f32.mrb[0].mxu0
      %v1188 = vpop.f32.mrb[0].mxu0
      %v1189 = vadd.f32 %v897, %v1188
      %v1190 = vpop.f32.mrb[0].mxu0
      %1191 = vmatprep.mubr.bf16.mxu0 0
      %1192 = vmatmul.mubr.bf16.gmra.mrb[0].mxu0 %v1049
      %v1193 = vpop.f32.mrb[0].mxu0
      %v1194 = vadd.f32 %v902, %v1193
      %v1195 = vpop.f32.mrb[0].mxu0
      %v1196 = vpop.f32.mrb[0].mxu0
      %v1197 = vadd.f32 %v905, %v1196
      %v1198 = vpop.f32.mrb[0].mxu0
      %1199 = vmatprep.mubr.bf16.mxu0 0
      %1200 = vmatmul.mubr.bf16.gmra.mrb[0].mxu0 %v1052
      %v1201 = vpop.f32.mrb[0].mxu0
      %v1202 = vadd.f32 %v910, %v1201
      %v1203 = vpop.f32.mrb[0].mxu0
      %v1204 = vpop.f32.mrb[0].mxu0
      %v1205 = vadd.f32 %v913, %v1204
      %v1206 = vpop.f32.mrb[0].mxu0
      %1207 = vmatprep.mubr.bf16.mxu0 0
      %1208 = vmatmul.mubr.bf16.gmra.mrb[0].mxu0 %v1055
      %v1209 = vpop.f32.mrb[0].mxu0
      %v1210 = vadd.f32 %v918, %v1209
      %v1211 = vpop.f32.mrb[0].mxu0
      %v1212 = vpop.f32.mrb[0].mxu0
      %v1213 = vadd.f32 %v921, %v1212
      %v1214 = vpop.f32.mrb[0].mxu0
      %1215 = vmatprep.mubr.bf16.mxu0 0
      %1216 = vmatmul.mubr.bf16.gmra.mrb[0].mxu0 %v1058
      %v1217 = vpop.f32.mrb[0].mxu0
      %v1218 = vadd.f32 %v926, %v1217
      %v1219 = vpop.f32.mrb[0].mxu0
      %v1220 = vpop.f32.mrb[0].mxu0
      %v1221 = vadd.f32 %v929, %v1220
      %v1222 = vpop.f32.mrb[0].mxu0
      %1223 = vdwg.mxu0
      %vm1240 = vcmask 1042432
      %vm1241 = vcmask 1046532
      %vm1242 = vmor %vm1240, %vm1241
      %v1243 = vrot.slane %v220, 5
      %v1244 = vrot.slane %v1243, 4
      %v1245 = vrot.slane %v221, 5
      %v1246 = vsel %vm1242, %v1244, %v1245
      %v1247 = vrot.slane %v1245, 4
      %v1248 = vrot.slane %v222, 5
      %v1249 = vsel %vm1242, %v1247, %v1248
      %v1250 = vrot.slane %v223, 5
      %v1251 = vrot.slane %v1250, 4
      %v1252 = vrot.slane %v224, 5
      %v1253 = vsel %vm1242, %v1251, %v1252
      %v1254 = vrot.slane %v1252, 4
      %v1255 = vrot.slane %v225, 5
      %v1256 = vsel %vm1242, %v1254, %v1255
      %v1257 = vrot.slane %v226, 5
      %v1258 = vrot.slane %v1257, 4
      %v1259 = vrot.slane %v227, 5
      %v1260 = vsel %vm1242, %v1258, %v1259
      %v1261 = vrot.slane %v1259, 4
      %v1262 = vrot.slane %v228, 5
      %v1263 = vsel %vm1242, %v1261, %v1262
      %v1264 = vrot.slane %v229, 5
      %v1265 = vrot.slane %v1264, 4
      %v1266 = vrot.slane %v230, 5
      %v1267 = vsel %vm1242, %v1265, %v1266
      %v1268 = vrot.slane %v1266, 4
      %v1269 = vrot.slane %v231, 5
      %v1270 = vsel %vm1242, %v1268, %v1269
      %v1271 = vrot.slane %v232, 5
      %v1272 = vrot.slane %v1271, 4
      %v1273 = vrot.slane %v233, 5
      %v1274 = vsel %vm1242, %v1272, %v1273
      %v1275 = vrot.slane %v1273, 4
      %v1276 = vrot.slane %v234, 5
      %v1277 = vsel %vm1242, %v1275, %v1276
      %v1278 = vrot.slane %v235, 5
      %v1279 = vrot.slane %v1278, 4
      %v1280 = vrot.slane %v236, 5
      %v1281 = vsel %vm1242, %v1279, %v1280
      %v1282 = vrot.slane %v1280, 4
      %v1283 = vrot.slane %v237, 5
      %v1284 = vsel %vm1242, %v1282, %v1283
      %v1285 = vrot.slane %v238, 5
      %v1286 = vrot.slane %v1285, 4
      %v1287 = vrot.slane %v239, 5
      %v1288 = vsel %vm1242, %v1286, %v1287
      %v1289 = vrot.slane %v1287, 4
      %v1290 = vrot.slane %v240, 5
      %v1291 = vsel %vm1242, %v1289, %v1290
      %v1292 = vrot.slane %v241, 5
      %v1293 = vrot.slane %v1292, 4
      %v1294 = vrot.slane %v242, 5
      %v1295 = vsel %vm1242, %v1293, %v1294
      %v1296 = vrot.slane %v1294, 4
      %v1297 = vrot.slane %v243, 5
      %v1298 = vsel %vm1242, %v1296, %v1297
      %v1299 = vrot.slane %v244, 5
      %v1300 = vrot.slane %v1299, 4
      %v1301 = vrot.slane %v245, 5
      %v1302 = vsel %vm1242, %v1300, %v1301
      %v1303 = vrot.slane %v1301, 4
      %v1304 = vrot.slane %v246, 5
      %v1305 = vsel %vm1242, %v1303, %v1304
      %v1306 = vrot.slane %v247, 5
      %v1307 = vrot.slane %v1306, 4
      %v1308 = vrot.slane %v248, 5
      %v1309 = vsel %vm1242, %v1307, %v1308
      %v1310 = vrot.slane %v1308, 4
      %v1311 = vrot.slane %v249, 5
      %v1312 = vsel %vm1242, %v1310, %v1311
      %v1313 = vrot.slane %v250, 5
      %v1314 = vrot.slane %v1313, 4
      %v1315 = vrot.slane %v251, 5
      %v1316 = vsel %vm1242, %v1314, %v1315
      %v1317 = vrot.slane %v1315, 4
      %v1318 = vrot.slane %v252, 5
      %v1319 = vsel %vm1242, %v1317, %v1318
      %v1320 = vrot.slane %v253, 5
      %v1321 = vrot.slane %v1320, 4
      %v1322 = vrot.slane %v254, 5
      %v1323 = vsel %vm1242, %v1321, %v1322
      %v1324 = vrot.slane %v1322, 4
      %v1325 = vrot.slane %v255, 5
      %v1326 = vsel %vm1242, %v1324, %v1325
      %v1327 = vrot.slane %v256, 5
      %v1328 = vrot.slane %v1327, 4
      %v1329 = vrot.slane %v257, 5
      %v1330 = vsel %vm1242, %v1328, %v1329
      %v1331 = vrot.slane %v1329, 4
      %v1332 = vrot.slane %v258, 5
      %v1333 = vsel %vm1242, %v1331, %v1332
      %v1334 = vrot.slane %v259, 5
      %v1335 = vrot.slane %v1334, 4
      %v1336 = vrot.slane %v260, 5
      %v1337 = vsel %vm1242, %v1335, %v1336
      %v1338 = vrot.slane %v1336, 4
      %v1339 = vrot.slane %v261, 5
      %v1340 = vsel %vm1242, %v1338, %v1339
      %v1341 = vrot.slane %v262, 5
      %v1342 = vrot.slane %v1341, 4
      %v1343 = vrot.slane %v263, 5
      %v1344 = vsel %vm1242, %v1342, %v1343
      %v1345 = vrot.slane %v1343, 4
      %v1346 = vrot.slane %v264, 5
      %v1347 = vsel %vm1242, %v1345, %v1346
      %v1348 = vrot.slane %v265, 5
      %v1349 = vrot.slane %v1348, 4
      %v1350 = vrot.slane %v266, 5
      %v1351 = vsel %vm1242, %v1349, %v1350
      %v1352 = vrot.slane %v1350, 4
      %v1353 = vrot.slane %v267, 5
      %v1354 = vsel %vm1242, %v1352, %v1353
      %v1355 = vunpack.c.l.b16 %v1246
      %v1356 = vunpack.c.l.b16 %v1249
      %v1357 = vunpack.c.l.b16 %v1253
      %v1358 = vunpack.c.l.b16 %v1256
      %v1359 = vunpack.c.l.b16 %v1260
      %v1360 = vunpack.c.l.b16 %v1263
      %v1361 = vunpack.c.l.b16 %v1267
      %v1362 = vunpack.c.l.b16 %v1270
      %v1363 = vunpack.c.l.b16 %v1274
      %v1364 = vunpack.c.l.b16 %v1277
      %v1365 = vunpack.c.l.b16 %v1281
      %v1366 = vunpack.c.l.b16 %v1284
      %v1367 = vunpack.c.l.b16 %v1288
      %v1368 = vunpack.c.l.b16 %v1291
      %v1369 = vunpack.c.l.b16 %v1295
      %v1370 = vunpack.c.l.b16 %v1298
      %v1371 = vunpack.c.l.b16 %v1302
      %v1372 = vunpack.c.l.b16 %v1305
      %v1373 = vunpack.c.l.b16 %v1309
      %v1374 = vunpack.c.l.b16 %v1312
      %v1375 = vunpack.c.l.b16 %v1316
      %v1376 = vunpack.c.l.b16 %v1319
      %v1377 = vunpack.c.l.b16 %v1323
      %v1378 = vunpack.c.l.b16 %v1326
      %v1379 = vunpack.c.l.b16 %v1330
      %v1380 = vunpack.c.l.b16 %v1333
      %v1381 = vunpack.c.l.b16 %v1337
      %v1382 = vunpack.c.l.b16 %v1340
      %v1383 = vunpack.c.l.b16 %v1344
      %v1384 = vunpack.c.l.b16 %v1347
      %v1385 = vunpack.c.l.b16 %v1351
      %v1386 = vunpack.c.l.b16 %v1354
      %v1387 = vpack.c.b16 %v1356, %v1355
      %v1388 = vpack.c.b16 %v1358, %v1357
      %v1389 = vpack.c.b16 %v1360, %v1359
      %v1390 = vpack.c.b16 %v1362, %v1361
      %v1391 = vpack.c.b16 %v1364, %v1363
      %v1392 = vpack.c.b16 %v1366, %v1365
      %v1393 = vpack.c.b16 %v1368, %v1367
      %v1394 = vpack.c.b16 %v1370, %v1369
      %v1395 = vpack.c.b16 %v1372, %v1371
      %v1396 = vpack.c.b16 %v1374, %v1373
      %v1397 = vpack.c.b16 %v1376, %v1375
      %v1398 = vpack.c.b16 %v1378, %v1377
      %v1399 = vpack.c.b16 %v1380, %v1379
      %v1400 = vpack.c.b16 %v1382, %v1381
      %v1401 = vpack.c.b16 %v1384, %v1383
      %v1402 = vpack.c.b16 %v1386, %v1385
      %v1404 = vsel %vm718, %v1387, 0
      %v1407 = vsel %vm718, %v1388, 0
      %v1410 = vsel %vm718, %v1389, 0
      %v1413 = vsel %vm718, %v1390, 0
      %v1416 = vsel %vm718, %v1391, 0
      %v1419 = vsel %vm718, %v1392, 0
      %v1422 = vsel %vm718, %v1393, 0
      %v1425 = vsel %vm718, %v1394, 0
      %v1428 = vsel %vm718, %v1395, 0
      %v1431 = vsel %vm718, %v1396, 0
      %v1434 = vsel %vm718, %v1397, 0
      %v1437 = vsel %vm718, %v1398, 0
      %v1440 = vsel %vm718, %v1399, 0
      %v1443 = vsel %vm718, %v1400, 0
      %v1446 = vsel %vm718, %v1401, 0
      %v1449 = vsel %vm718, %v1402, 0
      %v1452 = vsel %vm767, %v275, 0
      %1454 = vmatprep.subr.bf16.mxu0 0
      %1455 = vmatpush1.bf16.msra.mxu0 %v1452
      %1456 = vmatprep.subr.bf16.mxu0 0
      %1457 = vmatpush1.bf16.msra.mxu0 0
      %1458 = vmatprep.subr.bf16.mxu0 0
      %1459 = vmatpush1.bf16.msra.mxu0 0
      %1460 = vmatprep.subr.bf16.mxu0 0
      %1461 = vmatpush1.bf16.msra.mxu0 0
      %1462 = vmatprep.subr.bf16.mxu0 0
      %1463 = vmatpush1.bf16.msra.mxu0 0
      %1464 = vmatprep.subr.bf16.mxu0 0
      %1465 = vmatpush1.bf16.msra.mxu0 0
      %1466 = vmatprep.subr.bf16.mxu0 0
      %1467 = vmatpush1.bf16.msra.mxu0 0
      %1468 = vmatprep.subr.bf16.mxu0 0
      %1469 = vmatpush1.bf16.msra.mxu0 0
      %1470 = vmatprep.subr.bf16.mxu0 0
      %1471 = vmatpush1.bf16.msra.mxu0 0
      %1472 = vmatprep.subr.bf16.mxu0 0
      %1473 = vmatpush1.bf16.msra.mxu0 0
      %1474 = vmatprep.subr.bf16.mxu0 0
      %1475 = vmatpush1.bf16.msra.mxu0 0
      %1476 = vmatprep.subr.bf16.mxu0 0
      %1477 = vmatpush1.bf16.msra.mxu0 0
      %1478 = vmatprep.subr.bf16.mxu0 0
      %1479 = vmatpush1.bf16.msra.mxu0 0
      %1480 = vmatprep.subr.bf16.mxu0 0
      %1481 = vmatpush1.bf16.msra.mxu0 0
      %1482 = vmatprep.subr.bf16.mxu0 0
      %1483 = vmatpush1.bf16.msra.mxu0 0
      %1484 = vmatprep.subr.bf16.mxu0 0
      %1485 = vmatpush1.bf16.msra.mxu0 0
      %1486 = vmatprep.mubr.bf16.mxu0 0
      %1487 = vmatmul.mubr.bf16.gmra.mrb[0].mxu0 %v1404
      %v1488 = vpop.f32.mrb[0].mxu0
      %v1489 = vadd.f32 0.0, %v1488
      %v1490 = vpop.f32.mrb[0].mxu0
      %v1491 = vpop.f32.mrb[0].mxu0
      %v1492 = vadd.f32 0.0, %v1491
      %v1493 = vpop.f32.mrb[0].mxu0
      %1494 = vmatprep.mubr.bf16.mxu0 0
      %1495 = vmatmul.mubr.bf16.gmra.mrb[0].mxu0 %v1407
      %v1496 = vpop.f32.mrb[0].mxu0
      %v1497 = vadd.f32 0.0, %v1496
      %v1498 = vpop.f32.mrb[0].mxu0
      %v1499 = vpop.f32.mrb[0].mxu0
      %v1500 = vadd.f32 0.0, %v1499
      %v1501 = vpop.f32.mrb[0].mxu0
      %1502 = vmatprep.mubr.bf16.mxu0 0
      %1503 = vmatmul.mubr.bf16.gmra.mrb[0].mxu0 %v1410
      %v1504 = vpop.f32.mrb[0].mxu0
      %v1505 = vadd.f32 0.0, %v1504
      %v1506 = vpop.f32.mrb[0].mxu0
      %v1507 = vpop.f32.mrb[0].mxu0
      %v1508 = vadd.f32 0.0, %v1507
      %v1509 = vpop.f32.mrb[0].mxu0
      %1510 = vmatprep.mubr.bf16.mxu0 0
      %1511 = vmatmul.mubr.bf16.gmra.mrb[0].mxu0 %v1413
      %v1512 = vpop.f32.mrb[0].mxu0
      %v1513 = vadd.f32 0.0, %v1512
      %v1514 = vpop.f32.mrb[0].mxu0
      %v1515 = vpop.f32.mrb[0].mxu0
      %v1516 = vadd.f32 0.0, %v1515
      %v1517 = vpop.f32.mrb[0].mxu0
      %1518 = vmatprep.mubr.bf16.mxu0 0
      %1519 = vmatmul.mubr.bf16.gmra.mrb[0].mxu0 %v1416
      %v1520 = vpop.f32.mrb[0].mxu0
      %v1521 = vadd.f32 0.0, %v1520
      %v1522 = vpop.f32.mrb[0].mxu0
      %v1523 = vpop.f32.mrb[0].mxu0
      %v1524 = vadd.f32 0.0, %v1523
      %v1525 = vpop.f32.mrb[0].mxu0
      %1526 = vmatprep.mubr.bf16.mxu0 0
      %1527 = vmatmul.mubr.bf16.gmra.mrb[0].mxu0 %v1419
      %v1528 = vpop.f32.mrb[0].mxu0
      %v1529 = vadd.f32 0.0, %v1528
      %v1530 = vpop.f32.mrb[0].mxu0
      %v1531 = vpop.f32.mrb[0].mxu0
      %v1532 = vadd.f32 0.0, %v1531
      %v1533 = vpop.f32.mrb[0].mxu0
      %1534 = vmatprep.mubr.bf16.mxu0 0
      %1535 = vmatmul.mubr.bf16.gmra.mrb[0].mxu0 %v1422
      %v1536 = vpop.f32.mrb[0].mxu0
      %v1537 = vadd.f32 0.0, %v1536
      %v1538 = vpop.f32.mrb[0].mxu0
      %v1539 = vpop.f32.mrb[0].mxu0
      %v1540 = vadd.f32 0.0, %v1539
      %v1541 = vpop.f32.mrb[0].mxu0
      %1542 = vmatprep.mubr.bf16.mxu0 0
      %1543 = vmatmul.mubr.bf16.gmra.mrb[0].mxu0 %v1425
      %v1544 = vpop.f32.mrb[0].mxu0
      %v1545 = vadd.f32 0.0, %v1544
      %v1546 = vpop.f32.mrb[0].mxu0
      %v1547 = vpop.f32.mrb[0].mxu0
      %v1548 = vadd.f32 0.0, %v1547
      %v1549 = vpop.f32.mrb[0].mxu0
      %1550 = vmatprep.mubr.bf16.mxu0 0
      %1551 = vmatmul.mubr.bf16.gmra.mrb[0].mxu0 %v1428
      %v1552 = vpop.f32.mrb[0].mxu0
      %v1553 = vadd.f32 0.0, %v1552
      %v1554 = vpop.f32.mrb[0].mxu0
      %v1555 = vpop.f32.mrb[0].mxu0
      %v1556 = vadd.f32 0.0, %v1555
      %v1557 = vpop.f32.mrb[0].mxu0
      %1558 = vmatprep.mubr.bf16.mxu0 0
      %1559 = vmatmul.mubr.bf16.gmra.mrb[0].mxu0 %v1431
      %v1560 = vpop.f32.mrb[0].mxu0
      %v1561 = vadd.f32 0.0, %v1560
      %v1562 = vpop.f32.mrb[0].mxu0
      %v1563 = vpop.f32.mrb[0].mxu0
      %v1564 = vadd.f32 0.0, %v1563
      %v1565 = vpop.f32.mrb[0].mxu0
      %1566 = vmatprep.mubr.bf16.mxu0 0
      %1567 = vmatmul.mubr.bf16.gmra.mrb[0].mxu0 %v1434
      %v1568 = vpop.f32.mrb[0].mxu0
      %v1569 = vadd.f32 0.0, %v1568
      %v1570 = vpop.f32.mrb[0].mxu0
      %v1571 = vpop.f32.mrb[0].mxu0
      %v1572 = vadd.f32 0.0, %v1571
      %v1573 = vpop.f32.mrb[0].mxu0
      %1574 = vmatprep.mubr.bf16.mxu0 0
      %1575 = vmatmul.mubr.bf16.gmra.mrb[0].mxu0 %v1437
      %v1576 = vpop.f32.mrb[0].mxu0
      %v1577 = vadd.f32 0.0, %v1576
      %v1578 = vpop.f32.mrb[0].mxu0
      %v1579 = vpop.f32.mrb[0].mxu0
      %v1580 = vadd.f32 0.0, %v1579
      %v1581 = vpop.f32.mrb[0].mxu0
      %1582 = vmatprep.mubr.bf16.mxu0 0
      %1583 = vmatmul.mubr.bf16.gmra.mrb[0].mxu0 %v1440
      %v1584 = vpop.f32.mrb[0].mxu0
      %v1585 = vadd.f32 0.0, %v1584
      %v1586 = vpop.f32.mrb[0].mxu0
      %v1587 = vpop.f32.mrb[0].mxu0
      %v1588 = vadd.f32 0.0, %v1587
      %v1589 = vpop.f32.mrb[0].mxu0
      %1590 = vmatprep.mubr.bf16.mxu0 0
      %1591 = vmatmul.mubr.bf16.gmra.mrb[0].mxu0 %v1443
      %v1592 = vpop.f32.mrb[0].mxu0
      %v1593 = vadd.f32 0.0, %v1592
      %v1594 = vpop.f32.mrb[0].mxu0
      %v1595 = vpop.f32.mrb[0].mxu0
      %v1596 = vadd.f32 0.0, %v1595
      %v1597 = vpop.f32.mrb[0].mxu0
      %1598 = vmatprep.mubr.bf16.mxu0 0
      %1599 = vmatmul.mubr.bf16.gmra.mrb[0].mxu0 %v1446
      %v1600 = vpop.f32.mrb[0].mxu0
      %v1601 = vadd.f32 0.0, %v1600
      %v1602 = vpop.f32.mrb[0].mxu0
      %v1603 = vpop.f32.mrb[0].mxu0
      %v1604 = vadd.f32 0.0, %v1603
      %v1605 = vpop.f32.mrb[0].mxu0
      %1606 = vmatprep.mubr.bf16.mxu0 0
      %1607 = vmatmul.mubr.bf16.gmra.mrb[0].mxu0 %v1449
      %v1608 = vpop.f32.mrb[0].mxu0
      %v1609 = vadd.f32 0.0, %v1608
      %v1610 = vpop.f32.mrb[0].mxu0
      %v1611 = vpop.f32.mrb[0].mxu0
      %v1612 = vadd.f32 0.0, %v1611
      %v1613 = vpop.f32.mrb[0].mxu0
      %1614 = vdwg.mxu0
      %v1615 = vadd.f32 %v1098, %v1489
      %v1616 = vadd.f32 %v1101, %v1492
      %v1617 = vadd.f32 %v1106, %v1497
      %v1618 = vadd.f32 %v1109, %v1500
      %v1619 = vadd.f32 %v1114, %v1505
      %v1620 = vadd.f32 %v1117, %v1508
      %v1621 = vadd.f32 %v1122, %v1513
      %v1622 = vadd.f32 %v1125, %v1516
      %v1623 = vadd.f32 %v1130, %v1521
      %v1624 = vadd.f32 %v1133, %v1524
      %v1625 = vadd.f32 %v1138, %v1529
      %v1626 = vadd.f32 %v1141, %v1532
      %v1627 = vadd.f32 %v1146, %v1537
      %v1628 = vadd.f32 %v1149, %v1540
      %v1629 = vadd.f32 %v1154, %v1545
      %v1630 = vadd.f32 %v1157, %v1548
      %v1631 = vadd.f32 %v1162, %v1553
      %v1632 = vadd.f32 %v1165, %v1556
      %v1633 = vadd.f32 %v1170, %v1561
      %v1634 = vadd.f32 %v1173, %v1564
      %v1635 = vadd.f32 %v1178, %v1569
      %v1636 = vadd.f32 %v1181, %v1572
      %v1637 = vadd.f32 %v1186, %v1577
      %v1638 = vadd.f32 %v1189, %v1580
      %v1639 = vadd.f32 %v1194, %v1585
      %v1640 = vadd.f32 %v1197, %v1588
      %v1641 = vadd.f32 %v1202, %v1593
      %v1642 = vadd.f32 %v1205, %v1596
      %v1643 = vadd.f32 %v1210, %v1601
      %v1644 = vadd.f32 %v1213, %v1604
      %v1645 = vadd.f32 %v1218, %v1609
      %v1646 = vadd.f32 %v1221, %v1612
      %v1649 = vunpack.c.l.b16 %v268
      %v1650 = vunpack.c.l.b16 %v269
      %v1651 = vpack.c.b16 %v1650, %v1649
      %v1653 = vunpack.c.l.b16 %v275
      %v1654 = vpack.c.b16 %v1653, %v1653
      %v1655 = vrot.slane %v1654, 2
      %v1657 = vsel %vm718, %v1651, 0
      %v1660 = vsel %vm767, %v1655, 0
      %1662 = vmatprep.subr.bf16.mxu0 0
      %1663 = vmatpush1.bf16.msra.mxu0 %v1660
      %1664 = vmatprep.subr.bf16.mxu0 0
      %1665 = vmatpush1.bf16.msra.mxu0 0
      %1666 = vmatprep.subr.bf16.mxu0 0
      %1667 = vmatpush1.bf16.msra.mxu0 0
      %1668 = vmatprep.subr.bf16.mxu0 0
      %1669 = vmatpush1.bf16.msra.mxu0 0
      %1670 = vmatprep.subr.bf16.mxu0 0
      %1671 = vmatpush1.bf16.msra.mxu0 0
      %1672 = vmatprep.subr.bf16.mxu0 0
      %1673 = vmatpush1.bf16.msra.mxu0 0
      %1674 = vmatprep.subr.bf16.mxu0 0
      %1675 = vmatpush1.bf16.msra.mxu0 0
      %1676 = vmatprep.subr.bf16.mxu0 0
      %1677 = vmatpush1.bf16.msra.mxu0 0
      %1678 = vmatprep.subr.bf16.mxu0 0
      %1679 = vmatpush1.bf16.msra.mxu0 0
      %1680 = vmatprep.subr.bf16.mxu0 0
      %1681 = vmatpush1.bf16.msra.mxu0 0
      %1682 = vmatprep.subr.bf16.mxu0 0
      %1683 = vmatpush1.bf16.msra.mxu0 0
      %1684 = vmatprep.subr.bf16.mxu0 0
      %1685 = vmatpush1.bf16.msra.mxu0 0
      %1686 = vmatprep.subr.bf16.mxu0 0
      %1687 = vmatpush1.bf16.msra.mxu0 0
      %1688 = vmatprep.subr.bf16.mxu0 0
      %1689 = vmatpush1.bf16.msra.mxu0 0
      %1690 = vmatprep.subr.bf16.mxu0 0
      %1691 = vmatpush1.bf16.msra.mxu0 0
      %1692 = vmatprep.subr.bf16.mxu0 0
      %1693 = vmatpush1.bf16.msra.mxu0 0
      %1694 = vmatprep.mubr.bf16.mxu0 0
      %1695 = vmatmul.mubr.bf16.gmra.mrb[0].mxu0 %v1016
      %v1696 = vpop.f32.mrb[0].mxu0
      %v1697 = vadd.f32 0.0, %v1696
      %v1698 = vpop.f32.mrb[0].mxu0
      %v1699 = vpop.f32.mrb[0].mxu0
      %v1700 = vadd.f32 0.0, %v1699
      %v1701 = vpop.f32.mrb[0].mxu0
      %1702 = vmatprep.mubr.bf16.mxu0 0
      %1703 = vmatmul.mubr.bf16.gmra.mrb[0].mxu0 %v1019
      %v1704 = vpop.f32.mrb[0].mxu0
      %v1705 = vadd.f32 0.0, %v1704
      %v1706 = vpop.f32.mrb[0].mxu0
      %v1707 = vpop.f32.mrb[0].mxu0
      %v1708 = vadd.f32 0.0, %v1707
      %v1709 = vpop.f32.mrb[0].mxu0
      %1710 = vmatprep.mubr.bf16.mxu0 0
      %1711 = vmatmul.mubr.bf16.gmra.mrb[0].mxu0 %v1022
      %v1712 = vpop.f32.mrb[0].mxu0
      %v1713 = vadd.f32 0.0, %v1712
      %v1714 = vpop.f32.mrb[0].mxu0
      %v1715 = vpop.f32.mrb[0].mxu0
      %v1716 = vadd.f32 0.0, %v1715
      %v1717 = vpop.f32.mrb[0].mxu0
      %1718 = vmatprep.mubr.bf16.mxu0 0
      %1719 = vmatmul.mubr.bf16.gmra.mrb[0].mxu0 %v1025
      %v1720 = vpop.f32.mrb[0].mxu0
      %v1721 = vadd.f32 0.0, %v1720
      %v1722 = vpop.f32.mrb[0].mxu0
      %v1723 = vpop.f32.mrb[0].mxu0
      %v1724 = vadd.f32 0.0, %v1723
      %v1725 = vpop.f32.mrb[0].mxu0
      %1726 = vmatprep.mubr.bf16.mxu0 0
      %1727 = vmatmul.mubr.bf16.gmra.mrb[0].mxu0 %v1028
      %v1728 = vpop.f32.mrb[0].mxu0
      %v1729 = vadd.f32 0.0, %v1728
      %v1730 = vpop.f32.mrb[0].mxu0
      %v1731 = vpop.f32.mrb[0].mxu0
      %v1732 = vadd.f32 0.0, %v1731
      %v1733 = vpop.f32.mrb[0].mxu0
      %1734 = vmatprep.mubr.bf16.mxu0 0
      %1735 = vmatmul.mubr.bf16.gmra.mrb[0].mxu0 %v1031
      %v1736 = vpop.f32.mrb[0].mxu0
      %v1737 = vadd.f32 0.0, %v1736
      %v1738 = vpop.f32.mrb[0].mxu0
      %v1739 = vpop.f32.mrb[0].mxu0
      %v1740 = vadd.f32 0.0, %v1739
      %v1741 = vpop.f32.mrb[0].mxu0
      %1742 = vmatprep.mubr.bf16.mxu0 0
      %1743 = vmatmul.mubr.bf16.gmra.mrb[0].mxu0 %v1034
      %v1744 = vpop.f32.mrb[0].mxu0
      %v1745 = vadd.f32 0.0, %v1744
      %v1746 = vpop.f32.mrb[0].mxu0
      %v1747 = vpop.f32.mrb[0].mxu0
      %v1748 = vadd.f32 0.0, %v1747
      %v1749 = vpop.f32.mrb[0].mxu0
      %1750 = vmatprep.mubr.bf16.mxu0 0
      %1751 = vmatmul.mubr.bf16.gmra.mrb[0].mxu0 %v1037
      %v1752 = vpop.f32.mrb[0].mxu0
      %v1753 = vadd.f32 0.0, %v1752
      %v1754 = vpop.f32.mrb[0].mxu0
      %v1755 = vpop.f32.mrb[0].mxu0
      %v1756 = vadd.f32 0.0, %v1755
      %v1757 = vpop.f32.mrb[0].mxu0
      %1758 = vmatprep.mubr.bf16.mxu0 0
      %1759 = vmatmul.mubr.bf16.gmra.mrb[0].mxu0 %v1040
      %v1760 = vpop.f32.mrb[0].mxu0
      %v1761 = vadd.f32 0.0, %v1760
      %v1762 = vpop.f32.mrb[0].mxu0
      %v1763 = vpop.f32.mrb[0].mxu0
      %v1764 = vadd.f32 0.0, %v1763
      %v1765 = vpop.f32.mrb[0].mxu0
      %1766 = vmatprep.mubr.bf16.mxu0 0
      %1767 = vmatmul.mubr.bf16.gmra.mrb[0].mxu0 %v1043
      %v1768 = vpop.f32.mrb[0].mxu0
      %v1769 = vadd.f32 0.0, %v1768
      %v1770 = vpop.f32.mrb[0].mxu0
      %v1771 = vpop.f32.mrb[0].mxu0
      %v1772 = vadd.f32 0.0, %v1771
      %v1773 = vpop.f32.mrb[0].mxu0
      %1774 = vmatprep.mubr.bf16.mxu0 0
      %1775 = vmatmul.mubr.bf16.gmra.mrb[0].mxu0 %v1046
      %v1776 = vpop.f32.mrb[0].mxu0
      %v1777 = vadd.f32 0.0, %v1776
      %v1778 = vpop.f32.mrb[0].mxu0
      %v1779 = vpop.f32.mrb[0].mxu0
      %v1780 = vadd.f32 0.0, %v1779
      %v1781 = vpop.f32.mrb[0].mxu0
      %1782 = vmatprep.mubr.bf16.mxu0 0
      %1783 = vmatmul.mubr.bf16.gmra.mrb[0].mxu0 %v1049
      %v1784 = vpop.f32.mrb[0].mxu0
      %v1785 = vadd.f32 0.0, %v1784
      %v1786 = vpop.f32.mrb[0].mxu0
      %v1787 = vpop.f32.mrb[0].mxu0
      %v1788 = vadd.f32 0.0, %v1787
      %v1789 = vpop.f32.mrb[0].mxu0
      %1790 = vmatprep.mubr.bf16.mxu0 0
      %1791 = vmatmul.mubr.bf16.gmra.mrb[0].mxu0 %v1052
      %v1792 = vpop.f32.mrb[0].mxu0
      %v1793 = vadd.f32 0.0, %v1792
      %v1794 = vpop.f32.mrb[0].mxu0
      %v1795 = vpop.f32.mrb[0].mxu0
      %v1796 = vadd.f32 0.0, %v1795
      %v1797 = vpop.f32.mrb[0].mxu0
      %1798 = vmatprep.mubr.bf16.mxu0 0
      %1799 = vmatmul.mubr.bf16.gmra.mrb[0].mxu0 %v1055
      %v1800 = vpop.f32.mrb[0].mxu0
      %v1801 = vadd.f32 0.0, %v1800
      %v1802 = vpop.f32.mrb[0].mxu0
      %v1803 = vpop.f32.mrb[0].mxu0
      %v1804 = vadd.f32 0.0, %v1803
      %v1805 = vpop.f32.mrb[0].mxu0
      %1806 = vmatprep.mubr.bf16.mxu0 0
      %1807 = vmatmul.mubr.bf16.gmra.mrb[0].mxu0 %v1058
      %v1808 = vpop.f32.mrb[0].mxu0
      %v1809 = vadd.f32 0.0, %v1808
      %v1810 = vpop.f32.mrb[0].mxu0
      %v1811 = vpop.f32.mrb[0].mxu0
      %v1812 = vadd.f32 0.0, %v1811
      %v1813 = vpop.f32.mrb[0].mxu0
      %1814 = vmatprep.mubr.bf16.mxu0 0
      %1815 = vmatmul.mubr.bf16.gmra.mrb[0].mxu0 %v1657
      %v1816 = vpop.f32.mrb[0].mxu0
      %v1817 = vadd.f32 0.0, %v1816
      %v1818 = vpop.f32.mrb[0].mxu0
      %v1819 = vpop.f32.mrb[0].mxu0
      %v1820 = vadd.f32 0.0, %v1819
      %v1821 = vpop.f32.mrb[0].mxu0
      %1822 = vdwg.mxu0
      %v1823 = vadd.f32 %v1615, %v1697
      %v1824 = vadd.f32 %v1616, %v1700
      %v1825 = vadd.f32 %v1617, %v1705
      %v1826 = vadd.f32 %v1618, %v1708
      %v1827 = vadd.f32 %v1619, %v1713
      %v1828 = vadd.f32 %v1620, %v1716
      %v1829 = vadd.f32 %v1621, %v1721
      %v1830 = vadd.f32 %v1622, %v1724
      %v1831 = vadd.f32 %v1623, %v1729
      %v1832 = vadd.f32 %v1624, %v1732
      %v1833 = vadd.f32 %v1625, %v1737
      %v1834 = vadd.f32 %v1626, %v1740
      %v1835 = vadd.f32 %v1627, %v1745
      %v1836 = vadd.f32 %v1628, %v1748
      %v1837 = vadd.f32 %v1629, %v1753
      %v1838 = vadd.f32 %v1630, %v1756
      %v1839 = vadd.f32 %v1631, %v1761
      %v1840 = vadd.f32 %v1632, %v1764
      %v1841 = vadd.f32 %v1633, %v1769
      %v1842 = vadd.f32 %v1634, %v1772
      %v1843 = vadd.f32 %v1635, %v1777
      %v1844 = vadd.f32 %v1636, %v1780
      %v1845 = vadd.f32 %v1637, %v1785
      %v1846 = vadd.f32 %v1638, %v1788
      %v1847 = vadd.f32 %v1639, %v1793
      %v1848 = vadd.f32 %v1640, %v1796
      %v1849 = vadd.f32 %v1641, %v1801
      %v1850 = vadd.f32 %v1642, %v1804
      %v1851 = vadd.f32 %v1643, %v1809
      %v1852 = vadd.f32 %v1644, %v1812
      %v1853 = vadd.f32 %v1645, %v1817
      %v1854 = vadd.f32 %v1646, %v1820
      %v1856 = vshrl.u32 %v268, 16
      %v1858 = vrot.slane %v1856, 4
      %v1859 = vshll.u32 %v268, 16
      %v1861 = vrot.slane %v1859, 5
      %v1862 = vor.u32 %v1858, %v1861
      %v1863 = vrot.slane %v1862, 4
      %v1865 = vshll.u32 %v269, 16
      %v1867 = vrot.slane %v1865, 5
      %v1868 = vsel %vm281, %v1863, %v1867
      %v1869 = vshrl.u32 %v269, 16
      %v1871 = vrot.slane %v1869, 4
      %v1872 = vor.u32 %v1871, %v1867
      %v1873 = vrot.slane %v1872, 4
      %v1875 = vshll.u32 %v270, 16
      %v1877 = vrot.slane %v1875, 5
      %v1878 = vsel %vm281, %v1873, %v1877
      %v1879 = vunpack.c.l.b16 %v1868
      %v1880 = vunpack.c.l.b16 %v1878
      %v1881 = vpack.c.b16 %v1880, %v1879
      %v1883 = vsel %vm718, %v1881, 0
      %v1886 = vsel %vm767, %v276, 0
      %1888 = vmatprep.subr.bf16.mxu0 0
      %1889 = vmatpush1.bf16.msra.mxu0 %v1886
      %1890 = vmatprep.subr.bf16.mxu0 0
      %1891 = vmatpush1.bf16.msra.mxu0 0
      %1892 = vmatprep.subr.bf16.mxu0 0
      %1893 = vmatpush1.bf16.msra.mxu0 0
      %1894 = vmatprep.subr.bf16.mxu0 0
      %1895 = vmatpush1.bf16.msra.mxu0 0
      %1896 = vmatprep.subr.bf16.mxu0 0
      %1897 = vmatpush1.bf16.msra.mxu0 0
      %1898 = vmatprep.subr.bf16.mxu0 0
      %1899 = vmatpush1.bf16.msra.mxu0 0
      %1900 = vmatprep.subr.bf16.mxu0 0
      %1901 = vmatpush1.bf16.msra.mxu0 0
      %1902 = vmatprep.subr.bf16.mxu0 0
      %1903 = vmatpush1.bf16.msra.mxu0 0
      %1904 = vmatprep.subr.bf16.mxu0 0
      %1905 = vmatpush1.bf16.msra.mxu0 0
      %1906 = vmatprep.subr.bf16.mxu0 0
      %1907 = vmatpush1.bf16.msra.mxu0 0
      %1908 = vmatprep.subr.bf16.mxu0 0
      %1909 = vmatpush1.bf16.msra.mxu0 0
      %1910 = vmatprep.subr.bf16.mxu0 0
      %1911 = vmatpush1.bf16.msra.mxu0 0
      %1912 = vmatprep.subr.bf16.mxu0 0
      %1913 = vmatpush1.bf16.msra.mxu0 0
      %1914 = vmatprep.subr.bf16.mxu0 0
      %1915 = vmatpush1.bf16.msra.mxu0 0
      %1916 = vmatprep.subr.bf16.mxu0 0
      %1917 = vmatpush1.bf16.msra.mxu0 0
      %1918 = vmatprep.subr.bf16.mxu0 0
      %1919 = vmatpush1.bf16.msra.mxu0 0
      %1920 = vmatprep.mubr.bf16.mxu0 0
      %1921 = vmatmul.mubr.bf16.gmra.mrb[0].mxu0 %v723
      %v1922 = vpop.f32.mrb[0].mxu0
      %v1923 = vadd.f32 0.0, %v1922
      %v1924 = vpop.f32.mrb[0].mxu0
      %v1925 = vpop.f32.mrb[0].mxu0
      %v1926 = vadd.f32 0.0, %v1925
      %v1927 = vpop.f32.mrb[0].mxu0
      %1928 = vmatprep.mubr.bf16.mxu0 0
      %1929 = vmatmul.mubr.bf16.gmra.mrb[0].mxu0 %v726
      %v1930 = vpop.f32.mrb[0].mxu0
      %v1931 = vadd.f32 0.0, %v1930
      %v1932 = vpop.f32.mrb[0].mxu0
      %v1933 = vpop.f32.mrb[0].mxu0
      %v1934 = vadd.f32 0.0, %v1933
      %v1935 = vpop.f32.mrb[0].mxu0
      %1936 = vmatprep.mubr.bf16.mxu0 0
      %1937 = vmatmul.mubr.bf16.gmra.mrb[0].mxu0 %v729
      %v1938 = vpop.f32.mrb[0].mxu0
      %v1939 = vadd.f32 0.0, %v1938
      %v1940 = vpop.f32.mrb[0].mxu0
      %v1941 = vpop.f32.mrb[0].mxu0
      %v1942 = vadd.f32 0.0, %v1941
      %v1943 = vpop.f32.mrb[0].mxu0
      %1944 = vmatprep.mubr.bf16.mxu0 0
      %1945 = vmatmul.mubr.bf16.gmra.mrb[0].mxu0 %v732
      %v1946 = vpop.f32.mrb[0].mxu0
      %v1947 = vadd.f32 0.0, %v1946
      %v1948 = vpop.f32.mrb[0].mxu0
      %v1949 = vpop.f32.mrb[0].mxu0
      %v1950 = vadd.f32 0.0, %v1949
      %v1951 = vpop.f32.mrb[0].mxu0
      %1952 = vmatprep.mubr.bf16.mxu0 0
      %1953 = vmatmul.mubr.bf16.gmra.mrb[0].mxu0 %v735
      %v1954 = vpop.f32.mrb[0].mxu0
      %v1955 = vadd.f32 0.0, %v1954
      %v1956 = vpop.f32.mrb[0].mxu0
      %v1957 = vpop.f32.mrb[0].mxu0
      %v1958 = vadd.f32 0.0, %v1957
      %v1959 = vpop.f32.mrb[0].mxu0
      %1960 = vmatprep.mubr.bf16.mxu0 0
      %1961 = vmatmul.mubr.bf16.gmra.mrb[0].mxu0 %v738
      %v1962 = vpop.f32.mrb[0].mxu0
      %v1963 = vadd.f32 0.0, %v1962
      %v1964 = vpop.f32.mrb[0].mxu0
      %v1965 = vpop.f32.mrb[0].mxu0
      %v1966 = vadd.f32 0.0, %v1965
      %v1967 = vpop.f32.mrb[0].mxu0
      %1968 = vmatprep.mubr.bf16.mxu0 0
      %1969 = vmatmul.mubr.bf16.gmra.mrb[0].mxu0 %v741
      %v1970 = vpop.f32.mrb[0].mxu0
      %v1971 = vadd.f32 0.0, %v1970
      %v1972 = vpop.f32.mrb[0].mxu0
      %v1973 = vpop.f32.mrb[0].mxu0
      %v1974 = vadd.f32 0.0, %v1973
      %v1975 = vpop.f32.mrb[0].mxu0
      %1976 = vmatprep.mubr.bf16.mxu0 0
      %1977 = vmatmul.mubr.bf16.gmra.mrb[0].mxu0 %v744
      %v1978 = vpop.f32.mrb[0].mxu0
      %v1979 = vadd.f32 0.0, %v1978
      %v1980 = vpop.f32.mrb[0].mxu0
      %v1981 = vpop.f32.mrb[0].mxu0
      %v1982 = vadd.f32 0.0, %v1981
      %v1983 = vpop.f32.mrb[0].mxu0
      %1984 = vmatprep.mubr.bf16.mxu0 0
      %1985 = vmatmul.mubr.bf16.gmra.mrb[0].mxu0 %v747
      %v1986 = vpop.f32.mrb[0].mxu0
      %v1987 = vadd.f32 0.0, %v1986
      %v1988 = vpop.f32.mrb[0].mxu0
      %v1989 = vpop.f32.mrb[0].mxu0
      %v1990 = vadd.f32 0.0, %v1989
      %v1991 = vpop.f32.mrb[0].mxu0
      %1992 = vmatprep.mubr.bf16.mxu0 0
      %1993 = vmatmul.mubr.bf16.gmra.mrb[0].mxu0 %v750
      %v1994 = vpop.f32.mrb[0].mxu0
      %v1995 = vadd.f32 0.0, %v1994
      %v1996 = vpop.f32.mrb[0].mxu0
      %v1997 = vpop.f32.mrb[0].mxu0
      %v1998 = vadd.f32 0.0, %v1997
      %v1999 = vpop.f32.mrb[0].mxu0
      %2000 = vmatprep.mubr.bf16.mxu0 0
      %2001 = vmatmul.mubr.bf16.gmra.mrb[0].mxu0 %v753
      %v2002 = vpop.f32.mrb[0].mxu0
      %v2003 = vadd.f32 0.0, %v2002
      %v2004 = vpop.f32.mrb[0].mxu0
      %v2005 = vpop.f32.mrb[0].mxu0
      %v2006 = vadd.f32 0.0, %v2005
      %v2007 = vpop.f32.mrb[0].mxu0
      %2008 = vmatprep.mubr.bf16.mxu0 0
      %2009 = vmatmul.mubr.bf16.gmra.mrb[0].mxu0 %v756
      %v2010 = vpop.f32.mrb[0].mxu0
      %v2011 = vadd.f32 0.0, %v2010
      %v2012 = vpop.f32.mrb[0].mxu0
      %v2013 = vpop.f32.mrb[0].mxu0
      %v2014 = vadd.f32 0.0, %v2013
      %v2015 = vpop.f32.mrb[0].mxu0
      %2016 = vmatprep.mubr.bf16.mxu0 0
      %2017 = vmatmul.mubr.bf16.gmra.mrb[0].mxu0 %v759
      %v2018 = vpop.f32.mrb[0].mxu0
      %v2019 = vadd.f32 0.0, %v2018
      %v2020 = vpop.f32.mrb[0].mxu0
      %v2021 = vpop.f32.mrb[0].mxu0
      %v2022 = vadd.f32 0.0, %v2021
      %v2023 = vpop.f32.mrb[0].mxu0
      %2024 = vmatprep.mubr.bf16.mxu0 0
      %2025 = vmatmul.mubr.bf16.gmra.mrb[0].mxu0 %v762
      %v2026 = vpop.f32.mrb[0].mxu0
      %v2027 = vadd.f32 0.0, %v2026
      %v2028 = vpop.f32.mrb[0].mxu0
      %v2029 = vpop.f32.mrb[0].mxu0
      %v2030 = vadd.f32 0.0, %v2029
      %v2031 = vpop.f32.mrb[0].mxu0
      %2032 = vmatprep.mubr.bf16.mxu0 0
      %2033 = vmatmul.mubr.bf16.gmra.mrb[0].mxu0 %v765
      %v2034 = vpop.f32.mrb[0].mxu0
      %v2035 = vadd.f32 0.0, %v2034
      %v2036 = vpop.f32.mrb[0].mxu0
      %v2037 = vpop.f32.mrb[0].mxu0
      %v2038 = vadd.f32 0.0, %v2037
      %v2039 = vpop.f32.mrb[0].mxu0
      %2040 = vmatprep.mubr.bf16.mxu0 0
      %2041 = vmatmul.mubr.bf16.gmra.mrb[0].mxu0 %v1883
      %v2042 = vpop.f32.mrb[0].mxu0
      %v2043 = vadd.f32 0.0, %v2042
      %v2044 = vpop.f32.mrb[0].mxu0
      %v2045 = vpop.f32.mrb[0].mxu0
      %v2046 = vadd.f32 0.0, %v2045
      %v2047 = vpop.f32.mrb[0].mxu0
      %2048 = vdwg.mxu0
      %v2049 = vadd.f32 %v1823, %v1923
      %v2050 = vadd.f32 %v1824, %v1926
      %v2051 = vadd.f32 %v1825, %v1931
      %v2052 = vadd.f32 %v1826, %v1934
      %v2053 = vadd.f32 %v1827, %v1939
      %v2054 = vadd.f32 %v1828, %v1942
      %v2055 = vadd.f32 %v1829, %v1947
      %v2056 = vadd.f32 %v1830, %v1950
      %v2057 = vadd.f32 %v1831, %v1955
      %v2058 = vadd.f32 %v1832, %v1958
      %v2059 = vadd.f32 %v1833, %v1963
      %v2060 = vadd.f32 %v1834, %v1966
      %v2061 = vadd.f32 %v1835, %v1971
      %v2062 = vadd.f32 %v1836, %v1974
      %v2063 = vadd.f32 %v1837, %v1979
      %v2064 = vadd.f32 %v1838, %v1982
      %v2065 = vadd.f32 %v1839, %v1987
      %v2066 = vadd.f32 %v1840, %v1990
      %v2067 = vadd.f32 %v1841, %v1995
      %v2068 = vadd.f32 %v1842, %v1998
      %v2069 = vadd.f32 %v1843, %v2003
      %v2070 = vadd.f32 %v1844, %v2006
      %v2071 = vadd.f32 %v1845, %v2011
      %v2072 = vadd.f32 %v1846, %v2014
      %v2073 = vadd.f32 %v1847, %v2019
      %v2074 = vadd.f32 %v1848, %v2022
      %v2075 = vadd.f32 %v1849, %v2027
      %v2076 = vadd.f32 %v1850, %v2030
      %v2077 = vadd.f32 %v1851, %v2035
      %v2078 = vadd.f32 %v1852, %v2038
      %v2079 = vadd.f32 %v1853, %v2043
      %v2080 = vadd.f32 %v1854, %v2046
      %v2082 = vrot.slane %v268, 5
      %v2083 = vrot.slane %v2082, 4
      %v2084 = vrot.slane %v269, 5
      %v2085 = vsel %vm1242, %v2083, %v2084
      %v2086 = vrot.slane %v2084, 4
      %v2087 = vrot.slane %v270, 5
      %v2088 = vsel %vm1242, %v2086, %v2087
      %v2089 = vunpack.c.l.b16 %v2085
      %v2090 = vunpack.c.l.b16 %v2088
      %v2091 = vpack.c.b16 %v2090, %v2089
      %v2093 = vunpack.c.l.b16 %v276
      %v2094 = vpack.c.b16 %v2093, %v2093
      %v2095 = vrot.slane %v2094, 2
      %v2097 = vsel %vm718, %v2091, 0
      %v2100 = vsel %vm767, %v2095, 0
      %2102 = vmatprep.subr.bf16.mxu0 0
      %2103 = vmatpush1.bf16.msra.mxu0 %v2100
      %2104 = vmatprep.subr.bf16.mxu0 0
      %2105 = vmatpush1.bf16.msra.mxu0 0
      %2106 = vmatprep.subr.bf16.mxu0 0
      %2107 = vmatpush1.bf16.msra.mxu0 0
      %2108 = vmatprep.subr.bf16.mxu0 0
      %2109 = vmatpush1.bf16.msra.mxu0 0
      %2110 = vmatprep.subr.bf16.mxu0 0
      %2111 = vmatpush1.bf16.msra.mxu0 0
      %2112 = vmatprep.subr.bf16.mxu0 0
      %2113 = vmatpush1.bf16.msra.mxu0 0
      %2114 = vmatprep.subr.bf16.mxu0 0
      %2115 = vmatpush1.bf16.msra.mxu0 0
      %2116 = vmatprep.subr.bf16.mxu0 0
      %2117 = vmatpush1.bf16.msra.mxu0 0
      %2118 = vmatprep.subr.bf16.mxu0 0
      %2119 = vmatpush1.bf16.msra.mxu0 0
      %2120 = vmatprep.subr.bf16.mxu0 0
      %2121 = vmatpush1.bf16.msra.mxu0 0
      %2122 = vmatprep.subr.bf16.mxu0 0
      %2123 = vmatpush1.bf16.msra.mxu0 0
      %2124 = vmatprep.subr.bf16.mxu0 0
      %2125 = vmatpush1.bf16.msra.mxu0 0
      %2126 = vmatprep.subr.bf16.mxu0 0
      %2127 = vmatpush1.bf16.msra.mxu0 0
      %2128 = vmatprep.subr.bf16.mxu0 0
      %2129 = vmatpush1.bf16.msra.mxu0 0
      %2130 = vmatprep.subr.bf16.mxu0 0
      %2131 = vmatpush1.bf16.msra.mxu0 0
      %2132 = vmatprep.subr.bf16.mxu0 0
      %2133 = vmatpush1.bf16.msra.mxu0 0
      %2134 = vmatprep.mubr.bf16.mxu0 0
      %2135 = vmatmul.mubr.bf16.gmra.mrb[0].mxu0 %v1407
      %v2136 = vpop.f32.mrb[0].mxu0
      %v2137 = vadd.f32 0.0, %v2136
      %v2138 = vpop.f32.mrb[0].mxu0
      %v2139 = vpop.f32.mrb[0].mxu0
      %v2140 = vadd.f32 0.0, %v2139
      %v2141 = vpop.f32.mrb[0].mxu0
      %2142 = vmatprep.mubr.bf16.mxu0 0
      %2143 = vmatmul.mubr.bf16.gmra.mrb[0].mxu0 %v1410
      %v2144 = vpop.f32.mrb[0].mxu0
      %v2145 = vadd.f32 0.0, %v2144
      %v2146 = vpop.f32.mrb[0].mxu0
      %v2147 = vpop.f32.mrb[0].mxu0
      %v2148 = vadd.f32 0.0, %v2147
      %v2149 = vpop.f32.mrb[0].mxu0
      %2150 = vmatprep.mubr.bf16.mxu0 0
      %2151 = vmatmul.mubr.bf16.gmra.mrb[0].mxu0 %v1413
      %v2152 = vpop.f32.mrb[0].mxu0
      %v2153 = vadd.f32 0.0, %v2152
      %v2154 = vpop.f32.mrb[0].mxu0
      %v2155 = vpop.f32.mrb[0].mxu0
      %v2156 = vadd.f32 0.0, %v2155
      %v2157 = vpop.f32.mrb[0].mxu0
      %2158 = vmatprep.mubr.bf16.mxu0 0
      %2159 = vmatmul.mubr.bf16.gmra.mrb[0].mxu0 %v1416
      %v2160 = vpop.f32.mrb[0].mxu0
      %v2161 = vadd.f32 0.0, %v2160
      %v2162 = vpop.f32.mrb[0].mxu0
      %v2163 = vpop.f32.mrb[0].mxu0
      %v2164 = vadd.f32 0.0, %v2163
      %v2165 = vpop.f32.mrb[0].mxu0
      %2166 = vmatprep.mubr.bf16.mxu0 0
      %2167 = vmatmul.mubr.bf16.gmra.mrb[0].mxu0 %v1419
      %v2168 = vpop.f32.mrb[0].mxu0
      %v2169 = vadd.f32 0.0, %v2168
      %v2170 = vpop.f32.mrb[0].mxu0
      %v2171 = vpop.f32.mrb[0].mxu0
      %v2172 = vadd.f32 0.0, %v2171
      %v2173 = vpop.f32.mrb[0].mxu0
      %2174 = vmatprep.mubr.bf16.mxu0 0
      %2175 = vmatmul.mubr.bf16.gmra.mrb[0].mxu0 %v1422
      %v2176 = vpop.f32.mrb[0].mxu0
      %v2177 = vadd.f32 0.0, %v2176
      %v2178 = vpop.f32.mrb[0].mxu0
      %v2179 = vpop.f32.mrb[0].mxu0
      %v2180 = vadd.f32 0.0, %v2179
      %v2181 = vpop.f32.mrb[0].mxu0
      %2182 = vmatprep.mubr.bf16.mxu0 0
      %2183 = vmatmul.mubr.bf16.gmra.mrb[0].mxu0 %v1425
      %v2184 = vpop.f32.mrb[0].mxu0
      %v2185 = vadd.f32 0.0, %v2184
      %v2186 = vpop.f32.mrb[0].mxu0
      %v2187 = vpop.f32.mrb[0].mxu0
      %v2188 = vadd.f32 0.0, %v2187
      %v2189 = vpop.f32.mrb[0].mxu0
      %2190 = vmatprep.mubr.bf16.mxu0 0
      %2191 = vmatmul.mubr.bf16.gmra.mrb[0].mxu0 %v1428
      %v2192 = vpop.f32.mrb[0].mxu0
      %v2193 = vadd.f32 0.0, %v2192
      %v2194 = vpop.f32.mrb[0].mxu0
      %v2195 = vpop.f32.mrb[0].mxu0
      %v2196 = vadd.f32 0.0, %v2195
      %v2197 = vpop.f32.mrb[0].mxu0
      %2198 = vmatprep.mubr.bf16.mxu0 0
      %2199 = vmatmul.mubr.bf16.gmra.mrb[0].mxu0 %v1431
      %v2200 = vpop.f32.mrb[0].mxu0
      %v2201 = vadd.f32 0.0, %v2200
      %v2202 = vpop.f32.mrb[0].mxu0
      %v2203 = vpop.f32.mrb[0].mxu0
      %v2204 = vadd.f32 0.0, %v2203
      %v2205 = vpop.f32.mrb[0].mxu0
      %2206 = vmatprep.mubr.bf16.mxu0 0
      %2207 = vmatmul.mubr.bf16.gmra.mrb[0].mxu0 %v1434
      %v2208 = vpop.f32.mrb[0].mxu0
      %v2209 = vadd.f32 0.0, %v2208
      %v2210 = vpop.f32.mrb[0].mxu0
      %v2211 = vpop.f32.mrb[0].mxu0
      %v2212 = vadd.f32 0.0, %v2211
      %v2213 = vpop.f32.mrb[0].mxu0
      %2214 = vmatprep.mubr.bf16.mxu0 0
      %2215 = vmatmul.mubr.bf16.gmra.mrb[0].mxu0 %v1437
      %v2216 = vpop.f32.mrb[0].mxu0
      %v2217 = vadd.f32 0.0, %v2216
      %v2218 = vpop.f32.mrb[0].mxu0
      %v2219 = vpop.f32.mrb[0].mxu0
      %v2220 = vadd.f32 0.0, %v2219
      %v2221 = vpop.f32.mrb[0].mxu0
      %2222 = vmatprep.mubr.bf16.mxu0 0
      %2223 = vmatmul.mubr.bf16.gmra.mrb[0].mxu0 %v1440
      %v2224 = vpop.f32.mrb[0].mxu0
      %v2225 = vadd.f32 0.0, %v2224
      %v2226 = vpop.f32.mrb[0].mxu0
      %v2227 = vpop.f32.mrb[0].mxu0
      %v2228 = vadd.f32 0.0, %v2227
      %v2229 = vpop.f32.mrb[0].mxu0
      %2230 = vmatprep.mubr.bf16.mxu0 0
      %2231 = vmatmul.mubr.bf16.gmra.mrb[0].mxu0 %v1443
      %v2232 = vpop.f32.mrb[0].mxu0
      %v2233 = vadd.f32 0.0, %v2232
      %v2234 = vpop.f32.mrb[0].mxu0
      %v2235 = vpop.f32.mrb[0].mxu0
      %v2236 = vadd.f32 0.0, %v2235
      %v2237 = vpop.f32.mrb[0].mxu0
      %2238 = vmatprep.mubr.bf16.mxu0 0
      %2239 = vmatmul.mubr.bf16.gmra.mrb[0].mxu0 %v1446
      %v2240 = vpop.f32.mrb[0].mxu0
      %v2241 = vadd.f32 0.0, %v2240
      %v2242 = vpop.f32.mrb[0].mxu0
      %v2243 = vpop.f32.mrb[0].mxu0
      %v2244 = vadd.f32 0.0, %v2243
      %v2245 = vpop.f32.mrb[0].mxu0
      %2246 = vmatprep.mubr.bf16.mxu0 0
      %2247 = vmatmul.mubr.bf16.gmra.mrb[0].mxu0 %v1449
      %v2248 = vpop.f32.mrb[0].mxu0
      %v2249 = vadd.f32 0.0, %v2248
      %v2250 = vpop.f32.mrb[0].mxu0
      %v2251 = vpop.f32.mrb[0].mxu0
      %v2252 = vadd.f32 0.0, %v2251
      %v2253 = vpop.f32.mrb[0].mxu0
      %2254 = vmatprep.mubr.bf16.mxu0 0
      %2255 = vmatmul.mubr.bf16.gmra.mrb[0].mxu0 %v2097
      %v2256 = vpop.f32.mrb[0].mxu0
      %v2257 = vadd.f32 0.0, %v2256
      %v2258 = vpop.f32.mrb[0].mxu0
      %v2259 = vpop.f32.mrb[0].mxu0
      %v2260 = vadd.f32 0.0, %v2259
      %v2261 = vpop.f32.mrb[0].mxu0
      %2262 = vdwg.mxu0
      %v2263 = vadd.f32 %v2049, %v2137
      %v2264 = vadd.f32 %v2050, %v2140
      %v2265 = vadd.f32 %v2051, %v2145
      %v2266 = vadd.f32 %v2052, %v2148
      %v2267 = vadd.f32 %v2053, %v2153
      %v2268 = vadd.f32 %v2054, %v2156
      %v2269 = vadd.f32 %v2055, %v2161
      %v2270 = vadd.f32 %v2056, %v2164
      %v2271 = vadd.f32 %v2057, %v2169
      %v2272 = vadd.f32 %v2058, %v2172
      %v2273 = vadd.f32 %v2059, %v2177
      %v2274 = vadd.f32 %v2060, %v2180
      %v2275 = vadd.f32 %v2061, %v2185
      %v2276 = vadd.f32 %v2062, %v2188
      %v2277 = vadd.f32 %v2063, %v2193
      %v2278 = vadd.f32 %v2064, %v2196
      %v2279 = vadd.f32 %v2065, %v2201
      %v2280 = vadd.f32 %v2066, %v2204
      %v2281 = vadd.f32 %v2067, %v2209
      %v2282 = vadd.f32 %v2068, %v2212
      %v2283 = vadd.f32 %v2069, %v2217
      %v2284 = vadd.f32 %v2070, %v2220
      %v2285 = vadd.f32 %v2071, %v2225
      %v2286 = vadd.f32 %v2072, %v2228
      %v2287 = vadd.f32 %v2073, %v2233
      %v2288 = vadd.f32 %v2074, %v2236
      %v2289 = vadd.f32 %v2075, %v2241
      %v2290 = vadd.f32 %v2076, %v2244
      %v2291 = vadd.f32 %v2077, %v2249
      %v2292 = vadd.f32 %v2078, %v2252
      %v2293 = vadd.f32 %v2079, %v2257
      %v2294 = vadd.f32 %v2080, %v2260
      %v2297 = vunpack.c.l.b16 %v271
      %v2298 = vunpack.c.l.b16 %v272
      %v2299 = vpack.c.b16 %v2298, %v2297
      %v2301 = vsel %vm718, %v2299, 0
      %v2304 = vsel %vm767, %v277, 0
      %2306 = vmatprep.subr.bf16.mxu0 0
      %2307 = vmatpush1.bf16.msra.mxu0 %v2304
      %2308 = vmatprep.subr.bf16.mxu0 0
      %2309 = vmatpush1.bf16.msra.mxu0 0
      %2310 = vmatprep.subr.bf16.mxu0 0
      %2311 = vmatpush1.bf16.msra.mxu0 0
      %2312 = vmatprep.subr.bf16.mxu0 0
      %2313 = vmatpush1.bf16.msra.mxu0 0
      %2314 = vmatprep.subr.bf16.mxu0 0
      %2315 = vmatpush1.bf16.msra.mxu0 0
      %2316 = vmatprep.subr.bf16.mxu0 0
      %2317 = vmatpush1.bf16.msra.mxu0 0
      %2318 = vmatprep.subr.bf16.mxu0 0
      %2319 = vmatpush1.bf16.msra.mxu0 0
      %2320 = vmatprep.subr.bf16.mxu0 0
      %2321 = vmatpush1.bf16.msra.mxu0 0
      %2322 = vmatprep.subr.bf16.mxu0 0
      %2323 = vmatpush1.bf16.msra.mxu0 0
      %2324 = vmatprep.subr.bf16.mxu0 0
      %2325 = vmatpush1.bf16.msra.mxu0 0
      %2326 = vmatprep.subr.bf16.mxu0 0
      %2327 = vmatpush1.bf16.msra.mxu0 0
      %2328 = vmatprep.subr.bf16.mxu0 0
      %2329 = vmatpush1.bf16.msra.mxu0 0
      %2330 = vmatprep.subr.bf16.mxu0 0
      %2331 = vmatpush1.bf16.msra.mxu0 0
      %2332 = vmatprep.subr.bf16.mxu0 0
      %2333 = vmatpush1.bf16.msra.mxu0 0
      %2334 = vmatprep.subr.bf16.mxu0 0
      %2335 = vmatpush1.bf16.msra.mxu0 0
      %2336 = vmatprep.subr.bf16.mxu0 0
      %2337 = vmatpush1.bf16.msra.mxu0 0
      %2338 = vmatprep.mubr.bf16.mxu0 0
      %2339 = vmatmul.mubr.bf16.gmra.mrb[0].mxu0 %v1019
      %v2340 = vpop.f32.mrb[0].mxu0
      %v2341 = vadd.f32 0.0, %v2340
      %v2342 = vpop.f32.mrb[0].mxu0
      %v2343 = vpop.f32.mrb[0].mxu0
      %v2344 = vadd.f32 0.0, %v2343
      %v2345 = vpop.f32.mrb[0].mxu0
      %2346 = vmatprep.mubr.bf16.mxu0 0
      %2347 = vmatmul.mubr.bf16.gmra.mrb[0].mxu0 %v1022
      %v2348 = vpop.f32.mrb[0].mxu0
      %v2349 = vadd.f32 0.0, %v2348
      %v2350 = vpop.f32.mrb[0].mxu0
      %v2351 = vpop.f32.mrb[0].mxu0
      %v2352 = vadd.f32 0.0, %v2351
      %v2353 = vpop.f32.mrb[0].mxu0
      %2354 = vmatprep.mubr.bf16.mxu0 0
      %2355 = vmatmul.mubr.bf16.gmra.mrb[0].mxu0 %v1025
      %v2356 = vpop.f32.mrb[0].mxu0
      %v2357 = vadd.f32 0.0, %v2356
      %v2358 = vpop.f32.mrb[0].mxu0
      %v2359 = vpop.f32.mrb[0].mxu0
      %v2360 = vadd.f32 0.0, %v2359
      %v2361 = vpop.f32.mrb[0].mxu0
      %2362 = vmatprep.mubr.bf16.mxu0 0
      %2363 = vmatmul.mubr.bf16.gmra.mrb[0].mxu0 %v1028
      %v2364 = vpop.f32.mrb[0].mxu0
      %v2365 = vadd.f32 0.0, %v2364
      %v2366 = vpop.f32.mrb[0].mxu0
      %v2367 = vpop.f32.mrb[0].mxu0
      %v2368 = vadd.f32 0.0, %v2367
      %v2369 = vpop.f32.mrb[0].mxu0
      %2370 = vmatprep.mubr.bf16.mxu0 0
      %2371 = vmatmul.mubr.bf16.gmra.mrb[0].mxu0 %v1031
      %v2372 = vpop.f32.mrb[0].mxu0
      %v2373 = vadd.f32 0.0, %v2372
      %v2374 = vpop.f32.mrb[0].mxu0
      %v2375 = vpop.f32.mrb[0].mxu0
      %v2376 = vadd.f32 0.0, %v2375
      %v2377 = vpop.f32.mrb[0].mxu0
      %2378 = vmatprep.mubr.bf16.mxu0 0
      %2379 = vmatmul.mubr.bf16.gmra.mrb[0].mxu0 %v1034
      %v2380 = vpop.f32.mrb[0].mxu0
      %v2381 = vadd.f32 0.0, %v2380
      %v2382 = vpop.f32.mrb[0].mxu0
      %v2383 = vpop.f32.mrb[0].mxu0
      %v2384 = vadd.f32 0.0, %v2383
      %v2385 = vpop.f32.mrb[0].mxu0
      %2386 = vmatprep.mubr.bf16.mxu0 0
      %2387 = vmatmul.mubr.bf16.gmra.mrb[0].mxu0 %v1037
      %v2388 = vpop.f32.mrb[0].mxu0
      %v2389 = vadd.f32 0.0, %v2388
      %v2390 = vpop.f32.mrb[0].mxu0
      %v2391 = vpop.f32.mrb[0].mxu0
      %v2392 = vadd.f32 0.0, %v2391
      %v2393 = vpop.f32.mrb[0].mxu0
      %2394 = vmatprep.mubr.bf16.mxu0 0
      %2395 = vmatmul.mubr.bf16.gmra.mrb[0].mxu0 %v1040
      %v2396 = vpop.f32.mrb[0].mxu0
      %v2397 = vadd.f32 0.0, %v2396
      %v2398 = vpop.f32.mrb[0].mxu0
      %v2399 = vpop.f32.mrb[0].mxu0
      %v2400 = vadd.f32 0.0, %v2399
      %v2401 = vpop.f32.mrb[0].mxu0
      %2402 = vmatprep.mubr.bf16.mxu0 0
      %2403 = vmatmul.mubr.bf16.gmra.mrb[0].mxu0 %v1043
      %v2404 = vpop.f32.mrb[0].mxu0
      %v2405 = vadd.f32 0.0, %v2404
      %v2406 = vpop.f32.mrb[0].mxu0
      %v2407 = vpop.f32.mrb[0].mxu0
      %v2408 = vadd.f32 0.0, %v2407
      %v2409 = vpop.f32.mrb[0].mxu0
      %2410 = vmatprep.mubr.bf16.mxu0 0
      %2411 = vmatmul.mubr.bf16.gmra.mrb[0].mxu0 %v1046
      %v2412 = vpop.f32.mrb[0].mxu0
      %v2413 = vadd.f32 0.0, %v2412
      %v2414 = vpop.f32.mrb[0].mxu0
      %v2415 = vpop.f32.mrb[0].mxu0
      %v2416 = vadd.f32 0.0, %v2415
      %v2417 = vpop.f32.mrb[0].mxu0
      %2418 = vmatprep.mubr.bf16.mxu0 0
      %2419 = vmatmul.mubr.bf16.gmra.mrb[0].mxu0 %v1049
      %v2420 = vpop.f32.mrb[0].mxu0
      %v2421 = vadd.f32 0.0, %v2420
      %v2422 = vpop.f32.mrb[0].mxu0
      %v2423 = vpop.f32.mrb[0].mxu0
      %v2424 = vadd.f32 0.0, %v2423
      %v2425 = vpop.f32.mrb[0].mxu0
      %2426 = vmatprep.mubr.bf16.mxu0 0
      %2427 = vmatmul.mubr.bf16.gmra.mrb[0].mxu0 %v1052
      %v2428 = vpop.f32.mrb[0].mxu0
      %v2429 = vadd.f32 0.0, %v2428
      %v2430 = vpop.f32.mrb[0].mxu0
      %v2431 = vpop.f32.mrb[0].mxu0
      %v2432 = vadd.f32 0.0, %v2431
      %v2433 = vpop.f32.mrb[0].mxu0
      %2434 = vmatprep.mubr.bf16.mxu0 0
      %2435 = vmatmul.mubr.bf16.gmra.mrb[0].mxu0 %v1055
      %v2436 = vpop.f32.mrb[0].mxu0
      %v2437 = vadd.f32 0.0, %v2436
      %v2438 = vpop.f32.mrb[0].mxu0
      %v2439 = vpop.f32.mrb[0].mxu0
      %v2440 = vadd.f32 0.0, %v2439
      %v2441 = vpop.f32.mrb[0].mxu0
      %2442 = vmatprep.mubr.bf16.mxu0 0
      %2443 = vmatmul.mubr.bf16.gmra.mrb[0].mxu0 %v1058
      %v2444 = vpop.f32.mrb[0].mxu0
      %v2445 = vadd.f32 0.0, %v2444
      %v2446 = vpop.f32.mrb[0].mxu0
      %v2447 = vpop.f32.mrb[0].mxu0
      %v2448 = vadd.f32 0.0, %v2447
      %v2449 = vpop.f32.mrb[0].mxu0
      %2450 = vmatprep.mubr.bf16.mxu0 0
      %2451 = vmatmul.mubr.bf16.gmra.mrb[0].mxu0 %v1657
      %v2452 = vpop.f32.mrb[0].mxu0
      %v2453 = vadd.f32 0.0, %v2452
      %v2454 = vpop.f32.mrb[0].mxu0
      %v2455 = vpop.f32.mrb[0].mxu0
      %v2456 = vadd.f32 0.0, %v2455
      %v2457 = vpop.f32.mrb[0].mxu0
      %2458 = vmatprep.mubr.bf16.mxu0 0
      %2459 = vmatmul.mubr.bf16.gmra.mrb[0].mxu0 %v2301
      %v2460 = vpop.f32.mrb[0].mxu0
      %v2461 = vadd.f32 0.0, %v2460
      %v2462 = vpop.f32.mrb[0].mxu0
      %v2463 = vpop.f32.mrb[0].mxu0
      %v2464 = vadd.f32 0.0, %v2463
      %v2465 = vpop.f32.mrb[0].mxu0
      %2466 = vdwg.mxu0
      %v2467 = vadd.f32 %v2263, %v2341
      %v2468 = vadd.f32 %v2264, %v2344
      %v2469 = vadd.f32 %v2265, %v2349
      %v2470 = vadd.f32 %v2266, %v2352
      %v2471 = vadd.f32 %v2267, %v2357
      %v2472 = vadd.f32 %v2268, %v2360
      %v2473 = vadd.f32 %v2269, %v2365
      %v2474 = vadd.f32 %v2270, %v2368
      %v2475 = vadd.f32 %v2271, %v2373
      %v2476 = vadd.f32 %v2272, %v2376
      %v2477 = vadd.f32 %v2273, %v2381
      %v2478 = vadd.f32 %v2274, %v2384
      %v2479 = vadd.f32 %v2275, %v2389
      %v2480 = vadd.f32 %v2276, %v2392
      %v2481 = vadd.f32 %v2277, %v2397
      %v2482 = vadd.f32 %v2278, %v2400
      %v2483 = vadd.f32 %v2279, %v2405
      %v2484 = vadd.f32 %v2280, %v2408
      %v2485 = vadd.f32 %v2281, %v2413
      %v2486 = vadd.f32 %v2282, %v2416
      %v2487 = vadd.f32 %v2283, %v2421
      %v2488 = vadd.f32 %v2284, %v2424
      %v2489 = vadd.f32 %v2285, %v2429
      %v2490 = vadd.f32 %v2286, %v2432
      %v2491 = vadd.f32 %v2287, %v2437
      %v2492 = vadd.f32 %v2288, %v2440
      %v2493 = vadd.f32 %v2289, %v2445
      %v2494 = vadd.f32 %v2290, %v2448
      %v2495 = vadd.f32 %v2291, %v2453
      %v2496 = vadd.f32 %v2292, %v2456
      %v2497 = vadd.f32 %v2293, %v2461
      %v2498 = vadd.f32 %v2294, %v2464
      %v2500 = vshrl.u32 %v271, 16
      %v2502 = vrot.slane %v2500, 4
      %v2503 = vshll.u32 %v271, 16
      %v2505 = vrot.slane %v2503, 5
      %v2506 = vor.u32 %v2502, %v2505
      %v2507 = vrot.slane %v2506, 4
      %v2509 = vshll.u32 %v272, 16
      %v2511 = vrot.slane %v2509, 5
      %v2512 = vsel %vm281, %v2507, %v2511
      %v2513 = vshrl.u32 %v272, 16
      %v2515 = vrot.slane %v2513, 4
      %v2516 = vor.u32 %v2515, %v2511
      %v2517 = vrot.slane %v2516, 4
      %v2519 = vshll.u32 %v273, 16
      %v2521 = vrot.slane %v2519, 5
      %v2522 = vsel %vm281, %v2517, %v2521
      %v2523 = vunpack.c.l.b16 %v2512
      %v2524 = vunpack.c.l.b16 %v2522
      %v2525 = vpack.c.b16 %v2524, %v2523
      %v2527 = vunpack.c.l.b16 %v277
      %v2528 = vpack.c.b16 %v2527, %v2527
      %v2529 = vrot.slane %v2528, 2
      %v2531 = vsel %vm718, %v2525, 0
      %v2534 = vsel %vm767, %v2529, 0
      %2536 = vmatprep.subr.bf16.mxu0 0
      %2537 = vmatpush1.bf16.msra.mxu0 %v2534
      %2538 = vmatprep.subr.bf16.mxu0 0
      %2539 = vmatpush1.bf16.msra.mxu0 0
      %2540 = vmatprep.subr.bf16.mxu0 0
      %2541 = vmatpush1.bf16.msra.mxu0 0
      %2542 = vmatprep.subr.bf16.mxu0 0
      %2543 = vmatpush1.bf16.msra.mxu0 0
      %2544 = vmatprep.subr.bf16.mxu0 0
      %2545 = vmatpush1.bf16.msra.mxu0 0
      %2546 = vmatprep.subr.bf16.mxu0 0
      %2547 = vmatpush1.bf16.msra.mxu0 0
      %2548 = vmatprep.subr.bf16.mxu0 0
      %2549 = vmatpush1.bf16.msra.mxu0 0
      %2550 = vmatprep.subr.bf16.mxu0 0
      %2551 = vmatpush1.bf16.msra.mxu0 0
      %2552 = vmatprep.subr.bf16.mxu0 0
      %2553 = vmatpush1.bf16.msra.mxu0 0
      %2554 = vmatprep.subr.bf16.mxu0 0
      %2555 = vmatpush1.bf16.msra.mxu0 0
      %2556 = vmatprep.subr.bf16.mxu0 0
      %2557 = vmatpush1.bf16.msra.mxu0 0
      %2558 = vmatprep.subr.bf16.mxu0 0
      %2559 = vmatpush1.bf16.msra.mxu0 0
      %2560 = vmatprep.subr.bf16.mxu0 0
      %2561 = vmatpush1.bf16.msra.mxu0 0
      %2562 = vmatprep.subr.bf16.mxu0 0
      %2563 = vmatpush1.bf16.msra.mxu0 0
      %2564 = vmatprep.subr.bf16.mxu0 0
      %2565 = vmatpush1.bf16.msra.mxu0 0
      %2566 = vmatprep.subr.bf16.mxu0 0
      %2567 = vmatpush1.bf16.msra.mxu0 0
      %2568 = vmatprep.mubr.bf16.mxu0 0
      %2569 = vmatmul.mubr.bf16.gmra.mrb[0].mxu0 %v726
      %v2570 = vpop.f32.mrb[0].mxu0
      %v2571 = vadd.f32 0.0, %v2570
      %v2572 = vpop.f32.mrb[0].mxu0
      %v2573 = vpop.f32.mrb[0].mxu0
      %v2574 = vadd.f32 0.0, %v2573
      %v2575 = vpop.f32.mrb[0].mxu0
      %2576 = vmatprep.mubr.bf16.mxu0 0
      %2577 = vmatmul.mubr.bf16.gmra.mrb[0].mxu0 %v729
      %v2578 = vpop.f32.mrb[0].mxu0
      %v2579 = vadd.f32 0.0, %v2578
      %v2580 = vpop.f32.mrb[0].mxu0
      %v2581 = vpop.f32.mrb[0].mxu0
      %v2582 = vadd.f32 0.0, %v2581
      %v2583 = vpop.f32.mrb[0].mxu0
      %2584 = vmatprep.mubr.bf16.mxu0 0
      %2585 = vmatmul.mubr.bf16.gmra.mrb[0].mxu0 %v732
      %v2586 = vpop.f32.mrb[0].mxu0
      %v2587 = vadd.f32 0.0, %v2586
      %v2588 = vpop.f32.mrb[0].mxu0
      %v2589 = vpop.f32.mrb[0].mxu0
      %v2590 = vadd.f32 0.0, %v2589
      %v2591 = vpop.f32.mrb[0].mxu0
      %2592 = vmatprep.mubr.bf16.mxu0 0
      %2593 = vmatmul.mubr.bf16.gmra.mrb[0].mxu0 %v735
      %v2594 = vpop.f32.mrb[0].mxu0
      %v2595 = vadd.f32 0.0, %v2594
      %v2596 = vpop.f32.mrb[0].mxu0
      %v2597 = vpop.f32.mrb[0].mxu0
      %v2598 = vadd.f32 0.0, %v2597
      %v2599 = vpop.f32.mrb[0].mxu0
      %2600 = vmatprep.mubr.bf16.mxu0 0
      %2601 = vmatmul.mubr.bf16.gmra.mrb[0].mxu0 %v738
      %v2602 = vpop.f32.mrb[0].mxu0
      %v2603 = vadd.f32 0.0, %v2602
      %v2604 = vpop.f32.mrb[0].mxu0
      %v2605 = vpop.f32.mrb[0].mxu0
      %v2606 = vadd.f32 0.0, %v2605
      %v2607 = vpop.f32.mrb[0].mxu0
      %2608 = vmatprep.mubr.bf16.mxu0 0
      %2609 = vmatmul.mubr.bf16.gmra.mrb[0].mxu0 %v741
      %v2610 = vpop.f32.mrb[0].mxu0
      %v2611 = vadd.f32 0.0, %v2610
      %v2612 = vpop.f32.mrb[0].mxu0
      %v2613 = vpop.f32.mrb[0].mxu0
      %v2614 = vadd.f32 0.0, %v2613
      %v2615 = vpop.f32.mrb[0].mxu0
      %2616 = vmatprep.mubr.bf16.mxu0 0
      %2617 = vmatmul.mubr.bf16.gmra.mrb[0].mxu0 %v744
      %v2618 = vpop.f32.mrb[0].mxu0
      %v2619 = vadd.f32 0.0, %v2618
      %v2620 = vpop.f32.mrb[0].mxu0
      %v2621 = vpop.f32.mrb[0].mxu0
      %v2622 = vadd.f32 0.0, %v2621
      %v2623 = vpop.f32.mrb[0].mxu0
      %2624 = vmatprep.mubr.bf16.mxu0 0
      %2625 = vmatmul.mubr.bf16.gmra.mrb[0].mxu0 %v747
      %v2626 = vpop.f32.mrb[0].mxu0
      %v2627 = vadd.f32 0.0, %v2626
      %v2628 = vpop.f32.mrb[0].mxu0
      %v2629 = vpop.f32.mrb[0].mxu0
      %v2630 = vadd.f32 0.0, %v2629
      %v2631 = vpop.f32.mrb[0].mxu0
      %2632 = vmatprep.mubr.bf16.mxu0 0
      %2633 = vmatmul.mubr.bf16.gmra.mrb[0].mxu0 %v750
      %v2634 = vpop.f32.mrb[0].mxu0
      %v2635 = vadd.f32 0.0, %v2634
      %v2636 = vpop.f32.mrb[0].mxu0
      %v2637 = vpop.f32.mrb[0].mxu0
      %v2638 = vadd.f32 0.0, %v2637
      %v2639 = vpop.f32.mrb[0].mxu0
      %2640 = vmatprep.mubr.bf16.mxu0 0
      %2641 = vmatmul.mubr.bf16.gmra.mrb[0].mxu0 %v753
      %v2642 = vpop.f32.mrb[0].mxu0
      %v2643 = vadd.f32 0.0, %v2642
      %v2644 = vpop.f32.mrb[0].mxu0
      %v2645 = vpop.f32.mrb[0].mxu0
      %v2646 = vadd.f32 0.0, %v2645
      %v2647 = vpop.f32.mrb[0].mxu0
      %2648 = vmatprep.mubr.bf16.mxu0 0
      %2649 = vmatmul.mubr.bf16.gmra.mrb[0].mxu0 %v756
      %v2650 = vpop.f32.mrb[0].mxu0
      %v2651 = vadd.f32 0.0, %v2650
      %v2652 = vpop.f32.mrb[0].mxu0
      %v2653 = vpop.f32.mrb[0].mxu0
      %v2654 = vadd.f32 0.0, %v2653
      %v2655 = vpop.f32.mrb[0].mxu0
      %2656 = vmatprep.mubr.bf16.mxu0 0
      %2657 = vmatmul.mubr.bf16.gmra.mrb[0].mxu0 %v759
      %v2658 = vpop.f32.mrb[0].mxu0
      %v2659 = vadd.f32 0.0, %v2658
      %v2660 = vpop.f32.mrb[0].mxu0
      %v2661 = vpop.f32.mrb[0].mxu0
      %v2662 = vadd.f32 0.0, %v2661
      %v2663 = vpop.f32.mrb[0].mxu0
      %2664 = vmatprep.mubr.bf16.mxu0 0
      %2665 = vmatmul.mubr.bf16.gmra.mrb[0].mxu0 %v762
      %v2666 = vpop.f32.mrb[0].mxu0
      %v2667 = vadd.f32 0.0, %v2666
      %v2668 = vpop.f32.mrb[0].mxu0
      %v2669 = vpop.f32.mrb[0].mxu0
      %v2670 = vadd.f32 0.0, %v2669
      %v2671 = vpop.f32.mrb[0].mxu0
      %2672 = vmatprep.mubr.bf16.mxu0 0
      %2673 = vmatmul.mubr.bf16.gmra.mrb[0].mxu0 %v765
      %v2674 = vpop.f32.mrb[0].mxu0
      %v2675 = vadd.f32 0.0, %v2674
      %v2676 = vpop.f32.mrb[0].mxu0
      %v2677 = vpop.f32.mrb[0].mxu0
      %v2678 = vadd.f32 0.0, %v2677
      %v2679 = vpop.f32.mrb[0].mxu0
      %2680 = vmatprep.mubr.bf16.mxu0 0
      %2681 = vmatmul.mubr.bf16.gmra.mrb[0].mxu0 %v1883
      %v2682 = vpop.f32.mrb[0].mxu0
      %v2683 = vadd.f32 0.0, %v2682
      %v2684 = vpop.f32.mrb[0].mxu0
      %v2685 = vpop.f32.mrb[0].mxu0
      %v2686 = vadd.f32 0.0, %v2685
      %v2687 = vpop.f32.mrb[0].mxu0
      %2688 = vmatprep.mubr.bf16.mxu0 0
      %2689 = vmatmul.mubr.bf16.gmra.mrb[0].mxu0 %v2531
      %v2690 = vpop.f32.mrb[0].mxu0
      %v2691 = vadd.f32 0.0, %v2690
      %v2692 = vpop.f32.mrb[0].mxu0
      %v2693 = vpop.f32.mrb[0].mxu0
      %v2694 = vadd.f32 0.0, %v2693
      %v2695 = vpop.f32.mrb[0].mxu0
      %2696 = vdwg.mxu0
      %v2697 = vadd.f32 %v2467, %v2571
      %v2698 = vadd.f32 %v2468, %v2574
      %v2699 = vadd.f32 %v2469, %v2579
      %v2700 = vadd.f32 %v2470, %v2582
      %v2701 = vadd.f32 %v2471, %v2587
      %v2702 = vadd.f32 %v2472, %v2590
      %v2703 = vadd.f32 %v2473, %v2595
      %v2704 = vadd.f32 %v2474, %v2598
      %v2705 = vadd.f32 %v2475, %v2603
      %v2706 = vadd.f32 %v2476, %v2606
      %v2707 = vadd.f32 %v2477, %v2611
      %v2708 = vadd.f32 %v2478, %v2614
      %v2709 = vadd.f32 %v2479, %v2619
      %v2710 = vadd.f32 %v2480, %v2622
      %v2711 = vadd.f32 %v2481, %v2627
      %v2712 = vadd.f32 %v2482, %v2630
      %v2713 = vadd.f32 %v2483, %v2635
      %v2714 = vadd.f32 %v2484, %v2638
      %v2715 = vadd.f32 %v2485, %v2643
      %v2716 = vadd.f32 %v2486, %v2646
      %v2717 = vadd.f32 %v2487, %v2651
      %v2718 = vadd.f32 %v2488, %v2654
      %v2719 = vadd.f32 %v2489, %v2659
      %v2720 = vadd.f32 %v2490, %v2662
      %v2721 = vadd.f32 %v2491, %v2667
      %v2722 = vadd.f32 %v2492, %v2670
      %v2723 = vadd.f32 %v2493, %v2675
      %v2724 = vadd.f32 %v2494, %v2678
      %v2725 = vadd.f32 %v2495, %v2683
      %v2726 = vadd.f32 %v2496, %v2686
      %v2727 = vadd.f32 %v2497, %v2691
      %v2728 = vadd.f32 %v2498, %v2694
      %v2730 = vrot.slane %v271, 5
      %v2731 = vrot.slane %v2730, 4
      %v2732 = vrot.slane %v272, 5
      %v2733 = vsel %vm1242, %v2731, %v2732
      %v2734 = vrot.slane %v2732, 4
      %v2735 = vrot.slane %v273, 5
      %v2736 = vsel %vm1242, %v2734, %v2735
      %v2737 = vunpack.c.l.b16 %v2733
      %v2738 = vunpack.c.l.b16 %v2736
      %v2739 = vpack.c.b16 %v2738, %v2737
      %v2741 = vsel %vm718, %v2739, 0
      %v2744 = vsel %vm767, %v278, 0
      %2746 = vmatprep.subr.bf16.mxu0 0
      %2747 = vmatpush1.bf16.msra.mxu0 %v2744
      %2748 = vmatprep.subr.bf16.mxu0 0
      %2749 = vmatpush1.bf16.msra.mxu0 0
      %2750 = vmatprep.subr.bf16.mxu0 0
      %2751 = vmatpush1.bf16.msra.mxu0 0
      %2752 = vmatprep.subr.bf16.mxu0 0
      %2753 = vmatpush1.bf16.msra.mxu0 0
      %2754 = vmatprep.subr.bf16.mxu0 0
      %2755 = vmatpush1.bf16.msra.mxu0 0
      %2756 = vmatprep.subr.bf16.mxu0 0
      %2757 = vmatpush1.bf16.msra.mxu0 0
      %2758 = vmatprep.subr.bf16.mxu0 0
      %2759 = vmatpush1.bf16.msra.mxu0 0
      %2760 = vmatprep.subr.bf16.mxu0 0
      %2761 = vmatpush1.bf16.msra.mxu0 0
      %2762 = vmatprep.subr.bf16.mxu0 0
      %2763 = vmatpush1.bf16.msra.mxu0 0
      %2764 = vmatprep.subr.bf16.mxu0 0
      %2765 = vmatpush1.bf16.msra.mxu0 0
      %2766 = vmatprep.subr.bf16.mxu0 0
      %2767 = vmatpush1.bf16.msra.mxu0 0
      %2768 = vmatprep.subr.bf16.mxu0 0
      %2769 = vmatpush1.bf16.msra.mxu0 0
      %2770 = vmatprep.subr.bf16.mxu0 0
      %2771 = vmatpush1.bf16.msra.mxu0 0
      %2772 = vmatprep.subr.bf16.mxu0 0
      %2773 = vmatpush1.bf16.msra.mxu0 0
      %2774 = vmatprep.subr.bf16.mxu0 0
      %2775 = vmatpush1.bf16.msra.mxu0 0
      %2776 = vmatprep.subr.bf16.mxu0 0
      %2777 = vmatpush1.bf16.msra.mxu0 0
      %2778 = vmatprep.mubr.bf16.mxu0 0
      %2779 = vmatmul.mubr.bf16.gmra.mrb[0].mxu0 %v1410
      %v2780 = vpop.f32.mrb[0].mxu0
      %v2781 = vadd.f32 0.0, %v2780
      %v2782 = vpop.f32.mrb[0].mxu0
      %v2783 = vpop.f32.mrb[0].mxu0
      %v2784 = vadd.f32 0.0, %v2783
      %v2785 = vpop.f32.mrb[0].mxu0
      %2786 = vmatprep.mubr.bf16.mxu0 0
      %2787 = vmatmul.mubr.bf16.gmra.mrb[0].mxu0 %v1413
      %v2788 = vpop.f32.mrb[0].mxu0
      %v2789 = vadd.f32 0.0, %v2788
      %v2790 = vpop.f32.mrb[0].mxu0
      %v2791 = vpop.f32.mrb[0].mxu0
      %v2792 = vadd.f32 0.0, %v2791
      %v2793 = vpop.f32.mrb[0].mxu0
      %2794 = vmatprep.mubr.bf16.mxu0 0
      %2795 = vmatmul.mubr.bf16.gmra.mrb[0].mxu0 %v1416
      %v2796 = vpop.f32.mrb[0].mxu0
      %v2797 = vadd.f32 0.0, %v2796
      %v2798 = vpop.f32.mrb[0].mxu0
      %v2799 = vpop.f32.mrb[0].mxu0
      %v2800 = vadd.f32 0.0, %v2799
      %v2801 = vpop.f32.mrb[0].mxu0
      %2802 = vmatprep.mubr.bf16.mxu0 0
      %2803 = vmatmul.mubr.bf16.gmra.mrb[0].mxu0 %v1419
      %v2804 = vpop.f32.mrb[0].mxu0
      %v2805 = vadd.f32 0.0, %v2804
      %v2806 = vpop.f32.mrb[0].mxu0
      %v2807 = vpop.f32.mrb[0].mxu0
      %v2808 = vadd.f32 0.0, %v2807
      %v2809 = vpop.f32.mrb[0].mxu0
      %2810 = vmatprep.mubr.bf16.mxu0 0
      %2811 = vmatmul.mubr.bf16.gmra.mrb[0].mxu0 %v1422
      %v2812 = vpop.f32.mrb[0].mxu0
      %v2813 = vadd.f32 0.0, %v2812
      %v2814 = vpop.f32.mrb[0].mxu0
      %v2815 = vpop.f32.mrb[0].mxu0
      %v2816 = vadd.f32 0.0, %v2815
      %v2817 = vpop.f32.mrb[0].mxu0
      %2818 = vmatprep.mubr.bf16.mxu0 0
      %2819 = vmatmul.mubr.bf16.gmra.mrb[0].mxu0 %v1425
      %v2820 = vpop.f32.mrb[0].mxu0
      %v2821 = vadd.f32 0.0, %v2820
      %v2822 = vpop.f32.mrb[0].mxu0
      %v2823 = vpop.f32.mrb[0].mxu0
      %v2824 = vadd.f32 0.0, %v2823
      %v2825 = vpop.f32.mrb[0].mxu0
      %2826 = vmatprep.mubr.bf16.mxu0 0
      %2827 = vmatmul.mubr.bf16.gmra.mrb[0].mxu0 %v1428
      %v2828 = vpop.f32.mrb[0].mxu0
      %v2829 = vadd.f32 0.0, %v2828
      %v2830 = vpop.f32.mrb[0].mxu0
      %v2831 = vpop.f32.mrb[0].mxu0
      %v2832 = vadd.f32 0.0, %v2831
      %v2833 = vpop.f32.mrb[0].mxu0
      %2834 = vmatprep.mubr.bf16.mxu0 0
      %2835 = vmatmul.mubr.bf16.gmra.mrb[0].mxu0 %v1431
      %v2836 = vpop.f32.mrb[0].mxu0
      %v2837 = vadd.f32 0.0, %v2836
      %v2838 = vpop.f32.mrb[0].mxu0
      %v2839 = vpop.f32.mrb[0].mxu0
      %v2840 = vadd.f32 0.0, %v2839
      %v2841 = vpop.f32.mrb[0].mxu0
      %2842 = vmatprep.mubr.bf16.mxu0 0
      %2843 = vmatmul.mubr.bf16.gmra.mrb[0].mxu0 %v1434
      %v2844 = vpop.f32.mrb[0].mxu0
      %v2845 = vadd.f32 0.0, %v2844
      %v2846 = vpop.f32.mrb[0].mxu0
      %v2847 = vpop.f32.mrb[0].mxu0
      %v2848 = vadd.f32 0.0, %v2847
      %v2849 = vpop.f32.mrb[0].mxu0
      %2850 = vmatprep.mubr.bf16.mxu0 0
      %2851 = vmatmul.mubr.bf16.gmra.mrb[0].mxu0 %v1437
      %v2852 = vpop.f32.mrb[0].mxu0
      %v2853 = vadd.f32 0.0, %v2852
      %v2854 = vpop.f32.mrb[0].mxu0
      %v2855 = vpop.f32.mrb[0].mxu0
      %v2856 = vadd.f32 0.0, %v2855
      %v2857 = vpop.f32.mrb[0].mxu0
      %2858 = vmatprep.mubr.bf16.mxu0 0
      %2859 = vmatmul.mubr.bf16.gmra.mrb[0].mxu0 %v1440
      %v2860 = vpop.f32.mrb[0].mxu0
      %v2861 = vadd.f32 0.0, %v2860
      %v2862 = vpop.f32.mrb[0].mxu0
      %v2863 = vpop.f32.mrb[0].mxu0
      %v2864 = vadd.f32 0.0, %v2863
      %v2865 = vpop.f32.mrb[0].mxu0
      %2866 = vmatprep.mubr.bf16.mxu0 0
      %2867 = vmatmul.mubr.bf16.gmra.mrb[0].mxu0 %v1443
      %v2868 = vpop.f32.mrb[0].mxu0
      %v2869 = vadd.f32 0.0, %v2868
      %v2870 = vpop.f32.mrb[0].mxu0
      %v2871 = vpop.f32.mrb[0].mxu0
      %v2872 = vadd.f32 0.0, %v2871
      %v2873 = vpop.f32.mrb[0].mxu0
      %2874 = vmatprep.mubr.bf16.mxu0 0
      %2875 = vmatmul.mubr.bf16.gmra.mrb[0].mxu0 %v1446
      %v2876 = vpop.f32.mrb[0].mxu0
      %v2877 = vadd.f32 0.0, %v2876
      %v2878 = vpop.f32.mrb[0].mxu0
      %v2879 = vpop.f32.mrb[0].mxu0
      %v2880 = vadd.f32 0.0, %v2879
      %v2881 = vpop.f32.mrb[0].mxu0
      %2882 = vmatprep.mubr.bf16.mxu0 0
      %2883 = vmatmul.mubr.bf16.gmra.mrb[0].mxu0 %v1449
      %v2884 = vpop.f32.mrb[0].mxu0
      %v2885 = vadd.f32 0.0, %v2884
      %v2886 = vpop.f32.mrb[0].mxu0
      %v2887 = vpop.f32.mrb[0].mxu0
      %v2888 = vadd.f32 0.0, %v2887
      %v2889 = vpop.f32.mrb[0].mxu0
      %2890 = vmatprep.mubr.bf16.mxu0 0
      %2891 = vmatmul.mubr.bf16.gmra.mrb[0].mxu0 %v2097
      %v2892 = vpop.f32.mrb[0].mxu0
      %v2893 = vadd.f32 0.0, %v2892
      %v2894 = vpop.f32.mrb[0].mxu0
      %v2895 = vpop.f32.mrb[0].mxu0
      %v2896 = vadd.f32 0.0, %v2895
      %v2897 = vpop.f32.mrb[0].mxu0
      %2898 = vmatprep.mubr.bf16.mxu0 0
      %2899 = vmatmul.mubr.bf16.gmra.mrb[0].mxu0 %v2741
      %v2900 = vpop.f32.mrb[0].mxu0
      %v2901 = vadd.f32 0.0, %v2900
      %v2902 = vpop.f32.mrb[0].mxu0
      %v2903 = vpop.f32.mrb[0].mxu0
      %v2904 = vadd.f32 0.0, %v2903
      %v2905 = vpop.f32.mrb[0].mxu0
      %2906 = vdwg.mxu0
      %v2907 = vadd.f32 %v2697, %v2781
      %v2908 = vadd.f32 %v2698, %v2784
      %v2909 = vadd.f32 %v2699, %v2789
      %v2910 = vadd.f32 %v2700, %v2792
      %v2911 = vadd.f32 %v2701, %v2797
      %v2912 = vadd.f32 %v2702, %v2800
      %v2913 = vadd.f32 %v2703, %v2805
      %v2914 = vadd.f32 %v2704, %v2808
      %v2915 = vadd.f32 %v2705, %v2813
      %v2916 = vadd.f32 %v2706, %v2816
      %v2917 = vadd.f32 %v2707, %v2821
      %v2918 = vadd.f32 %v2708, %v2824
      %v2919 = vadd.f32 %v2709, %v2829
      %v2920 = vadd.f32 %v2710, %v2832
      %v2921 = vadd.f32 %v2711, %v2837
      %v2922 = vadd.f32 %v2712, %v2840
      %v2923 = vadd.f32 %v2713, %v2845
      %v2924 = vadd.f32 %v2714, %v2848
      %v2925 = vadd.f32 %v2715, %v2853
      %v2926 = vadd.f32 %v2716, %v2856
      %v2927 = vadd.f32 %v2717, %v2861
      %v2928 = vadd.f32 %v2718, %v2864
      %v2929 = vadd.f32 %v2719, %v2869
      %v2930 = vadd.f32 %v2720, %v2872
      %v2931 = vadd.f32 %v2721, %v2877
      %v2932 = vadd.f32 %v2722, %v2880
      %v2933 = vadd.f32 %v2723, %v2885
      %v2934 = vadd.f32 %v2724, %v2888
      %v2935 = vadd.f32 %v2725, %v2893
      %v2936 = vadd.f32 %v2726, %v2896
      %v2937 = vadd.f32 %v2727, %v2901
      %v2938 = vadd.f32 %v2728, %v2904
      %v2939 = vpack.c.bf16 %v2908, %v2907
      %v2940 = vpack.c.bf16 %v2910, %v2909
      %v2941 = vpack.c.bf16 %v2912, %v2911
      %v2942 = vpack.c.bf16 %v2914, %v2913
      %v2943 = vpack.c.bf16 %v2916, %v2915
      %v2944 = vpack.c.bf16 %v2918, %v2917
      %v2945 = vpack.c.bf16 %v2920, %v2919
      %v2946 = vpack.c.bf16 %v2922, %v2921
      %v2947 = vpack.c.bf16 %v2924, %v2923
      %v2948 = vpack.c.bf16 %v2926, %v2925
      %v2949 = vpack.c.bf16 %v2928, %v2927
      %v2950 = vpack.c.bf16 %v2930, %v2929
      %v2951 = vpack.c.bf16 %v2932, %v2931
      %v2952 = vpack.c.bf16 %v2934, %v2933
      %v2953 = vpack.c.bf16 %v2936, %v2935
      %v2954 = vpack.c.bf16 %v2938, %v2937
      %v2971 = vunpack.c.l.b16 %v2939
      %v2972 = vunpack.c.h.b16 %v2939
      %v2973 = vunpack.c.l.b16 %v2940
      %v2974 = vunpack.c.h.b16 %v2940
      %v2975 = vunpack.c.l.b16 %v2941
      %v2976 = vunpack.c.h.b16 %v2941
      %v2977 = vunpack.c.l.b16 %v2942
      %v2978 = vunpack.c.h.b16 %v2942
      %v2979 = vunpack.c.l.b16 %v2943
      %v2980 = vunpack.c.h.b16 %v2943
      %v2981 = vunpack.c.l.b16 %v2944
      %v2982 = vunpack.c.h.b16 %v2944
      %v2983 = vunpack.c.l.b16 %v2945
      %v2984 = vunpack.c.h.b16 %v2945
      %v2985 = vunpack.c.l.b16 %v2946
      %v2986 = vunpack.c.h.b16 %v2946
      %v2987 = vunpack.c.l.b16 %v2947
      %v2988 = vunpack.c.h.b16 %v2947
      %v2989 = vunpack.c.l.b16 %v2948
      %v2990 = vunpack.c.h.b16 %v2948
      %v2991 = vunpack.c.l.b16 %v2949
      %v2992 = vunpack.c.h.b16 %v2949
      %v2993 = vunpack.c.l.b16 %v2950
      %v2994 = vunpack.c.h.b16 %v2950
      %v2995 = vunpack.c.l.b16 %v2951
      %v2996 = vunpack.c.h.b16 %v2951
      %v2997 = vunpack.c.l.b16 %v2952
      %v2998 = vunpack.c.h.b16 %v2952
      %v2999 = vunpack.c.l.b16 %v2953
      %v3000 = vunpack.c.h.b16 %v2953
      %v3001 = vunpack.c.l.b16 %v2954
      %v3002 = vunpack.c.h.b16 %v2954
      %v3003 = vpack.c.b16 %v2971, %v2971
      %v3004 = vpack.c.b16 %v2972, %v2972
      %v3005 = vpack.c.b16 %v2973, %v2973
      %v3006 = vpack.c.b16 %v2974, %v2974
      %v3007 = vpack.c.b16 %v2975, %v2975
      %v3008 = vpack.c.b16 %v2976, %v2976
      %v3009 = vpack.c.b16 %v2977, %v2977
      %v3010 = vpack.c.b16 %v2978, %v2978
      %v3011 = vpack.c.b16 %v2979, %v2979
      %v3012 = vpack.c.b16 %v2980, %v2980
      %v3013 = vpack.c.b16 %v2981, %v2981
      %v3014 = vpack.c.b16 %v2982, %v2982
      %v3015 = vpack.c.b16 %v2983, %v2983
      %v3016 = vpack.c.b16 %v2984, %v2984
      %v3017 = vpack.c.b16 %v2985, %v2985
      %v3018 = vpack.c.b16 %v2986, %v2986
      %v3019 = vpack.c.b16 %v2987, %v2987
      %v3020 = vpack.c.b16 %v2988, %v2988
      %v3021 = vpack.c.b16 %v2989, %v2989
      %v3022 = vpack.c.b16 %v2990, %v2990
      %v3023 = vpack.c.b16 %v2991, %v2991
      %v3024 = vpack.c.b16 %v2992, %v2992
      %v3025 = vpack.c.b16 %v2993, %v2993
      %v3026 = vpack.c.b16 %v2994, %v2994
      %v3027 = vpack.c.b16 %v2995, %v2995
      %v3028 = vpack.c.b16 %v2996, %v2996
      %v3029 = vpack.c.b16 %v2997, %v2997
      %v3030 = vpack.c.b16 %v2998, %v2998
      %v3031 = vpack.c.b16 %v2999, %v2999
      %v3032 = vpack.c.b16 %v3000, %v3000
      %v3033 = vpack.c.b16 %v3001, %v3001
      %v3034 = vpack.c.b16 %v3002, %v3002
      %vm3067 = vcmask 60416
      %3068 = vst.msk [vmem:[%s210] sm:$0xf] %vm3067, %v3003
      %3069 = vst.msk [vmem:[%s210 + $0x4] sm:$0xf] %vm3067, %v3004
      %3070 = vst.msk [vmem:[%s210 + $0x8] sm:$0xf] %vm3067, %v3005
      %3071 = vst.msk [vmem:[%s210 + $0xc] sm:$0xf] %vm3067, %v3006
      %3072 = vst.msk [vmem:[%s210 + $0x10] sm:$0xf] %vm3067, %v3007
      %3073 = vst.msk [vmem:[%s210 + $0x14] sm:$0xf] %vm3067, %v3008
      %3074 = vst.msk [vmem:[%s210 + $0x18] sm:$0xf] %vm3067, %v3009
      %3075 = vst.msk [vmem:[%s210 + $0x1c] sm:$0xf] %vm3067, %v3010
      %3076 = vst.msk [vmem:[%s210 + $0x20] sm:$0xf] %vm3067, %v3011
      %3077 = vst.msk [vmem:[%s210 + $0x24] sm:$0xf] %vm3067, %v3012
      %3078 = vst.msk [vmem:[%s210 + $0x28] sm:$0xf] %vm3067, %v3013
      %3079 = vst.msk [vmem:[%s210 + $0x2c] sm:$0xf] %vm3067, %v3014
      %3080 = vst.msk [vmem:[%s210 + $0x30] sm:$0xf] %vm3067, %v3015
      %3081 = vst.msk [vmem:[%s210 + $0x34] sm:$0xf] %vm3067, %v3016
      %3082 = vst.msk [vmem:[%s210 + $0x38] sm:$0xf] %vm3067, %v3017
      %3083 = vst.msk [vmem:[%s210 + $0x3c] sm:$0xf] %vm3067, %v3018
      %3084 = vst.msk [vmem:[%s210 + $0x40] sm:$0xf] %vm3067, %v3019
      %3085 = vst.msk [vmem:[%s210 + $0x44] sm:$0xf] %vm3067, %v3020
      %3086 = vst.msk [vmem:[%s210 + $0x48] sm:$0xf] %vm3067, %v3021
      %3087 = vst.msk [vmem:[%s210 + $0x4c] sm:$0xf] %vm3067, %v3022
      %3088 = vst.msk [vmem:[%s210 + $0x50] sm:$0xf] %vm3067, %v3023
      %3089 = vst.msk [vmem:[%s210 + $0x54] sm:$0xf] %vm3067, %v3024
      %3090 = vst.msk [vmem:[%s210 + $0x58] sm:$0xf] %vm3067, %v3025
      %3091 = vst.msk [vmem:[%s210 + $0x5c] sm:$0xf] %vm3067, %v3026
      %3092 = vst.msk [vmem:[%s210 + $0x60] sm:$0xf] %vm3067, %v3027
      %3093 = vst.msk [vmem:[%s210 + $0x64] sm:$0xf] %vm3067, %v3028
      %3094 = vst.msk [vmem:[%s210 + $0x68] sm:$0xf] %vm3067, %v3029
      %3095 = vst.msk [vmem:[%s210 + $0x6c] sm:$0xf] %vm3067, %v3030
      %3096 = vst.msk [vmem:[%s210 + $0x70] sm:$0xf] %vm3067, %v3031
      %3097 = vst.msk [vmem:[%s210 + $0x74] sm:$0xf] %vm3067, %v3032
      %3098 = vst.msk [vmem:[%s210 + $0x78] sm:$0xf] %vm3067, %v3033
      %3099 = vst.msk [vmem:[%s210 + $0x7c] sm:$0xf] %vm3067, %v3034
      %v3100 = vadd.f32 %v2907, %v2908
      %v3101 = vadd.f32 %v3100, %v2909
      %v3102 = vadd.f32 %v3101, %v2910
      %v3103 = vadd.f32 %v3102, %v2911
      %v3104 = vadd.f32 %v3103, %v2912
      %v3105 = vadd.f32 %v3104, %v2913
      %v3106 = vadd.f32 %v3105, %v2914
      %v3107 = vadd.f32 %v3106, %v2915
      %v3108 = vadd.f32 %v3107, %v2916
      %v3109 = vadd.f32 %v3108, %v2917
      %v3110 = vadd.f32 %v3109, %v2918
      %v3111 = vadd.f32 %v3110, %v2919
      %v3112 = vadd.f32 %v3111, %v2920
      %v3113 = vadd.f32 %v3112, %v2921
      %v3114 = vadd.f32 %v3113, %v2922
      %v3115 = vadd.f32 %v3114, %v2923
      %v3116 = vadd.f32 %v3115, %v2924
      %v3117 = vadd.f32 %v3116, %v2925
      %v3118 = vadd.f32 %v3117, %v2926
      %v3119 = vadd.f32 %v3118, %v2927
      %v3120 = vadd.f32 %v3119, %v2928
      %v3121 = vadd.f32 %v3120, %v2929
      %v3122 = vadd.f32 %v3121, %v2930
      %v3123 = vadd.f32 %v3122, %v2931
      %v3124 = vadd.f32 %v3123, %v2932
      %v3125 = vadd.f32 %v3124, %v2933
      %v3126 = vadd.f32 %v3125, %v2934
      %v3127 = vadd.f32 %v3126, %v2935
      %v3128 = vadd.f32 %v3127, %v2936
      %v3129 = vadd.f32 %v3128, %v2937
      %v3130 = vadd.f32 %v3129, %v2938
      %3131 = vst [vmem:[%s214] sm:$0xff] %v3130
      %v3132 = vmul.f32 %v2907, %v2907
      %v3133 = vmul.f32 %v2908, %v2908
      %v3134 = vmul.f32 %v2909, %v2909
      %v3135 = vmul.f32 %v2910, %v2910
      %v3136 = vmul.f32 %v2911, %v2911
      %v3137 = vmul.f32 %v2912, %v2912
      %v3138 = vmul.f32 %v2913, %v2913
      %v3139 = vmul.f32 %v2914, %v2914
      %v3140 = vmul.f32 %v2915, %v2915
      %v3141 = vmul.f32 %v2916, %v2916
      %v3142 = vmul.f32 %v2917, %v2917
      %v3143 = vmul.f32 %v2918, %v2918
      %v3144 = vmul.f32 %v2919, %v2919
      %v3145 = vmul.f32 %v2920, %v2920
      %v3146 = vmul.f32 %v2921, %v2921
      %v3147 = vmul.f32 %v2922, %v2922
      %v3148 = vmul.f32 %v2923, %v2923
      %v3149 = vmul.f32 %v2924, %v2924
      %v3150 = vmul.f32 %v2925, %v2925
      %v3151 = vmul.f32 %v2926, %v2926
      %v3152 = vmul.f32 %v2927, %v2927
      %v3153 = vmul.f32 %v2928, %v2928
      %v3154 = vmul.f32 %v2929, %v2929
      %v3155 = vmul.f32 %v2930, %v2930
      %v3156 = vmul.f32 %v2931, %v2931
      %v3157 = vmul.f32 %v2932, %v2932
      %v3158 = vmul.f32 %v2933, %v2933
      %v3159 = vmul.f32 %v2934, %v2934
      %v3160 = vmul.f32 %v2935, %v2935
      %v3161 = vmul.f32 %v2936, %v2936
      %v3162 = vmul.f32 %v2937, %v2937
      %v3163 = vmul.f32 %v2938, %v2938
      %v3164 = vadd.f32 %v3132, %v3133
      %v3165 = vadd.f32 %v3164, %v3134
      %v3166 = vadd.f32 %v3165, %v3135
      %v3167 = vadd.f32 %v3166, %v3136
      %v3168 = vadd.f32 %v3167, %v3137
      %v3169 = vadd.f32 %v3168, %v3138
      %v3170 = vadd.f32 %v3169, %v3139
      %v3171 = vadd.f32 %v3170, %v3140
      %v3172 = vadd.f32 %v3171, %v3141
      %v3173 = vadd.f32 %v3172, %v3142
      %v3174 = vadd.f32 %v3173, %v3143
      %v3175 = vadd.f32 %v3174, %v3144
      %v3176 = vadd.f32 %v3175, %v3145
      %v3177 = vadd.f32 %v3176, %v3146
      %v3178 = vadd.f32 %v3177, %v3147
      %v3179 = vadd.f32 %v3178, %v3148
      %v3180 = vadd.f32 %v3179, %v3149
      %v3181 = vadd.f32 %v3180, %v3150
      %v3182 = vadd.f32 %v3181, %v3151
      %v3183 = vadd.f32 %v3182, %v3152
      %v3184 = vadd.f32 %v3183, %v3153
      %v3185 = vadd.f32 %v3184, %v3154
      %v3186 = vadd.f32 %v3185, %v3155
      %v3187 = vadd.f32 %v3186, %v3156
      %v3188 = vadd.f32 %v3187, %v3157
      %v3189 = vadd.f32 %v3188, %v3158
      %v3190 = vadd.f32 %v3189, %v3159
      %v3191 = vadd.f32 %v3190, %v3160
      %v3192 = vadd.f32 %v3191, %v3161
      %v3193 = vadd.f32 %v3192, %v3162
      %v3194 = vadd.f32 %v3193, %v3163
      %3195 = vst [vmem:[%s218] sm:$0xff] %v3194
      %p3196 = scmp.lt.s32.totalorder %s16, 1
      %s3197 = scalar_select %p3196, %s16, 1
      %s3198 = smul.addr %s3197, 32
      %s3199 = smul.addr %s3198, 4
      %s3200 = scalar_lea.vmem %s2, %s3199
      %p3201 = scmp.lt.s32.totalorder %s16, 1
      %s3202 = scalar_select %p3201, %s16, 1
      %s3203 = smul.addr %s3202, 8
      %s3204 = scalar_lea.vmem %s3, %s3203
      %p3205 = scmp.lt.s32.totalorder %s16, 1
      %s3206 = scalar_select %p3205, %s16, 1
      %s3207 = smul.addr %s3206, 8
      %s3208 = scalar_lea.vmem %s4, %s3207
      // Predicated region
      $region29: #{_lambda_.3} parent=27 // pred_check
        %p3209 = pneg %p81
      $region30: #{_lambda_.3} parent=27 // pred_check_branch
        %3211 = sbr.rel (%p3209) target = $region32
      $region31: #{_lambda_.3} parent=27 // pred_region
        _
      $region32: #{_lambda_.3} parent=27 // pred_fallthru
        _
      // Predicated region
      $region33: #{_lambda_.3} parent=27 // pred_check
        %p3212 = pneg %p107
      $region34: #{_lambda_.3} parent=27 // pred_check_branch
        %3214 = sbr.rel (%p3212) target = $region36
      $region35: #{_lambda_.3} parent=27 // pred_region
        _
      $region36: #{_lambda_.3} parent=27 // pred_fallthru
        _
      // Predicated region
      $region37: #{_lambda_.3} parent=27 // pred_check
        %p3215 = pneg %p133
      $region38: #{_lambda_.3} parent=27 // pred_check_branch
        %3217 = sbr.rel (%p3215) target = $region40
      $region39: #{_lambda_.3} parent=27 // pred_region
        _
      $region40: #{_lambda_.3} parent=27 // pred_fallthru
        _
    $region28: #{_lambda_.3} parent=5 // pred_fallthru
      _
    %p3218 = scmp.le.s32.totalorder 2, %s11
    // Predicated region
    $region41: #{_lambda_.3} parent=5 // pred_check
      %p3219 = pneg %p3218
    $region42: #{_lambda_.3} parent=5 // pred_check_branch
      %3221 = sbr.rel (%p3219) target = $region44
    $region43: #{_lambda_.3} parent=5 // pred_region
      %s3222 = ssub.s32 %s11, 2
      // Predicated region
      $region45: #{_lambda_.3} parent=43 // pred_check
        %p3223 = pneg %p87
      $region46: #{_lambda_.3} parent=43 // pred_check_branch
        %3225 = sbr.rel (%p3223) target = $region48
      $region47: #{_lambda_.3} parent=43 // pred_region
        %p3226 = scmp.lt.s32.totalorder %s17, 1
        %s3227 = scalar_select %p3226, %s17, 1
        %s3228 = smul.addr %s3227, 32
        %s3229 = smul.addr %s3228, 4
        %s3230 = scalar_lea.vmem %s2, %s3229
      $region48: #{_lambda_.3} parent=43 // pred_fallthru
        _
      // Predicated region
      $region49: #{_lambda_.3} parent=43 // pred_check
        %p3231 = pneg %p113
      $region50: #{_lambda_.3} parent=43 // pred_check_branch
        %3233 = sbr.rel (%p3231) target = $region52
      $region51: #{_lambda_.3} parent=43 // pred_region
        %p3234 = scmp.lt.s32.totalorder %s17, 1
        %s3235 = scalar_select %p3234, %s17, 1
        %s3236 = smul.addr %s3235, 8
        %s3237 = scalar_lea.vmem %s3, %s3236
      $region52: #{_lambda_.3} parent=43 // pred_fallthru
        _
      // Predicated region
      $region53: #{_lambda_.3} parent=43 // pred_check
        %p3238 = pneg %p139
      $region54: #{_lambda_.3} parent=43 // pred_check_branch
        %3240 = sbr.rel (%p3238) target = $region56
      $region55: #{_lambda_.3} parent=43 // pred_region
        %p3241 = scmp.lt.s32.totalorder %s17, 1
        %s3242 = scalar_select %p3241, %s17, 1
        %s3243 = smul.addr %s3242, 8
        %s3244 = scalar_lea.vmem %s4, %s3243
      $region56: #{_lambda_.3} parent=43 // pred_fallthru
        _
    $region44: #{_lambda_.3} parent=5 // pred_fallthru
      _
  $region6: #{_lambda_.3} parent=0 // loop_footer
    %s15 = sadd.s32 1, %s11
  $region7: #{_lambda_.3} parent=0 // loop_footer_branch
    %10 = sbr.rel target = $region3
  $region8: #{_lambda_.3} parent=0 // loop_exit
    _

// kernel: _lambda_.4
$region0: #{_lambda_.4}
  #allocation0 [shape = 'u32[]', space=smem, size = 0x4, offset = 0x4, fixed_abs, tag = 'smem constant byte address 0x4 - core index']
  #allocation1 [shape = 'u32[144,128]{1,0:T(1,128)}', space=vmem, size = 0x12000, scoped, tag = 'internal scratch']
  #allocation2 [shape = 'bf16[18,18,8]{2,1,0:T(8,128)(2,1)}', space=vmem, size = 0x1b000, scoped, tag = 'scratch operand']
  %s0 = inlined_call_operand.vmem [shape: bf16[2,16,16,8], index: 0, kind: input, shape index: {}]
  %s1 = inlined_call_operand.vmem [shape: f32[1,8], index: 1, kind: input, shape index: {}]
  %s2 = inlined_call_operand.vmem [shape: f32[1,8], index: 2, kind: input, shape index: {}]
  %s3 = inlined_call_operand.vmem [shape: bf16[72,128], index: 3, kind: input, shape index: {}]
  %s4 = inlined_call_operand.vmem [shape: bf16[2,16,16,8], index: 4, kind: output, shape index: {0}]
  %s5 = inlined_call_operand.vmem [shape: f32[2,8,128], index: 5, kind: output, shape index: {1}]
  %s6 = inlined_call_operand.vmem [shape: f32[2,8,128], index: 6, kind: output, shape index: {2}]
  %7 = xla_tuple %s4, %s5, %s6
  %s8 = sld [smem:[#allocation0]]
  $region65: #{_lambda_.4} parent=0
    _
  %s10 = ssub.s32 1, %s8
  %s11 = scalar_select 0, %s10, %s8
  loop: start=0, step=1, limit=4
  $region2: #{_lambda_.4} parent=0 // loop_pre_header
    _
  $region3: #{_lambda_.4} parent=0 // loop_header
    %s13 = sphi 0, %s17
    %p14 = scmp.ge.s32.totalorder %s13, 4
    %s23 = sphi 0, %s25
    %s26 = sphi 0, %s23
    %s27 = sphi 0, %s26
    %s43 = sphi 0, %s27
    %s47 = sphi 0, %s47
    %s49 = sphi 0, %s47
    %s50 = sphi 0, %s49
    %s64 = sphi 0, %s50
    %s68 = sphi 0, %s68
    %s70 = sphi 0, %s68
    %s71 = sphi 0, %s70
    %s85 = sphi 0, %s71
    %s89 = sphi 0, %s89
    %s91 = sphi 0, %s89
    %s92 = sphi 0, %s91
    %s106 = sphi 0, %s92
    %s112 = sphi 0, %s114
    %s115 = sphi 0, %s112
    %s116 = sphi 0, %s115
    %s132 = sphi 0, %s116
    %s138 = sphi 0, %s140
    %s141 = sphi 0, %s138
    %s142 = sphi 0, %s141
    %s158 = sphi 0, %s142
    %s164 = sphi 0, %s166
    %s167 = sphi 0, %s164
    %s168 = sphi 0, %s167
    %s184 = sphi 0, %s168
  $region4: #{_lambda_.4} parent=0 // loop_header_branch
    %16 = sbr.rel (%p14) target = $region8
  $region5: #{_lambda_.4} parent=0 // loop_body
    %s18 = ssub.s32 %s13, 1
    %s19 = ssub.s32 %s13, 2
    %s20 = sadd.s32 %s13, 1
    %s21 = ssub.s32 %s13, %s20
    %p22 = scmp.eq.s32.totalorder %s21, 0
    %s24 = sadd.s32 %s23, 1
    %s25 = scalar_select %p22, %s23, %s24
    %p28 = pneg %p22
    %p29 = scmp.eq.s32.totalorder %s13, 1
    %p30 = por %p28, %p29
    %p31 = scmp.ne.s32.totalorder %s23, %s26
    %p32 = scmp.eq.s32.totalorder %s13, 0
    %p33 = por %p31, %p32
    %p34 = scmp.ne.s32.totalorder %s23, %s26
    %p35 = scmp.eq.s32.totalorder %s18, 1
    %p36 = por %p34, %p35
    %p37 = scmp.ne.s32.totalorder %s26, %s27
    %p38 = scmp.eq.s32.totalorder %s18, 0
    %p39 = por %p37, %p38
    %p40 = scmp.ne.s32.totalorder %s26, %s27
    %p41 = scmp.eq.s32.totalorder %s19, 1
    %p42 = por %p40, %p41
    %p44 = scmp.ne.s32.totalorder %s27, %s43
    %p45 = scmp.eq.s32.totalorder %s19, 0
    %p46 = por %p44, %p45
    %s48 = sadd.s32 %s47, 1
    %p51 = scmp.eq.s32.totalorder %s13, 1
    %p52 = scmp.ne.s32.totalorder %s47, %s49
    %p53 = scmp.eq.s32.totalorder %s13, 0
    %p54 = por %p52, %p53
    %p55 = scmp.ne.s32.totalorder %s47, %s49
    %p56 = scmp.eq.s32.totalorder %s18, 1
    %p57 = por %p55, %p56
    %p58 = scmp.ne.s32.totalorder %s49, %s50
    %p59 = scmp.eq.s32.totalorder %s18, 0
    %p60 = por %p58, %p59
    %p61 = scmp.ne.s32.totalorder %s49, %s50
    %p62 = scmp.eq.s32.totalorder %s19, 1
    %p63 = por %p61, %p62
    %p65 = scmp.ne.s32.totalorder %s50, %s64
    %p66 = scmp.eq.s32.totalorder %s19, 0
    %p67 = por %p65, %p66
    %s69 = sadd.s32 %s68, 1
    %p72 = scmp.eq.s32.totalorder %s13, 1
    %p73 = scmp.ne.s32.totalorder %s68, %s70
    %p74 = scmp.eq.s32.totalorder %s13, 0
    %p75 = por %p73, %p74
    %p76 = scmp.ne.s32.totalorder %s68, %s70
    %p77 = scmp.eq.s32.totalorder %s18, 1
    %p78 = por %p76, %p77
    %p79 = scmp.ne.s32.totalorder %s70, %s71
    %p80 = scmp.eq.s32.totalorder %s18, 0
    %p81 = por %p79, %p80
    %p82 = scmp.ne.s32.totalorder %s70, %s71
    %p83 = scmp.eq.s32.totalorder %s19, 1
    %p84 = por %p82, %p83
    %p86 = scmp.ne.s32.totalorder %s71, %s85
    %p87 = scmp.eq.s32.totalorder %s19, 0
    %p88 = por %p86, %p87
    %s90 = sadd.s32 %s89, 1
    %p93 = scmp.eq.s32.totalorder %s13, 1
    %p94 = scmp.ne.s32.totalorder %s89, %s91
    %p95 = scmp.eq.s32.totalorder %s13, 0
    %p96 = por %p94, %p95
    %p97 = scmp.ne.s32.totalorder %s89, %s91
    %p98 = scmp.eq.s32.totalorder %s18, 1
    %p99 = por %p97, %p98
    %p100 = scmp.ne.s32.totalorder %s91, %s92
    %p101 = scmp.eq.s32.totalorder %s18, 0
    %p102 = por %p100, %p101
    %p103 = scmp.ne.s32.totalorder %s91, %s92
    %p104 = scmp.eq.s32.totalorder %s19, 1
    %p105 = por %p103, %p104
    %p107 = scmp.ne.s32.totalorder %s92, %s106
    %p108 = scmp.eq.s32.totalorder %s19, 0
    %p109 = por %p107, %p108
    %s110 = ssub.s32 %s13, %s20
    %p111 = scmp.eq.s32.totalorder %s110, 0
    %s113 = sadd.s32 %s112, 1
    %s114 = scalar_select %p111, %s112, %s113
    %p117 = pneg %p111
    %p118 = scmp.eq.s32.totalorder %s13, 1
    %p119 = por %p117, %p118
    %p120 = scmp.ne.s32.totalorder %s112, %s115
    %p121 = scmp.eq.s32.totalorder %s13, 0
    %p122 = por %p120, %p121
    %p123 = scmp.ne.s32.totalorder %s112, %s115
    %p124 = scmp.eq.s32.totalorder %s18, 1
    %p125 = por %p123, %p124
    %p126 = scmp.ne.s32.totalorder %s115, %s116
    %p127 = scmp.eq.s32.totalorder %s18, 0
    %p128 = por %p126, %p127
    %p129 = scmp.ne.s32.totalorder %s115, %s116
    %p130 = scmp.eq.s32.totalorder %s19, 1
    %p131 = por %p129, %p130
    %p133 = scmp.ne.s32.totalorder %s116, %s132
    %p134 = scmp.eq.s32.totalorder %s19, 0
    %p135 = por %p133, %p134
    %s136 = ssub.s32 %s13, %s20
    %p137 = scmp.eq.s32.totalorder %s136, 0
    %s139 = sadd.s32 %s138, 1
    %s140 = scalar_select %p137, %s138, %s139
    %p143 = pneg %p137
    %p144 = scmp.eq.s32.totalorder %s13, 1
    %p145 = por %p143, %p144
    %p146 = scmp.ne.s32.totalorder %s138, %s141
    %p147 = scmp.eq.s32.totalorder %s13, 0
    %p148 = por %p146, %p147
    %p149 = scmp.ne.s32.totalorder %s138, %s141
    %p150 = scmp.eq.s32.totalorder %s18, 1
    %p151 = por %p149, %p150
    %p152 = scmp.ne.s32.totalorder %s141, %s142
    %p153 = scmp.eq.s32.totalorder %s18, 0
    %p154 = por %p152, %p153
    %p155 = scmp.ne.s32.totalorder %s141, %s142
    %p156 = scmp.eq.s32.totalorder %s19, 1
    %p157 = por %p155, %p156
    %p159 = scmp.ne.s32.totalorder %s142, %s158
    %p160 = scmp.eq.s32.totalorder %s19, 0
    %p161 = por %p159, %p160
    %s162 = ssub.s32 %s13, %s20
    %p163 = scmp.eq.s32.totalorder %s162, 0
    %s165 = sadd.s32 %s164, 1
    %s166 = scalar_select %p163, %s164, %s165
    %p169 = pneg %p163
    %p170 = scmp.eq.s32.totalorder %s13, 1
    %p171 = por %p169, %p170
    %p172 = scmp.ne.s32.totalorder %s164, %s167
    %p173 = scmp.eq.s32.totalorder %s13, 0
    %p174 = por %p172, %p173
    %p175 = scmp.ne.s32.totalorder %s164, %s167
    %p176 = scmp.eq.s32.totalorder %s18, 1
    %p177 = por %p175, %p176
    %p178 = scmp.ne.s32.totalorder %s167, %s168
    %p179 = scmp.eq.s32.totalorder %s18, 0
    %p180 = por %p178, %p179
    %p181 = scmp.ne.s32.totalorder %s167, %s168
    %p182 = scmp.eq.s32.totalorder %s19, 1
    %p183 = por %p181, %p182
    %p185 = scmp.ne.s32.totalorder %s168, %s184
    %p186 = scmp.eq.s32.totalorder %s19, 0
    %p187 = por %p185, %p186
    %p188 = scmp.le.s32.totalorder 1, %s13
    %p189 = scmp.lt.s32.totalorder %s13, 3
    %p190 = pnand %p188, %p189
    %p191 = pneg %p190
    // Predicated region
    $region9: #{_lambda_.4} parent=5 // pred_check
      _
    $region10: #{_lambda_.4} parent=5 // pred_check_branch
      %193 = sbr.rel (%p190) target = $region12
    $region11: #{_lambda_.4} parent=5 // pred_region
      %s194 = ssub.s32 %s13, 1
      // Predicated region
      $region13: #{_lambda_.4} parent=11 // pred_check
        %p195 = pneg %p60
      $region14: #{_lambda_.4} parent=11 // pred_check_branch
        %197 = sbr.rel (%p195) target = $region16
      $region15: #{_lambda_.4} parent=11 // pred_region
        _
      $region16: #{_lambda_.4} parent=11 // pred_fallthru
        _
      // Predicated region
      $region17: #{_lambda_.4} parent=11 // pred_check
        %p198 = pneg %p81
      $region18: #{_lambda_.4} parent=11 // pred_check_branch
        %200 = sbr.rel (%p198) target = $region20
      $region19: #{_lambda_.4} parent=11 // pred_region
        _
      $region20: #{_lambda_.4} parent=11 // pred_fallthru
        _
      // Predicated region
      $region21: #{_lambda_.4} parent=11 // pred_check
        %p201 = pneg %p102
      $region22: #{_lambda_.4} parent=11 // pred_check_branch
        %203 = sbr.rel (%p201) target = $region24
      $region23: #{_lambda_.4} parent=11 // pred_region
        _
      $region24: #{_lambda_.4} parent=11 // pred_fallthru
        _
    $region12: #{_lambda_.4} parent=5 // pred_fallthru
      _
    %p204 = scmp.lt.s32.totalorder %s13, 2
    // Predicated region
    $region25: #{_lambda_.4} parent=5 // pred_check
      %p205 = pneg %p204
    $region26: #{_lambda_.4} parent=5 // pred_check_branch
      %207 = sbr.rel (%p205) target = $region28
    $region27: #{_lambda_.4} parent=5 // pred_region
      // Predicated region
      $region29: #{_lambda_.4} parent=27 // pred_check
        %p208 = pneg %p33
      $region30: #{_lambda_.4} parent=27 // pred_check_branch
        %210 = sbr.rel (%p208) target = $region32
      $region31: #{_lambda_.4} parent=27 // pred_region
        %p211 = scmp.lt.s32.totalorder %s13, 1
        %s212 = scalar_select %p211, %s13, 1
        %s213 = smul.addr %s212, 32
        %s214 = smul.addr %s213, 4
        %s215 = scalar_lea.vmem %s0, %s214
      $region32: #{_lambda_.4} parent=27 // pred_fallthru
        _
    $region28: #{_lambda_.4} parent=5 // pred_fallthru
      _
    %p216 = scmp.le.s32.totalorder 1, %s13
    %p217 = scmp.lt.s32.totalorder %s13, 3
    %p218 = pnand %p216, %p217
    %p219 = pneg %p218
    // Predicated region
    $region33: #{_lambda_.4} parent=5 // pred_check
      _
    $region34: #{_lambda_.4} parent=5 // pred_check_branch
      %221 = sbr.rel (%p218) target = $region36
    $region35: #{_lambda_.4} parent=5 // pred_region
      %s222 = ssub.s32 %s13, 1
      %p223 = scmp.lt.s32.totalorder %s18, 1
      %s224 = scalar_select %p223, %s18, 1
      %s225 = smul.addr %s224, 32
      %s226 = smul.addr %s225, 4
      %s227 = scalar_lea.vmem %s0, %s226
      %p228 = pneg %p39
      %p229 = pneg %p36
      %p230 = pneg %p60
      %p231 = pneg %p57
      %p232 = pneg %p81
      %p233 = pneg %p78
      %p234 = pneg %p102
      %p235 = pneg %p99
      %p236 = pneg %p128
      %p237 = pneg %p125
      %p238 = scmp.lt.s32.totalorder %s18, 1
      %s239 = scalar_select %p238, %s18, 1
      %s240 = smul.addr %s239, 32
      %s241 = smul.addr %s240, 4
      %s242 = scalar_lea.vmem %s4, %s241
      %p243 = pneg %p154
      %p244 = pneg %p151
      %p245 = scmp.lt.s32.totalorder %s18, 1
      %s246 = scalar_select %p245, %s18, 1
      %s247 = smul.addr %s246, 8
      %s248 = scalar_lea.vmem %s5, %s247
      %p249 = pneg %p180
      %p250 = pneg %p177
      %p251 = scmp.lt.s32.totalorder %s18, 1
      %s252 = scalar_select %p251, %s18, 1
      %s253 = smul.addr %s252, 8
      %s254 = scalar_lea.vmem %s6, %s253
      %p255 = scmp.lt.s32.totalorder %s18, 1
      %s256 = scalar_select %p255, %s18, 1
      %s257 = smul.addr %s256, 32
      %s258 = smul.addr %s257, 4
      %s259 = scalar_lea.vmem %s0, %s258
      %p260 = scmp.lt.s32.totalorder %s18, 1
      %s261 = scalar_select %p260, %s18, 1
      %s262 = smul.addr %s261, 32
      %s263 = smul.addr %s262, 4
      %s264 = scalar_lea.vmem %s4, %s263
      %p265 = scmp.lt.s32.totalorder %s18, 1
      %s266 = scalar_select %p265, %s18, 1
      %s267 = smul.addr %s266, 8
      %s268 = scalar_lea.vmem %s5, %s267
      %p269 = scmp.lt.s32.totalorder %s18, 1
      %s270 = scalar_select %p269, %s18, 1
      %s271 = smul.addr %s270, 8
      %s272 = scalar_lea.vmem %s6, %s271
      %v274 = vld [vmem:[%s259] sm:$0xf]
      %v275 = vld [vmem:[%s259 + $0x4] sm:$0xf]
      %v276 = vld [vmem:[%s259 + $0x8] sm:$0xf]
      %v277 = vld [vmem:[%s259 + $0xc] sm:$0xf]
      %v278 = vld [vmem:[%s259 + $0x10] sm:$0xf]
      %v279 = vld [vmem:[%s259 + $0x14] sm:$0xf]
      %v280 = vld [vmem:[%s259 + $0x18] sm:$0xf]
      %v281 = vld [vmem:[%s259 + $0x1c] sm:$0xf]
      %v282 = vld [vmem:[%s259 + $0x20] sm:$0xf]
      %v283 = vld [vmem:[%s259 + $0x24] sm:$0xf]
      %v284 = vld [vmem:[%s259 + $0x28] sm:$0xf]
      %v285 = vld [vmem:[%s259 + $0x2c] sm:$0xf]
      %v286 = vld [vmem:[%s259 + $0x30] sm:$0xf]
      %v287 = vld [vmem:[%s259 + $0x34] sm:$0xf]
      %v288 = vld [vmem:[%s259 + $0x38] sm:$0xf]
      %v289 = vld [vmem:[%s259 + $0x3c] sm:$0xf]
      %v290 = vld [vmem:[%s259 + $0x40] sm:$0xf]
      %v291 = vld [vmem:[%s259 + $0x44] sm:$0xf]
      %v292 = vld [vmem:[%s259 + $0x48] sm:$0xf]
      %v293 = vld [vmem:[%s259 + $0x4c] sm:$0xf]
      %v294 = vld [vmem:[%s259 + $0x50] sm:$0xf]
      %v295 = vld [vmem:[%s259 + $0x54] sm:$0xf]
      %v296 = vld [vmem:[%s259 + $0x58] sm:$0xf]
      %v297 = vld [vmem:[%s259 + $0x5c] sm:$0xf]
      %v298 = vld [vmem:[%s259 + $0x60] sm:$0xf]
      %v299 = vld [vmem:[%s259 + $0x64] sm:$0xf]
      %v300 = vld [vmem:[%s259 + $0x68] sm:$0xf]
      %v301 = vld [vmem:[%s259 + $0x6c] sm:$0xf]
      %v302 = vld [vmem:[%s259 + $0x70] sm:$0xf]
      %v303 = vld [vmem:[%s259 + $0x74] sm:$0xf]
      %v304 = vld [vmem:[%s259 + $0x78] sm:$0xf]
      %v305 = vld [vmem:[%s259 + $0x7c] sm:$0xf]
      %v306 = vunpack.c.l.bf16 %v274
      %v307 = vunpack.c.l.bf16 %v275
      %v308 = vunpack.c.l.bf16 %v276
      %v309 = vunpack.c.l.bf16 %v277
      %v310 = vunpack.c.l.bf16 %v278
      %v311 = vunpack.c.l.bf16 %v279
      %v312 = vunpack.c.l.bf16 %v280
      %v313 = vunpack.c.l.bf16 %v281
      %v314 = vunpack.c.l.bf16 %v282
      %v315 = vunpack.c.l.bf16 %v283
      %v316 = vunpack.c.l.bf16 %v284
      %v317 = vunpack.c.l.bf16 %v285
      %v318 = vunpack.c.l.bf16 %v286
      %v319 = vunpack.c.l.bf16 %v287
      %v320 = vunpack.c.l.bf16 %v288
      %v321 = vunpack.c.l.bf16 %v289
      %v322 = vunpack.c.l.bf16 %v290
      %v323 = vunpack.c.l.bf16 %v291
      %v324 = vunpack.c.l.bf16 %v292
      %v325 = vunpack.c.l.bf16 %v293
      %v326 = vunpack.c.l.bf16 %v294
      %v327 = vunpack.c.l.bf16 %v295
      %v328 = vunpack.c.l.bf16 %v296
      %v329 = vunpack.c.l.bf16 %v297
      %v330 = vunpack.c.l.bf16 %v298
      %v331 = vunpack.c.l.bf16 %v299
      %v332 = vunpack.c.l.bf16 %v300
      %v333 = vunpack.c.l.bf16 %v301
      %v334 = vunpack.c.l.bf16 %v302
      %v335 = vunpack.c.l.bf16 %v303
      %v336 = vunpack.c.l.bf16 %v304
      %v337 = vunpack.c.l.bf16 %v305
      %v338 = vld [vmem:[%s1] sm:$0x1]
      %v340 = vlaneseq
      %v341 = vshrl.u32 %v340, 7
      %v342 = vsub.s32 0, %v341
      %v343 = vrot.slane %v338, %v342
      %v345 = vmul.f32 %v306, %v343
      %v346 = vmul.f32 %v307, %v343
      %v347 = vmul.f32 %v308, %v343
      %v348 = vmul.f32 %v309, %v343
      %v349 = vmul.f32 %v310, %v343
      %v350 = vmul.f32 %v311, %v343
      %v351 = vmul.f32 %v312, %v343
      %v352 = vmul.f32 %v313, %v343
      %v353 = vmul.f32 %v314, %v343
      %v354 = vmul.f32 %v315, %v343
      %v355 = vmul.f32 %v316, %v343
      %v356 = vmul.f32 %v317, %v343
      %v357 = vmul.f32 %v318, %v343
      %v358 = vmul.f32 %v319, %v343
      %v359 = vmul.f32 %v320, %v343
      %v360 = vmul.f32 %v321, %v343
      %v361 = vmul.f32 %v322, %v343
      %v362 = vmul.f32 %v323, %v343
      %v363 = vmul.f32 %v324, %v343
      %v364 = vmul.f32 %v325, %v343
      %v365 = vmul.f32 %v326, %v343
      %v366 = vmul.f32 %v327, %v343
      %v367 = vmul.f32 %v328, %v343
      %v368 = vmul.f32 %v329, %v343
      %v369 = vmul.f32 %v330, %v343
      %v370 = vmul.f32 %v331, %v343
      %v371 = vmul.f32 %v332, %v343
      %v372 = vmul.f32 %v333, %v343
      %v373 = vmul.f32 %v334, %v343
      %v374 = vmul.f32 %v335, %v343
      %v375 = vmul.f32 %v336, %v343
      %v376 = vmul.f32 %v337, %v343
      %v377 = vld [vmem:[%s2] sm:$0x1]
      %v379 = vlaneseq
      %v380 = vshrl.u32 %v379, 7
      %v381 = vsub.s32 0, %v380
      %v382 = vrot.slane %v377, %v381
      %v384 = vadd.f32 %v345, %v382
      %v385 = vadd.f32 %v346, %v382
      %v386 = vadd.f32 %v347, %v382
      %v387 = vadd.f32 %v348, %v382
      %v388 = vadd.f32 %v349, %v382
      %v389 = vadd.f32 %v350, %v382
      %v390 = vadd.f32 %v351, %v382
      %v391 = vadd.f32 %v352, %v382
      %v392 = vadd.f32 %v353, %v382
      %v393 = vadd.f32 %v354, %v382
      %v394 = vadd.f32 %v355, %v382
      %v395 = vadd.f32 %v356, %v382
      %v396 = vadd.f32 %v357, %v382
      %v397 = vadd.f32 %v358, %v382
      %v398 = vadd.f32 %v359, %v382
      %v399 = vadd.f32 %v360, %v382
      %v400 = vadd.f32 %v361, %v382
      %v401 = vadd.f32 %v362, %v382
      %v402 = vadd.f32 %v363, %v382
      %v403 = vadd.f32 %v364, %v382
      %v404 = vadd.f32 %v365, %v382
      %v405 = vadd.f32 %v366, %v382
      %v406 = vadd.f32 %v367, %v382
      %v407 = vadd.f32 %v368, %v382
      %v408 = vadd.f32 %v369, %v382
      %v409 = vadd.f32 %v370, %v382
      %v410 = vadd.f32 %v371, %v382
      %v411 = vadd.f32 %v372, %v382
      %v412 = vadd.f32 %v373, %v382
      %v413 = vadd.f32 %v374, %v382
      %v414 = vadd.f32 %v375, %v382
      %v415 = vadd.f32 %v376, %v382
      %v416 = vmul.f32 %v384, 0.5
      %v417 = vmul.f32 %v385, 0.5
      %v418 = vmul.f32 %v386, 0.5
      %v419 = vmul.f32 %v387, 0.5
      %v420 = vmul.f32 %v388, 0.5
      %v421 = vmul.f32 %v389, 0.5
      %v422 = vmul.f32 %v390, 0.5
      %v423 = vmul.f32 %v391, 0.5
      %v424 = vmul.f32 %v392, 0.5
      %v425 = vmul.f32 %v393, 0.5
      %v426 = vmul.f32 %v394, 0.5
      %v427 = vmul.f32 %v395, 0.5
      %v428 = vmul.f32 %v396, 0.5
      %v429 = vmul.f32 %v397, 0.5
      %v430 = vmul.f32 %v398, 0.5
      %v431 = vmul.f32 %v399, 0.5
      %v432 = vmul.f32 %v400, 0.5
      %v433 = vmul.f32 %v401, 0.5
      %v434 = vmul.f32 %v402, 0.5
      %v435 = vmul.f32 %v403, 0.5
      %v436 = vmul.f32 %v404, 0.5
      %v437 = vmul.f32 %v405, 0.5
      %v438 = vmul.f32 %v406, 0.5
      %v439 = vmul.f32 %v407, 0.5
      %v440 = vmul.f32 %v408, 0.5
      %v441 = vmul.f32 %v409, 0.5
      %v442 = vmul.f32 %v410, 0.5
      %v443 = vmul.f32 %v411, 0.5
      %v444 = vmul.f32 %v412, 0.5
      %v445 = vmul.f32 %v413, 0.5
      %v446 = vmul.f32 %v414, 0.5
      %v447 = vmul.f32 %v415, 0.5
      %v448 = vtanh.pop %v416
      %v449 = vtanh.pop %v417
      %v450 = vtanh.pop %v418
      %v451 = vtanh.pop %v419
      %v452 = vtanh.pop %v420
      %v453 = vtanh.pop %v421
      %v454 = vtanh.pop %v422
      %v455 = vtanh.pop %v423
      %v456 = vtanh.pop %v424
      %v457 = vtanh.pop %v425
      %v458 = vtanh.pop %v426
      %v459 = vtanh.pop %v427
      %v460 = vtanh.pop %v428
      %v461 = vtanh.pop %v429
      %v462 = vtanh.pop %v430
      %v463 = vtanh.pop %v431
      %v464 = vtanh.pop %v432
      %v465 = vtanh.pop %v433
      %v466 = vtanh.pop %v434
      %v467 = vtanh.pop %v435
      %v468 = vtanh.pop %v436
      %v469 = vtanh.pop %v437
      %v470 = vtanh.pop %v438
      %v471 = vtanh.pop %v439
      %v472 = vtanh.pop %v440
      %v473 = vtanh.pop %v441
      %v474 = vtanh.pop %v442
      %v475 = vtanh.pop %v443
      %v476 = vtanh.pop %v444
      %v477 = vtanh.pop %v445
      %v478 = vtanh.pop %v446
      %v479 = vtanh.pop %v447
      %v480 = vadd.f32 %v448, 1.0
      %v481 = vadd.f32 %v449, 1.0
      %v482 = vadd.f32 %v450, 1.0
      %v483 = vadd.f32 %v451, 1.0
      %v484 = vadd.f32 %v452, 1.0
      %v485 = vadd.f32 %v453, 1.0
      %v486 = vadd.f32 %v454, 1.0
      %v487 = vadd.f32 %v455, 1.0
      %v488 = vadd.f32 %v456, 1.0
      %v489 = vadd.f32 %v457, 1.0
      %v490 = vadd.f32 %v458, 1.0
      %v491 = vadd.f32 %v459, 1.0
      %v492 = vadd.f32 %v460, 1.0
      %v493 = vadd.f32 %v461, 1.0
      %v494 = vadd.f32 %v462, 1.0
      %v495 = vadd.f32 %v463, 1.0
      %v496 = vadd.f32 %v464, 1.0
      %v497 = vadd.f32 %v465, 1.0
      %v498 = vadd.f32 %v466, 1.0
      %v499 = vadd.f32 %v467, 1.0
      %v500 = vadd.f32 %v468, 1.0
      %v501 = vadd.f32 %v469, 1.0
      %v502 = vadd.f32 %v470, 1.0
      %v503 = vadd.f32 %v471, 1.0
      %v504 = vadd.f32 %v472, 1.0
      %v505 = vadd.f32 %v473, 1.0
      %v506 = vadd.f32 %v474, 1.0
      %v507 = vadd.f32 %v475, 1.0
      %v508 = vadd.f32 %v476, 1.0
      %v509 = vadd.f32 %v477, 1.0
      %v510 = vadd.f32 %v478, 1.0
      %v511 = vadd.f32 %v479, 1.0
      %v512 = vmul.f32 %v480, 0.5
      %v513 = vmul.f32 %v481, 0.5
      %v514 = vmul.f32 %v482, 0.5
      %v515 = vmul.f32 %v483, 0.5
      %v516 = vmul.f32 %v484, 0.5
      %v517 = vmul.f32 %v485, 0.5
      %v518 = vmul.f32 %v486, 0.5
      %v519 = vmul.f32 %v487, 0.5
      %v520 = vmul.f32 %v488, 0.5
      %v521 = vmul.f32 %v489, 0.5
      %v522 = vmul.f32 %v490, 0.5
      %v523 = vmul.f32 %v491, 0.5
      %v524 = vmul.f32 %v492, 0.5
      %v525 = vmul.f32 %v493, 0.5
      %v526 = vmul.f32 %v494, 0.5
      %v527 = vmul.f32 %v495, 0.5
      %v528 = vmul.f32 %v496, 0.5
      %v529 = vmul.f32 %v497, 0.5
      %v530 = vmul.f32 %v498, 0.5
      %v531 = vmul.f32 %v499, 0.5
      %v532 = vmul.f32 %v500, 0.5
      %v533 = vmul.f32 %v501, 0.5
      %v534 = vmul.f32 %v502, 0.5
      %v535 = vmul.f32 %v503, 0.5
      %v536 = vmul.f32 %v504, 0.5
      %v537 = vmul.f32 %v505, 0.5
      %v538 = vmul.f32 %v506, 0.5
      %v539 = vmul.f32 %v507, 0.5
      %v540 = vmul.f32 %v508, 0.5
      %v541 = vmul.f32 %v509, 0.5
      %v542 = vmul.f32 %v510, 0.5
      %v543 = vmul.f32 %v511, 0.5
      %v544 = vmul.f32 %v384, %v512
      %v545 = vmul.f32 %v385, %v513
      %v546 = vmul.f32 %v386, %v514
      %v547 = vmul.f32 %v387, %v515
      %v548 = vmul.f32 %v388, %v516
      %v549 = vmul.f32 %v389, %v517
      %v550 = vmul.f32 %v390, %v518
      %v551 = vmul.f32 %v391, %v519
      %v552 = vmul.f32 %v392, %v520
      %v553 = vmul.f32 %v393, %v521
      %v554 = vmul.f32 %v394, %v522
      %v555 = vmul.f32 %v395, %v523
      %v556 = vmul.f32 %v396, %v524
      %v557 = vmul.f32 %v397, %v525
      %v558 = vmul.f32 %v398, %v526
      %v559 = vmul.f32 %v399, %v527
      %v560 = vmul.f32 %v400, %v528
      %v561 = vmul.f32 %v401, %v529
      %v562 = vmul.f32 %v402, %v530
      %v563 = vmul.f32 %v403, %v531
      %v564 = vmul.f32 %v404, %v532
      %v565 = vmul.f32 %v405, %v533
      %v566 = vmul.f32 %v406, %v534
      %v567 = vmul.f32 %v407, %v535
      %v568 = vmul.f32 %v408, %v536
      %v569 = vmul.f32 %v409, %v537
      %v570 = vmul.f32 %v410, %v538
      %v571 = vmul.f32 %v411, %v539
      %v572 = vmul.f32 %v412, %v540
      %v573 = vmul.f32 %v413, %v541
      %v574 = vmul.f32 %v414, %v542
      %v575 = vmul.f32 %v415, %v543
      %v576 = vpack.c.bf16 %v545, %v544
      %v577 = vpack.c.bf16 %v547, %v546
      %v578 = vpack.c.bf16 %v549, %v548
      %v579 = vpack.c.bf16 %v551, %v550
      %v580 = vpack.c.bf16 %v553, %v552
      %v581 = vpack.c.bf16 %v555, %v554
      %v582 = vpack.c.bf16 %v557, %v556
      %v583 = vpack.c.bf16 %v559, %v558
      %v584 = vpack.c.bf16 %v561, %v560
      %v585 = vpack.c.bf16 %v563, %v562
      %v586 = vpack.c.bf16 %v565, %v564
      %v587 = vpack.c.bf16 %v567, %v566
      %v588 = vpack.c.bf16 %v569, %v568
      %v589 = vpack.c.bf16 %v571, %v570
      %v590 = vpack.c.bf16 %v573, %v572
      %v591 = vpack.c.bf16 %v575, %v574
      %vm592 = vcmask 60416
      %593 = vst.msk [vmem:[#allocation2] sm:$0xf] %vm592, 0
      %594 = vst.msk [vmem:[#allocation2 + $0x4] sm:$0xf] %vm592, 0
      %vm595 = vcmask 57344
      %596 = vst.msk [vmem:[#allocation2 + $0x8] sm:$0x1] %vm595, 0
      %597 = vst.msk [vmem:[#allocation2 + $0xc] sm:$0xf] %vm592, 0
      %598 = vst.msk [vmem:[#allocation2 + $0x10] sm:$0xf] %vm592, 0
      %599 = vst.msk [vmem:[#allocation2 + $0x14] sm:$0x1] %vm595, 0
      %600 = vst.msk [vmem:[#allocation2 + $0x18] sm:$0xf] %vm592, 0
      %601 = vst.msk [vmem:[#allocation2 + $0x1c] sm:$0xf] %vm592, 0
      %602 = vst.msk [vmem:[#allocation2 + $0x20] sm:$0x1] %vm595, 0
      %603 = vst.msk [vmem:[#allocation2 + $0x24] sm:$0xf] %vm592, 0
      %604 = vst.msk [vmem:[#allocation2 + $0x28] sm:$0xf] %vm592, 0
      %605 = vst.msk [vmem:[#allocation2 + $0x2c] sm:$0x1] %vm595, 0
      %606 = vst.msk [vmem:[#allocation2 + $0x30] sm:$0xf] %vm592, 0
      %607 = vst.msk [vmem:[#allocation2 + $0x34] sm:$0xf] %vm592, 0
      %608 = vst.msk [vmem:[#allocation2 + $0x38] sm:$0x1] %vm595, 0
      %609 = vst.msk [vmem:[#allocation2 + $0x3c] sm:$0xf] %vm592, 0
      %610 = vst.msk [vmem:[#allocation2 + $0x40] sm:$0xf] %vm592, 0
      %611 = vst.msk [vmem:[#allocation2 + $0x44] sm:$0x1] %vm595, 0
      %612 = vst.msk [vmem:[#allocation2 + $0x48] sm:$0xf] %vm592, 0
      %613 = vst.msk [vmem:[#allocation2 + $0x4c] sm:$0xf] %vm592, 0
      %614 = vst.msk [vmem:[#allocation2 + $0x50] sm:$0x1] %vm595, 0
      %615 = vst.msk [vmem:[#allocation2 + $0x54] sm:$0xf] %vm592, 0
      %616 = vst.msk [vmem:[#allocation2 + $0x58] sm:$0xf] %vm592, 0
      %617 = vst.msk [vmem:[#allocation2 + $0x5c] sm:$0x1] %vm595, 0
      %618 = vst.msk [vmem:[#allocation2 + $0x60] sm:$0xf] %vm592, 0
      %619 = vst.msk [vmem:[#allocation2 + $0x64] sm:$0xf] %vm592, 0
      %620 = vst.msk [vmem:[#allocation2 + $0x68] sm:$0x1] %vm595, 0
      %621 = vst.msk [vmem:[#allocation2 + $0x6c] sm:$0xf] %vm592, 0
      %622 = vst.msk [vmem:[#allocation2 + $0x70] sm:$0xf] %vm592, 0
      %623 = vst.msk [vmem:[#allocation2 + $0x74] sm:$0x1] %vm595, 0
      %624 = vst.msk [vmem:[#allocation2 + $0x78] sm:$0xf] %vm592, 0
      %625 = vst.msk [vmem:[#allocation2 + $0x7c] sm:$0xf] %vm592, 0
      %626 = vst.msk [vmem:[#allocation2 + $0x80] sm:$0x1] %vm595, 0
      %627 = vst.msk [vmem:[#allocation2 + $0x84] sm:$0xf] %vm592, 0
      %628 = vst.msk [vmem:[#allocation2 + $0x88] sm:$0xf] %vm592, 0
      %629 = vst.msk [vmem:[#allocation2 + $0x8c] sm:$0x1] %vm595, 0
      %630 = vst.msk [vmem:[#allocation2 + $0x90] sm:$0xf] %vm592, 0
      %631 = vst.msk [vmem:[#allocation2 + $0x94] sm:$0xf] %vm592, 0
      %632 = vst.msk [vmem:[#allocation2 + $0x98] sm:$0x1] %vm595, 0
      %633 = vst.msk [vmem:[#allocation2 + $0x9c] sm:$0xf] %vm592, 0
      %634 = vst.msk [vmem:[#allocation2 + $0xa0] sm:$0xf] %vm592, 0
      %635 = vst.msk [vmem:[#allocation2 + $0xa4] sm:$0x1] %vm595, 0
      %636 = vst.msk [vmem:[#allocation2 + $0xa8] sm:$0xf] %vm592, 0
      %637 = vst.msk [vmem:[#allocation2 + $0xac] sm:$0xf] %vm592, 0
      %638 = vst.msk [vmem:[#allocation2 + $0xb0] sm:$0x1] %vm595, 0
      %639 = vst.msk [vmem:[#allocation2 + $0xb4] sm:$0xf] %vm592, 0
      %640 = vst.msk [vmem:[#allocation2 + $0xb8] sm:$0xf] %vm592, 0
      %641 = vst.msk [vmem:[#allocation2 + $0xbc] sm:$0x1] %vm595, 0
      %642 = vst.msk [vmem:[#allocation2 + $0xc0] sm:$0xf] %vm592, 0
      %643 = vst.msk [vmem:[#allocation2 + $0xc4] sm:$0xf] %vm592, 0
      %644 = vst.msk [vmem:[#allocation2 + $0xc8] sm:$0x1] %vm595, 0
      %645 = vst.msk [vmem:[#allocation2 + $0xcc] sm:$0xf] %vm592, 0
      %646 = vst.msk [vmem:[#allocation2 + $0xd0] sm:$0xf] %vm592, 0
      %647 = vst.msk [vmem:[#allocation2 + $0xd4] sm:$0x1] %vm595, 0
      %v664 = vunpack.c.l.b16 %v576
      %v665 = vunpack.c.h.b16 %v576
      %v666 = vunpack.c.l.b16 %v577
      %v667 = vunpack.c.h.b16 %v577
      %v668 = vunpack.c.l.b16 %v578
      %v669 = vunpack.c.h.b16 %v578
      %v670 = vunpack.c.l.b16 %v579
      %v671 = vunpack.c.h.b16 %v579
      %v672 = vunpack.c.l.b16 %v580
      %v673 = vunpack.c.h.b16 %v580
      %v674 = vunpack.c.l.b16 %v581
      %v675 = vunpack.c.h.b16 %v581
      %v676 = vunpack.c.l.b16 %v582
      %v677 = vunpack.c.h.b16 %v582
      %v678 = vunpack.c.l.b16 %v583
      %v679 = vunpack.c.h.b16 %v583
      %v680 = vunpack.c.l.b16 %v584
      %v681 = vunpack.c.h.b16 %v584
      %v682 = vunpack.c.l.b16 %v585
      %v683 = vunpack.c.h.b16 %v585
      %v684 = vunpack.c.l.b16 %v586
      %v685 = vunpack.c.h.b16 %v586
      %v686 = vunpack.c.l.b16 %v587
      %v687 = vunpack.c.h.b16 %v587
      %v688 = vunpack.c.l.b16 %v588
      %v689 = vunpack.c.h.b16 %v588
      %v690 = vunpack.c.l.b16 %v589
      %v691 = vunpack.c.h.b16 %v589
      %v692 = vunpack.c.l.b16 %v590
      %v693 = vunpack.c.h.b16 %v590
      %v694 = vunpack.c.l.b16 %v591
      %v695 = vunpack.c.h.b16 %v591
      %v696 = vpack.c.b16 %v664, %v664
      %v697 = vpack.c.b16 %v665, %v665
      %v698 = vpack.c.b16 %v666, %v666
      %v699 = vpack.c.b16 %v667, %v667
      %v700 = vpack.c.b16 %v668, %v668
      %v701 = vpack.c.b16 %v669, %v669
      %v702 = vpack.c.b16 %v670, %v670
      %v703 = vpack.c.b16 %v671, %v671
      %v704 = vpack.c.b16 %v672, %v672
      %v705 = vpack.c.b16 %v673, %v673
      %v706 = vpack.c.b16 %v674, %v674
      %v707 = vpack.c.b16 %v675, %v675
      %v708 = vpack.c.b16 %v676, %v676
      %v709 = vpack.c.b16 %v677, %v677
      %v710 = vpack.c.b16 %v678, %v678
      %v711 = vpack.c.b16 %v679, %v679
      %v712 = vpack.c.b16 %v680, %v680
      %v713 = vpack.c.b16 %v681, %v681
      %v714 = vpack.c.b16 %v682, %v682
      %v715 = vpack.c.b16 %v683, %v683
      %v716 = vpack.c.b16 %v684, %v684
      %v717 = vpack.c.b16 %v685, %v685
      %v718 = vpack.c.b16 %v686, %v686
      %v719 = vpack.c.b16 %v687, %v687
      %v720 = vpack.c.b16 %v688, %v688
      %v721 = vpack.c.b16 %v689, %v689
      %v722 = vpack.c.b16 %v690, %v690
      %v723 = vpack.c.b16 %v691, %v691
      %v724 = vpack.c.b16 %v692, %v692
      %v725 = vpack.c.b16 %v693, %v693
      %v726 = vpack.c.b16 %v694, %v694
      %v727 = vpack.c.b16 %v695, %v695
      %vm728 = vsmask.f32 256
      %vm729 = vsmask.f32 4368
      %vm730 = vmor %vm728, %vm729
      %v732 = vshrl.u32 %v696, 16
      %v734 = vrot.slane %v732, 7
      %v735 = vshll.u32 %v696, 16
      %v737 = vor.u32 %v734, %v735
      %v738 = vrot.slane %v734, 4
      %v740 = vshrl.u32 %v697, 16
      %v742 = vrot.slane %v740, 7
      %v743 = vshll.u32 %v697, 16
      %v745 = vor.u32 %v742, %v743
      %v746 = vsel %vm730, %v738, %v745
      %v747 = vrot.slane %v742, 4
      %v749 = vshrl.u32 %v698, 16
      %v751 = vrot.slane %v749, 7
      %v752 = vshll.u32 %v698, 16
      %v754 = vor.u32 %v751, %v752
      %v755 = vrot.slane %v751, 4
      %v757 = vshrl.u32 %v699, 16
      %v759 = vrot.slane %v757, 7
      %v760 = vshll.u32 %v699, 16
      %v762 = vor.u32 %v759, %v760
      %v763 = vsel %vm730, %v755, %v762
      %v764 = vrot.slane %v759, 4
      %v766 = vshrl.u32 %v700, 16
      %v768 = vrot.slane %v766, 7
      %v769 = vshll.u32 %v700, 16
      %v771 = vor.u32 %v768, %v769
      %v772 = vrot.slane %v768, 4
      %v774 = vshrl.u32 %v701, 16
      %v776 = vrot.slane %v774, 7
      %v777 = vshll.u32 %v701, 16
      %v779 = vor.u32 %v776, %v777
      %v780 = vsel %vm730, %v772, %v779
      %v781 = vrot.slane %v776, 4
      %v783 = vshrl.u32 %v702, 16
      %v785 = vrot.slane %v783, 7
      %v786 = vshll.u32 %v702, 16
      %v788 = vor.u32 %v785, %v786
      %v789 = vrot.slane %v785, 4
      %v791 = vshrl.u32 %v703, 16
      %v793 = vrot.slane %v791, 7
      %v794 = vshll.u32 %v703, 16
      %v796 = vor.u32 %v793, %v794
      %v797 = vsel %vm730, %v789, %v796
      %v798 = vrot.slane %v793, 4
      %v800 = vshrl.u32 %v704, 16
      %v802 = vrot.slane %v800, 7
      %v803 = vshll.u32 %v704, 16
      %v805 = vor.u32 %v802, %v803
      %v806 = vrot.slane %v802, 4
      %v808 = vshrl.u32 %v705, 16
      %v810 = vrot.slane %v808, 7
      %v811 = vshll.u32 %v705, 16
      %v813 = vor.u32 %v810, %v811
      %v814 = vsel %vm730, %v806, %v813
      %v815 = vrot.slane %v810, 4
      %v817 = vshrl.u32 %v706, 16
      %v819 = vrot.slane %v817, 7
      %v820 = vshll.u32 %v706, 16
      %v822 = vor.u32 %v819, %v820
      %v823 = vrot.slane %v819, 4
      %v825 = vshrl.u32 %v707, 16
      %v827 = vrot.slane %v825, 7
      %v828 = vshll.u32 %v707, 16
      %v830 = vor.u32 %v827, %v828
      %v831 = vsel %vm730, %v823, %v830
      %v832 = vrot.slane %v827, 4
      %v834 = vshrl.u32 %v708, 16
      %v836 = vrot.slane %v834, 7
      %v837 = vshll.u32 %v708, 16
      %v839 = vor.u32 %v836, %v837
      %v840 = vrot.slane %v836, 4
      %v842 = vshrl.u32 %v709, 16
      %v844 = vrot.slane %v842, 7
      %v845 = vshll.u32 %v709, 16
      %v847 = vor.u32 %v844, %v845
      %v848 = vsel %vm730, %v840, %v847
      %v849 = vrot.slane %v844, 4
      %v851 = vshrl.u32 %v710, 16
      %v853 = vrot.slane %v851, 7
      %v854 = vshll.u32 %v710, 16
      %v856 = vor.u32 %v853, %v854
      %v857 = vrot.slane %v853, 4
      %v859 = vshrl.u32 %v711, 16
      %v861 = vrot.slane %v859, 7
      %v862 = vshll.u32 %v711, 16
      %v864 = vor.u32 %v861, %v862
      %v865 = vsel %vm730, %v857, %v864
      %v866 = vrot.slane %v861, 4
      %v868 = vshrl.u32 %v712, 16
      %v870 = vrot.slane %v868, 7
      %v871 = vshll.u32 %v712, 16
      %v873 = vor.u32 %v870, %v871
      %v874 = vrot.slane %v870, 4
      %v876 = vshrl.u32 %v713, 16
      %v878 = vrot.slane %v876, 7
      %v879 = vshll.u32 %v713, 16
      %v881 = vor.u32 %v878, %v879
      %v882 = vsel %vm730, %v874, %v881
      %v883 = vrot.slane %v878, 4
      %v885 = vshrl.u32 %v714, 16
      %v887 = vrot.slane %v885, 7
      %v888 = vshll.u32 %v714, 16
      %v890 = vor.u32 %v887, %v888
      %v891 = vrot.slane %v887, 4
      %v893 = vshrl.u32 %v715, 16
      %v895 = vrot.slane %v893, 7
      %v896 = vshll.u32 %v715, 16
      %v898 = vor.u32 %v895, %v896
      %v899 = vsel %vm730, %v891, %v898
      %v900 = vrot.slane %v895, 4
      %v902 = vshrl.u32 %v716, 16
      %v904 = vrot.slane %v902, 7
      %v905 = vshll.u32 %v716, 16
      %v907 = vor.u32 %v904, %v905
      %v908 = vrot.slane %v904, 4
      %v910 = vshrl.u32 %v717, 16
      %v912 = vrot.slane %v910, 7
      %v913 = vshll.u32 %v717, 16
      %v915 = vor.u32 %v912, %v913
      %v916 = vsel %vm730, %v908, %v915
      %v917 = vrot.slane %v912, 4
      %v919 = vshrl.u32 %v718, 16
      %v921 = vrot.slane %v919, 7
      %v922 = vshll.u32 %v718, 16
      %v924 = vor.u32 %v921, %v922
      %v925 = vrot.slane %v921, 4
      %v927 = vshrl.u32 %v719, 16
      %v929 = vrot.slane %v927, 7
      %v930 = vshll.u32 %v719, 16
      %v932 = vor.u32 %v929, %v930
      %v933 = vsel %vm730, %v925, %v932
      %v934 = vrot.slane %v929, 4
      %v936 = vshrl.u32 %v720, 16
      %v938 = vrot.slane %v936, 7
      %v939 = vshll.u32 %v720, 16
      %v941 = vor.u32 %v938, %v939
      %v942 = vrot.slane %v938, 4
      %v944 = vshrl.u32 %v721, 16
      %v946 = vrot.slane %v944, 7
      %v947 = vshll.u32 %v721, 16
      %v949 = vor.u32 %v946, %v947
      %v950 = vsel %vm730, %v942, %v949
      %v951 = vrot.slane %v946, 4
      %v953 = vshrl.u32 %v722, 16
      %v955 = vrot.slane %v953, 7
      %v956 = vshll.u32 %v722, 16
      %v958 = vor.u32 %v955, %v956
      %v959 = vrot.slane %v955, 4
      %v961 = vshrl.u32 %v723, 16
      %v963 = vrot.slane %v961, 7
      %v964 = vshll.u32 %v723, 16
      %v966 = vor.u32 %v963, %v964
      %v967 = vsel %vm730, %v959, %v966
      %v968 = vrot.slane %v963, 4
      %v970 = vshrl.u32 %v724, 16
      %v972 = vrot.slane %v970, 7
      %v973 = vshll.u32 %v724, 16
      %v975 = vor.u32 %v972, %v973
      %v976 = vrot.slane %v972, 4
      %v978 = vshrl.u32 %v725, 16
      %v980 = vrot.slane %v978, 7
      %v981 = vshll.u32 %v725, 16
      %v983 = vor.u32 %v980, %v981
      %v984 = vsel %vm730, %v976, %v983
      %v985 = vrot.slane %v980, 4
      %v987 = vshrl.u32 %v726, 16
      %v989 = vrot.slane %v987, 7
      %v990 = vshll.u32 %v726, 16
      %v992 = vor.u32 %v989, %v990
      %v993 = vrot.slane %v989, 4
      %v995 = vshrl.u32 %v727, 16
      %v997 = vrot.slane %v995, 7
      %v998 = vshll.u32 %v727, 16
      %v1000 = vor.u32 %v997, %v998
      %v1001 = vsel %vm730, %v993, %v1000
      %v1002 = vrot.slane %v997, 4
      %s1051 = scalar_lea.vmem [#allocation2], 12
      %vm1052 = vcmask 60416
      %vm1053 = vsmask.f32 7938
      %vm1054 = vmand %vm1052, %vm1053
      %v1055 = vld [vmem:[%s1051] sm:$0xf]
      %v1056 = vsel %vm1054, %v737, %v1055
      %1057 = vst [vmem:[%s1051] sm:$0xf] %v1056
      %1058 = vst.msk [vmem:[%s1051 + $0x4] sm:$0xf] %vm592, %v746
      %vm1059 = vcmask 57344
      %vm1060 = vmand %vm1059, %vm728
      %v1061 = vld [vmem:[%s1051 + $0x8] sm:$0x1]
      %v1062 = vsel %vm1060, %v747, %v1061
      %1063 = vst [vmem:[%s1051 + $0x8] sm:$0x1] %v1062
      %v1064 = vld [vmem:[%s1051 + $0xc] sm:$0xf]
      %v1065 = vsel %vm1054, %v754, %v1064
      %1066 = vst [vmem:[%s1051 + $0xc] sm:$0xf] %v1065
      %1067 = vst.msk [vmem:[%s1051 + $0x10] sm:$0xf] %vm592, %v763
      %v1068 = vld [vmem:[%s1051 + $0x14] sm:$0x1]
      %v1069 = vsel %vm1060, %v764, %v1068
      %1070 = vst [vmem:[%s1051 + $0x14] sm:$0x1] %v1069
      %v1071 = vld [vmem:[%s1051 + $0x18] sm:$0xf]
      %v1072 = vsel %vm1054, %v771, %v1071
      %1073 = vst [vmem:[%s1051 + $0x18] sm:$0xf] %v1072
      %1074 = vst.msk [vmem:[%s1051 + $0x1c] sm:$0xf] %vm592, %v780
      %v1075 = vld [vmem:[%s1051 + $0x20] sm:$0x1]
      %v1076 = vsel %vm1060, %v781, %v1075
      %1077 = vst [vmem:[%s1051 + $0x20] sm:$0x1] %v1076
      %v1078 = vld [vmem:[%s1051 + $0x24] sm:$0xf]
      %v1079 = vsel %vm1054, %v788, %v1078
      %1080 = vst [vmem:[%s1051 + $0x24] sm:$0xf] %v1079
      %1081 = vst.msk [vmem:[%s1051 + $0x28] sm:$0xf] %vm592, %v797
      %v1082 = vld [vmem:[%s1051 + $0x2c] sm:$0x1]
      %v1083 = vsel %vm1060, %v798, %v1082
      %1084 = vst [vmem:[%s1051 + $0x2c] sm:$0x1] %v1083
      %v1085 = vld [vmem:[%s1051 + $0x30] sm:$0xf]
      %v1086 = vsel %vm1054, %v805, %v1085
      %1087 = vst [vmem:[%s1051 + $0x30] sm:$0xf] %v1086
      %1088 = vst.msk [vmem:[%s1051 + $0x34] sm:$0xf] %vm592, %v814
      %v1089 = vld [vmem:[%s1051 + $0x38] sm:$0x1]
      %v1090 = vsel %vm1060, %v815, %v1089
      %1091 = vst [vmem:[%s1051 + $0x38] sm:$0x1] %v1090
      %v1092 = vld [vmem:[%s1051 + $0x3c] sm:$0xf]
      %v1093 = vsel %vm1054, %v822, %v1092
      %1094 = vst [vmem:[%s1051 + $0x3c] sm:$0xf] %v1093
      %1095 = vst.msk [vmem:[%s1051 + $0x40] sm:$0xf] %vm592, %v831
      %v1096 = vld [vmem:[%s1051 + $0x44] sm:$0x1]
      %v1097 = vsel %vm1060, %v832, %v1096
      %1098 = vst [vmem:[%s1051 + $0x44] sm:$0x1] %v1097
      %v1099 = vld [vmem:[%s1051 + $0x48] sm:$0xf]
      %v1100 = vsel %vm1054, %v839, %v1099
      %1101 = vst [vmem:[%s1051 + $0x48] sm:$0xf] %v1100
      %1102 = vst.msk [vmem:[%s1051 + $0x4c] sm:$0xf] %vm592, %v848
      %v1103 = vld [vmem:[%s1051 + $0x50] sm:$0x1]
      %v1104 = vsel %vm1060, %v849, %v1103
      %1105 = vst [vmem:[%s1051 + $0x50] sm:$0x1] %v1104
      %v1106 = vld [vmem:[%s1051 + $0x54] sm:$0xf]
      %v1107 = vsel %vm1054, %v856, %v1106
      %1108 = vst [vmem:[%s1051 + $0x54] sm:$0xf] %v1107
      %1109 = vst.msk [vmem:[%s1051 + $0x58] sm:$0xf] %vm592, %v865
      %v1110 = vld [vmem:[%s1051 + $0x5c] sm:$0x1]
      %v1111 = vsel %vm1060, %v866, %v1110
      %1112 = vst [vmem:[%s1051 + $0x5c] sm:$0x1] %v1111
      %v1113 = vld [vmem:[%s1051 + $0x60] sm:$0xf]
      %v1114 = vsel %vm1054, %v873, %v1113
      %1115 = vst [vmem:[%s1051 + $0x60] sm:$0xf] %v1114
      %1116 = vst.msk [vmem:[%s1051 + $0x64] sm:$0xf] %vm592, %v882
      %v1117 = vld [vmem:[%s1051 + $0x68] sm:$0x1]
      %v1118 = vsel %vm1060, %v883, %v1117
      %1119 = vst [vmem:[%s1051 + $0x68] sm:$0x1] %v1118
      %v1120 = vld [vmem:[%s1051 + $0x6c] sm:$0xf]
      %v1121 = vsel %vm1054, %v890, %v1120
      %1122 = vst [vmem:[%s1051 + $0x6c] sm:$0xf] %v1121
      %1123 = vst.msk [vmem:[%s1051 + $0x70] sm:$0xf] %vm592, %v899
      %v1124 = vld [vmem:[%s1051 + $0x74] sm:$0x1]
      %v1125 = vsel %vm1060, %v900, %v1124
      %1126 = vst [vmem:[%s1051 + $0x74] sm:$0x1] %v1125
      %v1127 = vld [vmem:[%s1051 + $0x78] sm:$0xf]
      %v1128 = vsel %vm1054, %v907, %v1127
      %1129 = vst [vmem:[%s1051 + $0x78] sm:$0xf] %v1128
      %1130 = vst.msk [vmem:[%s1051 + $0x7c] sm:$0xf] %vm592, %v916
      %v1131 = vld [vmem:[%s1051 + $0x80] sm:$0x1]
      %v1132 = vsel %vm1060, %v917, %v1131
      %1133 = vst [vmem:[%s1051 + $0x80] sm:$0x1] %v1132
      %v1134 = vld [vmem:[%s1051 + $0x84] sm:$0xf]
      %v1135 = vsel %vm1054, %v924, %v1134
      %1136 = vst [vmem:[%s1051 + $0x84] sm:$0xf] %v1135
      %1137 = vst.msk [vmem:[%s1051 + $0x88] sm:$0xf] %vm592, %v933
      %v1138 = vld [vmem:[%s1051 + $0x8c] sm:$0x1]
      %v1139 = vsel %vm1060, %v934, %v1138
      %1140 = vst [vmem:[%s1051 + $0x8c] sm:$0x1] %v1139
      %v1141 = vld [vmem:[%s1051 + $0x90] sm:$0xf]
      %v1142 = vsel %vm1054, %v941, %v1141
      %1143 = vst [vmem:[%s1051 + $0x90] sm:$0xf] %v1142
      %1144 = vst.msk [vmem:[%s1051 + $0x94] sm:$0xf] %vm592, %v950
      %v1145 = vld [vmem:[%s1051 + $0x98] sm:$0x1]
      %v1146 = vsel %vm1060, %v951, %v1145
      %1147 = vst [vmem:[%s1051 + $0x98] sm:$0x1] %v1146
      %v1148 = vld [vmem:[%s1051 + $0x9c] sm:$0xf]
      %v1149 = vsel %vm1054, %v958, %v1148
      %1150 = vst [vmem:[%s1051 + $0x9c] sm:$0xf] %v1149
      %1151 = vst.msk [vmem:[%s1051 + $0xa0] sm:$0xf] %vm592, %v967
      %v1152 = vld [vmem:[%s1051 + $0xa4] sm:$0x1]
      %v1153 = vsel %vm1060, %v968, %v1152
      %1154 = vst [vmem:[%s1051 + $0xa4] sm:$0x1] %v1153
      %v1155 = vld [vmem:[%s1051 + $0xa8] sm:$0xf]
      %v1156 = vsel %vm1054, %v975, %v1155
      %1157 = vst [vmem:[%s1051 + $0xa8] sm:$0xf] %v1156
      %1158 = vst.msk [vmem:[%s1051 + $0xac] sm:$0xf] %vm592, %v984
      %v1159 = vld [vmem:[%s1051 + $0xb0] sm:$0x1]
      %v1160 = vsel %vm1060, %v985, %v1159
      %1161 = vst [vmem:[%s1051 + $0xb0] sm:$0x1] %v1160
      %v1162 = vld [vmem:[%s1051 + $0xb4] sm:$0xf]
      %v1163 = vsel %vm1054, %v992, %v1162
      %1164 = vst [vmem:[%s1051 + $0xb4] sm:$0xf] %v1163
      %1165 = vst.msk [vmem:[%s1051 + $0xb8] sm:$0xf] %vm592, %v1001
      %v1166 = vld [vmem:[%s1051 + $0xbc] sm:$0x1]
      %v1167 = vsel %vm1060, %v1002, %v1166
      %1168 = vst [vmem:[%s1051 + $0xbc] sm:$0x1] %v1167
      %v1169 = vld [vmem:[#allocation2] sm:$0xf]
      %v1170 = vld [vmem:[#allocation2 + $0x4] sm:$0xf]
      %v1171 = vld [vmem:[#allocation2 + $0x8] sm:$0x1]
      %v1172 = vld [vmem:[#allocation2 + $0xc] sm:$0xf]
      %v1173 = vld [vmem:[#allocation2 + $0x10] sm:$0xf]
      %v1174 = vld [vmem:[#allocation2 + $0x14] sm:$0x1]
      %v1175 = vld [vmem:[#allocation2 + $0x18] sm:$0xf]
      %v1176 = vld [vmem:[#allocation2 + $0x1c] sm:$0xf]
      %v1177 = vld [vmem:[#allocation2 + $0x20] sm:$0x1]
      %v1178 = vld [vmem:[#allocation2 + $0x24] sm:$0xf]
      %v1179 = vld [vmem:[#allocation2 + $0x28] sm:$0xf]
      %v1180 = vld [vmem:[#allocation2 + $0x2c] sm:$0x1]
      %v1181 = vld [vmem:[#allocation2 + $0x30] sm:$0xf]
      %v1182 = vld [vmem:[#allocation2 + $0x34] sm:$0xf]
      %v1183 = vld [vmem:[#allocation2 + $0x38] sm:$0x1]
      %v1184 = vld [vmem:[#allocation2 + $0x3c] sm:$0xf]
      %v1185 = vld [vmem:[#allocation2 + $0x40] sm:$0xf]
      %v1186 = vld [vmem:[#allocation2 + $0x44] sm:$0x1]
      %v1187 = vld [vmem:[#allocation2 + $0x48] sm:$0xf]
      %v1188 = vld [vmem:[#allocation2 + $0x4c] sm:$0xf]
      %v1189 = vld [vmem:[#allocation2 + $0x50] sm:$0x1]
      %v1190 = vld [vmem:[#allocation2 + $0x54] sm:$0xf]
      %v1191 = vld [vmem:[#allocation2 + $0x58] sm:$0xf]
      %v1192 = vld [vmem:[#allocation2 + $0x5c] sm:$0x1]
      %v1193 = vld [vmem:[#allocation2 + $0x60] sm:$0xf]
      %v1194 = vld [vmem:[#allocation2 + $0x64] sm:$0xf]
      %v1195 = vld [vmem:[#allocation2 + $0x68] sm:$0x1]
      %v1196 = vld [vmem:[#allocation2 + $0x6c] sm:$0xf]
      %v1197 = vld [vmem:[#allocation2 + $0x70] sm:$0xf]
      %v1198 = vld [vmem:[#allocation2 + $0x74] sm:$0x1]
      %v1199 = vld [vmem:[#allocation2 + $0x78] sm:$0xf]
      %v1200 = vld [vmem:[#allocation2 + $0x7c] sm:$0xf]
      %v1201 = vld [vmem:[#allocation2 + $0x80] sm:$0x1]
      %v1202 = vld [vmem:[#allocation2 + $0x84] sm:$0xf]
      %v1203 = vld [vmem:[#allocation2 + $0x88] sm:$0xf]
      %v1204 = vld [vmem:[#allocation2 + $0x8c] sm:$0x1]
      %v1205 = vld [vmem:[#allocation2 + $0x90] sm:$0xf]
      %v1206 = vld [vmem:[#allocation2 + $0x94] sm:$0xf]
      %v1207 = vld [vmem:[#allocation2 + $0x98] sm:$0x1]
      %v1208 = vld [vmem:[#allocation2 + $0x9c] sm:$0xf]
      %v1209 = vld [vmem:[#allocation2 + $0xa0] sm:$0xf]
      %v1210 = vld [vmem:[#allocation2 + $0xa4] sm:$0x1]
      %v1211 = vld [vmem:[#allocation2 + $0xa8] sm:$0xf]
      %v1212 = vld [vmem:[#allocation2 + $0xac] sm:$0xf]
      %v1213 = vld [vmem:[#allocation2 + $0xb0] sm:$0x1]
      %v1214 = vld [vmem:[#allocation2 + $0xb4] sm:$0xf]
      %v1215 = vld [vmem:[#allocation2 + $0xb8] sm:$0xf]
      %v1216 = vld [vmem:[#allocation2 + $0xbc] sm:$0x1]
      %v1217 = vld [vmem:[#allocation2 + $0xc0] sm:$0xf]
      %v1218 = vld [vmem:[#allocation2 + $0xc4] sm:$0xf]
      %v1219 = vld [vmem:[#allocation2 + $0xc8] sm:$0x1]
      %v1220 = vld [vmem:[#allocation2 + $0xcc] sm:$0xf]
      %v1221 = vld [vmem:[#allocation2 + $0xd0] sm:$0xf]
      %v1222 = vld [vmem:[#allocation2 + $0xd4] sm:$0x1]
      %v1223 = vld [vmem:[%s3] sm:$0xf]
      %v1224 = vld [vmem:[%s3 + $0x4] sm:$0xf]
      %v1225 = vld [vmem:[%s3 + $0x8] sm:$0xf]
      %v1226 = vld [vmem:[%s3 + $0xc] sm:$0xf]
      %v1227 = vld [vmem:[%s3 + $0x10] sm:$0xf]
      %v1228 = vld [vmem:[%s3 + $0x14] sm:$0xf]
      %v1229 = vld [vmem:[%s3 + $0x18] sm:$0xf]
      %v1230 = vld [vmem:[%s3 + $0x1c] sm:$0xf]
      %v1231 = vld [vmem:[%s3 + $0x20] sm:$0xf]
      %vm1232 = vsmask.f32 3328
      %vm1233 = vsmask.f32 7440
      %vm1234 = vmor %vm1232, %vm1233
      %v1236 = vshrl.u32 %v1169, 16
      %v1238 = vrot.slane %v1236, 4
      %v1239 = vshll.u32 %v1169, 16
      %v1241 = vrot.slane %v1239, 5
      %v1242 = vor.u32 %v1238, %v1241
      %v1243 = vrot.slane %v1242, 4
      %v1245 = vshll.u32 %v1170, 16
      %v1247 = vrot.slane %v1245, 5
      %v1248 = vsel %vm1234, %v1243, %v1247
      %v1249 = vshrl.u32 %v1170, 16
      %v1251 = vrot.slane %v1249, 4
      %v1252 = vor.u32 %v1251, %v1247
      %v1253 = vrot.slane %v1252, 4
      %v1255 = vshll.u32 %v1171, 16
      %v1257 = vrot.slane %v1255, 5
      %v1258 = vsel %vm1234, %v1253, %v1257
      %v1260 = vshrl.u32 %v1172, 16
      %v1262 = vrot.slane %v1260, 4
      %v1263 = vshll.u32 %v1172, 16
      %v1265 = vrot.slane %v1263, 5
      %v1266 = vor.u32 %v1262, %v1265
      %v1267 = vrot.slane %v1266, 4
      %v1269 = vshll.u32 %v1173, 16
      %v1271 = vrot.slane %v1269, 5
      %v1272 = vsel %vm1234, %v1267, %v1271
      %v1273 = vshrl.u32 %v1173, 16
      %v1275 = vrot.slane %v1273, 4
      %v1276 = vor.u32 %v1275, %v1271
      %v1277 = vrot.slane %v1276, 4
      %v1279 = vshll.u32 %v1174, 16
      %v1281 = vrot.slane %v1279, 5
      %v1282 = vsel %vm1234, %v1277, %v1281
      %v1284 = vshrl.u32 %v1175, 16
      %v1286 = vrot.slane %v1284, 4
      %v1287 = vshll.u32 %v1175, 16
      %v1289 = vrot.slane %v1287, 5
      %v1290 = vor.u32 %v1286, %v1289
      %v1291 = vrot.slane %v1290, 4
      %v1293 = vshll.u32 %v1176, 16
      %v1295 = vrot.slane %v1293, 5
      %v1296 = vsel %vm1234, %v1291, %v1295
      %v1297 = vshrl.u32 %v1176, 16
      %v1299 = vrot.slane %v1297, 4
      %v1300 = vor.u32 %v1299, %v1295
      %v1301 = vrot.slane %v1300, 4
      %v1303 = vshll.u32 %v1177, 16
      %v1305 = vrot.slane %v1303, 5
      %v1306 = vsel %vm1234, %v1301, %v1305
      %v1308 = vshrl.u32 %v1178, 16
      %v1310 = vrot.slane %v1308, 4
      %v1311 = vshll.u32 %v1178, 16
      %v1313 = vrot.slane %v1311, 5
      %v1314 = vor.u32 %v1310, %v1313
      %v1315 = vrot.slane %v1314, 4
      %v1317 = vshll.u32 %v1179, 16
      %v1319 = vrot.slane %v1317, 5
      %v1320 = vsel %vm1234, %v1315, %v1319
      %v1321 = vshrl.u32 %v1179, 16
      %v1323 = vrot.slane %v1321, 4
      %v1324 = vor.u32 %v1323, %v1319
      %v1325 = vrot.slane %v1324, 4
      %v1327 = vshll.u32 %v1180, 16
      %v1329 = vrot.slane %v1327, 5
      %v1330 = vsel %vm1234, %v1325, %v1329
      %v1332 = vshrl.u32 %v1181, 16
      %v1334 = vrot.slane %v1332, 4
      %v1335 = vshll.u32 %v1181, 16
      %v1337 = vrot.slane %v1335, 5
      %v1338 = vor.u32 %v1334, %v1337
      %v1339 = vrot.slane %v1338, 4
      %v1341 = vshll.u32 %v1182, 16
      %v1343 = vrot.slane %v1341, 5
      %v1344 = vsel %vm1234, %v1339, %v1343
      %v1345 = vshrl.u32 %v1182, 16
      %v1347 = vrot.slane %v1345, 4
      %v1348 = vor.u32 %v1347, %v1343
      %v1349 = vrot.slane %v1348, 4
      %v1351 = vshll.u32 %v1183, 16
      %v1353 = vrot.slane %v1351, 5
      %v1354 = vsel %vm1234, %v1349, %v1353
      %v1356 = vshrl.u32 %v1184, 16
      %v1358 = vrot.slane %v1356, 4
      %v1359 = vshll.u32 %v1184, 16
      %v1361 = vrot.slane %v1359, 5
      %v1362 = vor.u32 %v1358, %v1361
      %v1363 = vrot.slane %v1362, 4
      %v1365 = vshll.u32 %v1185, 16
      %v1367 = vrot.slane %v1365, 5
      %v1368 = vsel %vm1234, %v1363, %v1367
      %v1369 = vshrl.u32 %v1185, 16
      %v1371 = vrot.slane %v1369, 4
      %v1372 = vor.u32 %v1371, %v1367
      %v1373 = vrot.slane %v1372, 4
      %v1375 = vshll.u32 %v1186, 16
      %v1377 = vrot.slane %v1375, 5
      %v1378 = vsel %vm1234, %v1373, %v1377
      %v1380 = vshrl.u32 %v1187, 16
      %v1382 = vrot.slane %v1380, 4
      %v1383 = vshll.u32 %v1187, 16
      %v1385 = vrot.slane %v1383, 5
      %v1386 = vor.u32 %v1382, %v1385
      %v1387 = vrot.slane %v1386, 4
      %v1389 = vshll.u32 %v1188, 16
      %v1391 = vrot.slane %v1389, 5
      %v1392 = vsel %vm1234, %v1387, %v1391
      %v1393 = vshrl.u32 %v1188, 16
      %v1395 = vrot.slane %v1393, 4
      %v1396 = vor.u32 %v1395, %v1391
      %v1397 = vrot.slane %v1396, 4
      %v1399 = vshll.u32 %v1189, 16
      %v1401 = vrot.slane %v1399, 5
      %v1402 = vsel %vm1234, %v1397, %v1401
      %v1404 = vshrl.u32 %v1190, 16
      %v1406 = vrot.slane %v1404, 4
      %v1407 = vshll.u32 %v1190, 16
      %v1409 = vrot.slane %v1407, 5
      %v1410 = vor.u32 %v1406, %v1409
      %v1411 = vrot.slane %v1410, 4
      %v1413 = vshll.u32 %v1191, 16
      %v1415 = vrot.slane %v1413, 5
      %v1416 = vsel %vm1234, %v1411, %v1415
      %v1417 = vshrl.u32 %v1191, 16
      %v1419 = vrot.slane %v1417, 4
      %v1420 = vor.u32 %v1419, %v1415
      %v1421 = vrot.slane %v1420, 4
      %v1423 = vshll.u32 %v1192, 16
      %v1425 = vrot.slane %v1423, 5
      %v1426 = vsel %vm1234, %v1421, %v1425
      %v1428 = vshrl.u32 %v1193, 16
      %v1430 = vrot.slane %v1428, 4
      %v1431 = vshll.u32 %v1193, 16
      %v1433 = vrot.slane %v1431, 5
      %v1434 = vor.u32 %v1430, %v1433
      %v1435 = vrot.slane %v1434, 4
      %v1437 = vshll.u32 %v1194, 16
      %v1439 = vrot.slane %v1437, 5
      %v1440 = vsel %vm1234, %v1435, %v1439
      %v1441 = vshrl.u32 %v1194, 16
      %v1443 = vrot.slane %v1441, 4
      %v1444 = vor.u32 %v1443, %v1439
      %v1445 = vrot.slane %v1444, 4
      %v1447 = vshll.u32 %v1195, 16
      %v1449 = vrot.slane %v1447, 5
      %v1450 = vsel %vm1234, %v1445, %v1449
      %v1452 = vshrl.u32 %v1196, 16
      %v1454 = vrot.slane %v1452, 4
      %v1455 = vshll.u32 %v1196, 16
      %v1457 = vrot.slane %v1455, 5
      %v1458 = vor.u32 %v1454, %v1457
      %v1459 = vrot.slane %v1458, 4
      %v1461 = vshll.u32 %v1197, 16
      %v1463 = vrot.slane %v1461, 5
      %v1464 = vsel %vm1234, %v1459, %v1463
      %v1465 = vshrl.u32 %v1197, 16
      %v1467 = vrot.slane %v1465, 4
      %v1468 = vor.u32 %v1467, %v1463
      %v1469 = vrot.slane %v1468, 4
      %v1471 = vshll.u32 %v1198, 16
      %v1473 = vrot.slane %v1471, 5
      %v1474 = vsel %vm1234, %v1469, %v1473
      %v1476 = vshrl.u32 %v1199, 16
      %v1478 = vrot.slane %v1476, 4
      %v1479 = vshll.u32 %v1199, 16
      %v1481 = vrot.slane %v1479, 5
      %v1482 = vor.u32 %v1478, %v1481
      %v1483 = vrot.slane %v1482, 4
      %v1485 = vshll.u32 %v1200, 16
      %v1487 = vrot.slane %v1485, 5
      %v1488 = vsel %vm1234, %v1483, %v1487
      %v1489 = vshrl.u32 %v1200, 16
      %v1491 = vrot.slane %v1489, 4
      %v1492 = vor.u32 %v1491, %v1487
      %v1493 = vrot.slane %v1492, 4
      %v1495 = vshll.u32 %v1201, 16
      %v1497 = vrot.slane %v1495, 5
      %v1498 = vsel %vm1234, %v1493, %v1497
      %v1500 = vshrl.u32 %v1202, 16
      %v1502 = vrot.slane %v1500, 4
      %v1503 = vshll.u32 %v1202, 16
      %v1505 = vrot.slane %v1503, 5
      %v1506 = vor.u32 %v1502, %v1505
      %v1507 = vrot.slane %v1506, 4
      %v1509 = vshll.u32 %v1203, 16
      %v1511 = vrot.slane %v1509, 5
      %v1512 = vsel %vm1234, %v1507, %v1511
      %v1513 = vshrl.u32 %v1203, 16
      %v1515 = vrot.slane %v1513, 4
      %v1516 = vor.u32 %v1515, %v1511
      %v1517 = vrot.slane %v1516, 4
      %v1519 = vshll.u32 %v1204, 16
      %v1521 = vrot.slane %v1519, 5
      %v1522 = vsel %vm1234, %v1517, %v1521
      %v1524 = vshrl.u32 %v1205, 16
      %v1526 = vrot.slane %v1524, 4
      %v1527 = vshll.u32 %v1205, 16
      %v1529 = vrot.slane %v1527, 5
      %v1530 = vor.u32 %v1526, %v1529
      %v1531 = vrot.slane %v1530, 4
      %v1533 = vshll.u32 %v1206, 16
      %v1535 = vrot.slane %v1533, 5
      %v1536 = vsel %vm1234, %v1531, %v1535
      %v1537 = vshrl.u32 %v1206, 16
      %v1539 = vrot.slane %v1537, 4
      %v1540 = vor.u32 %v1539, %v1535
      %v1541 = vrot.slane %v1540, 4
      %v1543 = vshll.u32 %v1207, 16
      %v1545 = vrot.slane %v1543, 5
      %v1546 = vsel %vm1234, %v1541, %v1545
      %v1548 = vshrl.u32 %v1208, 16
      %v1550 = vrot.slane %v1548, 4
      %v1551 = vshll.u32 %v1208, 16
      %v1553 = vrot.slane %v1551, 5
      %v1554 = vor.u32 %v1550, %v1553
      %v1555 = vrot.slane %v1554, 4
      %v1557 = vshll.u32 %v1209, 16
      %v1559 = vrot.slane %v1557, 5
      %v1560 = vsel %vm1234, %v1555, %v1559
      %v1561 = vshrl.u32 %v1209, 16
      %v1563 = vrot.slane %v1561, 4
      %v1564 = vor.u32 %v1563, %v1559
      %v1565 = vrot.slane %v1564, 4
      %v1567 = vshll.u32 %v1210, 16
      %v1569 = vrot.slane %v1567, 5
      %v1570 = vsel %vm1234, %v1565, %v1569
      %v1572 = vshrl.u32 %v1211, 16
      %v1574 = vrot.slane %v1572, 4
      %v1575 = vshll.u32 %v1211, 16
      %v1577 = vrot.slane %v1575, 5
      %v1578 = vor.u32 %v1574, %v1577
      %v1579 = vrot.slane %v1578, 4
      %v1581 = vshll.u32 %v1212, 16
      %v1583 = vrot.slane %v1581, 5
      %v1584 = vsel %vm1234, %v1579, %v1583
      %v1585 = vshrl.u32 %v1212, 16
      %v1587 = vrot.slane %v1585, 4
      %v1588 = vor.u32 %v1587, %v1583
      %v1589 = vrot.slane %v1588, 4
      %v1591 = vshll.u32 %v1213, 16
      %v1593 = vrot.slane %v1591, 5
      %v1594 = vsel %vm1234, %v1589, %v1593
      %v1596 = vshrl.u32 %v1214, 16
      %v1598 = vrot.slane %v1596, 4
      %v1599 = vshll.u32 %v1214, 16
      %v1601 = vrot.slane %v1599, 5
      %v1602 = vor.u32 %v1598, %v1601
      %v1603 = vrot.slane %v1602, 4
      %v1605 = vshll.u32 %v1215, 16
      %v1607 = vrot.slane %v1605, 5
      %v1608 = vsel %vm1234, %v1603, %v1607
      %v1609 = vshrl.u32 %v1215, 16
      %v1611 = vrot.slane %v1609, 4
      %v1612 = vor.u32 %v1611, %v1607
      %v1613 = vrot.slane %v1612, 4
      %v1615 = vshll.u32 %v1216, 16
      %v1617 = vrot.slane %v1615, 5
      %v1618 = vsel %vm1234, %v1613, %v1617
      %v1619 = vunpack.c.l.b16 %v1248
      %v1620 = vunpack.c.l.b16 %v1258
      %v1621 = vunpack.c.l.b16 %v1272
      %v1622 = vunpack.c.l.b16 %v1282
      %v1623 = vunpack.c.l.b16 %v1296
      %v1624 = vunpack.c.l.b16 %v1306
      %v1625 = vunpack.c.l.b16 %v1320
      %v1626 = vunpack.c.l.b16 %v1330
      %v1627 = vunpack.c.l.b16 %v1344
      %v1628 = vunpack.c.l.b16 %v1354
      %v1629 = vunpack.c.l.b16 %v1368
      %v1630 = vunpack.c.l.b16 %v1378
      %v1631 = vunpack.c.l.b16 %v1392
      %v1632 = vunpack.c.l.b16 %v1402
      %v1633 = vunpack.c.l.b16 %v1416
      %v1634 = vunpack.c.l.b16 %v1426
      %v1635 = vunpack.c.l.b16 %v1440
      %v1636 = vunpack.c.l.b16 %v1450
      %v1637 = vunpack.c.l.b16 %v1464
      %v1638 = vunpack.c.l.b16 %v1474
      %v1639 = vunpack.c.l.b16 %v1488
      %v1640 = vunpack.c.l.b16 %v1498
      %v1641 = vunpack.c.l.b16 %v1512
      %v1642 = vunpack.c.l.b16 %v1522
      %v1643 = vunpack.c.l.b16 %v1536
      %v1644 = vunpack.c.l.b16 %v1546
      %v1645 = vunpack.c.l.b16 %v1560
      %v1646 = vunpack.c.l.b16 %v1570
      %v1647 = vunpack.c.l.b16 %v1584
      %v1648 = vunpack.c.l.b16 %v1594
      %v1649 = vunpack.c.l.b16 %v1608
      %v1650 = vunpack.c.l.b16 %v1618
      %v1651 = vpack.c.b16 %v1620, %v1619
      %v1652 = vpack.c.b16 %v1622, %v1621
      %v1653 = vpack.c.b16 %v1624, %v1623
      %v1654 = vpack.c.b16 %v1626, %v1625
      %v1655 = vpack.c.b16 %v1628, %v1627
      %v1656 = vpack.c.b16 %v1630, %v1629
      %v1657 = vpack.c.b16 %v1632, %v1631
      %v1658 = vpack.c.b16 %v1634, %v1633
      %v1659 = vpack.c.b16 %v1636, %v1635
      %v1660 = vpack.c.b16 %v1638, %v1637
      %v1661 = vpack.c.b16 %v1640, %v1639
      %v1662 = vpack.c.b16 %v1642, %v1641
      %v1663 = vpack.c.b16 %v1644, %v1643
      %v1664 = vpack.c.b16 %v1646, %v1645
      %v1665 = vpack.c.b16 %v1648, %v1647
      %v1666 = vpack.c.b16 %v1650, %v1649
      %vm1667 = vcmask 64512
      %v1669 = vsel %vm1667, %v1651, 0
      %v1672 = vsel %vm1667, %v1652, 0
      %v1675 = vsel %vm1667, %v1653, 0
      %v1678 = vsel %vm1667, %v1654, 0
      %v1681 = vsel %vm1667, %v1655, 0
      %v1684 = vsel %vm1667, %v1656, 0
      %v1687 = vsel %vm1667, %v1657, 0
      %v1690 = vsel %vm1667, %v1658, 0
      %v1693 = vsel %vm1667, %v1659, 0
      %v1696 = vsel %vm1667, %v1660, 0
      %v1699 = vsel %vm1667, %v1661, 0
      %v1702 = vsel %vm1667, %v1662, 0
      %v1705 = vsel %vm1667, %v1663, 0
      %v1708 = vsel %vm1667, %v1664, 0
      %v1711 = vsel %vm1667, %v1665, 0
      %v1714 = vsel %vm1667, %v1666, 0
      %vm1716 = vcmask 1043456
      %v1718 = vsel %vm1716, %v1224, 0
      %1720 = vmatprep.subr.bf16.mxu0 0
      %1721 = vmatpush1.bf16.msra.mxu0 %v1718
      %1722 = vmatprep.subr.bf16.mxu0 0
      %1723 = vmatpush1.bf16.msra.mxu0 0
      %1724 = vmatprep.subr.bf16.mxu0 0
      %1725 = vmatpush1.bf16.msra.mxu0 0
      %1726 = vmatprep.subr.bf16.mxu0 0
      %1727 = vmatpush1.bf16.msra.mxu0 0
      %1728 = vmatprep.subr.bf16.mxu0 0
      %1729 = vmatpush1.bf16.msra.mxu0 0
      %1730 = vmatprep.subr.bf16.mxu0 0
      %1731 = vmatpush1.bf16.msra.mxu0 0
      %1732 = vmatprep.subr.bf16.mxu0 0
      %1733 = vmatpush1.bf16.msra.mxu0 0
      %1734 = vmatprep.subr.bf16.mxu0 0
      %1735 = vmatpush1.bf16.msra.mxu0 0
      %1736 = vmatprep.subr.bf16.mxu0 0
      %1737 = vmatpush1.bf16.msra.mxu0 0
      %1738 = vmatprep.subr.bf16.mxu0 0
      %1739 = vmatpush1.bf16.msra.mxu0 0
      %1740 = vmatprep.subr.bf16.mxu0 0
      %1741 = vmatpush1.bf16.msra.mxu0 0
      %1742 = vmatprep.subr.bf16.mxu0 0
      %1743 = vmatpush1.bf16.msra.mxu0 0
      %1744 = vmatprep.subr.bf16.mxu0 0
      %1745 = vmatpush1.bf16.msra.mxu0 0
      %1746 = vmatprep.subr.bf16.mxu0 0
      %1747 = vmatpush1.bf16.msra.mxu0 0
      %1748 = vmatprep.subr.bf16.mxu0 0
      %1749 = vmatpush1.bf16.msra.mxu0 0
      %1750 = vmatprep.subr.bf16.mxu0 0
      %1751 = vmatpush1.bf16.msra.mxu0 0
      %1752 = vmatprep.mubr.bf16.mxu0 0
      %1753 = vmatmul.mubr.bf16.gmra.mrb[0].mxu0 %v1669
      %v1754 = vpop.f32.mrb[0].mxu0
      %v1755 = vadd.f32 0.0, %v1754
      %v1756 = vpop.f32.mrb[0].mxu0
      %v1757 = vpop.f32.mrb[0].mxu0
      %v1758 = vadd.f32 0.0, %v1757
      %v1759 = vpop.f32.mrb[0].mxu0
      %1760 = vmatprep.mubr.bf16.mxu0 0
      %1761 = vmatmul.mubr.bf16.gmra.mrb[0].mxu0 %v1672
      %v1762 = vpop.f32.mrb[0].mxu0
      %v1763 = vadd.f32 0.0, %v1762
      %v1764 = vpop.f32.mrb[0].mxu0
      %v1765 = vpop.f32.mrb[0].mxu0
      %v1766 = vadd.f32 0.0, %v1765
      %v1767 = vpop.f32.mrb[0].mxu0
      %1768 = vmatprep.mubr.bf16.mxu0 0
      %1769 = vmatmul.mubr.bf16.gmra.mrb[0].mxu0 %v1675
      %v1770 = vpop.f32.mrb[0].mxu0
      %v1771 = vadd.f32 0.0, %v1770
      %v1772 = vpop.f32.mrb[0].mxu0
      %v1773 = vpop.f32.mrb[0].mxu0
      %v1774 = vadd.f32 0.0, %v1773
      %v1775 = vpop.f32.mrb[0].mxu0
      %1776 = vmatprep.mubr.bf16.mxu0 0
      %1777 = vmatmul.mubr.bf16.gmra.mrb[0].mxu0 %v1678
      %v1778 = vpop.f32.mrb[0].mxu0
      %v1779 = vadd.f32 0.0, %v1778
      %v1780 = vpop.f32.mrb[0].mxu0
      %v1781 = vpop.f32.mrb[0].mxu0
      %v1782 = vadd.f32 0.0, %v1781
      %v1783 = vpop.f32.mrb[0].mxu0
      %1784 = vmatprep.mubr.bf16.mxu0 0
      %1785 = vmatmul.mubr.bf16.gmra.mrb[0].mxu0 %v1681
      %v1786 = vpop.f32.mrb[0].mxu0
      %v1787 = vadd.f32 0.0, %v1786
      %v1788 = vpop.f32.mrb[0].mxu0
      %v1789 = vpop.f32.mrb[0].mxu0
      %v1790 = vadd.f32 0.0, %v1789
      %v1791 = vpop.f32.mrb[0].mxu0
      %1792 = vmatprep.mubr.bf16.mxu0 0
      %1793 = vmatmul.mubr.bf16.gmra.mrb[0].mxu0 %v1684
      %v1794 = vpop.f32.mrb[0].mxu0
      %v1795 = vadd.f32 0.0, %v1794
      %v1796 = vpop.f32.mrb[0].mxu0
      %v1797 = vpop.f32.mrb[0].mxu0
      %v1798 = vadd.f32 0.0, %v1797
      %v1799 = vpop.f32.mrb[0].mxu0
      %1800 = vmatprep.mubr.bf16.mxu0 0
      %1801 = vmatmul.mubr.bf16.gmra.mrb[0].mxu0 %v1687
      %v1802 = vpop.f32.mrb[0].mxu0
      %v1803 = vadd.f32 0.0, %v1802
      %v1804 = vpop.f32.mrb[0].mxu0
      %v1805 = vpop.f32.mrb[0].mxu0
      %v1806 = vadd.f32 0.0, %v1805
      %v1807 = vpop.f32.mrb[0].mxu0
      %1808 = vmatprep.mubr.bf16.mxu0 0
      %1809 = vmatmul.mubr.bf16.gmra.mrb[0].mxu0 %v1690
      %v1810 = vpop.f32.mrb[0].mxu0
      %v1811 = vadd.f32 0.0, %v1810
      %v1812 = vpop.f32.mrb[0].mxu0
      %v1813 = vpop.f32.mrb[0].mxu0
      %v1814 = vadd.f32 0.0, %v1813
      %v1815 = vpop.f32.mrb[0].mxu0
      %1816 = vmatprep.mubr.bf16.mxu0 0
      %1817 = vmatmul.mubr.bf16.gmra.mrb[0].mxu0 %v1693
      %v1818 = vpop.f32.mrb[0].mxu0
      %v1819 = vadd.f32 0.0, %v1818
      %v1820 = vpop.f32.mrb[0].mxu0
      %v1821 = vpop.f32.mrb[0].mxu0
      %v1822 = vadd.f32 0.0, %v1821
      %v1823 = vpop.f32.mrb[0].mxu0
      %1824 = vmatprep.mubr.bf16.mxu0 0
      %1825 = vmatmul.mubr.bf16.gmra.mrb[0].mxu0 %v1696
      %v1826 = vpop.f32.mrb[0].mxu0
      %v1827 = vadd.f32 0.0, %v1826
      %v1828 = vpop.f32.mrb[0].mxu0
      %v1829 = vpop.f32.mrb[0].mxu0
      %v1830 = vadd.f32 0.0, %v1829
      %v1831 = vpop.f32.mrb[0].mxu0
      %1832 = vmatprep.mubr.bf16.mxu0 0
      %1833 = vmatmul.mubr.bf16.gmra.mrb[0].mxu0 %v1699
      %v1834 = vpop.f32.mrb[0].mxu0
      %v1835 = vadd.f32 0.0, %v1834
      %v1836 = vpop.f32.mrb[0].mxu0
      %v1837 = vpop.f32.mrb[0].mxu0
      %v1838 = vadd.f32 0.0, %v1837
      %v1839 = vpop.f32.mrb[0].mxu0
      %1840 = vmatprep.mubr.bf16.mxu0 0
      %1841 = vmatmul.mubr.bf16.gmra.mrb[0].mxu0 %v1702
      %v1842 = vpop.f32.mrb[0].mxu0
      %v1843 = vadd.f32 0.0, %v1842
      %v1844 = vpop.f32.mrb[0].mxu0
      %v1845 = vpop.f32.mrb[0].mxu0
      %v1846 = vadd.f32 0.0, %v1845
      %v1847 = vpop.f32.mrb[0].mxu0
      %1848 = vmatprep.mubr.bf16.mxu0 0
      %1849 = vmatmul.mubr.bf16.gmra.mrb[0].mxu0 %v1705
      %v1850 = vpop.f32.mrb[0].mxu0
      %v1851 = vadd.f32 0.0, %v1850
      %v1852 = vpop.f32.mrb[0].mxu0
      %v1853 = vpop.f32.mrb[0].mxu0
      %v1854 = vadd.f32 0.0, %v1853
      %v1855 = vpop.f32.mrb[0].mxu0
      %1856 = vmatprep.mubr.bf16.mxu0 0
      %1857 = vmatmul.mubr.bf16.gmra.mrb[0].mxu0 %v1708
      %v1858 = vpop.f32.mrb[0].mxu0
      %v1859 = vadd.f32 0.0, %v1858
      %v1860 = vpop.f32.mrb[0].mxu0
      %v1861 = vpop.f32.mrb[0].mxu0
      %v1862 = vadd.f32 0.0, %v1861
      %v1863 = vpop.f32.mrb[0].mxu0
      %1864 = vmatprep.mubr.bf16.mxu0 0
      %1865 = vmatmul.mubr.bf16.gmra.mrb[0].mxu0 %v1711
      %v1866 = vpop.f32.mrb[0].mxu0
      %v1867 = vadd.f32 0.0, %v1866
      %v1868 = vpop.f32.mrb[0].mxu0
      %v1869 = vpop.f32.mrb[0].mxu0
      %v1870 = vadd.f32 0.0, %v1869
      %v1871 = vpop.f32.mrb[0].mxu0
      %1872 = vmatprep.mubr.bf16.mxu0 0
      %1873 = vmatmul.mubr.bf16.gmra.mrb[0].mxu0 %v1714
      %v1874 = vpop.f32.mrb[0].mxu0
      %v1875 = vadd.f32 0.0, %v1874
      %v1876 = vpop.f32.mrb[0].mxu0
      %v1877 = vpop.f32.mrb[0].mxu0
      %v1878 = vadd.f32 0.0, %v1877
      %v1879 = vpop.f32.mrb[0].mxu0
      %1880 = vdwg.mxu0
      %v1913 = vunpack.c.l.b16 %v1169
      %v1914 = vunpack.c.l.b16 %v1170
      %v1915 = vunpack.c.l.b16 %v1172
      %v1916 = vunpack.c.l.b16 %v1173
      %v1917 = vunpack.c.l.b16 %v1175
      %v1918 = vunpack.c.l.b16 %v1176
      %v1919 = vunpack.c.l.b16 %v1178
      %v1920 = vunpack.c.l.b16 %v1179
      %v1921 = vunpack.c.l.b16 %v1181
      %v1922 = vunpack.c.l.b16 %v1182
      %v1923 = vunpack.c.l.b16 %v1184
      %v1924 = vunpack.c.l.b16 %v1185
      %v1925 = vunpack.c.l.b16 %v1187
      %v1926 = vunpack.c.l.b16 %v1188
      %v1927 = vunpack.c.l.b16 %v1190
      %v1928 = vunpack.c.l.b16 %v1191
      %v1929 = vunpack.c.l.b16 %v1193
      %v1930 = vunpack.c.l.b16 %v1194
      %v1931 = vunpack.c.l.b16 %v1196
      %v1932 = vunpack.c.l.b16 %v1197
      %v1933 = vunpack.c.l.b16 %v1199
      %v1934 = vunpack.c.l.b16 %v1200
      %v1935 = vunpack.c.l.b16 %v1202
      %v1936 = vunpack.c.l.b16 %v1203
      %v1937 = vunpack.c.l.b16 %v1205
      %v1938 = vunpack.c.l.b16 %v1206
      %v1939 = vunpack.c.l.b16 %v1208
      %v1940 = vunpack.c.l.b16 %v1209
      %v1941 = vunpack.c.l.b16 %v1211
      %v1942 = vunpack.c.l.b16 %v1212
      %v1943 = vunpack.c.l.b16 %v1214
      %v1944 = vunpack.c.l.b16 %v1215
      %v1945 = vpack.c.b16 %v1914, %v1913
      %v1946 = vpack.c.b16 %v1916, %v1915
      %v1947 = vpack.c.b16 %v1918, %v1917
      %v1948 = vpack.c.b16 %v1920, %v1919
      %v1949 = vpack.c.b16 %v1922, %v1921
      %v1950 = vpack.c.b16 %v1924, %v1923
      %v1951 = vpack.c.b16 %v1926, %v1925
      %v1952 = vpack.c.b16 %v1928, %v1927
      %v1953 = vpack.c.b16 %v1930, %v1929
      %v1954 = vpack.c.b16 %v1932, %v1931
      %v1955 = vpack.c.b16 %v1934, %v1933
      %v1956 = vpack.c.b16 %v1936, %v1935
      %v1957 = vpack.c.b16 %v1938, %v1937
      %v1958 = vpack.c.b16 %v1940, %v1939
      %v1959 = vpack.c.b16 %v1942, %v1941
      %v1960 = vpack.c.b16 %v1944, %v1943
      %v1962 = vsel %vm1667, %v1945, 0
      %v1965 = vsel %vm1667, %v1946, 0
      %v1968 = vsel %vm1667, %v1947, 0
      %v1971 = vsel %vm1667, %v1948, 0
      %v1974 = vsel %vm1667, %v1949, 0
      %v1977 = vsel %vm1667, %v1950, 0
      %v1980 = vsel %vm1667, %v1951, 0
      %v1983 = vsel %vm1667, %v1952, 0
      %v1986 = vsel %vm1667, %v1953, 0
      %v1989 = vsel %vm1667, %v1954, 0
      %v1992 = vsel %vm1667, %v1955, 0
      %v1995 = vsel %vm1667, %v1956, 0
      %v1998 = vsel %vm1667, %v1957, 0
      %v2001 = vsel %vm1667, %v1958, 0
      %v2004 = vsel %vm1667, %v1959, 0
      %v2007 = vsel %vm1667, %v1960, 0
      %v2010 = vsel %vm1716, %v1223, 0
      %2012 = vmatprep.subr.bf16.mxu0 0
      %2013 = vmatpush1.bf16.msra.mxu0 %v2010
      %2014 = vmatprep.subr.bf16.mxu0 0
      %2015 = vmatpush1.bf16.msra.mxu0 0
      %2016 = vmatprep.subr.bf16.mxu0 0
      %2017 = vmatpush1.bf16.msra.mxu0 0
      %2018 = vmatprep.subr.bf16.mxu0 0
      %2019 = vmatpush1.bf16.msra.mxu0 0
      %2020 = vmatprep.subr.bf16.mxu0 0
      %2021 = vmatpush1.bf16.msra.mxu0 0
      %2022 = vmatprep.subr.bf16.mxu0 0
      %2023 = vmatpush1.bf16.msra.mxu0 0
      %2024 = vmatprep.subr.bf16.mxu0 0
      %2025 = vmatpush1.bf16.msra.mxu0 0
      %2026 = vmatprep.subr.bf16.mxu0 0
      %2027 = vmatpush1.bf16.msra.mxu0 0
      %2028 = vmatprep.subr.bf16.mxu0 0
      %2029 = vmatpush1.bf16.msra.mxu0 0
      %2030 = vmatprep.subr.bf16.mxu0 0
      %2031 = vmatpush1.bf16.msra.mxu0 0
      %2032 = vmatprep.subr.bf16.mxu0 0
      %2033 = vmatpush1.bf16.msra.mxu0 0
      %2034 = vmatprep.subr.bf16.mxu0 0
      %2035 = vmatpush1.bf16.msra.mxu0 0
      %2036 = vmatprep.subr.bf16.mxu0 0
      %2037 = vmatpush1.bf16.msra.mxu0 0
      %2038 = vmatprep.subr.bf16.mxu0 0
      %2039 = vmatpush1.bf16.msra.mxu0 0
      %2040 = vmatprep.subr.bf16.mxu0 0
      %2041 = vmatpush1.bf16.msra.mxu0 0
      %2042 = vmatprep.subr.bf16.mxu0 0
      %2043 = vmatpush1.bf16.msra.mxu0 0
      %2044 = vmatprep.mubr.bf16.mxu0 0
      %2045 = vmatmul.mubr.bf16.gmra.mrb[0].mxu0 %v1962
      %v2046 = vpop.f32.mrb[0].mxu0
      %v2047 = vadd.f32 %v1755, %v2046
      %v2048 = vpop.f32.mrb[0].mxu0
      %v2049 = vpop.f32.mrb[0].mxu0
      %v2050 = vadd.f32 %v1758, %v2049
      %v2051 = vpop.f32.mrb[0].mxu0
      %2052 = vmatprep.mubr.bf16.mxu0 0
      %2053 = vmatmul.mubr.bf16.gmra.mrb[0].mxu0 %v1965
      %v2054 = vpop.f32.mrb[0].mxu0
      %v2055 = vadd.f32 %v1763, %v2054
      %v2056 = vpop.f32.mrb[0].mxu0
      %v2057 = vpop.f32.mrb[0].mxu0
      %v2058 = vadd.f32 %v1766, %v2057
      %v2059 = vpop.f32.mrb[0].mxu0
      %2060 = vmatprep.mubr.bf16.mxu0 0
      %2061 = vmatmul.mubr.bf16.gmra.mrb[0].mxu0 %v1968
      %v2062 = vpop.f32.mrb[0].mxu0
      %v2063 = vadd.f32 %v1771, %v2062
      %v2064 = vpop.f32.mrb[0].mxu0
      %v2065 = vpop.f32.mrb[0].mxu0
      %v2066 = vadd.f32 %v1774, %v2065
      %v2067 = vpop.f32.mrb[0].mxu0
      %2068 = vmatprep.mubr.bf16.mxu0 0
      %2069 = vmatmul.mubr.bf16.gmra.mrb[0].mxu0 %v1971
      %v2070 = vpop.f32.mrb[0].mxu0
      %v2071 = vadd.f32 %v1779, %v2070
      %v2072 = vpop.f32.mrb[0].mxu0
      %v2073 = vpop.f32.mrb[0].mxu0
      %v2074 = vadd.f32 %v1782, %v2073
      %v2075 = vpop.f32.mrb[0].mxu0
      %2076 = vmatprep.mubr.bf16.mxu0 0
      %2077 = vmatmul.mubr.bf16.gmra.mrb[0].mxu0 %v1974
      %v2078 = vpop.f32.mrb[0].mxu0
      %v2079 = vadd.f32 %v1787, %v2078
      %v2080 = vpop.f32.mrb[0].mxu0
      %v2081 = vpop.f32.mrb[0].mxu0
      %v2082 = vadd.f32 %v1790, %v2081
      %v2083 = vpop.f32.mrb[0].mxu0
      %2084 = vmatprep.mubr.bf16.mxu0 0
      %2085 = vmatmul.mubr.bf16.gmra.mrb[0].mxu0 %v1977
      %v2086 = vpop.f32.mrb[0].mxu0
      %v2087 = vadd.f32 %v1795, %v2086
      %v2088 = vpop.f32.mrb[0].mxu0
      %v2089 = vpop.f32.mrb[0].mxu0
      %v2090 = vadd.f32 %v1798, %v2089
      %v2091 = vpop.f32.mrb[0].mxu0
      %2092 = vmatprep.mubr.bf16.mxu0 0
      %2093 = vmatmul.mubr.bf16.gmra.mrb[0].mxu0 %v1980
      %v2094 = vpop.f32.mrb[0].mxu0
      %v2095 = vadd.f32 %v1803, %v2094
      %v2096 = vpop.f32.mrb[0].mxu0
      %v2097 = vpop.f32.mrb[0].mxu0
      %v2098 = vadd.f32 %v1806, %v2097
      %v2099 = vpop.f32.mrb[0].mxu0
      %2100 = vmatprep.mubr.bf16.mxu0 0
      %2101 = vmatmul.mubr.bf16.gmra.mrb[0].mxu0 %v1983
      %v2102 = vpop.f32.mrb[0].mxu0
      %v2103 = vadd.f32 %v1811, %v2102
      %v2104 = vpop.f32.mrb[0].mxu0
      %v2105 = vpop.f32.mrb[0].mxu0
      %v2106 = vadd.f32 %v1814, %v2105
      %v2107 = vpop.f32.mrb[0].mxu0
      %2108 = vmatprep.mubr.bf16.mxu0 0
      %2109 = vmatmul.mubr.bf16.gmra.mrb[0].mxu0 %v1986
      %v2110 = vpop.f32.mrb[0].mxu0
      %v2111 = vadd.f32 %v1819, %v2110
      %v2112 = vpop.f32.mrb[0].mxu0
      %v2113 = vpop.f32.mrb[0].mxu0
      %v2114 = vadd.f32 %v1822, %v2113
      %v2115 = vpop.f32.mrb[0].mxu0
      %2116 = vmatprep.mubr.bf16.mxu0 0
      %2117 = vmatmul.mubr.bf16.gmra.mrb[0].mxu0 %v1989
      %v2118 = vpop.f32.mrb[0].mxu0
      %v2119 = vadd.f32 %v1827, %v2118
      %v2120 = vpop.f32.mrb[0].mxu0
      %v2121 = vpop.f32.mrb[0].mxu0
      %v2122 = vadd.f32 %v1830, %v2121
      %v2123 = vpop.f32.mrb[0].mxu0
      %2124 = vmatprep.mubr.bf16.mxu0 0
      %2125 = vmatmul.mubr.bf16.gmra.mrb[0].mxu0 %v1992
      %v2126 = vpop.f32.mrb[0].mxu0
      %v2127 = vadd.f32 %v1835, %v2126
      %v2128 = vpop.f32.mrb[0].mxu0
      %v2129 = vpop.f32.mrb[0].mxu0
      %v2130 = vadd.f32 %v1838, %v2129
      %v2131 = vpop.f32.mrb[0].mxu0
      %2132 = vmatprep.mubr.bf16.mxu0 0
      %2133 = vmatmul.mubr.bf16.gmra.mrb[0].mxu0 %v1995
      %v2134 = vpop.f32.mrb[0].mxu0
      %v2135 = vadd.f32 %v1843, %v2134
      %v2136 = vpop.f32.mrb[0].mxu0
      %v2137 = vpop.f32.mrb[0].mxu0
      %v2138 = vadd.f32 %v1846, %v2137
      %v2139 = vpop.f32.mrb[0].mxu0
      %2140 = vmatprep.mubr.bf16.mxu0 0
      %2141 = vmatmul.mubr.bf16.gmra.mrb[0].mxu0 %v1998
      %v2142 = vpop.f32.mrb[0].mxu0
      %v2143 = vadd.f32 %v1851, %v2142
      %v2144 = vpop.f32.mrb[0].mxu0
      %v2145 = vpop.f32.mrb[0].mxu0
      %v2146 = vadd.f32 %v1854, %v2145
      %v2147 = vpop.f32.mrb[0].mxu0
      %2148 = vmatprep.mubr.bf16.mxu0 0
      %2149 = vmatmul.mubr.bf16.gmra.mrb[0].mxu0 %v2001
      %v2150 = vpop.f32.mrb[0].mxu0
      %v2151 = vadd.f32 %v1859, %v2150
      %v2152 = vpop.f32.mrb[0].mxu0
      %v2153 = vpop.f32.mrb[0].mxu0
      %v2154 = vadd.f32 %v1862, %v2153
      %v2155 = vpop.f32.mrb[0].mxu0
      %2156 = vmatprep.mubr.bf16.mxu0 0
      %2157 = vmatmul.mubr.bf16.gmra.mrb[0].mxu0 %v2004
      %v2158 = vpop.f32.mrb[0].mxu0
      %v2159 = vadd.f32 %v1867, %v2158
      %v2160 = vpop.f32.mrb[0].mxu0
      %v2161 = vpop.f32.mrb[0].mxu0
      %v2162 = vadd.f32 %v1870, %v2161
      %v2163 = vpop.f32.mrb[0].mxu0
      %2164 = vmatprep.mubr.bf16.mxu0 0
      %2165 = vmatmul.mubr.bf16.gmra.mrb[0].mxu0 %v2007
      %v2166 = vpop.f32.mrb[0].mxu0
      %v2167 = vadd.f32 %v1875, %v2166
      %v2168 = vpop.f32.mrb[0].mxu0
      %v2169 = vpop.f32.mrb[0].mxu0
      %v2170 = vadd.f32 %v1878, %v2169
      %v2171 = vpop.f32.mrb[0].mxu0
      %2172 = vdwg.mxu0
      %vm2189 = vcmask 1042432
      %vm2190 = vcmask 1046532
      %vm2191 = vmor %vm2189, %vm2190
      %v2192 = vrot.slane %v1169, 5
      %v2193 = vrot.slane %v2192, 4
      %v2194 = vrot.slane %v1170, 5
      %v2195 = vsel %vm2191, %v2193, %v2194
      %v2196 = vrot.slane %v2194, 4
      %v2197 = vrot.slane %v1171, 5
      %v2198 = vsel %vm2191, %v2196, %v2197
      %v2199 = vrot.slane %v1172, 5
      %v2200 = vrot.slane %v2199, 4
      %v2201 = vrot.slane %v1173, 5
      %v2202 = vsel %vm2191, %v2200, %v2201
      %v2203 = vrot.slane %v2201, 4
      %v2204 = vrot.slane %v1174, 5
      %v2205 = vsel %vm2191, %v2203, %v2204
      %v2206 = vrot.slane %v1175, 5
      %v2207 = vrot.slane %v2206, 4
      %v2208 = vrot.slane %v1176, 5
      %v2209 = vsel %vm2191, %v2207, %v2208
      %v2210 = vrot.slane %v2208, 4
      %v2211 = vrot.slane %v1177, 5
      %v2212 = vsel %vm2191, %v2210, %v2211
      %v2213 = vrot.slane %v1178, 5
      %v2214 = vrot.slane %v2213, 4
      %v2215 = vrot.slane %v1179, 5
      %v2216 = vsel %vm2191, %v2214, %v2215
      %v2217 = vrot.slane %v2215, 4
      %v2218 = vrot.slane %v1180, 5
      %v2219 = vsel %vm2191, %v2217, %v2218
      %v2220 = vrot.slane %v1181, 5
      %v2221 = vrot.slane %v2220, 4
      %v2222 = vrot.slane %v1182, 5
      %v2223 = vsel %vm2191, %v2221, %v2222
      %v2224 = vrot.slane %v2222, 4
      %v2225 = vrot.slane %v1183, 5
      %v2226 = vsel %vm2191, %v2224, %v2225
      %v2227 = vrot.slane %v1184, 5
      %v2228 = vrot.slane %v2227, 4
      %v2229 = vrot.slane %v1185, 5
      %v2230 = vsel %vm2191, %v2228, %v2229
      %v2231 = vrot.slane %v2229, 4
      %v2232 = vrot.slane %v1186, 5
      %v2233 = vsel %vm2191, %v2231, %v2232
      %v2234 = vrot.slane %v1187, 5
      %v2235 = vrot.slane %v2234, 4
      %v2236 = vrot.slane %v1188, 5
      %v2237 = vsel %vm2191, %v2235, %v2236
      %v2238 = vrot.slane %v2236, 4
      %v2239 = vrot.slane %v1189, 5
      %v2240 = vsel %vm2191, %v2238, %v2239
      %v2241 = vrot.slane %v1190, 5
      %v2242 = vrot.slane %v2241, 4
      %v2243 = vrot.slane %v1191, 5
      %v2244 = vsel %vm2191, %v2242, %v2243
      %v2245 = vrot.slane %v2243, 4
      %v2246 = vrot.slane %v1192, 5
      %v2247 = vsel %vm2191, %v2245, %v2246
      %v2248 = vrot.slane %v1193, 5
      %v2249 = vrot.slane %v2248, 4
      %v2250 = vrot.slane %v1194, 5
      %v2251 = vsel %vm2191, %v2249, %v2250
      %v2252 = vrot.slane %v2250, 4
      %v2253 = vrot.slane %v1195, 5
      %v2254 = vsel %vm2191, %v2252, %v2253
      %v2255 = vrot.slane %v1196, 5
      %v2256 = vrot.slane %v2255, 4
      %v2257 = vrot.slane %v1197, 5
      %v2258 = vsel %vm2191, %v2256, %v2257
      %v2259 = vrot.slane %v2257, 4
      %v2260 = vrot.slane %v1198, 5
      %v2261 = vsel %vm2191, %v2259, %v2260
      %v2262 = vrot.slane %v1199, 5
      %v2263 = vrot.slane %v2262, 4
      %v2264 = vrot.slane %v1200, 5
      %v2265 = vsel %vm2191, %v2263, %v2264
      %v2266 = vrot.slane %v2264, 4
      %v2267 = vrot.slane %v1201, 5
      %v2268 = vsel %vm2191, %v2266, %v2267
      %v2269 = vrot.slane %v1202, 5
      %v2270 = vrot.slane %v2269, 4
      %v2271 = vrot.slane %v1203, 5
      %v2272 = vsel %vm2191, %v2270, %v2271
      %v2273 = vrot.slane %v2271, 4
      %v2274 = vrot.slane %v1204, 5
      %v2275 = vsel %vm2191, %v2273, %v2274
      %v2276 = vrot.slane %v1205, 5
      %v2277 = vrot.slane %v2276, 4
      %v2278 = vrot.slane %v1206, 5
      %v2279 = vsel %vm2191, %v2277, %v2278
      %v2280 = vrot.slane %v2278, 4
      %v2281 = vrot.slane %v1207, 5
      %v2282 = vsel %vm2191, %v2280, %v2281
      %v2283 = vrot.slane %v1208, 5
      %v2284 = vrot.slane %v2283, 4
      %v2285 = vrot.slane %v1209, 5
      %v2286 = vsel %vm2191, %v2284, %v2285
      %v2287 = vrot.slane %v2285, 4
      %v2288 = vrot.slane %v1210, 5
      %v2289 = vsel %vm2191, %v2287, %v2288
      %v2290 = vrot.slane %v1211, 5
      %v2291 = vrot.slane %v2290, 4
      %v2292 = vrot.slane %v1212, 5
      %v2293 = vsel %vm2191, %v2291, %v2292
      %v2294 = vrot.slane %v2292, 4
      %v2295 = vrot.slane %v1213, 5
      %v2296 = vsel %vm2191, %v2294, %v2295
      %v2297 = vrot.slane %v1214, 5
      %v2298 = vrot.slane %v2297, 4
      %v2299 = vrot.slane %v1215, 5
      %v2300 = vsel %vm2191, %v2298, %v2299
      %v2301 = vrot.slane %v2299, 4
      %v2302 = vrot.slane %v1216, 5
      %v2303 = vsel %vm2191, %v2301, %v2302
      %v2304 = vunpack.c.l.b16 %v2195
      %v2305 = vunpack.c.l.b16 %v2198
      %v2306 = vunpack.c.l.b16 %v2202
      %v2307 = vunpack.c.l.b16 %v2205
      %v2308 = vunpack.c.l.b16 %v2209
      %v2309 = vunpack.c.l.b16 %v2212
      %v2310 = vunpack.c.l.b16 %v2216
      %v2311 = vunpack.c.l.b16 %v2219
      %v2312 = vunpack.c.l.b16 %v2223
      %v2313 = vunpack.c.l.b16 %v2226
      %v2314 = vunpack.c.l.b16 %v2230
      %v2315 = vunpack.c.l.b16 %v2233
      %v2316 = vunpack.c.l.b16 %v2237
      %v2317 = vunpack.c.l.b16 %v2240
      %v2318 = vunpack.c.l.b16 %v2244
      %v2319 = vunpack.c.l.b16 %v2247
      %v2320 = vunpack.c.l.b16 %v2251
      %v2321 = vunpack.c.l.b16 %v2254
      %v2322 = vunpack.c.l.b16 %v2258
      %v2323 = vunpack.c.l.b16 %v2261
      %v2324 = vunpack.c.l.b16 %v2265
      %v2325 = vunpack.c.l.b16 %v2268
      %v2326 = vunpack.c.l.b16 %v2272
      %v2327 = vunpack.c.l.b16 %v2275
      %v2328 = vunpack.c.l.b16 %v2279
      %v2329 = vunpack.c.l.b16 %v2282
      %v2330 = vunpack.c.l.b16 %v2286
      %v2331 = vunpack.c.l.b16 %v2289
      %v2332 = vunpack.c.l.b16 %v2293
      %v2333 = vunpack.c.l.b16 %v2296
      %v2334 = vunpack.c.l.b16 %v2300
      %v2335 = vunpack.c.l.b16 %v2303
      %v2336 = vpack.c.b16 %v2305, %v2304
      %v2337 = vpack.c.b16 %v2307, %v2306
      %v2338 = vpack.c.b16 %v2309, %v2308
      %v2339 = vpack.c.b16 %v2311, %v2310
      %v2340 = vpack.c.b16 %v2313, %v2312
      %v2341 = vpack.c.b16 %v2315, %v2314
      %v2342 = vpack.c.b16 %v2317, %v2316
      %v2343 = vpack.c.b16 %v2319, %v2318
      %v2344 = vpack.c.b16 %v2321, %v2320
      %v2345 = vpack.c.b16 %v2323, %v2322
      %v2346 = vpack.c.b16 %v2325, %v2324
      %v2347 = vpack.c.b16 %v2327, %v2326
      %v2348 = vpack.c.b16 %v2329, %v2328
      %v2349 = vpack.c.b16 %v2331, %v2330
      %v2350 = vpack.c.b16 %v2333, %v2332
      %v2351 = vpack.c.b16 %v2335, %v2334
      %v2353 = vsel %vm1667, %v2336, 0
      %v2356 = vsel %vm1667, %v2337, 0
      %v2359 = vsel %vm1667, %v2338, 0
      %v2362 = vsel %vm1667, %v2339, 0
      %v2365 = vsel %vm1667, %v2340, 0
      %v2368 = vsel %vm1667, %v2341, 0
      %v2371 = vsel %vm1667, %v2342, 0
      %v2374 = vsel %vm1667, %v2343, 0
      %v2377 = vsel %vm1667, %v2344, 0
      %v2380 = vsel %vm1667, %v2345, 0
      %v2383 = vsel %vm1667, %v2346, 0
      %v2386 = vsel %vm1667, %v2347, 0
      %v2389 = vsel %vm1667, %v2348, 0
      %v2392 = vsel %vm1667, %v2349, 0
      %v2395 = vsel %vm1667, %v2350, 0
      %v2398 = vsel %vm1667, %v2351, 0
      %v2401 = vsel %vm1716, %v1225, 0
      %2403 = vmatprep.subr.bf16.mxu0 0
      %2404 = vmatpush1.bf16.msra.mxu0 %v2401
      %2405 = vmatprep.subr.bf16.mxu0 0
      %2406 = vmatpush1.bf16.msra.mxu0 0
      %2407 = vmatprep.subr.bf16.mxu0 0
      %2408 = vmatpush1.bf16.msra.mxu0 0
      %2409 = vmatprep.subr.bf16.mxu0 0
      %2410 = vmatpush1.bf16.msra.mxu0 0
      %2411 = vmatprep.subr.bf16.mxu0 0
      %2412 = vmatpush1.bf16.msra.mxu0 0
      %2413 = vmatprep.subr.bf16.mxu0 0
      %2414 = vmatpush1.bf16.msra.mxu0 0
      %2415 = vmatprep.subr.bf16.mxu0 0
      %2416 = vmatpush1.bf16.msra.mxu0 0
      %2417 = vmatprep.subr.bf16.mxu0 0
      %2418 = vmatpush1.bf16.msra.mxu0 0
      %2419 = vmatprep.subr.bf16.mxu0 0
      %2420 = vmatpush1.bf16.msra.mxu0 0
      %2421 = vmatprep.subr.bf16.mxu0 0
      %2422 = vmatpush1.bf16.msra.mxu0 0
      %2423 = vmatprep.subr.bf16.mxu0 0
      %2424 = vmatpush1.bf16.msra.mxu0 0
      %2425 = vmatprep.subr.bf16.mxu0 0
      %2426 = vmatpush1.bf16.msra.mxu0 0
      %2427 = vmatprep.subr.bf16.mxu0 0
      %2428 = vmatpush1.bf16.msra.mxu0 0
      %2429 = vmatprep.subr.bf16.mxu0 0
      %2430 = vmatpush1.bf16.msra.mxu0 0
      %2431 = vmatprep.subr.bf16.mxu0 0
      %2432 = vmatpush1.bf16.msra.mxu0 0
      %2433 = vmatprep.subr.bf16.mxu0 0
      %2434 = vmatpush1.bf16.msra.mxu0 0
      %2435 = vmatprep.mubr.bf16.mxu0 0
      %2436 = vmatmul.mubr.bf16.gmra.mrb[0].mxu0 %v2353
      %v2437 = vpop.f32.mrb[0].mxu0
      %v2438 = vadd.f32 0.0, %v2437
      %v2439 = vpop.f32.mrb[0].mxu0
      %v2440 = vpop.f32.mrb[0].mxu0
      %v2441 = vadd.f32 0.0, %v2440
      %v2442 = vpop.f32.mrb[0].mxu0
      %2443 = vmatprep.mubr.bf16.mxu0 0
      %2444 = vmatmul.mubr.bf16.gmra.mrb[0].mxu0 %v2356
      %v2445 = vpop.f32.mrb[0].mxu0
      %v2446 = vadd.f32 0.0, %v2445
      %v2447 = vpop.f32.mrb[0].mxu0
      %v2448 = vpop.f32.mrb[0].mxu0
      %v2449 = vadd.f32 0.0, %v2448
      %v2450 = vpop.f32.mrb[0].mxu0
      %2451 = vmatprep.mubr.bf16.mxu0 0
      %2452 = vmatmul.mubr.bf16.gmra.mrb[0].mxu0 %v2359
      %v2453 = vpop.f32.mrb[0].mxu0
      %v2454 = vadd.f32 0.0, %v2453
      %v2455 = vpop.f32.mrb[0].mxu0
      %v2456 = vpop.f32.mrb[0].mxu0
      %v2457 = vadd.f32 0.0, %v2456
      %v2458 = vpop.f32.mrb[0].mxu0
      %2459 = vmatprep.mubr.bf16.mxu0 0
      %2460 = vmatmul.mubr.bf16.gmra.mrb[0].mxu0 %v2362
      %v2461 = vpop.f32.mrb[0].mxu0
      %v2462 = vadd.f32 0.0, %v2461
      %v2463 = vpop.f32.mrb[0].mxu0
      %v2464 = vpop.f32.mrb[0].mxu0
      %v2465 = vadd.f32 0.0, %v2464
      %v2466 = vpop.f32.mrb[0].mxu0
      %2467 = vmatprep.mubr.bf16.mxu0 0
      %2468 = vmatmul.mubr.bf16.gmra.mrb[0].mxu0 %v2365
      %v2469 = vpop.f32.mrb[0].mxu0
      %v2470 = vadd.f32 0.0, %v2469
      %v2471 = vpop.f32.mrb[0].mxu0
      %v2472 = vpop.f32.mrb[0].mxu0
      %v2473 = vadd.f32 0.0, %v2472
      %v2474 = vpop.f32.mrb[0].mxu0
      %2475 = vmatprep.mubr.bf16.mxu0 0
      %2476 = vmatmul.mubr.bf16.gmra.mrb[0].mxu0 %v2368
      %v2477 = vpop.f32.mrb[0].mxu0
      %v2478 = vadd.f32 0.0, %v2477
      %v2479 = vpop.f32.mrb[0].mxu0
      %v2480 = vpop.f32.mrb[0].mxu0
      %v2481 = vadd.f32 0.0, %v2480
      %v2482 = vpop.f32.mrb[0].mxu0
      %2483 = vmatprep.mubr.bf16.mxu0 0
      %2484 = vmatmul.mubr.bf16.gmra.mrb[0].mxu0 %v2371
      %v2485 = vpop.f32.mrb[0].mxu0
      %v2486 = vadd.f32 0.0, %v2485
      %v2487 = vpop.f32.mrb[0].mxu0
      %v2488 = vpop.f32.mrb[0].mxu0
      %v2489 = vadd.f32 0.0, %v2488
      %v2490 = vpop.f32.mrb[0].mxu0
      %2491 = vmatprep.mubr.bf16.mxu0 0
      %2492 = vmatmul.mubr.bf16.gmra.mrb[0].mxu0 %v2374
      %v2493 = vpop.f32.mrb[0].mxu0
      %v2494 = vadd.f32 0.0, %v2493
      %v2495 = vpop.f32.mrb[0].mxu0
      %v2496 = vpop.f32.mrb[0].mxu0
      %v2497 = vadd.f32 0.0, %v2496
      %v2498 = vpop.f32.mrb[0].mxu0
      %2499 = vmatprep.mubr.bf16.mxu0 0
      %2500 = vmatmul.mubr.bf16.gmra.mrb[0].mxu0 %v2377
      %v2501 = vpop.f32.mrb[0].mxu0
      %v2502 = vadd.f32 0.0, %v2501
      %v2503 = vpop.f32.mrb[0].mxu0
      %v2504 = vpop.f32.mrb[0].mxu0
      %v2505 = vadd.f32 0.0, %v2504
      %v2506 = vpop.f32.mrb[0].mxu0
      %2507 = vmatprep.mubr.bf16.mxu0 0
      %2508 = vmatmul.mubr.bf16.gmra.mrb[0].mxu0 %v2380
      %v2509 = vpop.f32.mrb[0].mxu0
      %v2510 = vadd.f32 0.0, %v2509
      %v2511 = vpop.f32.mrb[0].mxu0
      %v2512 = vpop.f32.mrb[0].mxu0
      %v2513 = vadd.f32 0.0, %v2512
      %v2514 = vpop.f32.mrb[0].mxu0
      %2515 = vmatprep.mubr.bf16.mxu0 0
      %2516 = vmatmul.mubr.bf16.gmra.mrb[0].mxu0 %v2383
      %v2517 = vpop.f32.mrb[0].mxu0
      %v2518 = vadd.f32 0.0, %v2517
      %v2519 = vpop.f32.mrb[0].mxu0
      %v2520 = vpop.f32.mrb[0].mxu0
      %v2521 = vadd.f32 0.0, %v2520
      %v2522 = vpop.f32.mrb[0].mxu0
      %2523 = vmatprep.mubr.bf16.mxu0 0
      %2524 = vmatmul.mubr.bf16.gmra.mrb[0].mxu0 %v2386
      %v2525 = vpop.f32.mrb[0].mxu0
      %v2526 = vadd.f32 0.0, %v2525
      %v2527 = vpop.f32.mrb[0].mxu0
      %v2528 = vpop.f32.mrb[0].mxu0
      %v2529 = vadd.f32 0.0, %v2528
      %v2530 = vpop.f32.mrb[0].mxu0
      %2531 = vmatprep.mubr.bf16.mxu0 0
      %2532 = vmatmul.mubr.bf16.gmra.mrb[0].mxu0 %v2389
      %v2533 = vpop.f32.mrb[0].mxu0
      %v2534 = vadd.f32 0.0, %v2533
      %v2535 = vpop.f32.mrb[0].mxu0
      %v2536 = vpop.f32.mrb[0].mxu0
      %v2537 = vadd.f32 0.0, %v2536
      %v2538 = vpop.f32.mrb[0].mxu0
      %2539 = vmatprep.mubr.bf16.mxu0 0
      %2540 = vmatmul.mubr.bf16.gmra.mrb[0].mxu0 %v2392
      %v2541 = vpop.f32.mrb[0].mxu0
      %v2542 = vadd.f32 0.0, %v2541
      %v2543 = vpop.f32.mrb[0].mxu0
      %v2544 = vpop.f32.mrb[0].mxu0
      %v2545 = vadd.f32 0.0, %v2544
      %v2546 = vpop.f32.mrb[0].mxu0
      %2547 = vmatprep.mubr.bf16.mxu0 0
      %2548 = vmatmul.mubr.bf16.gmra.mrb[0].mxu0 %v2395
      %v2549 = vpop.f32.mrb[0].mxu0
      %v2550 = vadd.f32 0.0, %v2549
      %v2551 = vpop.f32.mrb[0].mxu0
      %v2552 = vpop.f32.mrb[0].mxu0
      %v2553 = vadd.f32 0.0, %v2552
      %v2554 = vpop.f32.mrb[0].mxu0
      %2555 = vmatprep.mubr.bf16.mxu0 0
      %2556 = vmatmul.mubr.bf16.gmra.mrb[0].mxu0 %v2398
      %v2557 = vpop.f32.mrb[0].mxu0
      %v2558 = vadd.f32 0.0, %v2557
      %v2559 = vpop.f32.mrb[0].mxu0
      %v2560 = vpop.f32.mrb[0].mxu0
      %v2561 = vadd.f32 0.0, %v2560
      %v2562 = vpop.f32.mrb[0].mxu0
      %2563 = vdwg.mxu0
      %v2564 = vadd.f32 %v2047, %v2438
      %v2565 = vadd.f32 %v2050, %v2441
      %v2566 = vadd.f32 %v2055, %v2446
      %v2567 = vadd.f32 %v2058, %v2449
      %v2568 = vadd.f32 %v2063, %v2454
      %v2569 = vadd.f32 %v2066, %v2457
      %v2570 = vadd.f32 %v2071, %v2462
      %v2571 = vadd.f32 %v2074, %v2465
      %v2572 = vadd.f32 %v2079, %v2470
      %v2573 = vadd.f32 %v2082, %v2473
      %v2574 = vadd.f32 %v2087, %v2478
      %v2575 = vadd.f32 %v2090, %v2481
      %v2576 = vadd.f32 %v2095, %v2486
      %v2577 = vadd.f32 %v2098, %v2489
      %v2578 = vadd.f32 %v2103, %v2494
      %v2579 = vadd.f32 %v2106, %v2497
      %v2580 = vadd.f32 %v2111, %v2502
      %v2581 = vadd.f32 %v2114, %v2505
      %v2582 = vadd.f32 %v2119, %v2510
      %v2583 = vadd.f32 %v2122, %v2513
      %v2584 = vadd.f32 %v2127, %v2518
      %v2585 = vadd.f32 %v2130, %v2521
      %v2586 = vadd.f32 %v2135, %v2526
      %v2587 = vadd.f32 %v2138, %v2529
      %v2588 = vadd.f32 %v2143, %v2534
      %v2589 = vadd.f32 %v2146, %v2537
      %v2590 = vadd.f32 %v2151, %v2542
      %v2591 = vadd.f32 %v2154, %v2545
      %v2592 = vadd.f32 %v2159, %v2550
      %v2593 = vadd.f32 %v2162, %v2553
      %v2594 = vadd.f32 %v2167, %v2558
      %v2595 = vadd.f32 %v2170, %v2561
      %v2598 = vunpack.c.l.b16 %v1217
      %v2599 = vunpack.c.l.b16 %v1218
      %v2600 = vpack.c.b16 %v2599, %v2598
      %v2602 = vsel %vm1667, %v2600, 0
      %v2605 = vsel %vm1716, %v1226, 0
      %2607 = vmatprep.subr.bf16.mxu0 0
      %2608 = vmatpush1.bf16.msra.mxu0 %v2605
      %2609 = vmatprep.subr.bf16.mxu0 0
      %2610 = vmatpush1.bf16.msra.mxu0 0
      %2611 = vmatprep.subr.bf16.mxu0 0
      %2612 = vmatpush1.bf16.msra.mxu0 0
      %2613 = vmatprep.subr.bf16.mxu0 0
      %2614 = vmatpush1.bf16.msra.mxu0 0
      %2615 = vmatprep.subr.bf16.mxu0 0
      %2616 = vmatpush1.bf16.msra.mxu0 0
      %2617 = vmatprep.subr.bf16.mxu0 0
      %2618 = vmatpush1.bf16.msra.mxu0 0
      %2619 = vmatprep.subr.bf16.mxu0 0
      %2620 = vmatpush1.bf16.msra.mxu0 0
      %2621 = vmatprep.subr.bf16.mxu0 0
      %2622 = vmatpush1.bf16.msra.mxu0 0
      %2623 = vmatprep.subr.bf16.mxu0 0
      %2624 = vmatpush1.bf16.msra.mxu0 0
      %2625 = vmatprep.subr.bf16.mxu0 0
      %2626 = vmatpush1.bf16.msra.mxu0 0
      %2627 = vmatprep.subr.bf16.mxu0 0
      %2628 = vmatpush1.bf16.msra.mxu0 0
      %2629 = vmatprep.subr.bf16.mxu0 0
      %2630 = vmatpush1.bf16.msra.mxu0 0
      %2631 = vmatprep.subr.bf16.mxu0 0
      %2632 = vmatpush1.bf16.msra.mxu0 0
      %2633 = vmatprep.subr.bf16.mxu0 0
      %2634 = vmatpush1.bf16.msra.mxu0 0
      %2635 = vmatprep.subr.bf16.mxu0 0
      %2636 = vmatpush1.bf16.msra.mxu0 0
      %2637 = vmatprep.subr.bf16.mxu0 0
      %2638 = vmatpush1.bf16.msra.mxu0 0
      %2639 = vmatprep.mubr.bf16.mxu0 0
      %2640 = vmatmul.mubr.bf16.gmra.mrb[0].mxu0 %v1965
      %v2641 = vpop.f32.mrb[0].mxu0
      %v2642 = vadd.f32 0.0, %v2641
      %v2643 = vpop.f32.mrb[0].mxu0
      %v2644 = vpop.f32.mrb[0].mxu0
      %v2645 = vadd.f32 0.0, %v2644
      %v2646 = vpop.f32.mrb[0].mxu0
      %2647 = vmatprep.mubr.bf16.mxu0 0
      %2648 = vmatmul.mubr.bf16.gmra.mrb[0].mxu0 %v1968
      %v2649 = vpop.f32.mrb[0].mxu0
      %v2650 = vadd.f32 0.0, %v2649
      %v2651 = vpop.f32.mrb[0].mxu0
      %v2652 = vpop.f32.mrb[0].mxu0
      %v2653 = vadd.f32 0.0, %v2652
      %v2654 = vpop.f32.mrb[0].mxu0
      %2655 = vmatprep.mubr.bf16.mxu0 0
      %2656 = vmatmul.mubr.bf16.gmra.mrb[0].mxu0 %v1971
      %v2657 = vpop.f32.mrb[0].mxu0
      %v2658 = vadd.f32 0.0, %v2657
      %v2659 = vpop.f32.mrb[0].mxu0
      %v2660 = vpop.f32.mrb[0].mxu0
      %v2661 = vadd.f32 0.0, %v2660
      %v2662 = vpop.f32.mrb[0].mxu0
      %2663 = vmatprep.mubr.bf16.mxu0 0
      %2664 = vmatmul.mubr.bf16.gmra.mrb[0].mxu0 %v1974
      %v2665 = vpop.f32.mrb[0].mxu0
      %v2666 = vadd.f32 0.0, %v2665
      %v2667 = vpop.f32.mrb[0].mxu0
      %v2668 = vpop.f32.mrb[0].mxu0
      %v2669 = vadd.f32 0.0, %v2668
      %v2670 = vpop.f32.mrb[0].mxu0
      %2671 = vmatprep.mubr.bf16.mxu0 0
      %2672 = vmatmul.mubr.bf16.gmra.mrb[0].mxu0 %v1977
      %v2673 = vpop.f32.mrb[0].mxu0
      %v2674 = vadd.f32 0.0, %v2673
      %v2675 = vpop.f32.mrb[0].mxu0
      %v2676 = vpop.f32.mrb[0].mxu0
      %v2677 = vadd.f32 0.0, %v2676
      %v2678 = vpop.f32.mrb[0].mxu0
      %2679 = vmatprep.mubr.bf16.mxu0 0
      %2680 = vmatmul.mubr.bf16.gmra.mrb[0].mxu0 %v1980
      %v2681 = vpop.f32.mrb[0].mxu0
      %v2682 = vadd.f32 0.0, %v2681
      %v2683 = vpop.f32.mrb[0].mxu0
      %v2684 = vpop.f32.mrb[0].mxu0
      %v2685 = vadd.f32 0.0, %v2684
      %v2686 = vpop.f32.mrb[0].mxu0
      %2687 = vmatprep.mubr.bf16.mxu0 0
      %2688 = vmatmul.mubr.bf16.gmra.mrb[0].mxu0 %v1983
      %v2689 = vpop.f32.mrb[0].mxu0
      %v2690 = vadd.f32 0.0, %v2689
      %v2691 = vpop.f32.mrb[0].mxu0
      %v2692 = vpop.f32.mrb[0].mxu0
      %v2693 = vadd.f32 0.0, %v2692
      %v2694 = vpop.f32.mrb[0].mxu0
      %2695 = vmatprep.mubr.bf16.mxu0 0
      %2696 = vmatmul.mubr.bf16.gmra.mrb[0].mxu0 %v1986
      %v2697 = vpop.f32.mrb[0].mxu0
      %v2698 = vadd.f32 0.0, %v2697
      %v2699 = vpop.f32.mrb[0].mxu0
      %v2700 = vpop.f32.mrb[0].mxu0
      %v2701 = vadd.f32 0.0, %v2700
      %v2702 = vpop.f32.mrb[0].mxu0
      %2703 = vmatprep.mubr.bf16.mxu0 0
      %2704 = vmatmul.mubr.bf16.gmra.mrb[0].mxu0 %v1989
      %v2705 = vpop.f32.mrb[0].mxu0
      %v2706 = vadd.f32 0.0, %v2705
      %v2707 = vpop.f32.mrb[0].mxu0
      %v2708 = vpop.f32.mrb[0].mxu0
      %v2709 = vadd.f32 0.0, %v2708
      %v2710 = vpop.f32.mrb[0].mxu0
      %2711 = vmatprep.mubr.bf16.mxu0 0
      %2712 = vmatmul.mubr.bf16.gmra.mrb[0].mxu0 %v1992
      %v2713 = vpop.f32.mrb[0].mxu0
      %v2714 = vadd.f32 0.0, %v2713
      %v2715 = vpop.f32.mrb[0].mxu0
      %v2716 = vpop.f32.mrb[0].mxu0
      %v2717 = vadd.f32 0.0, %v2716
      %v2718 = vpop.f32.mrb[0].mxu0
      %2719 = vmatprep.mubr.bf16.mxu0 0
      %2720 = vmatmul.mubr.bf16.gmra.mrb[0].mxu0 %v1995
      %v2721 = vpop.f32.mrb[0].mxu0
      %v2722 = vadd.f32 0.0, %v2721
      %v2723 = vpop.f32.mrb[0].mxu0
      %v2724 = vpop.f32.mrb[0].mxu0
      %v2725 = vadd.f32 0.0, %v2724
      %v2726 = vpop.f32.mrb[0].mxu0
      %2727 = vmatprep.mubr.bf16.mxu0 0
      %2728 = vmatmul.mubr.bf16.gmra.mrb[0].mxu0 %v1998
      %v2729 = vpop.f32.mrb[0].mxu0
      %v2730 = vadd.f32 0.0, %v2729
      %v2731 = vpop.f32.mrb[0].mxu0
      %v2732 = vpop.f32.mrb[0].mxu0
      %v2733 = vadd.f32 0.0, %v2732
      %v2734 = vpop.f32.mrb[0].mxu0
      %2735 = vmatprep.mubr.bf16.mxu0 0
      %2736 = vmatmul.mubr.bf16.gmra.mrb[0].mxu0 %v2001
      %v2737 = vpop.f32.mrb[0].mxu0
      %v2738 = vadd.f32 0.0, %v2737
      %v2739 = vpop.f32.mrb[0].mxu0
      %v2740 = vpop.f32.mrb[0].mxu0
      %v2741 = vadd.f32 0.0, %v2740
      %v2742 = vpop.f32.mrb[0].mxu0
      %2743 = vmatprep.mubr.bf16.mxu0 0
      %2744 = vmatmul.mubr.bf16.gmra.mrb[0].mxu0 %v2004
      %v2745 = vpop.f32.mrb[0].mxu0
      %v2746 = vadd.f32 0.0, %v2745
      %v2747 = vpop.f32.mrb[0].mxu0
      %v2748 = vpop.f32.mrb[0].mxu0
      %v2749 = vadd.f32 0.0, %v2748
      %v2750 = vpop.f32.mrb[0].mxu0
      %2751 = vmatprep.mubr.bf16.mxu0 0
      %2752 = vmatmul.mubr.bf16.gmra.mrb[0].mxu0 %v2007
      %v2753 = vpop.f32.mrb[0].mxu0
      %v2754 = vadd.f32 0.0, %v2753
      %v2755 = vpop.f32.mrb[0].mxu0
      %v2756 = vpop.f32.mrb[0].mxu0
      %v2757 = vadd.f32 0.0, %v2756
      %v2758 = vpop.f32.mrb[0].mxu0
      %2759 = vmatprep.mubr.bf16.mxu0 0
      %2760 = vmatmul.mubr.bf16.gmra.mrb[0].mxu0 %v2602
      %v2761 = vpop.f32.mrb[0].mxu0
      %v2762 = vadd.f32 0.0, %v2761
      %v2763 = vpop.f32.mrb[0].mxu0
      %v2764 = vpop.f32.mrb[0].mxu0
      %v2765 = vadd.f32 0.0, %v2764
      %v2766 = vpop.f32.mrb[0].mxu0
      %2767 = vdwg.mxu0
      %v2768 = vadd.f32 %v2564, %v2642
      %v2769 = vadd.f32 %v2565, %v2645
      %v2770 = vadd.f32 %v2566, %v2650
      %v2771 = vadd.f32 %v2567, %v2653
      %v2772 = vadd.f32 %v2568, %v2658
      %v2773 = vadd.f32 %v2569, %v2661
      %v2774 = vadd.f32 %v2570, %v2666
      %v2775 = vadd.f32 %v2571, %v2669
      %v2776 = vadd.f32 %v2572, %v2674
      %v2777 = vadd.f32 %v2573, %v2677
      %v2778 = vadd.f32 %v2574, %v2682
      %v2779 = vadd.f32 %v2575, %v2685
      %v2780 = vadd.f32 %v2576, %v2690
      %v2781 = vadd.f32 %v2577, %v2693
      %v2782 = vadd.f32 %v2578, %v2698
      %v2783 = vadd.f32 %v2579, %v2701
      %v2784 = vadd.f32 %v2580, %v2706
      %v2785 = vadd.f32 %v2581, %v2709
      %v2786 = vadd.f32 %v2582, %v2714
      %v2787 = vadd.f32 %v2583, %v2717
      %v2788 = vadd.f32 %v2584, %v2722
      %v2789 = vadd.f32 %v2585, %v2725
      %v2790 = vadd.f32 %v2586, %v2730
      %v2791 = vadd.f32 %v2587, %v2733
      %v2792 = vadd.f32 %v2588, %v2738
      %v2793 = vadd.f32 %v2589, %v2741
      %v2794 = vadd.f32 %v2590, %v2746
      %v2795 = vadd.f32 %v2591, %v2749
      %v2796 = vadd.f32 %v2592, %v2754
      %v2797 = vadd.f32 %v2593, %v2757
      %v2798 = vadd.f32 %v2594, %v2762
      %v2799 = vadd.f32 %v2595, %v2765
      %v2801 = vshrl.u32 %v1217, 16
      %v2803 = vrot.slane %v2801, 4
      %v2804 = vshll.u32 %v1217, 16
      %v2806 = vrot.slane %v2804, 5
      %v2807 = vor.u32 %v2803, %v2806
      %v2808 = vrot.slane %v2807, 4
      %v2810 = vshll.u32 %v1218, 16
      %v2812 = vrot.slane %v2810, 5
      %v2813 = vsel %vm1234, %v2808, %v2812
      %v2814 = vshrl.u32 %v1218, 16
      %v2816 = vrot.slane %v2814, 4
      %v2817 = vor.u32 %v2816, %v2812
      %v2818 = vrot.slane %v2817, 4
      %v2820 = vshll.u32 %v1219, 16
      %v2822 = vrot.slane %v2820, 5
      %v2823 = vsel %vm1234, %v2818, %v2822
      %v2824 = vunpack.c.l.b16 %v2813
      %v2825 = vunpack.c.l.b16 %v2823
      %v2826 = vpack.c.b16 %v2825, %v2824
      %v2828 = vsel %vm1667, %v2826, 0
      %v2831 = vsel %vm1716, %v1227, 0
      %2833 = vmatprep.subr.bf16.mxu0 0
      %2834 = vmatpush1.bf16.msra.mxu0 %v2831
      %2835 = vmatprep.subr.bf16.mxu0 0
      %2836 = vmatpush1.bf16.msra.mxu0 0
      %2837 = vmatprep.subr.bf16.mxu0 0
      %2838 = vmatpush1.bf16.msra.mxu0 0
      %2839 = vmatprep.subr.bf16.mxu0 0
      %2840 = vmatpush1.bf16.msra.mxu0 0
      %2841 = vmatprep.subr.bf16.mxu0 0
      %2842 = vmatpush1.bf16.msra.mxu0 0
      %2843 = vmatprep.subr.bf16.mxu0 0
      %2844 = vmatpush1.bf16.msra.mxu0 0
      %2845 = vmatprep.subr.bf16.mxu0 0
      %2846 = vmatpush1.bf16.msra.mxu0 0
      %2847 = vmatprep.subr.bf16.mxu0 0
      %2848 = vmatpush1.bf16.msra.mxu0 0
      %2849 = vmatprep.subr.bf16.mxu0 0
      %2850 = vmatpush1.bf16.msra.mxu0 0
      %2851 = vmatprep.subr.bf16.mxu0 0
      %2852 = vmatpush1.bf16.msra.mxu0 0
      %2853 = vmatprep.subr.bf16.mxu0 0
      %2854 = vmatpush1.bf16.msra.mxu0 0
      %2855 = vmatprep.subr.bf16.mxu0 0
      %2856 = vmatpush1.bf16.msra.mxu0 0
      %2857 = vmatprep.subr.bf16.mxu0 0
      %2858 = vmatpush1.bf16.msra.mxu0 0
      %2859 = vmatprep.subr.bf16.mxu0 0
      %2860 = vmatpush1.bf16.msra.mxu0 0
      %2861 = vmatprep.subr.bf16.mxu0 0
      %2862 = vmatpush1.bf16.msra.mxu0 0
      %2863 = vmatprep.subr.bf16.mxu0 0
      %2864 = vmatpush1.bf16.msra.mxu0 0
      %2865 = vmatprep.mubr.bf16.mxu0 0
      %2866 = vmatmul.mubr.bf16.gmra.mrb[0].mxu0 %v1672
      %v2867 = vpop.f32.mrb[0].mxu0
      %v2868 = vadd.f32 0.0, %v2867
      %v2869 = vpop.f32.mrb[0].mxu0
      %v2870 = vpop.f32.mrb[0].mxu0
      %v2871 = vadd.f32 0.0, %v2870
      %v2872 = vpop.f32.mrb[0].mxu0
      %2873 = vmatprep.mubr.bf16.mxu0 0
      %2874 = vmatmul.mubr.bf16.gmra.mrb[0].mxu0 %v1675
      %v2875 = vpop.f32.mrb[0].mxu0
      %v2876 = vadd.f32 0.0, %v2875
      %v2877 = vpop.f32.mrb[0].mxu0
      %v2878 = vpop.f32.mrb[0].mxu0
      %v2879 = vadd.f32 0.0, %v2878
      %v2880 = vpop.f32.mrb[0].mxu0
      %2881 = vmatprep.mubr.bf16.mxu0 0
      %2882 = vmatmul.mubr.bf16.gmra.mrb[0].mxu0 %v1678
      %v2883 = vpop.f32.mrb[0].mxu0
      %v2884 = vadd.f32 0.0, %v2883
      %v2885 = vpop.f32.mrb[0].mxu0
      %v2886 = vpop.f32.mrb[0].mxu0
      %v2887 = vadd.f32 0.0, %v2886
      %v2888 = vpop.f32.mrb[0].mxu0
      %2889 = vmatprep.mubr.bf16.mxu0 0
      %2890 = vmatmul.mubr.bf16.gmra.mrb[0].mxu0 %v1681
      %v2891 = vpop.f32.mrb[0].mxu0
      %v2892 = vadd.f32 0.0, %v2891
      %v2893 = vpop.f32.mrb[0].mxu0
      %v2894 = vpop.f32.mrb[0].mxu0
      %v2895 = vadd.f32 0.0, %v2894
      %v2896 = vpop.f32.mrb[0].mxu0
      %2897 = vmatprep.mubr.bf16.mxu0 0
      %2898 = vmatmul.mubr.bf16.gmra.mrb[0].mxu0 %v1684
      %v2899 = vpop.f32.mrb[0].mxu0
      %v2900 = vadd.f32 0.0, %v2899
      %v2901 = vpop.f32.mrb[0].mxu0
      %v2902 = vpop.f32.mrb[0].mxu0
      %v2903 = vadd.f32 0.0, %v2902
      %v2904 = vpop.f32.mrb[0].mxu0
      %2905 = vmatprep.mubr.bf16.mxu0 0
      %2906 = vmatmul.mubr.bf16.gmra.mrb[0].mxu0 %v1687
      %v2907 = vpop.f32.mrb[0].mxu0
      %v2908 = vadd.f32 0.0, %v2907
      %v2909 = vpop.f32.mrb[0].mxu0
      %v2910 = vpop.f32.mrb[0].mxu0
      %v2911 = vadd.f32 0.0, %v2910
      %v2912 = vpop.f32.mrb[0].mxu0
      %2913 = vmatprep.mubr.bf16.mxu0 0
      %2914 = vmatmul.mubr.bf16.gmra.mrb[0].mxu0 %v1690
      %v2915 = vpop.f32.mrb[0].mxu0
      %v2916 = vadd.f32 0.0, %v2915
      %v2917 = vpop.f32.mrb[0].mxu0
      %v2918 = vpop.f32.mrb[0].mxu0
      %v2919 = vadd.f32 0.0, %v2918
      %v2920 = vpop.f32.mrb[0].mxu0
      %2921 = vmatprep.mubr.bf16.mxu0 0
      %2922 = vmatmul.mubr.bf16.gmra.mrb[0].mxu0 %v1693
      %v2923 = vpop.f32.mrb[0].mxu0
      %v2924 = vadd.f32 0.0, %v2923
      %v2925 = vpop.f32.mrb[0].mxu0
      %v2926 = vpop.f32.mrb[0].mxu0
      %v2927 = vadd.f32 0.0, %v2926
      %v2928 = vpop.f32.mrb[0].mxu0
      %2929 = vmatprep.mubr.bf16.mxu0 0
      %2930 = vmatmul.mubr.bf16.gmra.mrb[0].mxu0 %v1696
      %v2931 = vpop.f32.mrb[0].mxu0
      %v2932 = vadd.f32 0.0, %v2931
      %v2933 = vpop.f32.mrb[0].mxu0
      %v2934 = vpop.f32.mrb[0].mxu0
      %v2935 = vadd.f32 0.0, %v2934
      %v2936 = vpop.f32.mrb[0].mxu0
      %2937 = vmatprep.mubr.bf16.mxu0 0
      %2938 = vmatmul.mubr.bf16.gmra.mrb[0].mxu0 %v1699
      %v2939 = vpop.f32.mrb[0].mxu0
      %v2940 = vadd.f32 0.0, %v2939
      %v2941 = vpop.f32.mrb[0].mxu0
      %v2942 = vpop.f32.mrb[0].mxu0
      %v2943 = vadd.f32 0.0, %v2942
      %v2944 = vpop.f32.mrb[0].mxu0
      %2945 = vmatprep.mubr.bf16.mxu0 0
      %2946 = vmatmul.mubr.bf16.gmra.mrb[0].mxu0 %v1702
      %v2947 = vpop.f32.mrb[0].mxu0
      %v2948 = vadd.f32 0.0, %v2947
      %v2949 = vpop.f32.mrb[0].mxu0
      %v2950 = vpop.f32.mrb[0].mxu0
      %v2951 = vadd.f32 0.0, %v2950
      %v2952 = vpop.f32.mrb[0].mxu0
      %2953 = vmatprep.mubr.bf16.mxu0 0
      %2954 = vmatmul.mubr.bf16.gmra.mrb[0].mxu0 %v1705
      %v2955 = vpop.f32.mrb[0].mxu0
      %v2956 = vadd.f32 0.0, %v2955
      %v2957 = vpop.f32.mrb[0].mxu0
      %v2958 = vpop.f32.mrb[0].mxu0
      %v2959 = vadd.f32 0.0, %v2958
      %v2960 = vpop.f32.mrb[0].mxu0
      %2961 = vmatprep.mubr.bf16.mxu0 0
      %2962 = vmatmul.mubr.bf16.gmra.mrb[0].mxu0 %v1708
      %v2963 = vpop.f32.mrb[0].mxu0
      %v2964 = vadd.f32 0.0, %v2963
      %v2965 = vpop.f32.mrb[0].mxu0
      %v2966 = vpop.f32.mrb[0].mxu0
      %v2967 = vadd.f32 0.0, %v2966
      %v2968 = vpop.f32.mrb[0].mxu0
      %2969 = vmatprep.mubr.bf16.mxu0 0
      %2970 = vmatmul.mubr.bf16.gmra.mrb[0].mxu0 %v1711
      %v2971 = vpop.f32.mrb[0].mxu0
      %v2972 = vadd.f32 0.0, %v2971
      %v2973 = vpop.f32.mrb[0].mxu0
      %v2974 = vpop.f32.mrb[0].mxu0
      %v2975 = vadd.f32 0.0, %v2974
      %v2976 = vpop.f32.mrb[0].mxu0
      %2977 = vmatprep.mubr.bf16.mxu0 0
      %2978 = vmatmul.mubr.bf16.gmra.mrb[0].mxu0 %v1714
      %v2979 = vpop.f32.mrb[0].mxu0
      %v2980 = vadd.f32 0.0, %v2979
      %v2981 = vpop.f32.mrb[0].mxu0
      %v2982 = vpop.f32.mrb[0].mxu0
      %v2983 = vadd.f32 0.0, %v2982
      %v2984 = vpop.f32.mrb[0].mxu0
      %2985 = vmatprep.mubr.bf16.mxu0 0
      %2986 = vmatmul.mubr.bf16.gmra.mrb[0].mxu0 %v2828
      %v2987 = vpop.f32.mrb[0].mxu0
      %v2988 = vadd.f32 0.0, %v2987
      %v2989 = vpop.f32.mrb[0].mxu0
      %v2990 = vpop.f32.mrb[0].mxu0
      %v2991 = vadd.f32 0.0, %v2990
      %v2992 = vpop.f32.mrb[0].mxu0
      %2993 = vdwg.mxu0
      %v2994 = vadd.f32 %v2768, %v2868
      %v2995 = vadd.f32 %v2769, %v2871
      %v2996 = vadd.f32 %v2770, %v2876
      %v2997 = vadd.f32 %v2771, %v2879
      %v2998 = vadd.f32 %v2772, %v2884
      %v2999 = vadd.f32 %v2773, %v2887
      %v3000 = vadd.f32 %v2774, %v2892
      %v3001 = vadd.f32 %v2775, %v2895
      %v3002 = vadd.f32 %v2776, %v2900
      %v3003 = vadd.f32 %v2777, %v2903
      %v3004 = vadd.f32 %v2778, %v2908
      %v3005 = vadd.f32 %v2779, %v2911
      %v3006 = vadd.f32 %v2780, %v2916
      %v3007 = vadd.f32 %v2781, %v2919
      %v3008 = vadd.f32 %v2782, %v2924
      %v3009 = vadd.f32 %v2783, %v2927
      %v3010 = vadd.f32 %v2784, %v2932
      %v3011 = vadd.f32 %v2785, %v2935
      %v3012 = vadd.f32 %v2786, %v2940
      %v3013 = vadd.f32 %v2787, %v2943
      %v3014 = vadd.f32 %v2788, %v2948
      %v3015 = vadd.f32 %v2789, %v2951
      %v3016 = vadd.f32 %v2790, %v2956
      %v3017 = vadd.f32 %v2791, %v2959
      %v3018 = vadd.f32 %v2792, %v2964
      %v3019 = vadd.f32 %v2793, %v2967
      %v3020 = vadd.f32 %v2794, %v2972
      %v3021 = vadd.f32 %v2795, %v2975
      %v3022 = vadd.f32 %v2796, %v2980
      %v3023 = vadd.f32 %v2797, %v2983
      %v3024 = vadd.f32 %v2798, %v2988
      %v3025 = vadd.f32 %v2799, %v2991
      %v3027 = vrot.slane %v1217, 5
      %v3028 = vrot.slane %v3027, 4
      %v3029 = vrot.slane %v1218, 5
      %v3030 = vsel %vm2191, %v3028, %v3029
      %v3031 = vrot.slane %v3029, 4
      %v3032 = vrot.slane %v1219, 5
      %v3033 = vsel %vm2191, %v3031, %v3032
      %v3034 = vunpack.c.l.b16 %v3030
      %v3035 = vunpack.c.l.b16 %v3033
      %v3036 = vpack.c.b16 %v3035, %v3034
      %v3038 = vsel %vm1667, %v3036, 0
      %v3041 = vsel %vm1716, %v1228, 0
      %3043 = vmatprep.subr.bf16.mxu0 0
      %3044 = vmatpush1.bf16.msra.mxu0 %v3041
      %3045 = vmatprep.subr.bf16.mxu0 0
      %3046 = vmatpush1.bf16.msra.mxu0 0
      %3047 = vmatprep.subr.bf16.mxu0 0
      %3048 = vmatpush1.bf16.msra.mxu0 0
      %3049 = vmatprep.subr.bf16.mxu0 0
      %3050 = vmatpush1.bf16.msra.mxu0 0
      %3051 = vmatprep.subr.bf16.mxu0 0
      %3052 = vmatpush1.bf16.msra.mxu0 0
      %3053 = vmatprep.subr.bf16.mxu0 0
      %3054 = vmatpush1.bf16.msra.mxu0 0
      %3055 = vmatprep.subr.bf16.mxu0 0
      %3056 = vmatpush1.bf16.msra.mxu0 0
      %3057 = vmatprep.subr.bf16.mxu0 0
      %3058 = vmatpush1.bf16.msra.mxu0 0
      %3059 = vmatprep.subr.bf16.mxu0 0
      %3060 = vmatpush1.bf16.msra.mxu0 0
      %3061 = vmatprep.subr.bf16.mxu0 0
      %3062 = vmatpush1.bf16.msra.mxu0 0
      %3063 = vmatprep.subr.bf16.mxu0 0
      %3064 = vmatpush1.bf16.msra.mxu0 0
      %3065 = vmatprep.subr.bf16.mxu0 0
      %3066 = vmatpush1.bf16.msra.mxu0 0
      %3067 = vmatprep.subr.bf16.mxu0 0
      %3068 = vmatpush1.bf16.msra.mxu0 0
      %3069 = vmatprep.subr.bf16.mxu0 0
      %3070 = vmatpush1.bf16.msra.mxu0 0
      %3071 = vmatprep.subr.bf16.mxu0 0
      %3072 = vmatpush1.bf16.msra.mxu0 0
      %3073 = vmatprep.subr.bf16.mxu0 0
      %3074 = vmatpush1.bf16.msra.mxu0 0
      %3075 = vmatprep.mubr.bf16.mxu0 0
      %3076 = vmatmul.mubr.bf16.gmra.mrb[0].mxu0 %v2356
      %v3077 = vpop.f32.mrb[0].mxu0
      %v3078 = vadd.f32 0.0, %v3077
      %v3079 = vpop.f32.mrb[0].mxu0
      %v3080 = vpop.f32.mrb[0].mxu0
      %v3081 = vadd.f32 0.0, %v3080
      %v3082 = vpop.f32.mrb[0].mxu0
      %3083 = vmatprep.mubr.bf16.mxu0 0
      %3084 = vmatmul.mubr.bf16.gmra.mrb[0].mxu0 %v2359
      %v3085 = vpop.f32.mrb[0].mxu0
      %v3086 = vadd.f32 0.0, %v3085
      %v3087 = vpop.f32.mrb[0].mxu0
      %v3088 = vpop.f32.mrb[0].mxu0
      %v3089 = vadd.f32 0.0, %v3088
      %v3090 = vpop.f32.mrb[0].mxu0
      %3091 = vmatprep.mubr.bf16.mxu0 0
      %3092 = vmatmul.mubr.bf16.gmra.mrb[0].mxu0 %v2362
      %v3093 = vpop.f32.mrb[0].mxu0
      %v3094 = vadd.f32 0.0, %v3093
      %v3095 = vpop.f32.mrb[0].mxu0
      %v3096 = vpop.f32.mrb[0].mxu0
      %v3097 = vadd.f32 0.0, %v3096
      %v3098 = vpop.f32.mrb[0].mxu0
      %3099 = vmatprep.mubr.bf16.mxu0 0
      %3100 = vmatmul.mubr.bf16.gmra.mrb[0].mxu0 %v2365
      %v3101 = vpop.f32.mrb[0].mxu0
      %v3102 = vadd.f32 0.0, %v3101
      %v3103 = vpop.f32.mrb[0].mxu0
      %v3104 = vpop.f32.mrb[0].mxu0
      %v3105 = vadd.f32 0.0, %v3104
      %v3106 = vpop.f32.mrb[0].mxu0
      %3107 = vmatprep.mubr.bf16.mxu0 0
      %3108 = vmatmul.mubr.bf16.gmra.mrb[0].mxu0 %v2368
      %v3109 = vpop.f32.mrb[0].mxu0
      %v3110 = vadd.f32 0.0, %v3109
      %v3111 = vpop.f32.mrb[0].mxu0
      %v3112 = vpop.f32.mrb[0].mxu0
      %v3113 = vadd.f32 0.0, %v3112
      %v3114 = vpop.f32.mrb[0].mxu0
      %3115 = vmatprep.mubr.bf16.mxu0 0
      %3116 = vmatmul.mubr.bf16.gmra.mrb[0].mxu0 %v2371
      %v3117 = vpop.f32.mrb[0].mxu0
      %v3118 = vadd.f32 0.0, %v3117
      %v3119 = vpop.f32.mrb[0].mxu0
      %v3120 = vpop.f32.mrb[0].mxu0
      %v3121 = vadd.f32 0.0, %v3120
      %v3122 = vpop.f32.mrb[0].mxu0
      %3123 = vmatprep.mubr.bf16.mxu0 0
      %3124 = vmatmul.mubr.bf16.gmra.mrb[0].mxu0 %v2374
      %v3125 = vpop.f32.mrb[0].mxu0
      %v3126 = vadd.f32 0.0, %v3125
      %v3127 = vpop.f32.mrb[0].mxu0
      %v3128 = vpop.f32.mrb[0].mxu0
      %v3129 = vadd.f32 0.0, %v3128
      %v3130 = vpop.f32.mrb[0].mxu0
      %3131 = vmatprep.mubr.bf16.mxu0 0
      %3132 = vmatmul.mubr.bf16.gmra.mrb[0].mxu0 %v2377
      %v3133 = vpop.f32.mrb[0].mxu0
      %v3134 = vadd.f32 0.0, %v3133
      %v3135 = vpop.f32.mrb[0].mxu0
      %v3136 = vpop.f32.mrb[0].mxu0
      %v3137 = vadd.f32 0.0, %v3136
      %v3138 = vpop.f32.mrb[0].mxu0
      %3139 = vmatprep.mubr.bf16.mxu0 0
      %3140 = vmatmul.mubr.bf16.gmra.mrb[0].mxu0 %v2380
      %v3141 = vpop.f32.mrb[0].mxu0
      %v3142 = vadd.f32 0.0, %v3141
      %v3143 = vpop.f32.mrb[0].mxu0
      %v3144 = vpop.f32.mrb[0].mxu0
      %v3145 = vadd.f32 0.0, %v3144
      %v3146 = vpop.f32.mrb[0].mxu0
      %3147 = vmatprep.mubr.bf16.mxu0 0
      %3148 = vmatmul.mubr.bf16.gmra.mrb[0].mxu0 %v2383
      %v3149 = vpop.f32.mrb[0].mxu0
      %v3150 = vadd.f32 0.0, %v3149
      %v3151 = vpop.f32.mrb[0].mxu0
      %v3152 = vpop.f32.mrb[0].mxu0
      %v3153 = vadd.f32 0.0, %v3152
      %v3154 = vpop.f32.mrb[0].mxu0
      %3155 = vmatprep.mubr.bf16.mxu0 0
      %3156 = vmatmul.mubr.bf16.gmra.mrb[0].mxu0 %v2386
      %v3157 = vpop.f32.mrb[0].mxu0
      %v3158 = vadd.f32 0.0, %v3157
      %v3159 = vpop.f32.mrb[0].mxu0
      %v3160 = vpop.f32.mrb[0].mxu0
      %v3161 = vadd.f32 0.0, %v3160
      %v3162 = vpop.f32.mrb[0].mxu0
      %3163 = vmatprep.mubr.bf16.mxu0 0
      %3164 = vmatmul.mubr.bf16.gmra.mrb[0].mxu0 %v2389
      %v3165 = vpop.f32.mrb[0].mxu0
      %v3166 = vadd.f32 0.0, %v3165
      %v3167 = vpop.f32.mrb[0].mxu0
      %v3168 = vpop.f32.mrb[0].mxu0
      %v3169 = vadd.f32 0.0, %v3168
      %v3170 = vpop.f32.mrb[0].mxu0
      %3171 = vmatprep.mubr.bf16.mxu0 0
      %3172 = vmatmul.mubr.bf16.gmra.mrb[0].mxu0 %v2392
      %v3173 = vpop.f32.mrb[0].mxu0
      %v3174 = vadd.f32 0.0, %v3173
      %v3175 = vpop.f32.mrb[0].mxu0
      %v3176 = vpop.f32.mrb[0].mxu0
      %v3177 = vadd.f32 0.0, %v3176
      %v3178 = vpop.f32.mrb[0].mxu0
      %3179 = vmatprep.mubr.bf16.mxu0 0
      %3180 = vmatmul.mubr.bf16.gmra.mrb[0].mxu0 %v2395
      %v3181 = vpop.f32.mrb[0].mxu0
      %v3182 = vadd.f32 0.0, %v3181
      %v3183 = vpop.f32.mrb[0].mxu0
      %v3184 = vpop.f32.mrb[0].mxu0
      %v3185 = vadd.f32 0.0, %v3184
      %v3186 = vpop.f32.mrb[0].mxu0
      %3187 = vmatprep.mubr.bf16.mxu0 0
      %3188 = vmatmul.mubr.bf16.gmra.mrb[0].mxu0 %v2398
      %v3189 = vpop.f32.mrb[0].mxu0
      %v3190 = vadd.f32 0.0, %v3189
      %v3191 = vpop.f32.mrb[0].mxu0
      %v3192 = vpop.f32.mrb[0].mxu0
      %v3193 = vadd.f32 0.0, %v3192
      %v3194 = vpop.f32.mrb[0].mxu0
      %3195 = vmatprep.mubr.bf16.mxu0 0
      %3196 = vmatmul.mubr.bf16.gmra.mrb[0].mxu0 %v3038
      %v3197 = vpop.f32.mrb[0].mxu0
      %v3198 = vadd.f32 0.0, %v3197
      %v3199 = vpop.f32.mrb[0].mxu0
      %v3200 = vpop.f32.mrb[0].mxu0
      %v3201 = vadd.f32 0.0, %v3200
      %v3202 = vpop.f32.mrb[0].mxu0
      %3203 = vdwg.mxu0
      %v3204 = vadd.f32 %v2994, %v3078
      %v3205 = vadd.f32 %v2995, %v3081
      %v3206 = vadd.f32 %v2996, %v3086
      %v3207 = vadd.f32 %v2997, %v3089
      %v3208 = vadd.f32 %v2998, %v3094
      %v3209 = vadd.f32 %v2999, %v3097
      %v3210 = vadd.f32 %v3000, %v3102
      %v3211 = vadd.f32 %v3001, %v3105
      %v3212 = vadd.f32 %v3002, %v3110
      %v3213 = vadd.f32 %v3003, %v3113
      %v3214 = vadd.f32 %v3004, %v3118
      %v3215 = vadd.f32 %v3005, %v3121
      %v3216 = vadd.f32 %v3006, %v3126
      %v3217 = vadd.f32 %v3007, %v3129
      %v3218 = vadd.f32 %v3008, %v3134
      %v3219 = vadd.f32 %v3009, %v3137
      %v3220 = vadd.f32 %v3010, %v3142
      %v3221 = vadd.f32 %v3011, %v3145
      %v3222 = vadd.f32 %v3012, %v3150
      %v3223 = vadd.f32 %v3013, %v3153
      %v3224 = vadd.f32 %v3014, %v3158
      %v3225 = vadd.f32 %v3015, %v3161
      %v3226 = vadd.f32 %v3016, %v3166
      %v3227 = vadd.f32 %v3017, %v3169
      %v3228 = vadd.f32 %v3018, %v3174
      %v3229 = vadd.f32 %v3019, %v3177
      %v3230 = vadd.f32 %v3020, %v3182
      %v3231 = vadd.f32 %v3021, %v3185
      %v3232 = vadd.f32 %v3022, %v3190
      %v3233 = vadd.f32 %v3023, %v3193
      %v3234 = vadd.f32 %v3024, %v3198
      %v3235 = vadd.f32 %v3025, %v3201
      %v3238 = vunpack.c.l.b16 %v1220
      %v3239 = vunpack.c.l.b16 %v1221
      %v3240 = vpack.c.b16 %v3239, %v3238
      %v3242 = vsel %vm1667, %v3240, 0
      %v3245 = vsel %vm1716, %v1229, 0
      %3247 = vmatprep.subr.bf16.mxu0 0
      %3248 = vmatpush1.bf16.msra.mxu0 %v3245
      %3249 = vmatprep.subr.bf16.mxu0 0
      %3250 = vmatpush1.bf16.msra.mxu0 0
      %3251 = vmatprep.subr.bf16.mxu0 0
      %3252 = vmatpush1.bf16.msra.mxu0 0
      %3253 = vmatprep.subr.bf16.mxu0 0
      %3254 = vmatpush1.bf16.msra.mxu0 0
      %3255 = vmatprep.subr.bf16.mxu0 0
      %3256 = vmatpush1.bf16.msra.mxu0 0
      %3257 = vmatprep.subr.bf16.mxu0 0
      %3258 = vmatpush1.bf16.msra.mxu0 0
      %3259 = vmatprep.subr.bf16.mxu0 0
      %3260 = vmatpush1.bf16.msra.mxu0 0
      %3261 = vmatprep.subr.bf16.mxu0 0
      %3262 = vmatpush1.bf16.msra.mxu0 0
      %3263 = vmatprep.subr.bf16.mxu0 0
      %3264 = vmatpush1.bf16.msra.mxu0 0
      %3265 = vmatprep.subr.bf16.mxu0 0
      %3266 = vmatpush1.bf16.msra.mxu0 0
      %3267 = vmatprep.subr.bf16.mxu0 0
      %3268 = vmatpush1.bf16.msra.mxu0 0
      %3269 = vmatprep.subr.bf16.mxu0 0
      %3270 = vmatpush1.bf16.msra.mxu0 0
      %3271 = vmatprep.subr.bf16.mxu0 0
      %3272 = vmatpush1.bf16.msra.mxu0 0
      %3273 = vmatprep.subr.bf16.mxu0 0
      %3274 = vmatpush1.bf16.msra.mxu0 0
      %3275 = vmatprep.subr.bf16.mxu0 0
      %3276 = vmatpush1.bf16.msra.mxu0 0
      %3277 = vmatprep.subr.bf16.mxu0 0
      %3278 = vmatpush1.bf16.msra.mxu0 0
      %3279 = vmatprep.mubr.bf16.mxu0 0
      %3280 = vmatmul.mubr.bf16.gmra.mrb[0].mxu0 %v1968
      %v3281 = vpop.f32.mrb[0].mxu0
      %v3282 = vadd.f32 0.0, %v3281
      %v3283 = vpop.f32.mrb[0].mxu0
      %v3284 = vpop.f32.mrb[0].mxu0
      %v3285 = vadd.f32 0.0, %v3284
      %v3286 = vpop.f32.mrb[0].mxu0
      %3287 = vmatprep.mubr.bf16.mxu0 0
      %3288 = vmatmul.mubr.bf16.gmra.mrb[0].mxu0 %v1971
      %v3289 = vpop.f32.mrb[0].mxu0
      %v3290 = vadd.f32 0.0, %v3289
      %v3291 = vpop.f32.mrb[0].mxu0
      %v3292 = vpop.f32.mrb[0].mxu0
      %v3293 = vadd.f32 0.0, %v3292
      %v3294 = vpop.f32.mrb[0].mxu0
      %3295 = vmatprep.mubr.bf16.mxu0 0
      %3296 = vmatmul.mubr.bf16.gmra.mrb[0].mxu0 %v1974
      %v3297 = vpop.f32.mrb[0].mxu0
      %v3298 = vadd.f32 0.0, %v3297
      %v3299 = vpop.f32.mrb[0].mxu0
      %v3300 = vpop.f32.mrb[0].mxu0
      %v3301 = vadd.f32 0.0, %v3300
      %v3302 = vpop.f32.mrb[0].mxu0
      %3303 = vmatprep.mubr.bf16.mxu0 0
      %3304 = vmatmul.mubr.bf16.gmra.mrb[0].mxu0 %v1977
      %v3305 = vpop.f32.mrb[0].mxu0
      %v3306 = vadd.f32 0.0, %v3305
      %v3307 = vpop.f32.mrb[0].mxu0
      %v3308 = vpop.f32.mrb[0].mxu0
      %v3309 = vadd.f32 0.0, %v3308
      %v3310 = vpop.f32.mrb[0].mxu0
      %3311 = vmatprep.mubr.bf16.mxu0 0
      %3312 = vmatmul.mubr.bf16.gmra.mrb[0].mxu0 %v1980
      %v3313 = vpop.f32.mrb[0].mxu0
      %v3314 = vadd.f32 0.0, %v3313
      %v3315 = vpop.f32.mrb[0].mxu0
      %v3316 = vpop.f32.mrb[0].mxu0
      %v3317 = vadd.f32 0.0, %v3316
      %v3318 = vpop.f32.mrb[0].mxu0
      %3319 = vmatprep.mubr.bf16.mxu0 0
      %3320 = vmatmul.mubr.bf16.gmra.mrb[0].mxu0 %v1983
      %v3321 = vpop.f32.mrb[0].mxu0
      %v3322 = vadd.f32 0.0, %v3321
      %v3323 = vpop.f32.mrb[0].mxu0
      %v3324 = vpop.f32.mrb[0].mxu0
      %v3325 = vadd.f32 0.0, %v3324
      %v3326 = vpop.f32.mrb[0].mxu0
      %3327 = vmatprep.mubr.bf16.mxu0 0
      %3328 = vmatmul.mubr.bf16.gmra.mrb[0].mxu0 %v1986
      %v3329 = vpop.f32.mrb[0].mxu0
      %v3330 = vadd.f32 0.0, %v3329
      %v3331 = vpop.f32.mrb[0].mxu0
      %v3332 = vpop.f32.mrb[0].mxu0
      %v3333 = vadd.f32 0.0, %v3332
      %v3334 = vpop.f32.mrb[0].mxu0
      %3335 = vmatprep.mubr.bf16.mxu0 0
      %3336 = vmatmul.mubr.bf16.gmra.mrb[0].mxu0 %v1989
      %v3337 = vpop.f32.mrb[0].mxu0
      %v3338 = vadd.f32 0.0, %v3337
      %v3339 = vpop.f32.mrb[0].mxu0
      %v3340 = vpop.f32.mrb[0].mxu0
      %v3341 = vadd.f32 0.0, %v3340
      %v3342 = vpop.f32.mrb[0].mxu0
      %3343 = vmatprep.mubr.bf16.mxu0 0
      %3344 = vmatmul.mubr.bf16.gmra.mrb[0].mxu0 %v1992
      %v3345 = vpop.f32.mrb[0].mxu0
      %v3346 = vadd.f32 0.0, %v3345
      %v3347 = vpop.f32.mrb[0].mxu0
      %v3348 = vpop.f32.mrb[0].mxu0
      %v3349 = vadd.f32 0.0, %v3348
      %v3350 = vpop.f32.mrb[0].mxu0
      %3351 = vmatprep.mubr.bf16.mxu0 0
      %3352 = vmatmul.mubr.bf16.gmra.mrb[0].mxu0 %v1995
      %v3353 = vpop.f32.mrb[0].mxu0
      %v3354 = vadd.f32 0.0, %v3353
      %v3355 = vpop.f32.mrb[0].mxu0
      %v3356 = vpop.f32.mrb[0].mxu0
      %v3357 = vadd.f32 0.0, %v3356
      %v3358 = vpop.f32.mrb[0].mxu0
      %3359 = vmatprep.mubr.bf16.mxu0 0
      %3360 = vmatmul.mubr.bf16.gmra.mrb[0].mxu0 %v1998
      %v3361 = vpop.f32.mrb[0].mxu0
      %v3362 = vadd.f32 0.0, %v3361
      %v3363 = vpop.f32.mrb[0].mxu0
      %v3364 = vpop.f32.mrb[0].mxu0
      %v3365 = vadd.f32 0.0, %v3364
      %v3366 = vpop.f32.mrb[0].mxu0
      %3367 = vmatprep.mubr.bf16.mxu0 0
      %3368 = vmatmul.mubr.bf16.gmra.mrb[0].mxu0 %v2001
      %v3369 = vpop.f32.mrb[0].mxu0
      %v3370 = vadd.f32 0.0, %v3369
      %v3371 = vpop.f32.mrb[0].mxu0
      %v3372 = vpop.f32.mrb[0].mxu0
      %v3373 = vadd.f32 0.0, %v3372
      %v3374 = vpop.f32.mrb[0].mxu0
      %3375 = vmatprep.mubr.bf16.mxu0 0
      %3376 = vmatmul.mubr.bf16.gmra.mrb[0].mxu0 %v2004
      %v3377 = vpop.f32.mrb[0].mxu0
      %v3378 = vadd.f32 0.0, %v3377
      %v3379 = vpop.f32.mrb[0].mxu0
      %v3380 = vpop.f32.mrb[0].mxu0
      %v3381 = vadd.f32 0.0, %v3380
      %v3382 = vpop.f32.mrb[0].mxu0
      %3383 = vmatprep.mubr.bf16.mxu0 0
      %3384 = vmatmul.mubr.bf16.gmra.mrb[0].mxu0 %v2007
      %v3385 = vpop.f32.mrb[0].mxu0
      %v3386 = vadd.f32 0.0, %v3385
      %v3387 = vpop.f32.mrb[0].mxu0
      %v3388 = vpop.f32.mrb[0].mxu0
      %v3389 = vadd.f32 0.0, %v3388
      %v3390 = vpop.f32.mrb[0].mxu0
      %3391 = vmatprep.mubr.bf16.mxu0 0
      %3392 = vmatmul.mubr.bf16.gmra.mrb[0].mxu0 %v2602
      %v3393 = vpop.f32.mrb[0].mxu0
      %v3394 = vadd.f32 0.0, %v3393
      %v3395 = vpop.f32.mrb[0].mxu0
      %v3396 = vpop.f32.mrb[0].mxu0
      %v3397 = vadd.f32 0.0, %v3396
      %v3398 = vpop.f32.mrb[0].mxu0
      %3399 = vmatprep.mubr.bf16.mxu0 0
      %3400 = vmatmul.mubr.bf16.gmra.mrb[0].mxu0 %v3242
      %v3401 = vpop.f32.mrb[0].mxu0
      %v3402 = vadd.f32 0.0, %v3401
      %v3403 = vpop.f32.mrb[0].mxu0
      %v3404 = vpop.f32.mrb[0].mxu0
      %v3405 = vadd.f32 0.0, %v3404
      %v3406 = vpop.f32.mrb[0].mxu0
      %3407 = vdwg.mxu0
      %v3408 = vadd.f32 %v3204, %v3282
      %v3409 = vadd.f32 %v3205, %v3285
      %v3410 = vadd.f32 %v3206, %v3290
      %v3411 = vadd.f32 %v3207, %v3293
      %v3412 = vadd.f32 %v3208, %v3298
      %v3413 = vadd.f32 %v3209, %v3301
      %v3414 = vadd.f32 %v3210, %v3306
      %v3415 = vadd.f32 %v3211, %v3309
      %v3416 = vadd.f32 %v3212, %v3314
      %v3417 = vadd.f32 %v3213, %v3317
      %v3418 = vadd.f32 %v3214, %v3322
      %v3419 = vadd.f32 %v3215, %v3325
      %v3420 = vadd.f32 %v3216, %v3330
      %v3421 = vadd.f32 %v3217, %v3333
      %v3422 = vadd.f32 %v3218, %v3338
      %v3423 = vadd.f32 %v3219, %v3341
      %v3424 = vadd.f32 %v3220, %v3346
      %v3425 = vadd.f32 %v3221, %v3349
      %v3426 = vadd.f32 %v3222, %v3354
      %v3427 = vadd.f32 %v3223, %v3357
      %v3428 = vadd.f32 %v3224, %v3362
      %v3429 = vadd.f32 %v3225, %v3365
      %v3430 = vadd.f32 %v3226, %v3370
      %v3431 = vadd.f32 %v3227, %v3373
      %v3432 = vadd.f32 %v3228, %v3378
      %v3433 = vadd.f32 %v3229, %v3381
      %v3434 = vadd.f32 %v3230, %v3386
      %v3435 = vadd.f32 %v3231, %v3389
      %v3436 = vadd.f32 %v3232, %v3394
      %v3437 = vadd.f32 %v3233, %v3397
      %v3438 = vadd.f32 %v3234, %v3402
      %v3439 = vadd.f32 %v3235, %v3405
      %v3441 = vshrl.u32 %v1220, 16
      %v3443 = vrot.slane %v3441, 4
      %v3444 = vshll.u32 %v1220, 16
      %v3446 = vrot.slane %v3444, 5
      %v3447 = vor.u32 %v3443, %v3446
      %v3448 = vrot.slane %v3447, 4
      %v3450 = vshll.u32 %v1221, 16
      %v3452 = vrot.slane %v3450, 5
      %v3453 = vsel %vm1234, %v3448, %v3452
      %v3454 = vshrl.u32 %v1221, 16
      %v3456 = vrot.slane %v3454, 4
      %v3457 = vor.u32 %v3456, %v3452
      %v3458 = vrot.slane %v3457, 4
      %v3460 = vshll.u32 %v1222, 16
      %v3462 = vrot.slane %v3460, 5
      %v3463 = vsel %vm1234, %v3458, %v3462
      %v3464 = vunpack.c.l.b16 %v3453
      %v3465 = vunpack.c.l.b16 %v3463
      %v3466 = vpack.c.b16 %v3465, %v3464
      %v3468 = vsel %vm1667, %v3466, 0
      %v3471 = vsel %vm1716, %v1230, 0
      %3473 = vmatprep.subr.bf16.mxu0 0
      %3474 = vmatpush1.bf16.msra.mxu0 %v3471
      %3475 = vmatprep.subr.bf16.mxu0 0
      %3476 = vmatpush1.bf16.msra.mxu0 0
      %3477 = vmatprep.subr.bf16.mxu0 0
      %3478 = vmatpush1.bf16.msra.mxu0 0
      %3479 = vmatprep.subr.bf16.mxu0 0
      %3480 = vmatpush1.bf16.msra.mxu0 0
      %3481 = vmatprep.subr.bf16.mxu0 0
      %3482 = vmatpush1.bf16.msra.mxu0 0
      %3483 = vmatprep.subr.bf16.mxu0 0
      %3484 = vmatpush1.bf16.msra.mxu0 0
      %3485 = vmatprep.subr.bf16.mxu0 0
      %3486 = vmatpush1.bf16.msra.mxu0 0
      %3487 = vmatprep.subr.bf16.mxu0 0
      %3488 = vmatpush1.bf16.msra.mxu0 0
      %3489 = vmatprep.subr.bf16.mxu0 0
      %3490 = vmatpush1.bf16.msra.mxu0 0
      %3491 = vmatprep.subr.bf16.mxu0 0
      %3492 = vmatpush1.bf16.msra.mxu0 0
      %3493 = vmatprep.subr.bf16.mxu0 0
      %3494 = vmatpush1.bf16.msra.mxu0 0
      %3495 = vmatprep.subr.bf16.mxu0 0
      %3496 = vmatpush1.bf16.msra.mxu0 0
      %3497 = vmatprep.subr.bf16.mxu0 0
      %3498 = vmatpush1.bf16.msra.mxu0 0
      %3499 = vmatprep.subr.bf16.mxu0 0
      %3500 = vmatpush1.bf16.msra.mxu0 0
      %3501 = vmatprep.subr.bf16.mxu0 0
      %3502 = vmatpush1.bf16.msra.mxu0 0
      %3503 = vmatprep.subr.bf16.mxu0 0
      %3504 = vmatpush1.bf16.msra.mxu0 0
      %3505 = vmatprep.mubr.bf16.mxu0 0
      %3506 = vmatmul.mubr.bf16.gmra.mrb[0].mxu0 %v1675
      %v3507 = vpop.f32.mrb[0].mxu0
      %v3508 = vadd.f32 0.0, %v3507
      %v3509 = vpop.f32.mrb[0].mxu0
      %v3510 = vpop.f32.mrb[0].mxu0
      %v3511 = vadd.f32 0.0, %v3510
      %v3512 = vpop.f32.mrb[0].mxu0
      %3513 = vmatprep.mubr.bf16.mxu0 0
      %3514 = vmatmul.mubr.bf16.gmra.mrb[0].mxu0 %v1678
      %v3515 = vpop.f32.mrb[0].mxu0
      %v3516 = vadd.f32 0.0, %v3515
      %v3517 = vpop.f32.mrb[0].mxu0
      %v3518 = vpop.f32.mrb[0].mxu0
      %v3519 = vadd.f32 0.0, %v3518
      %v3520 = vpop.f32.mrb[0].mxu0
      %3521 = vmatprep.mubr.bf16.mxu0 0
      %3522 = vmatmul.mubr.bf16.gmra.mrb[0].mxu0 %v1681
      %v3523 = vpop.f32.mrb[0].mxu0
      %v3524 = vadd.f32 0.0, %v3523
      %v3525 = vpop.f32.mrb[0].mxu0
      %v3526 = vpop.f32.mrb[0].mxu0
      %v3527 = vadd.f32 0.0, %v3526
      %v3528 = vpop.f32.mrb[0].mxu0
      %3529 = vmatprep.mubr.bf16.mxu0 0
      %3530 = vmatmul.mubr.bf16.gmra.mrb[0].mxu0 %v1684
      %v3531 = vpop.f32.mrb[0].mxu0
      %v3532 = vadd.f32 0.0, %v3531
      %v3533 = vpop.f32.mrb[0].mxu0
      %v3534 = vpop.f32.mrb[0].mxu0
      %v3535 = vadd.f32 0.0, %v3534
      %v3536 = vpop.f32.mrb[0].mxu0
      %3537 = vmatprep.mubr.bf16.mxu0 0
      %3538 = vmatmul.mubr.bf16.gmra.mrb[0].mxu0 %v1687
      %v3539 = vpop.f32.mrb[0].mxu0
      %v3540 = vadd.f32 0.0, %v3539
      %v3541 = vpop.f32.mrb[0].mxu0
      %v3542 = vpop.f32.mrb[0].mxu0
      %v3543 = vadd.f32 0.0, %v3542
      %v3544 = vpop.f32.mrb[0].mxu0
      %3545 = vmatprep.mubr.bf16.mxu0 0
      %3546 = vmatmul.mubr.bf16.gmra.mrb[0].mxu0 %v1690
      %v3547 = vpop.f32.mrb[0].mxu0
      %v3548 = vadd.f32 0.0, %v3547
      %v3549 = vpop.f32.mrb[0].mxu0
      %v3550 = vpop.f32.mrb[0].mxu0
      %v3551 = vadd.f32 0.0, %v3550
      %v3552 = vpop.f32.mrb[0].mxu0
      %3553 = vmatprep.mubr.bf16.mxu0 0
      %3554 = vmatmul.mubr.bf16.gmra.mrb[0].mxu0 %v1693
      %v3555 = vpop.f32.mrb[0].mxu0
      %v3556 = vadd.f32 0.0, %v3555
      %v3557 = vpop.f32.mrb[0].mxu0
      %v3558 = vpop.f32.mrb[0].mxu0
      %v3559 = vadd.f32 0.0, %v3558
      %v3560 = vpop.f32.mrb[0].mxu0
      %3561 = vmatprep.mubr.bf16.mxu0 0
      %3562 = vmatmul.mubr.bf16.gmra.mrb[0].mxu0 %v1696
      %v3563 = vpop.f32.mrb[0].mxu0
      %v3564 = vadd.f32 0.0, %v3563
      %v3565 = vpop.f32.mrb[0].mxu0
      %v3566 = vpop.f32.mrb[0].mxu0
      %v3567 = vadd.f32 0.0, %v3566
      %v3568 = vpop.f32.mrb[0].mxu0
      %3569 = vmatprep.mubr.bf16.mxu0 0
      %3570 = vmatmul.mubr.bf16.gmra.mrb[0].mxu0 %v1699
      %v3571 = vpop.f32.mrb[0].mxu0
      %v3572 = vadd.f32 0.0, %v3571
      %v3573 = vpop.f32.mrb[0].mxu0
      %v3574 = vpop.f32.mrb[0].mxu0
      %v3575 = vadd.f32 0.0, %v3574
      %v3576 = vpop.f32.mrb[0].mxu0
      %3577 = vmatprep.mubr.bf16.mxu0 0
      %3578 = vmatmul.mubr.bf16.gmra.mrb[0].mxu0 %v1702
      %v3579 = vpop.f32.mrb[0].mxu0
      %v3580 = vadd.f32 0.0, %v3579
      %v3581 = vpop.f32.mrb[0].mxu0
      %v3582 = vpop.f32.mrb[0].mxu0
      %v3583 = vadd.f32 0.0, %v3582
      %v3584 = vpop.f32.mrb[0].mxu0
      %3585 = vmatprep.mubr.bf16.mxu0 0
      %3586 = vmatmul.mubr.bf16.gmra.mrb[0].mxu0 %v1705
      %v3587 = vpop.f32.mrb[0].mxu0
      %v3588 = vadd.f32 0.0, %v3587
      %v3589 = vpop.f32.mrb[0].mxu0
      %v3590 = vpop.f32.mrb[0].mxu0
      %v3591 = vadd.f32 0.0, %v3590
      %v3592 = vpop.f32.mrb[0].mxu0
      %3593 = vmatprep.mubr.bf16.mxu0 0
      %3594 = vmatmul.mubr.bf16.gmra.mrb[0].mxu0 %v1708
      %v3595 = vpop.f32.mrb[0].mxu0
      %v3596 = vadd.f32 0.0, %v3595
      %v3597 = vpop.f32.mrb[0].mxu0
      %v3598 = vpop.f32.mrb[0].mxu0
      %v3599 = vadd.f32 0.0, %v3598
      %v3600 = vpop.f32.mrb[0].mxu0
      %3601 = vmatprep.mubr.bf16.mxu0 0
      %3602 = vmatmul.mubr.bf16.gmra.mrb[0].mxu0 %v1711
      %v3603 = vpop.f32.mrb[0].mxu0
      %v3604 = vadd.f32 0.0, %v3603
      %v3605 = vpop.f32.mrb[0].mxu0
      %v3606 = vpop.f32.mrb[0].mxu0
      %v3607 = vadd.f32 0.0, %v3606
      %v3608 = vpop.f32.mrb[0].mxu0
      %3609 = vmatprep.mubr.bf16.mxu0 0
      %3610 = vmatmul.mubr.bf16.gmra.mrb[0].mxu0 %v1714
      %v3611 = vpop.f32.mrb[0].mxu0
      %v3612 = vadd.f32 0.0, %v3611
      %v3613 = vpop.f32.mrb[0].mxu0
      %v3614 = vpop.f32.mrb[0].mxu0
      %v3615 = vadd.f32 0.0, %v3614
      %v3616 = vpop.f32.mrb[0].mxu0
      %3617 = vmatprep.mubr.bf16.mxu0 0
      %3618 = vmatmul.mubr.bf16.gmra.mrb[0].mxu0 %v2828
      %v3619 = vpop.f32.mrb[0].mxu0
      %v3620 = vadd.f32 0.0, %v3619
      %v3621 = vpop.f32.mrb[0].mxu0
      %v3622 = vpop.f32.mrb[0].mxu0
      %v3623 = vadd.f32 0.0, %v3622
      %v3624 = vpop.f32.mrb[0].mxu0
      %3625 = vmatprep.mubr.bf16.mxu0 0
      %3626 = vmatmul.mubr.bf16.gmra.mrb[0].mxu0 %v3468
      %v3627 = vpop.f32.mrb[0].mxu0
      %v3628 = vadd.f32 0.0, %v3627
      %v3629 = vpop.f32.mrb[0].mxu0
      %v3630 = vpop.f32.mrb[0].mxu0
      %v3631 = vadd.f32 0.0, %v3630
      %v3632 = vpop.f32.mrb[0].mxu0
      %3633 = vdwg.mxu0
      %v3634 = vadd.f32 %v3408, %v3508
      %v3635 = vadd.f32 %v3409, %v3511
      %v3636 = vadd.f32 %v3410, %v3516
      %v3637 = vadd.f32 %v3411, %v3519
      %v3638 = vadd.f32 %v3412, %v3524
      %v3639 = vadd.f32 %v3413, %v3527
      %v3640 = vadd.f32 %v3414, %v3532
      %v3641 = vadd.f32 %v3415, %v3535
      %v3642 = vadd.f32 %v3416, %v3540
      %v3643 = vadd.f32 %v3417, %v3543
      %v3644 = vadd.f32 %v3418, %v3548
      %v3645 = vadd.f32 %v3419, %v3551
      %v3646 = vadd.f32 %v3420, %v3556
      %v3647 = vadd.f32 %v3421, %v3559
      %v3648 = vadd.f32 %v3422, %v3564
      %v3649 = vadd.f32 %v3423, %v3567
      %v3650 = vadd.f32 %v3424, %v3572
      %v3651 = vadd.f32 %v3425, %v3575
      %v3652 = vadd.f32 %v3426, %v3580
      %v3653 = vadd.f32 %v3427, %v3583
      %v3654 = vadd.f32 %v3428, %v3588
      %v3655 = vadd.f32 %v3429, %v3591
      %v3656 = vadd.f32 %v3430, %v3596
      %v3657 = vadd.f32 %v3431, %v3599
      %v3658 = vadd.f32 %v3432, %v3604
      %v3659 = vadd.f32 %v3433, %v3607
      %v3660 = vadd.f32 %v3434, %v3612
      %v3661 = vadd.f32 %v3435, %v3615
      %v3662 = vadd.f32 %v3436, %v3620
      %v3663 = vadd.f32 %v3437, %v3623
      %v3664 = vadd.f32 %v3438, %v3628
      %v3665 = vadd.f32 %v3439, %v3631
      %v3667 = vrot.slane %v1220, 5
      %v3668 = vrot.slane %v3667, 4
      %v3669 = vrot.slane %v1221, 5
      %v3670 = vsel %vm2191, %v3668, %v3669
      %v3671 = vrot.slane %v3669, 4
      %v3672 = vrot.slane %v1222, 5
      %v3673 = vsel %vm2191, %v3671, %v3672
      %v3674 = vunpack.c.l.b16 %v3670
      %v3675 = vunpack.c.l.b16 %v3673
      %v3676 = vpack.c.b16 %v3675, %v3674
      %v3678 = vsel %vm1667, %v3676, 0
      %v3681 = vsel %vm1716, %v1231, 0
      %3683 = vmatprep.subr.bf16.mxu0 0
      %3684 = vmatpush1.bf16.msra.mxu0 %v3681
      %3685 = vmatprep.subr.bf16.mxu0 0
      %3686 = vmatpush1.bf16.msra.mxu0 0
      %3687 = vmatprep.subr.bf16.mxu0 0
      %3688 = vmatpush1.bf16.msra.mxu0 0
      %3689 = vmatprep.subr.bf16.mxu0 0
      %3690 = vmatpush1.bf16.msra.mxu0 0
      %3691 = vmatprep.subr.bf16.mxu0 0
      %3692 = vmatpush1.bf16.msra.mxu0 0
      %3693 = vmatprep.subr.bf16.mxu0 0
      %3694 = vmatpush1.bf16.msra.mxu0 0
      %3695 = vmatprep.subr.bf16.mxu0 0
      %3696 = vmatpush1.bf16.msra.mxu0 0
      %3697 = vmatprep.subr.bf16.mxu0 0
      %3698 = vmatpush1.bf16.msra.mxu0 0
      %3699 = vmatprep.subr.bf16.mxu0 0
      %3700 = vmatpush1.bf16.msra.mxu0 0
      %3701 = vmatprep.subr.bf16.mxu0 0
      %3702 = vmatpush1.bf16.msra.mxu0 0
      %3703 = vmatprep.subr.bf16.mxu0 0
      %3704 = vmatpush1.bf16.msra.mxu0 0
      %3705 = vmatprep.subr.bf16.mxu0 0
      %3706 = vmatpush1.bf16.msra.mxu0 0
      %3707 = vmatprep.subr.bf16.mxu0 0
      %3708 = vmatpush1.bf16.msra.mxu0 0
      %3709 = vmatprep.subr.bf16.mxu0 0
      %3710 = vmatpush1.bf16.msra.mxu0 0
      %3711 = vmatprep.subr.bf16.mxu0 0
      %3712 = vmatpush1.bf16.msra.mxu0 0
      %3713 = vmatprep.subr.bf16.mxu0 0
      %3714 = vmatpush1.bf16.msra.mxu0 0
      %3715 = vmatprep.mubr.bf16.mxu0 0
      %3716 = vmatmul.mubr.bf16.gmra.mrb[0].mxu0 %v2359
      %v3717 = vpop.f32.mrb[0].mxu0
      %v3718 = vadd.f32 0.0, %v3717
      %v3719 = vpop.f32.mrb[0].mxu0
      %v3720 = vpop.f32.mrb[0].mxu0
      %v3721 = vadd.f32 0.0, %v3720
      %v3722 = vpop.f32.mrb[0].mxu0
      %3723 = vmatprep.mubr.bf16.mxu0 0
      %3724 = vmatmul.mubr.bf16.gmra.mrb[0].mxu0 %v2362
      %v3725 = vpop.f32.mrb[0].mxu0
      %v3726 = vadd.f32 0.0, %v3725
      %v3727 = vpop.f32.mrb[0].mxu0
      %v3728 = vpop.f32.mrb[0].mxu0
      %v3729 = vadd.f32 0.0, %v3728
      %v3730 = vpop.f32.mrb[0].mxu0
      %3731 = vmatprep.mubr.bf16.mxu0 0
      %3732 = vmatmul.mubr.bf16.gmra.mrb[0].mxu0 %v2365
      %v3733 = vpop.f32.mrb[0].mxu0
      %v3734 = vadd.f32 0.0, %v3733
      %v3735 = vpop.f32.mrb[0].mxu0
      %v3736 = vpop.f32.mrb[0].mxu0
      %v3737 = vadd.f32 0.0, %v3736
      %v3738 = vpop.f32.mrb[0].mxu0
      %3739 = vmatprep.mubr.bf16.mxu0 0
      %3740 = vmatmul.mubr.bf16.gmra.mrb[0].mxu0 %v2368
      %v3741 = vpop.f32.mrb[0].mxu0
      %v3742 = vadd.f32 0.0, %v3741
      %v3743 = vpop.f32.mrb[0].mxu0
      %v3744 = vpop.f32.mrb[0].mxu0
      %v3745 = vadd.f32 0.0, %v3744
      %v3746 = vpop.f32.mrb[0].mxu0
      %3747 = vmatprep.mubr.bf16.mxu0 0
      %3748 = vmatmul.mubr.bf16.gmra.mrb[0].mxu0 %v2371
      %v3749 = vpop.f32.mrb[0].mxu0
      %v3750 = vadd.f32 0.0, %v3749
      %v3751 = vpop.f32.mrb[0].mxu0
      %v3752 = vpop.f32.mrb[0].mxu0
      %v3753 = vadd.f32 0.0, %v3752
      %v3754 = vpop.f32.mrb[0].mxu0
      %3755 = vmatprep.mubr.bf16.mxu0 0
      %3756 = vmatmul.mubr.bf16.gmra.mrb[0].mxu0 %v2374
      %v3757 = vpop.f32.mrb[0].mxu0
      %v3758 = vadd.f32 0.0, %v3757
      %v3759 = vpop.f32.mrb[0].mxu0
      %v3760 = vpop.f32.mrb[0].mxu0
      %v3761 = vadd.f32 0.0, %v3760
      %v3762 = vpop.f32.mrb[0].mxu0
      %3763 = vmatprep.mubr.bf16.mxu0 0
      %3764 = vmatmul.mubr.bf16.gmra.mrb[0].mxu0 %v2377
      %v3765 = vpop.f32.mrb[0].mxu0
      %v3766 = vadd.f32 0.0, %v3765
      %v3767 = vpop.f32.mrb[0].mxu0
      %v3768 = vpop.f32.mrb[0].mxu0
      %v3769 = vadd.f32 0.0, %v3768
      %v3770 = vpop.f32.mrb[0].mxu0
      %3771 = vmatprep.mubr.bf16.mxu0 0
      %3772 = vmatmul.mubr.bf16.gmra.mrb[0].mxu0 %v2380
      %v3773 = vpop.f32.mrb[0].mxu0
      %v3774 = vadd.f32 0.0, %v3773
      %v3775 = vpop.f32.mrb[0].mxu0
      %v3776 = vpop.f32.mrb[0].mxu0
      %v3777 = vadd.f32 0.0, %v3776
      %v3778 = vpop.f32.mrb[0].mxu0
      %3779 = vmatprep.mubr.bf16.mxu0 0
      %3780 = vmatmul.mubr.bf16.gmra.mrb[0].mxu0 %v2383
      %v3781 = vpop.f32.mrb[0].mxu0
      %v3782 = vadd.f32 0.0, %v3781
      %v3783 = vpop.f32.mrb[0].mxu0
      %v3784 = vpop.f32.mrb[0].mxu0
      %v3785 = vadd.f32 0.0, %v3784
      %v3786 = vpop.f32.mrb[0].mxu0
      %3787 = vmatprep.mubr.bf16.mxu0 0
      %3788 = vmatmul.mubr.bf16.gmra.mrb[0].mxu0 %v2386
      %v3789 = vpop.f32.mrb[0].mxu0
      %v3790 = vadd.f32 0.0, %v3789
      %v3791 = vpop.f32.mrb[0].mxu0
      %v3792 = vpop.f32.mrb[0].mxu0
      %v3793 = vadd.f32 0.0, %v3792
      %v3794 = vpop.f32.mrb[0].mxu0
      %3795 = vmatprep.mubr.bf16.mxu0 0
      %3796 = vmatmul.mubr.bf16.gmra.mrb[0].mxu0 %v2389
      %v3797 = vpop.f32.mrb[0].mxu0
      %v3798 = vadd.f32 0.0, %v3797
      %v3799 = vpop.f32.mrb[0].mxu0
      %v3800 = vpop.f32.mrb[0].mxu0
      %v3801 = vadd.f32 0.0, %v3800
      %v3802 = vpop.f32.mrb[0].mxu0
      %3803 = vmatprep.mubr.bf16.mxu0 0
      %3804 = vmatmul.mubr.bf16.gmra.mrb[0].mxu0 %v2392
      %v3805 = vpop.f32.mrb[0].mxu0
      %v3806 = vadd.f32 0.0, %v3805
      %v3807 = vpop.f32.mrb[0].mxu0
      %v3808 = vpop.f32.mrb[0].mxu0
      %v3809 = vadd.f32 0.0, %v3808
      %v3810 = vpop.f32.mrb[0].mxu0
      %3811 = vmatprep.mubr.bf16.mxu0 0
      %3812 = vmatmul.mubr.bf16.gmra.mrb[0].mxu0 %v2395
      %v3813 = vpop.f32.mrb[0].mxu0
      %v3814 = vadd.f32 0.0, %v3813
      %v3815 = vpop.f32.mrb[0].mxu0
      %v3816 = vpop.f32.mrb[0].mxu0
      %v3817 = vadd.f32 0.0, %v3816
      %v3818 = vpop.f32.mrb[0].mxu0
      %3819 = vmatprep.mubr.bf16.mxu0 0
      %3820 = vmatmul.mubr.bf16.gmra.mrb[0].mxu0 %v2398
      %v3821 = vpop.f32.mrb[0].mxu0
      %v3822 = vadd.f32 0.0, %v3821
      %v3823 = vpop.f32.mrb[0].mxu0
      %v3824 = vpop.f32.mrb[0].mxu0
      %v3825 = vadd.f32 0.0, %v3824
      %v3826 = vpop.f32.mrb[0].mxu0
      %3827 = vmatprep.mubr.bf16.mxu0 0
      %3828 = vmatmul.mubr.bf16.gmra.mrb[0].mxu0 %v3038
      %v3829 = vpop.f32.mrb[0].mxu0
      %v3830 = vadd.f32 0.0, %v3829
      %v3831 = vpop.f32.mrb[0].mxu0
      %v3832 = vpop.f32.mrb[0].mxu0
      %v3833 = vadd.f32 0.0, %v3832
      %v3834 = vpop.f32.mrb[0].mxu0
      %3835 = vmatprep.mubr.bf16.mxu0 0
      %3836 = vmatmul.mubr.bf16.gmra.mrb[0].mxu0 %v3678
      %v3837 = vpop.f32.mrb[0].mxu0
      %v3838 = vadd.f32 0.0, %v3837
      %v3839 = vpop.f32.mrb[0].mxu0
      %v3840 = vpop.f32.mrb[0].mxu0
      %v3841 = vadd.f32 0.0, %v3840
      %v3842 = vpop.f32.mrb[0].mxu0
      %3843 = vdwg.mxu0
      %v3844 = vadd.f32 %v3634, %v3718
      %v3845 = vadd.f32 %v3635, %v3721
      %v3846 = vadd.f32 %v3636, %v3726
      %v3847 = vadd.f32 %v3637, %v3729
      %v3848 = vadd.f32 %v3638, %v3734
      %v3849 = vadd.f32 %v3639, %v3737
      %v3850 = vadd.f32 %v3640, %v3742
      %v3851 = vadd.f32 %v3641, %v3745
      %v3852 = vadd.f32 %v3642, %v3750
      %v3853 = vadd.f32 %v3643, %v3753
      %v3854 = vadd.f32 %v3644, %v3758
      %v3855 = vadd.f32 %v3645, %v3761
      %v3856 = vadd.f32 %v3646, %v3766
      %v3857 = vadd.f32 %v3647, %v3769
      %v3858 = vadd.f32 %v3648, %v3774
      %v3859 = vadd.f32 %v3649, %v3777
      %v3860 = vadd.f32 %v3650, %v3782
      %v3861 = vadd.f32 %v3651, %v3785
      %v3862 = vadd.f32 %v3652, %v3790
      %v3863 = vadd.f32 %v3653, %v3793
      %v3864 = vadd.f32 %v3654, %v3798
      %v3865 = vadd.f32 %v3655, %v3801
      %v3866 = vadd.f32 %v3656, %v3806
      %v3867 = vadd.f32 %v3657, %v3809
      %v3868 = vadd.f32 %v3658, %v3814
      %v3869 = vadd.f32 %v3659, %v3817
      %v3870 = vadd.f32 %v3660, %v3822
      %v3871 = vadd.f32 %v3661, %v3825
      %v3872 = vadd.f32 %v3662, %v3830
      %v3873 = vadd.f32 %v3663, %v3833
      %v3874 = vadd.f32 %v3664, %v3838
      %v3875 = vadd.f32 %v3665, %v3841
      %v3876 = vpack.c.bf16 %v3845, %v3844
      %v3877 = vpack.c.bf16 %v3847, %v3846
      %v3878 = vpack.c.bf16 %v3849, %v3848
      %v3879 = vpack.c.bf16 %v3851, %v3850
      %v3880 = vpack.c.bf16 %v3853, %v3852
      %v3881 = vpack.c.bf16 %v3855, %v3854
      %v3882 = vpack.c.bf16 %v3857, %v3856
      %v3883 = vpack.c.bf16 %v3859, %v3858
      %v3884 = vpack.c.bf16 %v3861, %v3860
      %v3885 = vpack.c.bf16 %v3863, %v3862
      %v3886 = vpack.c.bf16 %v3865, %v3864
      %v3887 = vpack.c.bf16 %v3867, %v3866
      %v3888 = vpack.c.bf16 %v3869, %v3868
      %v3889 = vpack.c.bf16 %v3871, %v3870
      %v3890 = vpack.c.bf16 %v3873, %v3872
      %v3891 = vpack.c.bf16 %v3875, %v3874
      %v3908 = vunpack.c.l.b16 %v3876
      %v3909 = vunpack.c.h.b16 %v3876
      %v3910 = vunpack.c.l.b16 %v3877
      %v3911 = vunpack.c.h.b16 %v3877
      %v3912 = vunpack.c.l.b16 %v3878
      %v3913 = vunpack.c.h.b16 %v3878
      %v3914 = vunpack.c.l.b16 %v3879
      %v3915 = vunpack.c.h.b16 %v3879
      %v3916 = vunpack.c.l.b16 %v3880
      %v3917 = vunpack.c.h.b16 %v3880
      %v3918 = vunpack.c.l.b16 %v3881
      %v3919 = vunpack.c.h.b16 %v3881
      %v3920 = vunpack.c.l.b16 %v3882
      %v3921 = vunpack.c.h.b16 %v3882
      %v3922 = vunpack.c.l.b16 %v3883
      %v3923 = vunpack.c.h.b16 %v3883
      %v3924 = vunpack.c.l.b16 %v3884
      %v3925 = vunpack.c.h.b16 %v3884
      %v3926 = vunpack.c.l.b16 %v3885
      %v3927 = vunpack.c.h.b16 %v3885
      %v3928 = vunpack.c.l.b16 %v3886
      %v3929 = vunpack.c.h.b16 %v3886
      %v3930 = vunpack.c.l.b16 %v3887
      %v3931 = vunpack.c.h.b16 %v3887
      %v3932 = vunpack.c.l.b16 %v3888
      %v3933 = vunpack.c.h.b16 %v3888
      %v3934 = vunpack.c.l.b16 %v3889
      %v3935 = vunpack.c.h.b16 %v3889
      %v3936 = vunpack.c.l.b16 %v3890
      %v3937 = vunpack.c.h.b16 %v3890
      %v3938 = vunpack.c.l.b16 %v3891
      %v3939 = vunpack.c.h.b16 %v3891
      %v3940 = vpack.c.b16 %v3908, %v3908
      %v3941 = vpack.c.b16 %v3909, %v3909
      %v3942 = vpack.c.b16 %v3910, %v3910
      %v3943 = vpack.c.b16 %v3911, %v3911
      %v3944 = vpack.c.b16 %v3912, %v3912
      %v3945 = vpack.c.b16 %v3913, %v3913
      %v3946 = vpack.c.b16 %v3914, %v3914
      %v3947 = vpack.c.b16 %v3915, %v3915
      %v3948 = vpack.c.b16 %v3916, %v3916
      %v3949 = vpack.c.b16 %v3917, %v3917
      %v3950 = vpack.c.b16 %v3918, %v3918
      %v3951 = vpack.c.b16 %v3919, %v3919
      %v3952 = vpack.c.b16 %v3920, %v3920
      %v3953 = vpack.c.b16 %v3921, %v3921
      %v3954 = vpack.c.b16 %v3922, %v3922
      %v3955 = vpack.c.b16 %v3923, %v3923
      %v3956 = vpack.c.b16 %v3924, %v3924
      %v3957 = vpack.c.b16 %v3925, %v3925
      %v3958 = vpack.c.b16 %v3926, %v3926
      %v3959 = vpack.c.b16 %v3927, %v3927
      %v3960 = vpack.c.b16 %v3928, %v3928
      %v3961 = vpack.c.b16 %v3929, %v3929
      %v3962 = vpack.c.b16 %v3930, %v3930
      %v3963 = vpack.c.b16 %v3931, %v3931
      %v3964 = vpack.c.b16 %v3932, %v3932
      %v3965 = vpack.c.b16 %v3933, %v3933
      %v3966 = vpack.c.b16 %v3934, %v3934
      %v3967 = vpack.c.b16 %v3935, %v3935
      %v3968 = vpack.c.b16 %v3936, %v3936
      %v3969 = vpack.c.b16 %v3937, %v3937
      %v3970 = vpack.c.b16 %v3938, %v3938
      %v3971 = vpack.c.b16 %v3939, %v3939
      %4004 = vst.msk [vmem:[%s264] sm:$0xf] %vm592, %v3940
      %4005 = vst.msk [vmem:[%s264 + $0x4] sm:$0xf] %vm592, %v3941
      %4006 = vst.msk [vmem:[%s264 + $0x8] sm:$0xf] %vm592, %v3942
      %4007 = vst.msk [vmem:[%s264 + $0xc] sm:$0xf] %vm592, %v3943
      %4008 = vst.msk [vmem:[%s264 + $0x10] sm:$0xf] %vm592, %v3944
      %4009 = vst.msk [vmem:[%s264 + $0x14] sm:$0xf] %vm592, %v3945
      %4010 = vst.msk [vmem:[%s264 + $0x18] sm:$0xf] %vm592, %v3946
      %4011 = vst.msk [vmem:[%s264 + $0x1c] sm:$0xf] %vm592, %v3947
      %4012 = vst.msk [vmem:[%s264 + $0x20] sm:$0xf] %vm592, %v3948
      %4013 = vst.msk [vmem:[%s264 + $0x24] sm:$0xf] %vm592, %v3949
      %4014 = vst.msk [vmem:[%s264 + $0x28] sm:$0xf] %vm592, %v3950
      %4015 = vst.msk [vmem:[%s264 + $0x2c] sm:$0xf] %vm592, %v3951
      %4016 = vst.msk [vmem:[%s264 + $0x30] sm:$0xf] %vm592, %v3952
      %4017 = vst.msk [vmem:[%s264 + $0x34] sm:$0xf] %vm592, %v3953
      %4018 = vst.msk [vmem:[%s264 + $0x38] sm:$0xf] %vm592, %v3954
      %4019 = vst.msk [vmem:[%s264 + $0x3c] sm:$0xf] %vm592, %v3955
      %4020 = vst.msk [vmem:[%s264 + $0x40] sm:$0xf] %vm592, %v3956
      %4021 = vst.msk [vmem:[%s264 + $0x44] sm:$0xf] %vm592, %v3957
      %4022 = vst.msk [vmem:[%s264 + $0x48] sm:$0xf] %vm592, %v3958
      %4023 = vst.msk [vmem:[%s264 + $0x4c] sm:$0xf] %vm592, %v3959
      %4024 = vst.msk [vmem:[%s264 + $0x50] sm:$0xf] %vm592, %v3960
      %4025 = vst.msk [vmem:[%s264 + $0x54] sm:$0xf] %vm592, %v3961
      %4026 = vst.msk [vmem:[%s264 + $0x58] sm:$0xf] %vm592, %v3962
      %4027 = vst.msk [vmem:[%s264 + $0x5c] sm:$0xf] %vm592, %v3963
      %4028 = vst.msk [vmem:[%s264 + $0x60] sm:$0xf] %vm592, %v3964
      %4029 = vst.msk [vmem:[%s264 + $0x64] sm:$0xf] %vm592, %v3965
      %4030 = vst.msk [vmem:[%s264 + $0x68] sm:$0xf] %vm592, %v3966
      %4031 = vst.msk [vmem:[%s264 + $0x6c] sm:$0xf] %vm592, %v3967
      %4032 = vst.msk [vmem:[%s264 + $0x70] sm:$0xf] %vm592, %v3968
      %4033 = vst.msk [vmem:[%s264 + $0x74] sm:$0xf] %vm592, %v3969
      %4034 = vst.msk [vmem:[%s264 + $0x78] sm:$0xf] %vm592, %v3970
      %4035 = vst.msk [vmem:[%s264 + $0x7c] sm:$0xf] %vm592, %v3971
      %v4036 = vadd.f32 %v3844, %v3845
      %v4037 = vadd.f32 %v4036, %v3846
      %v4038 = vadd.f32 %v4037, %v3847
      %v4039 = vadd.f32 %v4038, %v3848
      %v4040 = vadd.f32 %v4039, %v3849
      %v4041 = vadd.f32 %v4040, %v3850
      %v4042 = vadd.f32 %v4041, %v3851
      %v4043 = vadd.f32 %v4042, %v3852
      %v4044 = vadd.f32 %v4043, %v3853
      %v4045 = vadd.f32 %v4044, %v3854
      %v4046 = vadd.f32 %v4045, %v3855
      %v4047 = vadd.f32 %v4046, %v3856
      %v4048 = vadd.f32 %v4047, %v3857
      %v4049 = vadd.f32 %v4048, %v3858
      %v4050 = vadd.f32 %v4049, %v3859
      %v4051 = vadd.f32 %v4050, %v3860
      %v4052 = vadd.f32 %v4051, %v3861
      %v4053 = vadd.f32 %v4052, %v3862
      %v4054 = vadd.f32 %v4053, %v3863
      %v4055 = vadd.f32 %v4054, %v3864
      %v4056 = vadd.f32 %v4055, %v3865
      %v4057 = vadd.f32 %v4056, %v3866
      %v4058 = vadd.f32 %v4057, %v3867
      %v4059 = vadd.f32 %v4058, %v3868
      %v4060 = vadd.f32 %v4059, %v3869
      %v4061 = vadd.f32 %v4060, %v3870
      %v4062 = vadd.f32 %v4061, %v3871
      %v4063 = vadd.f32 %v4062, %v3872
      %v4064 = vadd.f32 %v4063, %v3873
      %v4065 = vadd.f32 %v4064, %v3874
      %v4066 = vadd.f32 %v4065, %v3875
      %4067 = vst [vmem:[%s268] sm:$0xff] %v4066
      %v4068 = vmul.f32 %v3844, %v3844
      %v4069 = vmul.f32 %v3845, %v3845
      %v4070 = vmul.f32 %v3846, %v3846
      %v4071 = vmul.f32 %v3847, %v3847
      %v4072 = vmul.f32 %v3848, %v3848
      %v4073 = vmul.f32 %v3849, %v3849
      %v4074 = vmul.f32 %v3850, %v3850
      %v4075 = vmul.f32 %v3851, %v3851
      %v4076 = vmul.f32 %v3852, %v3852
      %v4077 = vmul.f32 %v3853, %v3853
      %v4078 = vmul.f32 %v3854, %v3854
      %v4079 = vmul.f32 %v3855, %v3855
      %v4080 = vmul.f32 %v3856, %v3856
      %v4081 = vmul.f32 %v3857, %v3857
      %v4082 = vmul.f32 %v3858, %v3858
      %v4083 = vmul.f32 %v3859, %v3859
      %v4084 = vmul.f32 %v3860, %v3860
      %v4085 = vmul.f32 %v3861, %v3861
      %v4086 = vmul.f32 %v3862, %v3862
      %v4087 = vmul.f32 %v3863, %v3863
      %v4088 = vmul.f32 %v3864, %v3864
      %v4089 = vmul.f32 %v3865, %v3865
      %v4090 = vmul.f32 %v3866, %v3866
      %v4091 = vmul.f32 %v3867, %v3867
      %v4092 = vmul.f32 %v3868, %v3868
      %v4093 = vmul.f32 %v3869, %v3869
      %v4094 = vmul.f32 %v3870, %v3870
      %v4095 = vmul.f32 %v3871, %v3871
      %v4096 = vmul.f32 %v3872, %v3872
      %v4097 = vmul.f32 %v3873, %v3873
      %v4098 = vmul.f32 %v3874, %v3874
      %v4099 = vmul.f32 %v3875, %v3875
      %v4100 = vadd.f32 %v4068, %v4069
      %v4101 = vadd.f32 %v4100, %v4070
      %v4102 = vadd.f32 %v4101, %v4071
      %v4103 = vadd.f32 %v4102, %v4072
      %v4104 = vadd.f32 %v4103, %v4073
      %v4105 = vadd.f32 %v4104, %v4074
      %v4106 = vadd.f32 %v4105, %v4075
      %v4107 = vadd.f32 %v4106, %v4076
      %v4108 = vadd.f32 %v4107, %v4077
      %v4109 = vadd.f32 %v4108, %v4078
      %v4110 = vadd.f32 %v4109, %v4079
      %v4111 = vadd.f32 %v4110, %v4080
      %v4112 = vadd.f32 %v4111, %v4081
      %v4113 = vadd.f32 %v4112, %v4082
      %v4114 = vadd.f32 %v4113, %v4083
      %v4115 = vadd.f32 %v4114, %v4084
      %v4116 = vadd.f32 %v4115, %v4085
      %v4117 = vadd.f32 %v4116, %v4086
      %v4118 = vadd.f32 %v4117, %v4087
      %v4119 = vadd.f32 %v4118, %v4088
      %v4120 = vadd.f32 %v4119, %v4089
      %v4121 = vadd.f32 %v4120, %v4090
      %v4122 = vadd.f32 %v4121, %v4091
      %v4123 = vadd.f32 %v4122, %v4092
      %v4124 = vadd.f32 %v4123, %v4093
      %v4125 = vadd.f32 %v4124, %v4094
      %v4126 = vadd.f32 %v4125, %v4095
      %v4127 = vadd.f32 %v4126, %v4096
      %v4128 = vadd.f32 %v4127, %v4097
      %v4129 = vadd.f32 %v4128, %v4098
      %v4130 = vadd.f32 %v4129, %v4099
      %4131 = vst [vmem:[%s272] sm:$0xff] %v4130
      %p4132 = scmp.lt.s32.totalorder %s18, 1
      %s4133 = scalar_select %p4132, %s18, 1
      %s4134 = smul.addr %s4133, 32
      %s4135 = smul.addr %s4134, 4
      %s4136 = scalar_lea.vmem %s4, %s4135
      %p4137 = scmp.lt.s32.totalorder %s18, 1
      %s4138 = scalar_select %p4137, %s18, 1
      %s4139 = smul.addr %s4138, 8
      %s4140 = scalar_lea.vmem %s5, %s4139
      %p4141 = scmp.lt.s32.totalorder %s18, 1
      %s4142 = scalar_select %p4141, %s18, 1
      %s4143 = smul.addr %s4142, 8
      %s4144 = scalar_lea.vmem %s6, %s4143
      // Predicated region
      $region37: #{_lambda_.4} parent=35 // pred_check
        %p4145 = pneg %p125
      $region38: #{_lambda_.4} parent=35 // pred_check_branch
        %4147 = sbr.rel (%p4145) target = $region40
      $region39: #{_lambda_.4} parent=35 // pred_region
        _
      $region40: #{_lambda_.4} parent=35 // pred_fallthru
        _
      // Predicated region
      $region41: #{_lambda_.4} parent=35 // pred_check
        %p4148 = pneg %p151
      $region42: #{_lambda_.4} parent=35 // pred_check_branch
        %4150 = sbr.rel (%p4148) target = $region44
      $region43: #{_lambda_.4} parent=35 // pred_region
        _
      $region44: #{_lambda_.4} parent=35 // pred_fallthru
        _
      // Predicated region
      $region45: #{_lambda_.4} parent=35 // pred_check
        %p4151 = pneg %p177
      $region46: #{_lambda_.4} parent=35 // pred_check_branch
        %4153 = sbr.rel (%p4151) target = $region48
      $region47: #{_lambda_.4} parent=35 // pred_region
        _
      $region48: #{_lambda_.4} parent=35 // pred_fallthru
        _
    $region36: #{_lambda_.4} parent=5 // pred_fallthru
      _
    %p4154 = scmp.le.s32.totalorder 2, %s13
    // Predicated region
    $region49: #{_lambda_.4} parent=5 // pred_check
      %p4155 = pneg %p4154
    $region50: #{_lambda_.4} parent=5 // pred_check_branch
      %4157 = sbr.rel (%p4155) target = $region52
    $region51: #{_lambda_.4} parent=5 // pred_region
      %s4158 = ssub.s32 %s13, 2
      // Predicated region
      $region53: #{_lambda_.4} parent=51 // pred_check
        %p4159 = pneg %p131
      $region54: #{_lambda_.4} parent=51 // pred_check_branch
        %4161 = sbr.rel (%p4159) target = $region56
      $region55: #{_lambda_.4} parent=51 // pred_region
        %p4162 = scmp.lt.s32.totalorder %s19, 1
        %s4163 = scalar_select %p4162, %s19, 1
        %s4164 = smul.addr %s4163, 32
        %s4165 = smul.addr %s4164, 4
        %s4166 = scalar_lea.vmem %s4, %s4165
      $region56: #{_lambda_.4} parent=51 // pred_fallthru
        _
      // Predicated region
      $region57: #{_lambda_.4} parent=51 // pred_check
        %p4167 = pneg %p157
      $region58: #{_lambda_.4} parent=51 // pred_check_branch
        %4169 = sbr.rel (%p4167) target = $region60
      $region59: #{_lambda_.4} parent=51 // pred_region
        %p4170 = scmp.lt.s32.totalorder %s19, 1
        %s4171 = scalar_select %p4170, %s19, 1
        %s4172 = smul.addr %s4171, 8
        %s4173 = scalar_lea.vmem %s5, %s4172
      $region60: #{_lambda_.4} parent=51 // pred_fallthru
        _
      // Predicated region
      $region61: #{_lambda_.4} parent=51 // pred_check
        %p4174 = pneg %p183
      $region62: #{_lambda_.4} parent=51 // pred_check_branch
        %4176 = sbr.rel (%p4174) target = $region64
      $region63: #{_lambda_.4} parent=51 // pred_region
        %p4177 = scmp.lt.s32.totalorder %s19, 1
        %s4178 = scalar_select %p4177, %s19, 1
        %s4179 = smul.addr %s4178, 8
        %s4180 = scalar_lea.vmem %s6, %s4179
      $region64: #{_lambda_.4} parent=51 // pred_fallthru
        _
    $region52: #{_lambda_.4} parent=5 // pred_fallthru
      _
  $region6: #{_lambda_.4} parent=0 // loop_footer
    %s17 = sadd.s32 1, %s13
  $region7: #{_lambda_.4} parent=0 // loop_footer_branch
    %12 = sbr.rel target = $region3
  $region8: #{_lambda_.4} parent=0 // loop_exit
    _

</llo_original>
